<compile_context>
chip_gen: v7x
topology: tpu7x:2x2x1
jax: 0.10.0
libtpu: 0.0.40
codegen_flags: <defaults>
</compile_context>

<pallas_src>
import functools
import math

import numpy as np
import jax
import jax.numpy as jnp
from jax.experimental import pallas as pl
from jax.experimental.pallas import tpu as pltpu

F32 = jnp.float32
BF16 = jnp.bfloat16


# ----------------------------------------------------------------------------
# Constant pooling / spatial-shift matrices (compile-time constants under jit)
# ----------------------------------------------------------------------------
def _maxpool_select_mats(H, W):
    OH, OW = H // 2, W // 2
    m = np.zeros((4, OH * OW, H * W), np.float32)
    for oh in range(OH):
        for ow in range(OW):
            o = oh * OW + ow
            for k, (dy, dx) in enumerate(((0, 0), (0, 1), (1, 0), (1, 1))):
                m[k, o, (2 * oh + dy) * W + (2 * ow + dx)] = 1.0
    return m


def _avgpool_mat(H, W):
    OH, OW = H // 2, W // 2
    m = np.zeros((OH * OW, H * W), np.float32)
    for oh in range(OH):
        for ow in range(OW):
            o = oh * OW + ow
            for dy in (0, 1):
                for dx in (0, 1):
                    m[o, (2 * oh + dy) * W + (2 * ow + dx)] = 0.25
    return m


def _shift_mats_3x3(H, W):
    """S[k] @ x_flat == x shifted by (ky-1, kx-1) with zero padding, k = ky*3+kx."""
    N = H * W
    m = np.zeros((9, N, N), np.float32)
    for ky in range(3):
        for kx in range(3):
            k = ky * 3 + kx
            for h in range(H):
                for w in range(W):
                    hh, ww = h + ky - 1, w + kx - 1
                    if 0 <= hh < H and 0 <= ww < W:
                        m[k, h * W + w, hh * W + ww] = 1.0
    return m


# ----------------------------------------------------------------------------
# Single fused Pallas kernel: whole forward pass for one image per grid step
# ----------------------------------------------------------------------------
def _fused_cnn_kernel(depth, x_ref, mp_ref, s8_ref, avg_ref, s4_ref, *refs):
    out_ref = refs[-1]
    wrefs = refs[:-1]
    pos = [0]

    def nxt():
        r = wrefs[pos[0]]
        pos[0] += 1
        return r

    def mm(a, b):  # bf16 MXU matmul with f32 accumulation
        return jnp.dot(a.astype(BF16), b.astype(BF16), preferred_element_type=F32)

    # ---- conv0 (im2col patches @ W0, BN0 pre-folded) + ReLU --------------------------
    x = x_ref[0]                                   # (H1*W1, 49*Cin) bf16
    w0, b0 = nxt(), nxt()
    y = jnp.dot(x, w0[...], preferred_element_type=F32) + b0[...]
    y = jnp.maximum(y, 0.0)

    # ---- 2x2 max-pool: 4 row-selection matmuls + elementwise max --------------------
    yb = y.astype(BF16)
    p = jnp.dot(mp_ref[0], yb, preferred_element_type=F32)
    for k in range(1, 4):
        p = jnp.maximum(p, jnp.dot(mp_ref[k], yb, preferred_element_type=F32))
    chunks = [p]                                   # DenseNet features as channel chunks

    def bottleneck(chunks, s_ref):
        bn1s, bn1b, w1 = nxt(), nxt(), nxt()
        bn2s, bn2b, w3 = nxt(), nxt(), nxt()
        n = chunks[0].shape[0]
        inter = w1.shape[1]
        g = w3.shape[2]

        # BN1 + ReLU + 1x1 conv, per channel-chunk (== same ops on the concatenation)
        h = jnp.zeros((n, inter), F32)
        off = 0
        for c in chunks:
            cw = c.shape[1]
            a = jnp.maximum(c * bn1s[:, off:off + cw] + bn1b[:, off:off + cw], 0.0)
            h = h + mm(a, w1[off:off + cw, :])
            off += cw

        # BN2 + ReLU + 3x3 conv (pad 1) as a sum over 9 spatial-shift taps
        h = jnp.maximum(h * bn2s[...] + bn2b[...], 0.0)
        hb = h.astype(BF16)
        acc = jnp.zeros((n, g), F32)
        for k in range(9):
            t = jnp.dot(hb, w3[k], preferred_element_type=F32)     # (n, g)
            acc = acc + mm(s_ref[k], t)
        chunks.append(acc)                          # torch.cat([x, out], dim=1)
        return chunks

    def transition(chunks, pool_ref):
        ts, tb, tw = nxt(), nxt(), nxt()
        n = chunks[0].shape[0]
        cout = tw.shape[1]
        t = jnp.zeros((n, cout), F32)
        off = 0
        for c in chunks:
            cw = c.shape[1]
            a = jnp.maximum(c * ts[:, off:off + cw] + tb[:, off:off + cw], 0.0)
            t = t + mm(a, tw[off:off + cw, :])
            off += cw
        if pool_ref is not None:                    # 2x2 avg-pool as a constant matmul
            t = jnp.dot(pool_ref[...], t.astype(BF16), preferred_element_type=F32)
        return [t]

    for _ in range(depth):
        chunks = bottleneck(chunks, s8_ref)
    chunks = transition(chunks, avg_ref)            # trans1 (with avg-pool)
    for _ in range(depth):
        chunks = bottleneck(chunks, s4_ref)
    out = transition(chunks, None)[0]               # trans2: BN + ReLU + 1x1 conv
    out_ref[0] = out.astype(out_ref.dtype)


# ----------------------------------------------------------------------------
# Wrapper: im2col for the stride-2 stem conv (XLA glue) + single pallas_call
# ----------------------------------------------------------------------------
def _full_spec(a):
    return pl.BlockSpec(a.shape, lambda b, _nd=a.ndim: (0,) * _nd)


def _extract_conv0_patches(x_nhwc, k=7, stride=2, pad=3):
    B, H, W, C = x_nhwc.shape
    xp = jnp.pad(x_nhwc, ((0, 0), (pad, pad), (pad, pad), (0, 0)))
    OH = (H + 2 * pad - k) // stride + 1
    OW = (W + 2 * pad - k) // stride + 1
    cols = []
    for ky in range(k):
        for kx in range(k):
            cols.append(xp[:, ky:ky + stride * OH:stride, kx:kx + stride * OW:stride, :])
    patches = jnp.concatenate(cols, axis=-1)          # (B, OH, OW, k*k*C)
    return patches.reshape(B, OH * OW, k * k * C), OH, OW


@jax.jit
def smaller_deep_cnn300_forward(params, x_nchw):
    """x: [B, Cin, H, W] -> [B, C_out, H//8, W//8]  (use_256_input=True path)."""
    B, Cin, H, W = x_nchw.shape
    depth = len(params['block1'])

    x_nhwc = jnp.transpose(x_nchw, (0, 2, 3, 1))
    patches, OH, OW = _extract_conv0_patches(x_nhwc)
    patches = patches.astype(BF16)

    H1, W1 = OH, OW                 # after conv0
    H2, W2 = H1 // 2, W1 // 2       # after max-pool
    H3, W3 = H2 // 2, W2 // 2       # after trans1 avg-pool
    mp = jnp.asarray(_maxpool_select_mats(H1, W1), BF16)
    s8 = jnp.asarray(_shift_mats_3x3(H2, W2), BF16)
    avg = jnp.asarray(_avgpool_mat(H2, W2), BF16)
    s4 = jnp.asarray(_shift_mats_3x3(H3, W3), BF16)

    # weights flattened in the exact order the kernel consumes them
    wlist = [params['w0'], params['b0']]
    for blk_key, tr_key in (('block1', 'trans1'), ('block2', 'trans2')):
        for bl in params[blk_key]:
            wlist += [bl['bn1_s'], bl['bn1_b'], bl['w1'],
                      bl['bn2_s'], bl['bn2_b'], bl['w3']]
        tr = params[tr_key]
        wlist += [tr['bn_s'], tr['bn_b'], tr['w']]

    c_out = params['trans2']['w'].shape[1]
    n_out = H3 * W3

    out = pl.pallas_call(
        functools.partial(_fused_cnn_kernel, depth),
        grid=(B,),
        in_specs=[pl.BlockSpec((1, H1 * W1, patches.shape[-1]), lambda b: (b, 0, 0))]
                + [_full_spec(a) for a in (mp, s8, avg, s4)]
                + [_full_spec(a) for a in wlist],
        out_specs=pl.BlockSpec((1, n_out, c_out), lambda b: (b, 0, 0)),
        out_shape=jax.ShapeDtypeStruct((B, n_out, c_out), F32),
        compiler_params=pltpu.CompilerParams(
            dimension_semantics=("parallel",),
            vmem_limit_bytes=32 * 1024 * 1024),
    )(patches, mp, s8, avg, s4, *wlist)

    out = out.reshape(B, H3, W3, c_out)
    return jnp.transpose(out, (0, 3, 1, 2))          # back to NCHW like PyTorch


# ----------------------------------------------------------------------------
# Deterministic synthetic parameters (no checkpoint); BN folded to scale/shift
# ----------------------------------------------------------------------------
def init_params(seed, input_channel, num_in_features, growth_rate, depth):
    key = jax.random.PRNGKey(seed)
    keys = iter(jax.random.split(key, 1024))

    def conv_w(din, dout, kk=1):
        # PyTorch conv weight [dout, din, kh, kw] stored pre-reshaped for x @ W:
        # W[(ky*kk + kx)*din + ci, co] = torch_w[co, ci, ky, kx]
        fan_in = din * kk * kk
        return jax.random.normal(next(keys), (kk * kk * din, dout), F32) / math.sqrt(fan_in)

    def bn_fold(C):
        gamma = 1.0 + 0.1 * jax.random.normal(next(keys), (1, C), F32)
        beta = 0.1 * jax.random.normal(next(keys), (1, C), F32)
        mean = 0.1 * jax.random.normal(next(keys), (1, C), F32)
        var = jnp.abs(1.0 + 0.1 * jax.random.normal(next(keys), (1, C), F32))
        scale = gamma / jnp.sqrt(var + 1e-5)
        shift = beta - mean * scale
        return scale, shift

    F = num_in_features
    G = growth_rate
    params = {}

    w0 = conv_w(input_channel, F, kk=7)
    bn0_s, bn0_b = bn_fold(F)
    params['w0'] = (w0 * bn0_s).astype(BF16)          # fold BN0 into conv0 (no bias)
    params['b0'] = bn0_b

    def dense_block(c_in):
        layers, c = [], c_in
        for _ in range(depth):
            bn1_s, bn1_b = bn_fold(c)
            w1 = conv_w(c, 4 * G).astype(BF16)
            bn2_s, bn2_b = bn_fold(4 * G)
            w3 = conv_w(4 * G, G, kk=3).reshape(9, 4 * G, G).astype(BF16)
            layers.append(dict(bn1_s=bn1_s, bn1_b=bn1_b, w1=w1,
                               bn2_s=bn2_s, bn2_b=bn2_b, w3=w3))
            c += G
        return layers, c

    params['block1'], c1 = dense_block(F)
    s, b = bn_fold(c1)
    params['trans1'] = dict(bn_s=s, bn_b=b, w=conv_w(c1, c1 // 2).astype(BF16))

    params['block2'], c2 = dense_block(c1 // 2)
    s, b = bn_fold(c2)
    params['trans2'] = dict(bn_s=s, bn_b=b, w=conv_w(c2, c2 // 2).astype(BF16))
    return params


# ----------------------------------------------------------------------------
if __name__ == "__main__":
    # Small config consistent with the module (constructor args scaled down):
    #   input [B, Cin, 32, 32], num_in_features=16, growth_rate=8, depth=2,
    #   use_256_input=True  ->  output [B, 16, 4, 4].
    B, CIN, H, W = 2, 4, 32, 32
    NUM_IN_FEATURES, GROWTH, DEPTH = 16, 8, 2

    key = jax.random.PRNGKey(0)
    x = jax.random.normal(key, (B, CIN, H, W), jnp.float32)

    params = init_params(seed=0, input_channel=CIN, num_in_features=NUM_IN_FEATURES,
                         growth_rate=GROWTH, depth=DEPTH)

    out = smaller_deep_cnn300_forward(params, x)
    out = jax.block_until_ready(out)

    c1 = NUM_IN_FEATURES + DEPTH * GROWTH          # after block1
    c2 = c1 // 2 + DEPTH * GROWTH                  # after block2
    assert out.shape == (B, c2 // 2, H // 8, W // 8), out.shape
    assert bool(jnp.all(jnp.isfinite(out)))
    print("KERNEL_OK")
</pallas_src>

<mosaic_0001>
module attributes {stable_mosaic.version = 11 : i64} {
  func.func @_fused_cnn_kernel(%arg0: i32, %arg1: memref<1x256x196xbf16, #tpu.memory_space<vmem>>, %arg2: memref<4x64x256xbf16, #tpu.memory_space<vmem>>, %arg3: memref<9x64x64xbf16, #tpu.memory_space<vmem>>, %arg4: memref<16x64xbf16, #tpu.memory_space<vmem>>, %arg5: memref<9x16x16xbf16, #tpu.memory_space<vmem>>, %arg6: memref<196x16xbf16, #tpu.memory_space<vmem>>, %arg7: memref<1x16xf32, #tpu.memory_space<vmem>>, %arg8: memref<1x16xf32, #tpu.memory_space<vmem>>, %arg9: memref<1x16xf32, #tpu.memory_space<vmem>>, %arg10: memref<16x32xbf16, #tpu.memory_space<vmem>>, %arg11: memref<1x32xf32, #tpu.memory_space<vmem>>, %arg12: memref<1x32xf32, #tpu.memory_space<vmem>>, %arg13: memref<9x32x8xbf16, #tpu.memory_space<vmem>>, %arg14: memref<1x24xf32, #tpu.memory_space<vmem>>, %arg15: memref<1x24xf32, #tpu.memory_space<vmem>>, %arg16: memref<24x32xbf16, #tpu.memory_space<vmem>>, %arg17: memref<1x32xf32, #tpu.memory_space<vmem>>, %arg18: memref<1x32xf32, #tpu.memory_space<vmem>>, %arg19: memref<9x32x8xbf16, #tpu.memory_space<vmem>>, %arg20: memref<1x32xf32, #tpu.memory_space<vmem>>, %arg21: memref<1x32xf32, #tpu.memory_space<vmem>>, %arg22: memref<32x16xbf16, #tpu.memory_space<vmem>>, %arg23: memref<1x16xf32, #tpu.memory_space<vmem>>, %arg24: memref<1x16xf32, #tpu.memory_space<vmem>>, %arg25: memref<16x32xbf16, #tpu.memory_space<vmem>>, %arg26: memref<1x32xf32, #tpu.memory_space<vmem>>, %arg27: memref<1x32xf32, #tpu.memory_space<vmem>>, %arg28: memref<9x32x8xbf16, #tpu.memory_space<vmem>>, %arg29: memref<1x24xf32, #tpu.memory_space<vmem>>, %arg30: memref<1x24xf32, #tpu.memory_space<vmem>>, %arg31: memref<24x32xbf16, #tpu.memory_space<vmem>>, %arg32: memref<1x32xf32, #tpu.memory_space<vmem>>, %arg33: memref<1x32xf32, #tpu.memory_space<vmem>>, %arg34: memref<9x32x8xbf16, #tpu.memory_space<vmem>>, %arg35: memref<1x32xf32, #tpu.memory_space<vmem>>, %arg36: memref<1x32xf32, #tpu.memory_space<vmem>>, %arg37: memref<32x16xbf16, #tpu.memory_space<vmem>>, %arg38: memref<1x16x16xf32, #tpu.memory_space<vmem>>) attributes {dimension_semantics = [#tpu.dimension_semantics<parallel>], iteration_bounds = array<i64: 2>, scalar_prefetch = 0 : i64, scratch_operands = 0 : i64, tpu.core_type = #tpu.core_type<tc>, window_params = [{transform_indices = @transform_0, window_bounds = array<i64: 1, 256, 196>}, {pipeline_mode = #tpu.pipeline_mode<synchronous>, transform_indices = @transform_1, window_bounds = array<i64: 4, 64, 256>}, {pipeline_mode = #tpu.pipeline_mode<synchronous>, transform_indices = @transform_2, window_bounds = array<i64: 9, 64, 64>}, {pipeline_mode = #tpu.pipeline_mode<synchronous>, transform_indices = @transform_3, window_bounds = array<i64: 16, 64>}, {pipeline_mode = #tpu.pipeline_mode<synchronous>, transform_indices = @transform_4, window_bounds = array<i64: 9, 16, 16>}, {pipeline_mode = #tpu.pipeline_mode<synchronous>, transform_indices = @transform_5, window_bounds = array<i64: 196, 16>}, {pipeline_mode = #tpu.pipeline_mode<synchronous>, transform_indices = @transform_6, window_bounds = array<i64: 1, 16>}, {pipeline_mode = #tpu.pipeline_mode<synchronous>, transform_indices = @transform_7, window_bounds = array<i64: 1, 16>}, {pipeline_mode = #tpu.pipeline_mode<synchronous>, transform_indices = @transform_8, window_bounds = array<i64: 1, 16>}, {pipeline_mode = #tpu.pipeline_mode<synchronous>, transform_indices = @transform_9, window_bounds = array<i64: 16, 32>}, {pipeline_mode = #tpu.pipeline_mode<synchronous>, transform_indices = @transform_10, window_bounds = array<i64: 1, 32>}, {pipeline_mode = #tpu.pipeline_mode<synchronous>, transform_indices = @transform_11, window_bounds = array<i64: 1, 32>}, {pipeline_mode = #tpu.pipeline_mode<synchronous>, transform_indices = @transform_12, window_bounds = array<i64: 9, 32, 8>}, {pipeline_mode = #tpu.pipeline_mode<synchronous>, transform_indices = @transform_13, window_bounds = array<i64: 1, 24>}, {pipeline_mode = #tpu.pipeline_mode<synchronous>, transform_indices = @transform_14, window_bounds = array<i64: 1, 24>}, {pipeline_mode = #tpu.pipeline_mode<synchronous>, transform_indices = @transform_15, window_bounds = array<i64: 24, 32>}, {pipeline_mode = #tpu.pipeline_mode<synchronous>, transform_indices = @transform_16, window_bounds = array<i64: 1, 32>}, {pipeline_mode = #tpu.pipeline_mode<synchronous>, transform_indices = @transform_17, window_bounds = array<i64: 1, 32>}, {pipeline_mode = #tpu.pipeline_mode<synchronous>, transform_indices = @transform_18, window_bounds = array<i64: 9, 32, 8>}, {pipeline_mode = #tpu.pipeline_mode<synchronous>, transform_indices = @transform_19, window_bounds = array<i64: 1, 32>}, {pipeline_mode = #tpu.pipeline_mode<synchronous>, transform_indices = @transform_20, window_bounds = array<i64: 1, 32>}, {pipeline_mode = #tpu.pipeline_mode<synchronous>, transform_indices = @transform_21, window_bounds = array<i64: 32, 16>}, {pipeline_mode = #tpu.pipeline_mode<synchronous>, transform_indices = @transform_22, window_bounds = array<i64: 1, 16>}, {pipeline_mode = #tpu.pipeline_mode<synchronous>, transform_indices = @transform_23, window_bounds = array<i64: 1, 16>}, {pipeline_mode = #tpu.pipeline_mode<synchronous>, transform_indices = @transform_24, window_bounds = array<i64: 16, 32>}, {pipeline_mode = #tpu.pipeline_mode<synchronous>, transform_indices = @transform_25, window_bounds = array<i64: 1, 32>}, {pipeline_mode = #tpu.pipeline_mode<synchronous>, transform_indices = @transform_26, window_bounds = array<i64: 1, 32>}, {pipeline_mode = #tpu.pipeline_mode<synchronous>, transform_indices = @transform_27, window_bounds = array<i64: 9, 32, 8>}, {pipeline_mode = #tpu.pipeline_mode<synchronous>, transform_indices = @transform_28, window_bounds = array<i64: 1, 24>}, {pipeline_mode = #tpu.pipeline_mode<synchronous>, transform_indices = @transform_29, window_bounds = array<i64: 1, 24>}, {pipeline_mode = #tpu.pipeline_mode<synchronous>, transform_indices = @transform_30, window_bounds = array<i64: 24, 32>}, {pipeline_mode = #tpu.pipeline_mode<synchronous>, transform_indices = @transform_31, window_bounds = array<i64: 1, 32>}, {pipeline_mode = #tpu.pipeline_mode<synchronous>, transform_indices = @transform_32, window_bounds = array<i64: 1, 32>}, {pipeline_mode = #tpu.pipeline_mode<synchronous>, transform_indices = @transform_33, window_bounds = array<i64: 9, 32, 8>}, {pipeline_mode = #tpu.pipeline_mode<synchronous>, transform_indices = @transform_34, window_bounds = array<i64: 1, 32>}, {pipeline_mode = #tpu.pipeline_mode<synchronous>, transform_indices = @transform_35, window_bounds = array<i64: 1, 32>}, {pipeline_mode = #tpu.pipeline_mode<synchronous>, transform_indices = @transform_36, window_bounds = array<i64: 32, 16>}, {transform_indices = @transform_37, window_bounds = array<i64: 1, 16, 16>}]} {
    %c0 = arith.constant 0 : index
    %c0_0 = arith.constant 0 : index
    %c0_1 = arith.constant 0 : index
    %0 = vector.load %arg1[%c0, %c0_0, %c0_1] : memref<1x256x196xbf16, #tpu.memory_space<vmem>>, vector<1x256x196xbf16>
    %1 = vector.shape_cast %0 : vector<1x256x196xbf16> to vector<256x196xbf16>
    %c0_2 = arith.constant 0 : index
    %c0_3 = arith.constant 0 : index
    %2 = vector.load %arg6[%c0_2, %c0_3] : memref<196x16xbf16, #tpu.memory_space<vmem>>, vector<196x16xbf16>
    %cst = arith.constant dense<0.000000e+00> : vector<256x16xf32>
    %3 = tpu.matmul %1, %2, %cst {dimension_numbers = #tpu.dot_dimension_numbers<[1], [0], [0], [1], [0, 0, 1, 1], [], []>} : vector<256x196xbf16>, vector<196x16xbf16>, vector<256x16xf32> -> vector<256x16xf32>
    %c0_4 = arith.constant 0 : index
    %c0_5 = arith.constant 0 : index
    %4 = vector.load %arg7[%c0_4, %c0_5] : memref<1x16xf32, #tpu.memory_space<vmem>>, vector<1x16xf32>
    %5 = vector.broadcast %4 : vector<1x16xf32> to vector<256x16xf32>
    %6 = arith.addf %3, %5 : vector<256x16xf32>
    %cst_6 = arith.constant 0.000000e+00 : f32
    %7 = vector.broadcast %cst_6 : f32 to vector<256x16xf32>
    %8 = arith.maximumf %6, %7 : vector<256x16xf32>
    %9 = arith.truncf %8 : vector<256x16xf32> to vector<256x16xbf16>
    %c0_7 = arith.constant 0 : index
    %c0_8 = arith.constant 0 : index
    %c0_9 = arith.constant 0 : index
    %10 = vector.load %arg2[%c0_7, %c0_8, %c0_9] : memref<4x64x256xbf16, #tpu.memory_space<vmem>>, vector<1x64x256xbf16>
    %11 = vector.shape_cast %10 : vector<1x64x256xbf16> to vector<64x256xbf16>
    %cst_10 = arith.constant dense<0.000000e+00> : vector<64x16xf32>
    %12 = tpu.matmul %11, %9, %cst_10 {dimension_numbers = #tpu.dot_dimension_numbers<[1], [0], [0], [1], [0, 0, 1, 1], [], []>} : vector<64x256xbf16>, vector<256x16xbf16>, vector<64x16xf32> -> vector<64x16xf32>
    %c1 = arith.constant 1 : index
    %c0_11 = arith.constant 0 : index
    %c0_12 = arith.constant 0 : index
    %13 = vector.load %arg2[%c1, %c0_11, %c0_12] : memref<4x64x256xbf16, #tpu.memory_space<vmem>>, vector<1x64x256xbf16>
    %14 = vector.shape_cast %13 : vector<1x64x256xbf16> to vector<64x256xbf16>
    %cst_13 = arith.constant dense<0.000000e+00> : vector<64x16xf32>
    %15 = tpu.matmul %14, %9, %cst_13 {dimension_numbers = #tpu.dot_dimension_numbers<[1], [0], [0], [1], [0, 0, 1, 1], [], []>} : vector<64x256xbf16>, vector<256x16xbf16>, vector<64x16xf32> -> vector<64x16xf32>
    %16 = arith.maximumf %12, %15 : vector<64x16xf32>
    %c2 = arith.constant 2 : index
    %c0_14 = arith.constant 0 : index
    %c0_15 = arith.constant 0 : index
    %17 = vector.load %arg2[%c2, %c0_14, %c0_15] : memref<4x64x256xbf16, #tpu.memory_space<vmem>>, vector<1x64x256xbf16>
    %18 = vector.shape_cast %17 : vector<1x64x256xbf16> to vector<64x256xbf16>
    %cst_16 = arith.constant dense<0.000000e+00> : vector<64x16xf32>
    %19 = tpu.matmul %18, %9, %cst_16 {dimension_numbers = #tpu.dot_dimension_numbers<[1], [0], [0], [1], [0, 0, 1, 1], [], []>} : vector<64x256xbf16>, vector<256x16xbf16>, vector<64x16xf32> -> vector<64x16xf32>
    %20 = arith.maximumf %16, %19 : vector<64x16xf32>
    %c3 = arith.constant 3 : index
    %c0_17 = arith.constant 0 : index
    %c0_18 = arith.constant 0 : index
    %21 = vector.load %arg2[%c3, %c0_17, %c0_18] : memref<4x64x256xbf16, #tpu.memory_space<vmem>>, vector<1x64x256xbf16>
    %22 = vector.shape_cast %21 : vector<1x64x256xbf16> to vector<64x256xbf16>
    %cst_19 = arith.constant dense<0.000000e+00> : vector<64x16xf32>
    %23 = tpu.matmul %22, %9, %cst_19 {dimension_numbers = #tpu.dot_dimension_numbers<[1], [0], [0], [1], [0, 0, 1, 1], [], []>} : vector<64x256xbf16>, vector<256x16xbf16>, vector<64x16xf32> -> vector<64x16xf32>
    %24 = arith.maximumf %20, %23 : vector<64x16xf32>
    %cst_20 = arith.constant 0.000000e+00 : f32
    %25 = vector.broadcast %cst_20 : f32 to vector<64x32xf32>
    %c0_21 = arith.constant 0 : index
    %c0_22 = arith.constant 0 : index
    %26 = vector.load %arg8[%c0_21, %c0_22] : memref<1x16xf32, #tpu.memory_space<vmem>>, vector<1x16xf32>
    %27 = vector.broadcast %26 : vector<1x16xf32> to vector<64x16xf32>
    %28 = arith.mulf %24, %27 : vector<64x16xf32>
    %c0_23 = arith.constant 0 : index
    %c0_24 = arith.constant 0 : index
    %29 = vector.load %arg9[%c0_23, %c0_24] : memref<1x16xf32, #tpu.memory_space<vmem>>, vector<1x16xf32>
    %30 = vector.broadcast %29 : vector<1x16xf32> to vector<64x16xf32>
    %31 = arith.addf %28, %30 : vector<64x16xf32>
    %cst_25 = arith.constant 0.000000e+00 : f32
    %32 = vector.broadcast %cst_25 : f32 to vector<64x16xf32>
    %33 = arith.maximumf %31, %32 : vector<64x16xf32>
    %c0_26 = arith.constant 0 : index
    %c0_27 = arith.constant 0 : index
    %34 = vector.load %arg10[%c0_26, %c0_27] : memref<16x32xbf16, #tpu.memory_space<vmem>>, vector<16x32xbf16>
    %35 = arith.truncf %33 : vector<64x16xf32> to vector<64x16xbf16>
    %cst_28 = arith.constant dense<0.000000e+00> : vector<64x32xf32>
    %36 = tpu.matmul %35, %34, %cst_28 {dimension_numbers = #tpu.dot_dimension_numbers<[1], [0], [0], [1], [0, 0, 1, 1], [], []>} : vector<64x16xbf16>, vector<16x32xbf16>, vector<64x32xf32> -> vector<64x32xf32>
    %37 = arith.addf %25, %36 : vector<64x32xf32>
    %c0_29 = arith.constant 0 : index
    %c0_30 = arith.constant 0 : index
    %38 = vector.load %arg11[%c0_29, %c0_30] : memref<1x32xf32, #tpu.memory_space<vmem>>, vector<1x32xf32>
    %39 = vector.broadcast %38 : vector<1x32xf32> to vector<64x32xf32>
    %40 = arith.mulf %37, %39 : vector<64x32xf32>
    %c0_31 = arith.constant 0 : index
    %c0_32 = arith.constant 0 : index
    %41 = vector.load %arg12[%c0_31, %c0_32] : memref<1x32xf32, #tpu.memory_space<vmem>>, vector<1x32xf32>
    %42 = vector.broadcast %41 : vector<1x32xf32> to vector<64x32xf32>
    %43 = arith.addf %40, %42 : vector<64x32xf32>
    %cst_33 = arith.constant 0.000000e+00 : f32
    %44 = vector.broadcast %cst_33 : f32 to vector<64x32xf32>
    %45 = arith.maximumf %43, %44 : vector<64x32xf32>
    %46 = arith.truncf %45 : vector<64x32xf32> to vector<64x32xbf16>
    %cst_34 = arith.constant 0.000000e+00 : f32
    %47 = vector.broadcast %cst_34 : f32 to vector<64x8xf32>
    %c0_35 = arith.constant 0 : index
    %c0_36 = arith.constant 0 : index
    %c0_37 = arith.constant 0 : index
    %48 = vector.load %arg13[%c0_35, %c0_36, %c0_37] : memref<9x32x8xbf16, #tpu.memory_space<vmem>>, vector<1x32x8xbf16>
    %49 = vector.shape_cast %48 : vector<1x32x8xbf16> to vector<32x8xbf16>
    %cst_38 = arith.constant dense<0.000000e+00> : vector<64x8xf32>
    %50 = tpu.matmul %46, %49, %cst_38 {dimension_numbers = #tpu.dot_dimension_numbers<[1], [0], [0], [1], [0, 0, 1, 1], [], []>} : vector<64x32xbf16>, vector<32x8xbf16>, vector<64x8xf32> -> vector<64x8xf32>
    %c0_39 = arith.constant 0 : index
    %c0_40 = arith.constant 0 : index
    %c0_41 = arith.constant 0 : index
    %51 = vector.load %arg3[%c0_39, %c0_40, %c0_41] : memref<9x64x64xbf16, #tpu.memory_space<vmem>>, vector<1x64x64xbf16>
    %52 = vector.shape_cast %51 : vector<1x64x64xbf16> to vector<64x64xbf16>
    %53 = arith.truncf %50 : vector<64x8xf32> to vector<64x8xbf16>
    %cst_42 = arith.constant dense<0.000000e+00> : vector<64x8xf32>
    %54 = tpu.matmul %52, %53, %cst_42 {dimension_numbers = #tpu.dot_dimension_numbers<[1], [0], [0], [1], [0, 0, 1, 1], [], []>} : vector<64x64xbf16>, vector<64x8xbf16>, vector<64x8xf32> -> vector<64x8xf32>
    %55 = arith.addf %47, %54 : vector<64x8xf32>
    %c1_43 = arith.constant 1 : index
    %c0_44 = arith.constant 0 : index
    %c0_45 = arith.constant 0 : index
    %56 = vector.load %arg13[%c1_43, %c0_44, %c0_45] : memref<9x32x8xbf16, #tpu.memory_space<vmem>>, vector<1x32x8xbf16>
    %57 = vector.shape_cast %56 : vector<1x32x8xbf16> to vector<32x8xbf16>
    %cst_46 = arith.constant dense<0.000000e+00> : vector<64x8xf32>
    %58 = tpu.matmul %46, %57, %cst_46 {dimension_numbers = #tpu.dot_dimension_numbers<[1], [0], [0], [1], [0, 0, 1, 1], [], []>} : vector<64x32xbf16>, vector<32x8xbf16>, vector<64x8xf32> -> vector<64x8xf32>
    %c1_47 = arith.constant 1 : index
    %c0_48 = arith.constant 0 : index
    %c0_49 = arith.constant 0 : index
    %59 = vector.load %arg3[%c1_47, %c0_48, %c0_49] : memref<9x64x64xbf16, #tpu.memory_space<vmem>>, vector<1x64x64xbf16>
    %60 = vector.shape_cast %59 : vector<1x64x64xbf16> to vector<64x64xbf16>
    %61 = arith.truncf %58 : vector<64x8xf32> to vector<64x8xbf16>
    %cst_50 = arith.constant dense<0.000000e+00> : vector<64x8xf32>
    %62 = tpu.matmul %60, %61, %cst_50 {dimension_numbers = #tpu.dot_dimension_numbers<[1], [0], [0], [1], [0, 0, 1, 1], [], []>} : vector<64x64xbf16>, vector<64x8xbf16>, vector<64x8xf32> -> vector<64x8xf32>
    %63 = arith.addf %55, %62 : vector<64x8xf32>
    %c2_51 = arith.constant 2 : index
    %c0_52 = arith.constant 0 : index
    %c0_53 = arith.constant 0 : index
    %64 = vector.load %arg13[%c2_51, %c0_52, %c0_53] : memref<9x32x8xbf16, #tpu.memory_space<vmem>>, vector<1x32x8xbf16>
    %65 = vector.shape_cast %64 : vector<1x32x8xbf16> to vector<32x8xbf16>
    %cst_54 = arith.constant dense<0.000000e+00> : vector<64x8xf32>
    %66 = tpu.matmul %46, %65, %cst_54 {dimension_numbers = #tpu.dot_dimension_numbers<[1], [0], [0], [1], [0, 0, 1, 1], [], []>} : vector<64x32xbf16>, vector<32x8xbf16>, vector<64x8xf32> -> vector<64x8xf32>
    %c2_55 = arith.constant 2 : index
    %c0_56 = arith.constant 0 : index
    %c0_57 = arith.constant 0 : index
    %67 = vector.load %arg3[%c2_55, %c0_56, %c0_57] : memref<9x64x64xbf16, #tpu.memory_space<vmem>>, vector<1x64x64xbf16>
    %68 = vector.shape_cast %67 : vector<1x64x64xbf16> to vector<64x64xbf16>
    %69 = arith.truncf %66 : vector<64x8xf32> to vector<64x8xbf16>
    %cst_58 = arith.constant dense<0.000000e+00> : vector<64x8xf32>
    %70 = tpu.matmul %68, %69, %cst_58 {dimension_numbers = #tpu.dot_dimension_numbers<[1], [0], [0], [1], [0, 0, 1, 1], [], []>} : vector<64x64xbf16>, vector<64x8xbf16>, vector<64x8xf32> -> vector<64x8xf32>
    %71 = arith.addf %63, %70 : vector<64x8xf32>
    %c3_59 = arith.constant 3 : index
    %c0_60 = arith.constant 0 : index
    %c0_61 = arith.constant 0 : index
    %72 = vector.load %arg13[%c3_59, %c0_60, %c0_61] : memref<9x32x8xbf16, #tpu.memory_space<vmem>>, vector<1x32x8xbf16>
    %73 = vector.shape_cast %72 : vector<1x32x8xbf16> to vector<32x8xbf16>
    %cst_62 = arith.constant dense<0.000000e+00> : vector<64x8xf32>
    %74 = tpu.matmul %46, %73, %cst_62 {dimension_numbers = #tpu.dot_dimension_numbers<[1], [0], [0], [1], [0, 0, 1, 1], [], []>} : vector<64x32xbf16>, vector<32x8xbf16>, vector<64x8xf32> -> vector<64x8xf32>
    %c3_63 = arith.constant 3 : index
    %c0_64 = arith.constant 0 : index
    %c0_65 = arith.constant 0 : index
    %75 = vector.load %arg3[%c3_63, %c0_64, %c0_65] : memref<9x64x64xbf16, #tpu.memory_space<vmem>>, vector<1x64x64xbf16>
    %76 = vector.shape_cast %75 : vector<1x64x64xbf16> to vector<64x64xbf16>
    %77 = arith.truncf %74 : vector<64x8xf32> to vector<64x8xbf16>
    %cst_66 = arith.constant dense<0.000000e+00> : vector<64x8xf32>
    %78 = tpu.matmul %76, %77, %cst_66 {dimension_numbers = #tpu.dot_dimension_numbers<[1], [0], [0], [1], [0, 0, 1, 1], [], []>} : vector<64x64xbf16>, vector<64x8xbf16>, vector<64x8xf32> -> vector<64x8xf32>
    %79 = arith.addf %71, %78 : vector<64x8xf32>
    %c4 = arith.constant 4 : index
    %c0_67 = arith.constant 0 : index
    %c0_68 = arith.constant 0 : index
    %80 = vector.load %arg13[%c4, %c0_67, %c0_68] : memref<9x32x8xbf16, #tpu.memory_space<vmem>>, vector<1x32x8xbf16>
    %81 = vector.shape_cast %80 : vector<1x32x8xbf16> to vector<32x8xbf16>
    %cst_69 = arith.constant dense<0.000000e+00> : vector<64x8xf32>
    %82 = tpu.matmul %46, %81, %cst_69 {dimension_numbers = #tpu.dot_dimension_numbers<[1], [0], [0], [1], [0, 0, 1, 1], [], []>} : vector<64x32xbf16>, vector<32x8xbf16>, vector<64x8xf32> -> vector<64x8xf32>
    %c4_70 = arith.constant 4 : index
    %c0_71 = arith.constant 0 : index
    %c0_72 = arith.constant 0 : index
    %83 = vector.load %arg3[%c4_70, %c0_71, %c0_72] : memref<9x64x64xbf16, #tpu.memory_space<vmem>>, vector<1x64x64xbf16>
    %84 = vector.shape_cast %83 : vector<1x64x64xbf16> to vector<64x64xbf16>
    %85 = arith.truncf %82 : vector<64x8xf32> to vector<64x8xbf16>
    %cst_73 = arith.constant dense<0.000000e+00> : vector<64x8xf32>
    %86 = tpu.matmul %84, %85, %cst_73 {dimension_numbers = #tpu.dot_dimension_numbers<[1], [0], [0], [1], [0, 0, 1, 1], [], []>} : vector<64x64xbf16>, vector<64x8xbf16>, vector<64x8xf32> -> vector<64x8xf32>
    %87 = arith.addf %79, %86 : vector<64x8xf32>
    %c5 = arith.constant 5 : index
    %c0_74 = arith.constant 0 : index
    %c0_75 = arith.constant 0 : index
    %88 = vector.load %arg13[%c5, %c0_74, %c0_75] : memref<9x32x8xbf16, #tpu.memory_space<vmem>>, vector<1x32x8xbf16>
    %89 = vector.shape_cast %88 : vector<1x32x8xbf16> to vector<32x8xbf16>
    %cst_76 = arith.constant dense<0.000000e+00> : vector<64x8xf32>
    %90 = tpu.matmul %46, %89, %cst_76 {dimension_numbers = #tpu.dot_dimension_numbers<[1], [0], [0], [1], [0, 0, 1, 1], [], []>} : vector<64x32xbf16>, vector<32x8xbf16>, vector<64x8xf32> -> vector<64x8xf32>
    %c5_77 = arith.constant 5 : index
    %c0_78 = arith.constant 0 : index
    %c0_79 = arith.constant 0 : index
    %91 = vector.load %arg3[%c5_77, %c0_78, %c0_79] : memref<9x64x64xbf16, #tpu.memory_space<vmem>>, vector<1x64x64xbf16>
    %92 = vector.shape_cast %91 : vector<1x64x64xbf16> to vector<64x64xbf16>
    %93 = arith.truncf %90 : vector<64x8xf32> to vector<64x8xbf16>
    %cst_80 = arith.constant dense<0.000000e+00> : vector<64x8xf32>
    %94 = tpu.matmul %92, %93, %cst_80 {dimension_numbers = #tpu.dot_dimension_numbers<[1], [0], [0], [1], [0, 0, 1, 1], [], []>} : vector<64x64xbf16>, vector<64x8xbf16>, vector<64x8xf32> -> vector<64x8xf32>
    %95 = arith.addf %87, %94 : vector<64x8xf32>
    %c6 = arith.constant 6 : index
    %c0_81 = arith.constant 0 : index
    %c0_82 = arith.constant 0 : index
    %96 = vector.load %arg13[%c6, %c0_81, %c0_82] : memref<9x32x8xbf16, #tpu.memory_space<vmem>>, vector<1x32x8xbf16>
    %97 = vector.shape_cast %96 : vector<1x32x8xbf16> to vector<32x8xbf16>
    %cst_83 = arith.constant dense<0.000000e+00> : vector<64x8xf32>
    %98 = tpu.matmul %46, %97, %cst_83 {dimension_numbers = #tpu.dot_dimension_numbers<[1], [0], [0], [1], [0, 0, 1, 1], [], []>} : vector<64x32xbf16>, vector<32x8xbf16>, vector<64x8xf32> -> vector<64x8xf32>
    %c6_84 = arith.constant 6 : index
    %c0_85 = arith.constant 0 : index
    %c0_86 = arith.constant 0 : index
    %99 = vector.load %arg3[%c6_84, %c0_85, %c0_86] : memref<9x64x64xbf16, #tpu.memory_space<vmem>>, vector<1x64x64xbf16>
    %100 = vector.shape_cast %99 : vector<1x64x64xbf16> to vector<64x64xbf16>
    %101 = arith.truncf %98 : vector<64x8xf32> to vector<64x8xbf16>
    %cst_87 = arith.constant dense<0.000000e+00> : vector<64x8xf32>
    %102 = tpu.matmul %100, %101, %cst_87 {dimension_numbers = #tpu.dot_dimension_numbers<[1], [0], [0], [1], [0, 0, 1, 1], [], []>} : vector<64x64xbf16>, vector<64x8xbf16>, vector<64x8xf32> -> vector<64x8xf32>
    %103 = arith.addf %95, %102 : vector<64x8xf32>
    %c7 = arith.constant 7 : index
    %c0_88 = arith.constant 0 : index
    %c0_89 = arith.constant 0 : index
    %104 = vector.load %arg13[%c7, %c0_88, %c0_89] : memref<9x32x8xbf16, #tpu.memory_space<vmem>>, vector<1x32x8xbf16>
    %105 = vector.shape_cast %104 : vector<1x32x8xbf16> to vector<32x8xbf16>
    %cst_90 = arith.constant dense<0.000000e+00> : vector<64x8xf32>
    %106 = tpu.matmul %46, %105, %cst_90 {dimension_numbers = #tpu.dot_dimension_numbers<[1], [0], [0], [1], [0, 0, 1, 1], [], []>} : vector<64x32xbf16>, vector<32x8xbf16>, vector<64x8xf32> -> vector<64x8xf32>
    %c7_91 = arith.constant 7 : index
    %c0_92 = arith.constant 0 : index
    %c0_93 = arith.constant 0 : index
    %107 = vector.load %arg3[%c7_91, %c0_92, %c0_93] : memref<9x64x64xbf16, #tpu.memory_space<vmem>>, vector<1x64x64xbf16>
    %108 = vector.shape_cast %107 : vector<1x64x64xbf16> to vector<64x64xbf16>
    %109 = arith.truncf %106 : vector<64x8xf32> to vector<64x8xbf16>
    %cst_94 = arith.constant dense<0.000000e+00> : vector<64x8xf32>
    %110 = tpu.matmul %108, %109, %cst_94 {dimension_numbers = #tpu.dot_dimension_numbers<[1], [0], [0], [1], [0, 0, 1, 1], [], []>} : vector<64x64xbf16>, vector<64x8xbf16>, vector<64x8xf32> -> vector<64x8xf32>
    %111 = arith.addf %103, %110 : vector<64x8xf32>
    %c8 = arith.constant 8 : index
    %c0_95 = arith.constant 0 : index
    %c0_96 = arith.constant 0 : index
    %112 = vector.load %arg13[%c8, %c0_95, %c0_96] : memref<9x32x8xbf16, #tpu.memory_space<vmem>>, vector<1x32x8xbf16>
    %113 = vector.shape_cast %112 : vector<1x32x8xbf16> to vector<32x8xbf16>
    %cst_97 = arith.constant dense<0.000000e+00> : vector<64x8xf32>
    %114 = tpu.matmul %46, %113, %cst_97 {dimension_numbers = #tpu.dot_dimension_numbers<[1], [0], [0], [1], [0, 0, 1, 1], [], []>} : vector<64x32xbf16>, vector<32x8xbf16>, vector<64x8xf32> -> vector<64x8xf32>
    %c8_98 = arith.constant 8 : index
    %c0_99 = arith.constant 0 : index
    %c0_100 = arith.constant 0 : index
    %115 = vector.load %arg3[%c8_98, %c0_99, %c0_100] : memref<9x64x64xbf16, #tpu.memory_space<vmem>>, vector<1x64x64xbf16>
    %116 = vector.shape_cast %115 : vector<1x64x64xbf16> to vector<64x64xbf16>
    %117 = arith.truncf %114 : vector<64x8xf32> to vector<64x8xbf16>
    %cst_101 = arith.constant dense<0.000000e+00> : vector<64x8xf32>
    %118 = tpu.matmul %116, %117, %cst_101 {dimension_numbers = #tpu.dot_dimension_numbers<[1], [0], [0], [1], [0, 0, 1, 1], [], []>} : vector<64x64xbf16>, vector<64x8xbf16>, vector<64x8xf32> -> vector<64x8xf32>
    %119 = arith.addf %111, %118 : vector<64x8xf32>
    %cst_102 = arith.constant 0.000000e+00 : f32
    %120 = vector.broadcast %cst_102 : f32 to vector<64x32xf32>
    %c0_103 = arith.constant 0 : index
    %c0_104 = arith.constant 0 : index
    %121 = vector.load %arg14[%c0_103, %c0_104] : memref<1x24xf32, #tpu.memory_space<vmem>>, vector<1x16xf32>
    %122 = vector.broadcast %121 : vector<1x16xf32> to vector<64x16xf32>
    %123 = arith.mulf %24, %122 : vector<64x16xf32>
    %c0_105 = arith.constant 0 : index
    %c0_106 = arith.constant 0 : index
    %124 = vector.load %arg15[%c0_105, %c0_106] : memref<1x24xf32, #tpu.memory_space<vmem>>, vector<1x16xf32>
    %125 = vector.broadcast %124 : vector<1x16xf32> to vector<64x16xf32>
    %126 = arith.addf %123, %125 : vector<64x16xf32>
    %cst_107 = arith.constant 0.000000e+00 : f32
    %127 = vector.broadcast %cst_107 : f32 to vector<64x16xf32>
    %128 = arith.maximumf %126, %127 : vector<64x16xf32>
    %c0_108 = arith.constant 0 : index
    %c0_109 = arith.constant 0 : index
    %129 = vector.load %arg16[%c0_108, %c0_109] : memref<24x32xbf16, #tpu.memory_space<vmem>>, vector<16x32xbf16>
    %130 = arith.truncf %128 : vector<64x16xf32> to vector<64x16xbf16>
    %cst_110 = arith.constant dense<0.000000e+00> : vector<64x32xf32>
    %131 = tpu.matmul %130, %129, %cst_110 {dimension_numbers = #tpu.dot_dimension_numbers<[1], [0], [0], [1], [0, 0, 1, 1], [], []>} : vector<64x16xbf16>, vector<16x32xbf16>, vector<64x32xf32> -> vector<64x32xf32>
    %132 = arith.addf %120, %131 : vector<64x32xf32>
    %c0_111 = arith.constant 0 : index
    %c16 = arith.constant 16 : index
    %133 = vector.load %arg14[%c0_111, %c16] : memref<1x24xf32, #tpu.memory_space<vmem>>, vector<1x8xf32>
    %134 = vector.broadcast %133 : vector<1x8xf32> to vector<64x8xf32>
    %135 = arith.mulf %119, %134 : vector<64x8xf32>
    %c0_112 = arith.constant 0 : index
    %c16_113 = arith.constant 16 : index
    %136 = vector.load %arg15[%c0_112, %c16_113] : memref<1x24xf32, #tpu.memory_space<vmem>>, vector<1x8xf32>
    %137 = vector.broadcast %136 : vector<1x8xf32> to vector<64x8xf32>
    %138 = arith.addf %135, %137 : vector<64x8xf32>
    %cst_114 = arith.constant 0.000000e+00 : f32
    %139 = vector.broadcast %cst_114 : f32 to vector<64x8xf32>
    %140 = arith.maximumf %138, %139 : vector<64x8xf32>
    %c16_115 = arith.constant 16 : index
    %c0_116 = arith.constant 0 : index
    %141 = vector.load %arg16[%c16_115, %c0_116] : memref<24x32xbf16, #tpu.memory_space<vmem>>, vector<8x32xbf16>
    %142 = arith.truncf %140 : vector<64x8xf32> to vector<64x8xbf16>
    %cst_117 = arith.constant dense<0.000000e+00> : vector<64x32xf32>
    %143 = tpu.matmul %142, %141, %cst_117 {dimension_numbers = #tpu.dot_dimension_numbers<[1], [0], [0], [1], [0, 0, 1, 1], [], []>} : vector<64x8xbf16>, vector<8x32xbf16>, vector<64x32xf32> -> vector<64x32xf32>
    %144 = arith.addf %132, %143 : vector<64x32xf32>
    %c0_118 = arith.constant 0 : index
    %c0_119 = arith.constant 0 : index
    %145 = vector.load %arg17[%c0_118, %c0_119] : memref<1x32xf32, #tpu.memory_space<vmem>>, vector<1x32xf32>
    %146 = vector.broadcast %145 : vector<1x32xf32> to vector<64x32xf32>
    %147 = arith.mulf %144, %146 : vector<64x32xf32>
    %c0_120 = arith.constant 0 : index
    %c0_121 = arith.constant 0 : index
    %148 = vector.load %arg18[%c0_120, %c0_121] : memref<1x32xf32, #tpu.memory_space<vmem>>, vector<1x32xf32>
    %149 = vector.broadcast %148 : vector<1x32xf32> to vector<64x32xf32>
    %150 = arith.addf %147, %149 : vector<64x32xf32>
    %cst_122 = arith.constant 0.000000e+00 : f32
    %151 = vector.broadcast %cst_122 : f32 to vector<64x32xf32>
    %152 = arith.maximumf %150, %151 : vector<64x32xf32>
    %153 = arith.truncf %152 : vector<64x32xf32> to vector<64x32xbf16>
    %cst_123 = arith.constant 0.000000e+00 : f32
    %154 = vector.broadcast %cst_123 : f32 to vector<64x8xf32>
    %c0_124 = arith.constant 0 : index
    %c0_125 = arith.constant 0 : index
    %c0_126 = arith.constant 0 : index
    %155 = vector.load %arg19[%c0_124, %c0_125, %c0_126] : memref<9x32x8xbf16, #tpu.memory_space<vmem>>, vector<1x32x8xbf16>
    %156 = vector.shape_cast %155 : vector<1x32x8xbf16> to vector<32x8xbf16>
    %cst_127 = arith.constant dense<0.000000e+00> : vector<64x8xf32>
    %157 = tpu.matmul %153, %156, %cst_127 {dimension_numbers = #tpu.dot_dimension_numbers<[1], [0], [0], [1], [0, 0, 1, 1], [], []>} : vector<64x32xbf16>, vector<32x8xbf16>, vector<64x8xf32> -> vector<64x8xf32>
    %c0_128 = arith.constant 0 : index
    %c0_129 = arith.constant 0 : index
    %c0_130 = arith.constant 0 : index
    %158 = vector.load %arg3[%c0_128, %c0_129, %c0_130] : memref<9x64x64xbf16, #tpu.memory_space<vmem>>, vector<1x64x64xbf16>
    %159 = vector.shape_cast %158 : vector<1x64x64xbf16> to vector<64x64xbf16>
    %160 = arith.truncf %157 : vector<64x8xf32> to vector<64x8xbf16>
    %cst_131 = arith.constant dense<0.000000e+00> : vector<64x8xf32>
    %161 = tpu.matmul %159, %160, %cst_131 {dimension_numbers = #tpu.dot_dimension_numbers<[1], [0], [0], [1], [0, 0, 1, 1], [], []>} : vector<64x64xbf16>, vector<64x8xbf16>, vector<64x8xf32> -> vector<64x8xf32>
    %162 = arith.addf %154, %161 : vector<64x8xf32>
    %c1_132 = arith.constant 1 : index
    %c0_133 = arith.constant 0 : index
    %c0_134 = arith.constant 0 : index
    %163 = vector.load %arg19[%c1_132, %c0_133, %c0_134] : memref<9x32x8xbf16, #tpu.memory_space<vmem>>, vector<1x32x8xbf16>
    %164 = vector.shape_cast %163 : vector<1x32x8xbf16> to vector<32x8xbf16>
    %cst_135 = arith.constant dense<0.000000e+00> : vector<64x8xf32>
    %165 = tpu.matmul %153, %164, %cst_135 {dimension_numbers = #tpu.dot_dimension_numbers<[1], [0], [0], [1], [0, 0, 1, 1], [], []>} : vector<64x32xbf16>, vector<32x8xbf16>, vector<64x8xf32> -> vector<64x8xf32>
    %c1_136 = arith.constant 1 : index
    %c0_137 = arith.constant 0 : index
    %c0_138 = arith.constant 0 : index
    %166 = vector.load %arg3[%c1_136, %c0_137, %c0_138] : memref<9x64x64xbf16, #tpu.memory_space<vmem>>, vector<1x64x64xbf16>
    %167 = vector.shape_cast %166 : vector<1x64x64xbf16> to vector<64x64xbf16>
    %168 = arith.truncf %165 : vector<64x8xf32> to vector<64x8xbf16>
    %cst_139 = arith.constant dense<0.000000e+00> : vector<64x8xf32>
    %169 = tpu.matmul %167, %168, %cst_139 {dimension_numbers = #tpu.dot_dimension_numbers<[1], [0], [0], [1], [0, 0, 1, 1], [], []>} : vector<64x64xbf16>, vector<64x8xbf16>, vector<64x8xf32> -> vector<64x8xf32>
    %170 = arith.addf %162, %169 : vector<64x8xf32>
    %c2_140 = arith.constant 2 : index
    %c0_141 = arith.constant 0 : index
    %c0_142 = arith.constant 0 : index
    %171 = vector.load %arg19[%c2_140, %c0_141, %c0_142] : memref<9x32x8xbf16, #tpu.memory_space<vmem>>, vector<1x32x8xbf16>
    %172 = vector.shape_cast %171 : vector<1x32x8xbf16> to vector<32x8xbf16>
    %cst_143 = arith.constant dense<0.000000e+00> : vector<64x8xf32>
    %173 = tpu.matmul %153, %172, %cst_143 {dimension_numbers = #tpu.dot_dimension_numbers<[1], [0], [0], [1], [0, 0, 1, 1], [], []>} : vector<64x32xbf16>, vector<32x8xbf16>, vector<64x8xf32> -> vector<64x8xf32>
    %c2_144 = arith.constant 2 : index
    %c0_145 = arith.constant 0 : index
    %c0_146 = arith.constant 0 : index
    %174 = vector.load %arg3[%c2_144, %c0_145, %c0_146] : memref<9x64x64xbf16, #tpu.memory_space<vmem>>, vector<1x64x64xbf16>
    %175 = vector.shape_cast %174 : vector<1x64x64xbf16> to vector<64x64xbf16>
    %176 = arith.truncf %173 : vector<64x8xf32> to vector<64x8xbf16>
    %cst_147 = arith.constant dense<0.000000e+00> : vector<64x8xf32>
    %177 = tpu.matmul %175, %176, %cst_147 {dimension_numbers = #tpu.dot_dimension_numbers<[1], [0], [0], [1], [0, 0, 1, 1], [], []>} : vector<64x64xbf16>, vector<64x8xbf16>, vector<64x8xf32> -> vector<64x8xf32>
    %178 = arith.addf %170, %177 : vector<64x8xf32>
    %c3_148 = arith.constant 3 : index
    %c0_149 = arith.constant 0 : index
    %c0_150 = arith.constant 0 : index
    %179 = vector.load %arg19[%c3_148, %c0_149, %c0_150] : memref<9x32x8xbf16, #tpu.memory_space<vmem>>, vector<1x32x8xbf16>
    %180 = vector.shape_cast %179 : vector<1x32x8xbf16> to vector<32x8xbf16>
    %cst_151 = arith.constant dense<0.000000e+00> : vector<64x8xf32>
    %181 = tpu.matmul %153, %180, %cst_151 {dimension_numbers = #tpu.dot_dimension_numbers<[1], [0], [0], [1], [0, 0, 1, 1], [], []>} : vector<64x32xbf16>, vector<32x8xbf16>, vector<64x8xf32> -> vector<64x8xf32>
    %c3_152 = arith.constant 3 : index
    %c0_153 = arith.constant 0 : index
    %c0_154 = arith.constant 0 : index
    %182 = vector.load %arg3[%c3_152, %c0_153, %c0_154] : memref<9x64x64xbf16, #tpu.memory_space<vmem>>, vector<1x64x64xbf16>
    %183 = vector.shape_cast %182 : vector<1x64x64xbf16> to vector<64x64xbf16>
    %184 = arith.truncf %181 : vector<64x8xf32> to vector<64x8xbf16>
    %cst_155 = arith.constant dense<0.000000e+00> : vector<64x8xf32>
    %185 = tpu.matmul %183, %184, %cst_155 {dimension_numbers = #tpu.dot_dimension_numbers<[1], [0], [0], [1], [0, 0, 1, 1], [], []>} : vector<64x64xbf16>, vector<64x8xbf16>, vector<64x8xf32> -> vector<64x8xf32>
    %186 = arith.addf %178, %185 : vector<64x8xf32>
    %c4_156 = arith.constant 4 : index
    %c0_157 = arith.constant 0 : index
    %c0_158 = arith.constant 0 : index
    %187 = vector.load %arg19[%c4_156, %c0_157, %c0_158] : memref<9x32x8xbf16, #tpu.memory_space<vmem>>, vector<1x32x8xbf16>
    %188 = vector.shape_cast %187 : vector<1x32x8xbf16> to vector<32x8xbf16>
    %cst_159 = arith.constant dense<0.000000e+00> : vector<64x8xf32>
    %189 = tpu.matmul %153, %188, %cst_159 {dimension_numbers = #tpu.dot_dimension_numbers<[1], [0], [0], [1], [0, 0, 1, 1], [], []>} : vector<64x32xbf16>, vector<32x8xbf16>, vector<64x8xf32> -> vector<64x8xf32>
    %c4_160 = arith.constant 4 : index
    %c0_161 = arith.constant 0 : index
    %c0_162 = arith.constant 0 : index
    %190 = vector.load %arg3[%c4_160, %c0_161, %c0_162] : memref<9x64x64xbf16, #tpu.memory_space<vmem>>, vector<1x64x64xbf16>
    %191 = vector.shape_cast %190 : vector<1x64x64xbf16> to vector<64x64xbf16>
    %192 = arith.truncf %189 : vector<64x8xf32> to vector<64x8xbf16>
    %cst_163 = arith.constant dense<0.000000e+00> : vector<64x8xf32>
    %193 = tpu.matmul %191, %192, %cst_163 {dimension_numbers = #tpu.dot_dimension_numbers<[1], [0], [0], [1], [0, 0, 1, 1], [], []>} : vector<64x64xbf16>, vector<64x8xbf16>, vector<64x8xf32> -> vector<64x8xf32>
    %194 = arith.addf %186, %193 : vector<64x8xf32>
    %c5_164 = arith.constant 5 : index
    %c0_165 = arith.constant 0 : index
    %c0_166 = arith.constant 0 : index
    %195 = vector.load %arg19[%c5_164, %c0_165, %c0_166] : memref<9x32x8xbf16, #tpu.memory_space<vmem>>, vector<1x32x8xbf16>
    %196 = vector.shape_cast %195 : vector<1x32x8xbf16> to vector<32x8xbf16>
    %cst_167 = arith.constant dense<0.000000e+00> : vector<64x8xf32>
    %197 = tpu.matmul %153, %196, %cst_167 {dimension_numbers = #tpu.dot_dimension_numbers<[1], [0], [0], [1], [0, 0, 1, 1], [], []>} : vector<64x32xbf16>, vector<32x8xbf16>, vector<64x8xf32> -> vector<64x8xf32>
    %c5_168 = arith.constant 5 : index
    %c0_169 = arith.constant 0 : index
    %c0_170 = arith.constant 0 : index
    %198 = vector.load %arg3[%c5_168, %c0_169, %c0_170] : memref<9x64x64xbf16, #tpu.memory_space<vmem>>, vector<1x64x64xbf16>
    %199 = vector.shape_cast %198 : vector<1x64x64xbf16> to vector<64x64xbf16>
    %200 = arith.truncf %197 : vector<64x8xf32> to vector<64x8xbf16>
    %cst_171 = arith.constant dense<0.000000e+00> : vector<64x8xf32>
    %201 = tpu.matmul %199, %200, %cst_171 {dimension_numbers = #tpu.dot_dimension_numbers<[1], [0], [0], [1], [0, 0, 1, 1], [], []>} : vector<64x64xbf16>, vector<64x8xbf16>, vector<64x8xf32> -> vector<64x8xf32>
    %202 = arith.addf %194, %201 : vector<64x8xf32>
    %c6_172 = arith.constant 6 : index
    %c0_173 = arith.constant 0 : index
    %c0_174 = arith.constant 0 : index
    %203 = vector.load %arg19[%c6_172, %c0_173, %c0_174] : memref<9x32x8xbf16, #tpu.memory_space<vmem>>, vector<1x32x8xbf16>
    %204 = vector.shape_cast %203 : vector<1x32x8xbf16> to vector<32x8xbf16>
    %cst_175 = arith.constant dense<0.000000e+00> : vector<64x8xf32>
    %205 = tpu.matmul %153, %204, %cst_175 {dimension_numbers = #tpu.dot_dimension_numbers<[1], [0], [0], [1], [0, 0, 1, 1], [], []>} : vector<64x32xbf16>, vector<32x8xbf16>, vector<64x8xf32> -> vector<64x8xf32>
    %c6_176 = arith.constant 6 : index
    %c0_177 = arith.constant 0 : index
    %c0_178 = arith.constant 0 : index
    %206 = vector.load %arg3[%c6_176, %c0_177, %c0_178] : memref<9x64x64xbf16, #tpu.memory_space<vmem>>, vector<1x64x64xbf16>
    %207 = vector.shape_cast %206 : vector<1x64x64xbf16> to vector<64x64xbf16>
    %208 = arith.truncf %205 : vector<64x8xf32> to vector<64x8xbf16>
    %cst_179 = arith.constant dense<0.000000e+00> : vector<64x8xf32>
    %209 = tpu.matmul %207, %208, %cst_179 {dimension_numbers = #tpu.dot_dimension_numbers<[1], [0], [0], [1], [0, 0, 1, 1], [], []>} : vector<64x64xbf16>, vector<64x8xbf16>, vector<64x8xf32> -> vector<64x8xf32>
    %210 = arith.addf %202, %209 : vector<64x8xf32>
    %c7_180 = arith.constant 7 : index
    %c0_181 = arith.constant 0 : index
    %c0_182 = arith.constant 0 : index
    %211 = vector.load %arg19[%c7_180, %c0_181, %c0_182] : memref<9x32x8xbf16, #tpu.memory_space<vmem>>, vector<1x32x8xbf16>
    %212 = vector.shape_cast %211 : vector<1x32x8xbf16> to vector<32x8xbf16>
    %cst_183 = arith.constant dense<0.000000e+00> : vector<64x8xf32>
    %213 = tpu.matmul %153, %212, %cst_183 {dimension_numbers = #tpu.dot_dimension_numbers<[1], [0], [0], [1], [0, 0, 1, 1], [], []>} : vector<64x32xbf16>, vector<32x8xbf16>, vector<64x8xf32> -> vector<64x8xf32>
    %c7_184 = arith.constant 7 : index
    %c0_185 = arith.constant 0 : index
    %c0_186 = arith.constant 0 : index
    %214 = vector.load %arg3[%c7_184, %c0_185, %c0_186] : memref<9x64x64xbf16, #tpu.memory_space<vmem>>, vector<1x64x64xbf16>
    %215 = vector.shape_cast %214 : vector<1x64x64xbf16> to vector<64x64xbf16>
    %216 = arith.truncf %213 : vector<64x8xf32> to vector<64x8xbf16>
    %cst_187 = arith.constant dense<0.000000e+00> : vector<64x8xf32>
    %217 = tpu.matmul %215, %216, %cst_187 {dimension_numbers = #tpu.dot_dimension_numbers<[1], [0], [0], [1], [0, 0, 1, 1], [], []>} : vector<64x64xbf16>, vector<64x8xbf16>, vector<64x8xf32> -> vector<64x8xf32>
    %218 = arith.addf %210, %217 : vector<64x8xf32>
    %c8_188 = arith.constant 8 : index
    %c0_189 = arith.constant 0 : index
    %c0_190 = arith.constant 0 : index
    %219 = vector.load %arg19[%c8_188, %c0_189, %c0_190] : memref<9x32x8xbf16, #tpu.memory_space<vmem>>, vector<1x32x8xbf16>
    %220 = vector.shape_cast %219 : vector<1x32x8xbf16> to vector<32x8xbf16>
    %cst_191 = arith.constant dense<0.000000e+00> : vector<64x8xf32>
    %221 = tpu.matmul %153, %220, %cst_191 {dimension_numbers = #tpu.dot_dimension_numbers<[1], [0], [0], [1], [0, 0, 1, 1], [], []>} : vector<64x32xbf16>, vector<32x8xbf16>, vector<64x8xf32> -> vector<64x8xf32>
    %c8_192 = arith.constant 8 : index
    %c0_193 = arith.constant 0 : index
    %c0_194 = arith.constant 0 : index
    %222 = vector.load %arg3[%c8_192, %c0_193, %c0_194] : memref<9x64x64xbf16, #tpu.memory_space<vmem>>, vector<1x64x64xbf16>
    %223 = vector.shape_cast %222 : vector<1x64x64xbf16> to vector<64x64xbf16>
    %224 = arith.truncf %221 : vector<64x8xf32> to vector<64x8xbf16>
    %cst_195 = arith.constant dense<0.000000e+00> : vector<64x8xf32>
    %225 = tpu.matmul %223, %224, %cst_195 {dimension_numbers = #tpu.dot_dimension_numbers<[1], [0], [0], [1], [0, 0, 1, 1], [], []>} : vector<64x64xbf16>, vector<64x8xbf16>, vector<64x8xf32> -> vector<64x8xf32>
    %226 = arith.addf %218, %225 : vector<64x8xf32>
    %cst_196 = arith.constant 0.000000e+00 : f32
    %227 = vector.broadcast %cst_196 : f32 to vector<64x16xf32>
    %c0_197 = arith.constant 0 : index
    %c0_198 = arith.constant 0 : index
    %228 = vector.load %arg20[%c0_197, %c0_198] : memref<1x32xf32, #tpu.memory_space<vmem>>, vector<1x16xf32>
    %229 = vector.broadcast %228 : vector<1x16xf32> to vector<64x16xf32>
    %230 = arith.mulf %24, %229 : vector<64x16xf32>
    %c0_199 = arith.constant 0 : index
    %c0_200 = arith.constant 0 : index
    %231 = vector.load %arg21[%c0_199, %c0_200] : memref<1x32xf32, #tpu.memory_space<vmem>>, vector<1x16xf32>
    %232 = vector.broadcast %231 : vector<1x16xf32> to vector<64x16xf32>
    %233 = arith.addf %230, %232 : vector<64x16xf32>
    %cst_201 = arith.constant 0.000000e+00 : f32
    %234 = vector.broadcast %cst_201 : f32 to vector<64x16xf32>
    %235 = arith.maximumf %233, %234 : vector<64x16xf32>
    %c0_202 = arith.constant 0 : index
    %c0_203 = arith.constant 0 : index
    %236 = vector.load %arg22[%c0_202, %c0_203] : memref<32x16xbf16, #tpu.memory_space<vmem>>, vector<16x16xbf16>
    %237 = arith.truncf %235 : vector<64x16xf32> to vector<64x16xbf16>
    %cst_204 = arith.constant dense<0.000000e+00> : vector<64x16xf32>
    %238 = tpu.matmul %237, %236, %cst_204 {dimension_numbers = #tpu.dot_dimension_numbers<[1], [0], [0], [1], [0, 0, 1, 1], [], []>} : vector<64x16xbf16>, vector<16x16xbf16>, vector<64x16xf32> -> vector<64x16xf32>
    %239 = arith.addf %227, %238 : vector<64x16xf32>
    %c0_205 = arith.constant 0 : index
    %c16_206 = arith.constant 16 : index
    %240 = vector.load %arg20[%c0_205, %c16_206] : memref<1x32xf32, #tpu.memory_space<vmem>>, vector<1x8xf32>
    %241 = vector.broadcast %240 : vector<1x8xf32> to vector<64x8xf32>
    %242 = arith.mulf %119, %241 : vector<64x8xf32>
    %c0_207 = arith.constant 0 : index
    %c16_208 = arith.constant 16 : index
    %243 = vector.load %arg21[%c0_207, %c16_208] : memref<1x32xf32, #tpu.memory_space<vmem>>, vector<1x8xf32>
    %244 = vector.broadcast %243 : vector<1x8xf32> to vector<64x8xf32>
    %245 = arith.addf %242, %244 : vector<64x8xf32>
    %cst_209 = arith.constant 0.000000e+00 : f32
    %246 = vector.broadcast %cst_209 : f32 to vector<64x8xf32>
    %247 = arith.maximumf %245, %246 : vector<64x8xf32>
    %c16_210 = arith.constant 16 : index
    %c0_211 = arith.constant 0 : index
    %248 = vector.load %arg22[%c16_210, %c0_211] : memref<32x16xbf16, #tpu.memory_space<vmem>>, vector<8x16xbf16>
    %249 = arith.truncf %247 : vector<64x8xf32> to vector<64x8xbf16>
    %cst_212 = arith.constant dense<0.000000e+00> : vector<64x16xf32>
    %250 = tpu.matmul %249, %248, %cst_212 {dimension_numbers = #tpu.dot_dimension_numbers<[1], [0], [0], [1], [0, 0, 1, 1], [], []>} : vector<64x8xbf16>, vector<8x16xbf16>, vector<64x16xf32> -> vector<64x16xf32>
    %251 = arith.addf %239, %250 : vector<64x16xf32>
    %c0_213 = arith.constant 0 : index
    %c24 = arith.constant 24 : index
    %252 = vector.load %arg20[%c0_213, %c24] : memref<1x32xf32, #tpu.memory_space<vmem>>, vector<1x8xf32>
    %253 = vector.broadcast %252 : vector<1x8xf32> to vector<64x8xf32>
    %254 = arith.mulf %226, %253 : vector<64x8xf32>
    %c0_214 = arith.constant 0 : index
    %c24_215 = arith.constant 24 : index
    %255 = vector.load %arg21[%c0_214, %c24_215] : memref<1x32xf32, #tpu.memory_space<vmem>>, vector<1x8xf32>
    %256 = vector.broadcast %255 : vector<1x8xf32> to vector<64x8xf32>
    %257 = arith.addf %254, %256 : vector<64x8xf32>
    %cst_216 = arith.constant 0.000000e+00 : f32
    %258 = vector.broadcast %cst_216 : f32 to vector<64x8xf32>
    %259 = arith.maximumf %257, %258 : vector<64x8xf32>
    %c24_217 = arith.constant 24 : index
    %c0_218 = arith.constant 0 : index
    %260 = vector.load %arg22[%c24_217, %c0_218] : memref<32x16xbf16, #tpu.memory_space<vmem>>, vector<8x16xbf16>
    %261 = arith.truncf %259 : vector<64x8xf32> to vector<64x8xbf16>
    %cst_219 = arith.constant dense<0.000000e+00> : vector<64x16xf32>
    %262 = tpu.matmul %261, %260, %cst_219 {dimension_numbers = #tpu.dot_dimension_numbers<[1], [0], [0], [1], [0, 0, 1, 1], [], []>} : vector<64x8xbf16>, vector<8x16xbf16>, vector<64x16xf32> -> vector<64x16xf32>
    %263 = arith.addf %251, %262 : vector<64x16xf32>
    %c0_220 = arith.constant 0 : index
    %c0_221 = arith.constant 0 : index
    %264 = vector.load %arg4[%c0_220, %c0_221] : memref<16x64xbf16, #tpu.memory_space<vmem>>, vector<16x64xbf16>
    %265 = arith.truncf %263 : vector<64x16xf32> to vector<64x16xbf16>
    %cst_222 = arith.constant dense<0.000000e+00> : vector<16x16xf32>
    %266 = tpu.matmul %264, %265, %cst_222 {dimension_numbers = #tpu.dot_dimension_numbers<[1], [0], [0], [1], [0, 0, 1, 1], [], []>} : vector<16x64xbf16>, vector<64x16xbf16>, vector<16x16xf32> -> vector<16x16xf32>
    %cst_223 = arith.constant 0.000000e+00 : f32
    %267 = vector.broadcast %cst_223 : f32 to vector<16x32xf32>
    %c0_224 = arith.constant 0 : index
    %c0_225 = arith.constant 0 : index
    %268 = vector.load %arg23[%c0_224, %c0_225] : memref<1x16xf32, #tpu.memory_space<vmem>>, vector<1x16xf32>
    %269 = vector.broadcast %268 : vector<1x16xf32> to vector<16x16xf32>
    %270 = arith.mulf %266, %269 : vector<16x16xf32>
    %c0_226 = arith.constant 0 : index
    %c0_227 = arith.constant 0 : index
    %271 = vector.load %arg24[%c0_226, %c0_227] : memref<1x16xf32, #tpu.memory_space<vmem>>, vector<1x16xf32>
    %272 = vector.broadcast %271 : vector<1x16xf32> to vector<16x16xf32>
    %273 = arith.addf %270, %272 : vector<16x16xf32>
    %cst_228 = arith.constant 0.000000e+00 : f32
    %274 = vector.broadcast %cst_228 : f32 to vector<16x16xf32>
    %275 = arith.maximumf %273, %274 : vector<16x16xf32>
    %c0_229 = arith.constant 0 : index
    %c0_230 = arith.constant 0 : index
    %276 = vector.load %arg25[%c0_229, %c0_230] : memref<16x32xbf16, #tpu.memory_space<vmem>>, vector<16x32xbf16>
    %277 = arith.truncf %275 : vector<16x16xf32> to vector<16x16xbf16>
    %cst_231 = arith.constant dense<0.000000e+00> : vector<16x32xf32>
    %278 = tpu.matmul %277, %276, %cst_231 {dimension_numbers = #tpu.dot_dimension_numbers<[1], [0], [0], [1], [0, 0, 1, 1], [], []>} : vector<16x16xbf16>, vector<16x32xbf16>, vector<16x32xf32> -> vector<16x32xf32>
    %279 = arith.addf %267, %278 : vector<16x32xf32>
    %c0_232 = arith.constant 0 : index
    %c0_233 = arith.constant 0 : index
    %280 = vector.load %arg26[%c0_232, %c0_233] : memref<1x32xf32, #tpu.memory_space<vmem>>, vector<1x32xf32>
    %281 = vector.broadcast %280 : vector<1x32xf32> to vector<16x32xf32>
    %282 = arith.mulf %279, %281 : vector<16x32xf32>
    %c0_234 = arith.constant 0 : index
    %c0_235 = arith.constant 0 : index
    %283 = vector.load %arg27[%c0_234, %c0_235] : memref<1x32xf32, #tpu.memory_space<vmem>>, vector<1x32xf32>
    %284 = vector.broadcast %283 : vector<1x32xf32> to vector<16x32xf32>
    %285 = arith.addf %282, %284 : vector<16x32xf32>
    %cst_236 = arith.constant 0.000000e+00 : f32
    %286 = vector.broadcast %cst_236 : f32 to vector<16x32xf32>
    %287 = arith.maximumf %285, %286 : vector<16x32xf32>
    %288 = arith.truncf %287 : vector<16x32xf32> to vector<16x32xbf16>
    %cst_237 = arith.constant 0.000000e+00 : f32
    %289 = vector.broadcast %cst_237 : f32 to vector<16x8xf32>
    %c0_238 = arith.constant 0 : index
    %c0_239 = arith.constant 0 : index
    %c0_240 = arith.constant 0 : index
    %290 = vector.load %arg28[%c0_238, %c0_239, %c0_240] : memref<9x32x8xbf16, #tpu.memory_space<vmem>>, vector<1x32x8xbf16>
    %291 = vector.shape_cast %290 : vector<1x32x8xbf16> to vector<32x8xbf16>
    %cst_241 = arith.constant dense<0.000000e+00> : vector<16x8xf32>
    %292 = tpu.matmul %288, %291, %cst_241 {dimension_numbers = #tpu.dot_dimension_numbers<[1], [0], [0], [1], [0, 0, 1, 1], [], []>} : vector<16x32xbf16>, vector<32x8xbf16>, vector<16x8xf32> -> vector<16x8xf32>
    %c0_242 = arith.constant 0 : index
    %c0_243 = arith.constant 0 : index
    %c0_244 = arith.constant 0 : index
    %293 = vector.load %arg5[%c0_242, %c0_243, %c0_244] : memref<9x16x16xbf16, #tpu.memory_space<vmem>>, vector<1x16x16xbf16>
    %294 = vector.shape_cast %293 : vector<1x16x16xbf16> to vector<16x16xbf16>
    %295 = arith.truncf %292 : vector<16x8xf32> to vector<16x8xbf16>
    %cst_245 = arith.constant dense<0.000000e+00> : vector<16x8xf32>
    %296 = tpu.matmul %294, %295, %cst_245 {dimension_numbers = #tpu.dot_dimension_numbers<[1], [0], [0], [1], [0, 0, 1, 1], [], []>} : vector<16x16xbf16>, vector<16x8xbf16>, vector<16x8xf32> -> vector<16x8xf32>
    %297 = arith.addf %289, %296 : vector<16x8xf32>
    %c1_246 = arith.constant 1 : index
    %c0_247 = arith.constant 0 : index
    %c0_248 = arith.constant 0 : index
    %298 = vector.load %arg28[%c1_246, %c0_247, %c0_248] : memref<9x32x8xbf16, #tpu.memory_space<vmem>>, vector<1x32x8xbf16>
    %299 = vector.shape_cast %298 : vector<1x32x8xbf16> to vector<32x8xbf16>
    %cst_249 = arith.constant dense<0.000000e+00> : vector<16x8xf32>
    %300 = tpu.matmul %288, %299, %cst_249 {dimension_numbers = #tpu.dot_dimension_numbers<[1], [0], [0], [1], [0, 0, 1, 1], [], []>} : vector<16x32xbf16>, vector<32x8xbf16>, vector<16x8xf32> -> vector<16x8xf32>
    %c1_250 = arith.constant 1 : index
    %c0_251 = arith.constant 0 : index
    %c0_252 = arith.constant 0 : index
    %301 = vector.load %arg5[%c1_250, %c0_251, %c0_252] : memref<9x16x16xbf16, #tpu.memory_space<vmem>>, vector<1x16x16xbf16>
    %302 = vector.shape_cast %301 : vector<1x16x16xbf16> to vector<16x16xbf16>
    %303 = arith.truncf %300 : vector<16x8xf32> to vector<16x8xbf16>
    %cst_253 = arith.constant dense<0.000000e+00> : vector<16x8xf32>
    %304 = tpu.matmul %302, %303, %cst_253 {dimension_numbers = #tpu.dot_dimension_numbers<[1], [0], [0], [1], [0, 0, 1, 1], [], []>} : vector<16x16xbf16>, vector<16x8xbf16>, vector<16x8xf32> -> vector<16x8xf32>
    %305 = arith.addf %297, %304 : vector<16x8xf32>
    %c2_254 = arith.constant 2 : index
    %c0_255 = arith.constant 0 : index
    %c0_256 = arith.constant 0 : index
    %306 = vector.load %arg28[%c2_254, %c0_255, %c0_256] : memref<9x32x8xbf16, #tpu.memory_space<vmem>>, vector<1x32x8xbf16>
    %307 = vector.shape_cast %306 : vector<1x32x8xbf16> to vector<32x8xbf16>
    %cst_257 = arith.constant dense<0.000000e+00> : vector<16x8xf32>
    %308 = tpu.matmul %288, %307, %cst_257 {dimension_numbers = #tpu.dot_dimension_numbers<[1], [0], [0], [1], [0, 0, 1, 1], [], []>} : vector<16x32xbf16>, vector<32x8xbf16>, vector<16x8xf32> -> vector<16x8xf32>
    %c2_258 = arith.constant 2 : index
    %c0_259 = arith.constant 0 : index
    %c0_260 = arith.constant 0 : index
    %309 = vector.load %arg5[%c2_258, %c0_259, %c0_260] : memref<9x16x16xbf16, #tpu.memory_space<vmem>>, vector<1x16x16xbf16>
    %310 = vector.shape_cast %309 : vector<1x16x16xbf16> to vector<16x16xbf16>
    %311 = arith.truncf %308 : vector<16x8xf32> to vector<16x8xbf16>
    %cst_261 = arith.constant dense<0.000000e+00> : vector<16x8xf32>
    %312 = tpu.matmul %310, %311, %cst_261 {dimension_numbers = #tpu.dot_dimension_numbers<[1], [0], [0], [1], [0, 0, 1, 1], [], []>} : vector<16x16xbf16>, vector<16x8xbf16>, vector<16x8xf32> -> vector<16x8xf32>
    %313 = arith.addf %305, %312 : vector<16x8xf32>
    %c3_262 = arith.constant 3 : index
    %c0_263 = arith.constant 0 : index
    %c0_264 = arith.constant 0 : index
    %314 = vector.load %arg28[%c3_262, %c0_263, %c0_264] : memref<9x32x8xbf16, #tpu.memory_space<vmem>>, vector<1x32x8xbf16>
    %315 = vector.shape_cast %314 : vector<1x32x8xbf16> to vector<32x8xbf16>
    %cst_265 = arith.constant dense<0.000000e+00> : vector<16x8xf32>
    %316 = tpu.matmul %288, %315, %cst_265 {dimension_numbers = #tpu.dot_dimension_numbers<[1], [0], [0], [1], [0, 0, 1, 1], [], []>} : vector<16x32xbf16>, vector<32x8xbf16>, vector<16x8xf32> -> vector<16x8xf32>
    %c3_266 = arith.constant 3 : index
    %c0_267 = arith.constant 0 : index
    %c0_268 = arith.constant 0 : index
    %317 = vector.load %arg5[%c3_266, %c0_267, %c0_268] : memref<9x16x16xbf16, #tpu.memory_space<vmem>>, vector<1x16x16xbf16>
    %318 = vector.shape_cast %317 : vector<1x16x16xbf16> to vector<16x16xbf16>
    %319 = arith.truncf %316 : vector<16x8xf32> to vector<16x8xbf16>
    %cst_269 = arith.constant dense<0.000000e+00> : vector<16x8xf32>
    %320 = tpu.matmul %318, %319, %cst_269 {dimension_numbers = #tpu.dot_dimension_numbers<[1], [0], [0], [1], [0, 0, 1, 1], [], []>} : vector<16x16xbf16>, vector<16x8xbf16>, vector<16x8xf32> -> vector<16x8xf32>
    %321 = arith.addf %313, %320 : vector<16x8xf32>
    %c4_270 = arith.constant 4 : index
    %c0_271 = arith.constant 0 : index
    %c0_272 = arith.constant 0 : index
    %322 = vector.load %arg28[%c4_270, %c0_271, %c0_272] : memref<9x32x8xbf16, #tpu.memory_space<vmem>>, vector<1x32x8xbf16>
    %323 = vector.shape_cast %322 : vector<1x32x8xbf16> to vector<32x8xbf16>
    %cst_273 = arith.constant dense<0.000000e+00> : vector<16x8xf32>
    %324 = tpu.matmul %288, %323, %cst_273 {dimension_numbers = #tpu.dot_dimension_numbers<[1], [0], [0], [1], [0, 0, 1, 1], [], []>} : vector<16x32xbf16>, vector<32x8xbf16>, vector<16x8xf32> -> vector<16x8xf32>
    %c4_274 = arith.constant 4 : index
    %c0_275 = arith.constant 0 : index
    %c0_276 = arith.constant 0 : index
    %325 = vector.load %arg5[%c4_274, %c0_275, %c0_276] : memref<9x16x16xbf16, #tpu.memory_space<vmem>>, vector<1x16x16xbf16>
    %326 = vector.shape_cast %325 : vector<1x16x16xbf16> to vector<16x16xbf16>
    %327 = arith.truncf %324 : vector<16x8xf32> to vector<16x8xbf16>
    %cst_277 = arith.constant dense<0.000000e+00> : vector<16x8xf32>
    %328 = tpu.matmul %326, %327, %cst_277 {dimension_numbers = #tpu.dot_dimension_numbers<[1], [0], [0], [1], [0, 0, 1, 1], [], []>} : vector<16x16xbf16>, vector<16x8xbf16>, vector<16x8xf32> -> vector<16x8xf32>
    %329 = arith.addf %321, %328 : vector<16x8xf32>
    %c5_278 = arith.constant 5 : index
    %c0_279 = arith.constant 0 : index
    %c0_280 = arith.constant 0 : index
    %330 = vector.load %arg28[%c5_278, %c0_279, %c0_280] : memref<9x32x8xbf16, #tpu.memory_space<vmem>>, vector<1x32x8xbf16>
    %331 = vector.shape_cast %330 : vector<1x32x8xbf16> to vector<32x8xbf16>
    %cst_281 = arith.constant dense<0.000000e+00> : vector<16x8xf32>
    %332 = tpu.matmul %288, %331, %cst_281 {dimension_numbers = #tpu.dot_dimension_numbers<[1], [0], [0], [1], [0, 0, 1, 1], [], []>} : vector<16x32xbf16>, vector<32x8xbf16>, vector<16x8xf32> -> vector<16x8xf32>
    %c5_282 = arith.constant 5 : index
    %c0_283 = arith.constant 0 : index
    %c0_284 = arith.constant 0 : index
    %333 = vector.load %arg5[%c5_282, %c0_283, %c0_284] : memref<9x16x16xbf16, #tpu.memory_space<vmem>>, vector<1x16x16xbf16>
    %334 = vector.shape_cast %333 : vector<1x16x16xbf16> to vector<16x16xbf16>
    %335 = arith.truncf %332 : vector<16x8xf32> to vector<16x8xbf16>
    %cst_285 = arith.constant dense<0.000000e+00> : vector<16x8xf32>
    %336 = tpu.matmul %334, %335, %cst_285 {dimension_numbers = #tpu.dot_dimension_numbers<[1], [0], [0], [1], [0, 0, 1, 1], [], []>} : vector<16x16xbf16>, vector<16x8xbf16>, vector<16x8xf32> -> vector<16x8xf32>
    %337 = arith.addf %329, %336 : vector<16x8xf32>
    %c6_286 = arith.constant 6 : index
    %c0_287 = arith.constant 0 : index
    %c0_288 = arith.constant 0 : index
    %338 = vector.load %arg28[%c6_286, %c0_287, %c0_288] : memref<9x32x8xbf16, #tpu.memory_space<vmem>>, vector<1x32x8xbf16>
    %339 = vector.shape_cast %338 : vector<1x32x8xbf16> to vector<32x8xbf16>
    %cst_289 = arith.constant dense<0.000000e+00> : vector<16x8xf32>
    %340 = tpu.matmul %288, %339, %cst_289 {dimension_numbers = #tpu.dot_dimension_numbers<[1], [0], [0], [1], [0, 0, 1, 1], [], []>} : vector<16x32xbf16>, vector<32x8xbf16>, vector<16x8xf32> -> vector<16x8xf32>
    %c6_290 = arith.constant 6 : index
    %c0_291 = arith.constant 0 : index
    %c0_292 = arith.constant 0 : index
    %341 = vector.load %arg5[%c6_290, %c0_291, %c0_292] : memref<9x16x16xbf16, #tpu.memory_space<vmem>>, vector<1x16x16xbf16>
    %342 = vector.shape_cast %341 : vector<1x16x16xbf16> to vector<16x16xbf16>
    %343 = arith.truncf %340 : vector<16x8xf32> to vector<16x8xbf16>
    %cst_293 = arith.constant dense<0.000000e+00> : vector<16x8xf32>
    %344 = tpu.matmul %342, %343, %cst_293 {dimension_numbers = #tpu.dot_dimension_numbers<[1], [0], [0], [1], [0, 0, 1, 1], [], []>} : vector<16x16xbf16>, vector<16x8xbf16>, vector<16x8xf32> -> vector<16x8xf32>
    %345 = arith.addf %337, %344 : vector<16x8xf32>
    %c7_294 = arith.constant 7 : index
    %c0_295 = arith.constant 0 : index
    %c0_296 = arith.constant 0 : index
    %346 = vector.load %arg28[%c7_294, %c0_295, %c0_296] : memref<9x32x8xbf16, #tpu.memory_space<vmem>>, vector<1x32x8xbf16>
    %347 = vector.shape_cast %346 : vector<1x32x8xbf16> to vector<32x8xbf16>
    %cst_297 = arith.constant dense<0.000000e+00> : vector<16x8xf32>
    %348 = tpu.matmul %288, %347, %cst_297 {dimension_numbers = #tpu.dot_dimension_numbers<[1], [0], [0], [1], [0, 0, 1, 1], [], []>} : vector<16x32xbf16>, vector<32x8xbf16>, vector<16x8xf32> -> vector<16x8xf32>
    %c7_298 = arith.constant 7 : index
    %c0_299 = arith.constant 0 : index
    %c0_300 = arith.constant 0 : index
    %349 = vector.load %arg5[%c7_298, %c0_299, %c0_300] : memref<9x16x16xbf16, #tpu.memory_space<vmem>>, vector<1x16x16xbf16>
    %350 = vector.shape_cast %349 : vector<1x16x16xbf16> to vector<16x16xbf16>
    %351 = arith.truncf %348 : vector<16x8xf32> to vector<16x8xbf16>
    %cst_301 = arith.constant dense<0.000000e+00> : vector<16x8xf32>
    %352 = tpu.matmul %350, %351, %cst_301 {dimension_numbers = #tpu.dot_dimension_numbers<[1], [0], [0], [1], [0, 0, 1, 1], [], []>} : vector<16x16xbf16>, vector<16x8xbf16>, vector<16x8xf32> -> vector<16x8xf32>
    %353 = arith.addf %345, %352 : vector<16x8xf32>
    %c8_302 = arith.constant 8 : index
    %c0_303 = arith.constant 0 : index
    %c0_304 = arith.constant 0 : index
    %354 = vector.load %arg28[%c8_302, %c0_303, %c0_304] : memref<9x32x8xbf16, #tpu.memory_space<vmem>>, vector<1x32x8xbf16>
    %355 = vector.shape_cast %354 : vector<1x32x8xbf16> to vector<32x8xbf16>
    %cst_305 = arith.constant dense<0.000000e+00> : vector<16x8xf32>
    %356 = tpu.matmul %288, %355, %cst_305 {dimension_numbers = #tpu.dot_dimension_numbers<[1], [0], [0], [1], [0, 0, 1, 1], [], []>} : vector<16x32xbf16>, vector<32x8xbf16>, vector<16x8xf32> -> vector<16x8xf32>
    %c8_306 = arith.constant 8 : index
    %c0_307 = arith.constant 0 : index
    %c0_308 = arith.constant 0 : index
    %357 = vector.load %arg5[%c8_306, %c0_307, %c0_308] : memref<9x16x16xbf16, #tpu.memory_space<vmem>>, vector<1x16x16xbf16>
    %358 = vector.shape_cast %357 : vector<1x16x16xbf16> to vector<16x16xbf16>
    %359 = arith.truncf %356 : vector<16x8xf32> to vector<16x8xbf16>
    %cst_309 = arith.constant dense<0.000000e+00> : vector<16x8xf32>
    %360 = tpu.matmul %358, %359, %cst_309 {dimension_numbers = #tpu.dot_dimension_numbers<[1], [0], [0], [1], [0, 0, 1, 1], [], []>} : vector<16x16xbf16>, vector<16x8xbf16>, vector<16x8xf32> -> vector<16x8xf32>
    %361 = arith.addf %353, %360 : vector<16x8xf32>
    %cst_310 = arith.constant 0.000000e+00 : f32
    %362 = vector.broadcast %cst_310 : f32 to vector<16x32xf32>
    %c0_311 = arith.constant 0 : index
    %c0_312 = arith.constant 0 : index
    %363 = vector.load %arg29[%c0_311, %c0_312] : memref<1x24xf32, #tpu.memory_space<vmem>>, vector<1x16xf32>
    %364 = vector.broadcast %363 : vector<1x16xf32> to vector<16x16xf32>
    %365 = arith.mulf %266, %364 : vector<16x16xf32>
    %c0_313 = arith.constant 0 : index
    %c0_314 = arith.constant 0 : index
    %366 = vector.load %arg30[%c0_313, %c0_314] : memref<1x24xf32, #tpu.memory_space<vmem>>, vector<1x16xf32>
    %367 = vector.broadcast %366 : vector<1x16xf32> to vector<16x16xf32>
    %368 = arith.addf %365, %367 : vector<16x16xf32>
    %cst_315 = arith.constant 0.000000e+00 : f32
    %369 = vector.broadcast %cst_315 : f32 to vector<16x16xf32>
    %370 = arith.maximumf %368, %369 : vector<16x16xf32>
    %c0_316 = arith.constant 0 : index
    %c0_317 = arith.constant 0 : index
    %371 = vector.load %arg31[%c0_316, %c0_317] : memref<24x32xbf16, #tpu.memory_space<vmem>>, vector<16x32xbf16>
    %372 = arith.truncf %370 : vector<16x16xf32> to vector<16x16xbf16>
    %cst_318 = arith.constant dense<0.000000e+00> : vector<16x32xf32>
    %373 = tpu.matmul %372, %371, %cst_318 {dimension_numbers = #tpu.dot_dimension_numbers<[1], [0], [0], [1], [0, 0, 1, 1], [], []>} : vector<16x16xbf16>, vector<16x32xbf16>, vector<16x32xf32> -> vector<16x32xf32>
    %374 = arith.addf %362, %373 : vector<16x32xf32>
    %c0_319 = arith.constant 0 : index
    %c16_320 = arith.constant 16 : index
    %375 = vector.load %arg29[%c0_319, %c16_320] : memref<1x24xf32, #tpu.memory_space<vmem>>, vector<1x8xf32>
    %376 = vector.broadcast %375 : vector<1x8xf32> to vector<16x8xf32>
    %377 = arith.mulf %361, %376 : vector<16x8xf32>
    %c0_321 = arith.constant 0 : index
    %c16_322 = arith.constant 16 : index
    %378 = vector.load %arg30[%c0_321, %c16_322] : memref<1x24xf32, #tpu.memory_space<vmem>>, vector<1x8xf32>
    %379 = vector.broadcast %378 : vector<1x8xf32> to vector<16x8xf32>
    %380 = arith.addf %377, %379 : vector<16x8xf32>
    %cst_323 = arith.constant 0.000000e+00 : f32
    %381 = vector.broadcast %cst_323 : f32 to vector<16x8xf32>
    %382 = arith.maximumf %380, %381 : vector<16x8xf32>
    %c16_324 = arith.constant 16 : index
    %c0_325 = arith.constant 0 : index
    %383 = vector.load %arg31[%c16_324, %c0_325] : memref<24x32xbf16, #tpu.memory_space<vmem>>, vector<8x32xbf16>
    %384 = arith.truncf %382 : vector<16x8xf32> to vector<16x8xbf16>
    %cst_326 = arith.constant dense<0.000000e+00> : vector<16x32xf32>
    %385 = tpu.matmul %384, %383, %cst_326 {dimension_numbers = #tpu.dot_dimension_numbers<[1], [0], [0], [1], [0, 0, 1, 1], [], []>} : vector<16x8xbf16>, vector<8x32xbf16>, vector<16x32xf32> -> vector<16x32xf32>
    %386 = arith.addf %374, %385 : vector<16x32xf32>
    %c0_327 = arith.constant 0 : index
    %c0_328 = arith.constant 0 : index
    %387 = vector.load %arg32[%c0_327, %c0_328] : memref<1x32xf32, #tpu.memory_space<vmem>>, vector<1x32xf32>
    %388 = vector.broadcast %387 : vector<1x32xf32> to vector<16x32xf32>
    %389 = arith.mulf %386, %388 : vector<16x32xf32>
    %c0_329 = arith.constant 0 : index
    %c0_330 = arith.constant 0 : index
    %390 = vector.load %arg33[%c0_329, %c0_330] : memref<1x32xf32, #tpu.memory_space<vmem>>, vector<1x32xf32>
    %391 = vector.broadcast %390 : vector<1x32xf32> to vector<16x32xf32>
    %392 = arith.addf %389, %391 : vector<16x32xf32>
    %cst_331 = arith.constant 0.000000e+00 : f32
    %393 = vector.broadcast %cst_331 : f32 to vector<16x32xf32>
    %394 = arith.maximumf %392, %393 : vector<16x32xf32>
    %395 = arith.truncf %394 : vector<16x32xf32> to vector<16x32xbf16>
    %cst_332 = arith.constant 0.000000e+00 : f32
    %396 = vector.broadcast %cst_332 : f32 to vector<16x8xf32>
    %c0_333 = arith.constant 0 : index
    %c0_334 = arith.constant 0 : index
    %c0_335 = arith.constant 0 : index
    %397 = vector.load %arg34[%c0_333, %c0_334, %c0_335] : memref<9x32x8xbf16, #tpu.memory_space<vmem>>, vector<1x32x8xbf16>
    %398 = vector.shape_cast %397 : vector<1x32x8xbf16> to vector<32x8xbf16>
    %cst_336 = arith.constant dense<0.000000e+00> : vector<16x8xf32>
    %399 = tpu.matmul %395, %398, %cst_336 {dimension_numbers = #tpu.dot_dimension_numbers<[1], [0], [0], [1], [0, 0, 1, 1], [], []>} : vector<16x32xbf16>, vector<32x8xbf16>, vector<16x8xf32> -> vector<16x8xf32>
    %c0_337 = arith.constant 0 : index
    %c0_338 = arith.constant 0 : index
    %c0_339 = arith.constant 0 : index
    %400 = vector.load %arg5[%c0_337, %c0_338, %c0_339] : memref<9x16x16xbf16, #tpu.memory_space<vmem>>, vector<1x16x16xbf16>
    %401 = vector.shape_cast %400 : vector<1x16x16xbf16> to vector<16x16xbf16>
    %402 = arith.truncf %399 : vector<16x8xf32> to vector<16x8xbf16>
    %cst_340 = arith.constant dense<0.000000e+00> : vector<16x8xf32>
    %403 = tpu.matmul %401, %402, %cst_340 {dimension_numbers = #tpu.dot_dimension_numbers<[1], [0], [0], [1], [0, 0, 1, 1], [], []>} : vector<16x16xbf16>, vector<16x8xbf16>, vector<16x8xf32> -> vector<16x8xf32>
    %404 = arith.addf %396, %403 : vector<16x8xf32>
    %c1_341 = arith.constant 1 : index
    %c0_342 = arith.constant 0 : index
    %c0_343 = arith.constant 0 : index
    %405 = vector.load %arg34[%c1_341, %c0_342, %c0_343] : memref<9x32x8xbf16, #tpu.memory_space<vmem>>, vector<1x32x8xbf16>
    %406 = vector.shape_cast %405 : vector<1x32x8xbf16> to vector<32x8xbf16>
    %cst_344 = arith.constant dense<0.000000e+00> : vector<16x8xf32>
    %407 = tpu.matmul %395, %406, %cst_344 {dimension_numbers = #tpu.dot_dimension_numbers<[1], [0], [0], [1], [0, 0, 1, 1], [], []>} : vector<16x32xbf16>, vector<32x8xbf16>, vector<16x8xf32> -> vector<16x8xf32>
    %c1_345 = arith.constant 1 : index
    %c0_346 = arith.constant 0 : index
    %c0_347 = arith.constant 0 : index
    %408 = vector.load %arg5[%c1_345, %c0_346, %c0_347] : memref<9x16x16xbf16, #tpu.memory_space<vmem>>, vector<1x16x16xbf16>
    %409 = vector.shape_cast %408 : vector<1x16x16xbf16> to vector<16x16xbf16>
    %410 = arith.truncf %407 : vector<16x8xf32> to vector<16x8xbf16>
    %cst_348 = arith.constant dense<0.000000e+00> : vector<16x8xf32>
    %411 = tpu.matmul %409, %410, %cst_348 {dimension_numbers = #tpu.dot_dimension_numbers<[1], [0], [0], [1], [0, 0, 1, 1], [], []>} : vector<16x16xbf16>, vector<16x8xbf16>, vector<16x8xf32> -> vector<16x8xf32>
    %412 = arith.addf %404, %411 : vector<16x8xf32>
    %c2_349 = arith.constant 2 : index
    %c0_350 = arith.constant 0 : index
    %c0_351 = arith.constant 0 : index
    %413 = vector.load %arg34[%c2_349, %c0_350, %c0_351] : memref<9x32x8xbf16, #tpu.memory_space<vmem>>, vector<1x32x8xbf16>
    %414 = vector.shape_cast %413 : vector<1x32x8xbf16> to vector<32x8xbf16>
    %cst_352 = arith.constant dense<0.000000e+00> : vector<16x8xf32>
    %415 = tpu.matmul %395, %414, %cst_352 {dimension_numbers = #tpu.dot_dimension_numbers<[1], [0], [0], [1], [0, 0, 1, 1], [], []>} : vector<16x32xbf16>, vector<32x8xbf16>, vector<16x8xf32> -> vector<16x8xf32>
    %c2_353 = arith.constant 2 : index
    %c0_354 = arith.constant 0 : index
    %c0_355 = arith.constant 0 : index
    %416 = vector.load %arg5[%c2_353, %c0_354, %c0_355] : memref<9x16x16xbf16, #tpu.memory_space<vmem>>, vector<1x16x16xbf16>
    %417 = vector.shape_cast %416 : vector<1x16x16xbf16> to vector<16x16xbf16>
    %418 = arith.truncf %415 : vector<16x8xf32> to vector<16x8xbf16>
    %cst_356 = arith.constant dense<0.000000e+00> : vector<16x8xf32>
    %419 = tpu.matmul %417, %418, %cst_356 {dimension_numbers = #tpu.dot_dimension_numbers<[1], [0], [0], [1], [0, 0, 1, 1], [], []>} : vector<16x16xbf16>, vector<16x8xbf16>, vector<16x8xf32> -> vector<16x8xf32>
    %420 = arith.addf %412, %419 : vector<16x8xf32>
    %c3_357 = arith.constant 3 : index
    %c0_358 = arith.constant 0 : index
    %c0_359 = arith.constant 0 : index
    %421 = vector.load %arg34[%c3_357, %c0_358, %c0_359] : memref<9x32x8xbf16, #tpu.memory_space<vmem>>, vector<1x32x8xbf16>
    %422 = vector.shape_cast %421 : vector<1x32x8xbf16> to vector<32x8xbf16>
    %cst_360 = arith.constant dense<0.000000e+00> : vector<16x8xf32>
    %423 = tpu.matmul %395, %422, %cst_360 {dimension_numbers = #tpu.dot_dimension_numbers<[1], [0], [0], [1], [0, 0, 1, 1], [], []>} : vector<16x32xbf16>, vector<32x8xbf16>, vector<16x8xf32> -> vector<16x8xf32>
    %c3_361 = arith.constant 3 : index
    %c0_362 = arith.constant 0 : index
    %c0_363 = arith.constant 0 : index
    %424 = vector.load %arg5[%c3_361, %c0_362, %c0_363] : memref<9x16x16xbf16, #tpu.memory_space<vmem>>, vector<1x16x16xbf16>
    %425 = vector.shape_cast %424 : vector<1x16x16xbf16> to vector<16x16xbf16>
    %426 = arith.truncf %423 : vector<16x8xf32> to vector<16x8xbf16>
    %cst_364 = arith.constant dense<0.000000e+00> : vector<16x8xf32>
    %427 = tpu.matmul %425, %426, %cst_364 {dimension_numbers = #tpu.dot_dimension_numbers<[1], [0], [0], [1], [0, 0, 1, 1], [], []>} : vector<16x16xbf16>, vector<16x8xbf16>, vector<16x8xf32> -> vector<16x8xf32>
    %428 = arith.addf %420, %427 : vector<16x8xf32>
    %c4_365 = arith.constant 4 : index
    %c0_366 = arith.constant 0 : index
    %c0_367 = arith.constant 0 : index
    %429 = vector.load %arg34[%c4_365, %c0_366, %c0_367] : memref<9x32x8xbf16, #tpu.memory_space<vmem>>, vector<1x32x8xbf16>
    %430 = vector.shape_cast %429 : vector<1x32x8xbf16> to vector<32x8xbf16>
    %cst_368 = arith.constant dense<0.000000e+00> : vector<16x8xf32>
    %431 = tpu.matmul %395, %430, %cst_368 {dimension_numbers = #tpu.dot_dimension_numbers<[1], [0], [0], [1], [0, 0, 1, 1], [], []>} : vector<16x32xbf16>, vector<32x8xbf16>, vector<16x8xf32> -> vector<16x8xf32>
    %c4_369 = arith.constant 4 : index
    %c0_370 = arith.constant 0 : index
    %c0_371 = arith.constant 0 : index
    %432 = vector.load %arg5[%c4_369, %c0_370, %c0_371] : memref<9x16x16xbf16, #tpu.memory_space<vmem>>, vector<1x16x16xbf16>
    %433 = vector.shape_cast %432 : vector<1x16x16xbf16> to vector<16x16xbf16>
    %434 = arith.truncf %431 : vector<16x8xf32> to vector<16x8xbf16>
    %cst_372 = arith.constant dense<0.000000e+00> : vector<16x8xf32>
    %435 = tpu.matmul %433, %434, %cst_372 {dimension_numbers = #tpu.dot_dimension_numbers<[1], [0], [0], [1], [0, 0, 1, 1], [], []>} : vector<16x16xbf16>, vector<16x8xbf16>, vector<16x8xf32> -> vector<16x8xf32>
    %436 = arith.addf %428, %435 : vector<16x8xf32>
    %c5_373 = arith.constant 5 : index
    %c0_374 = arith.constant 0 : index
    %c0_375 = arith.constant 0 : index
    %437 = vector.load %arg34[%c5_373, %c0_374, %c0_375] : memref<9x32x8xbf16, #tpu.memory_space<vmem>>, vector<1x32x8xbf16>
    %438 = vector.shape_cast %437 : vector<1x32x8xbf16> to vector<32x8xbf16>
    %cst_376 = arith.constant dense<0.000000e+00> : vector<16x8xf32>
    %439 = tpu.matmul %395, %438, %cst_376 {dimension_numbers = #tpu.dot_dimension_numbers<[1], [0], [0], [1], [0, 0, 1, 1], [], []>} : vector<16x32xbf16>, vector<32x8xbf16>, vector<16x8xf32> -> vector<16x8xf32>
    %c5_377 = arith.constant 5 : index
    %c0_378 = arith.constant 0 : index
    %c0_379 = arith.constant 0 : index
    %440 = vector.load %arg5[%c5_377, %c0_378, %c0_379] : memref<9x16x16xbf16, #tpu.memory_space<vmem>>, vector<1x16x16xbf16>
    %441 = vector.shape_cast %440 : vector<1x16x16xbf16> to vector<16x16xbf16>
    %442 = arith.truncf %439 : vector<16x8xf32> to vector<16x8xbf16>
    %cst_380 = arith.constant dense<0.000000e+00> : vector<16x8xf32>
    %443 = tpu.matmul %441, %442, %cst_380 {dimension_numbers = #tpu.dot_dimension_numbers<[1], [0], [0], [1], [0, 0, 1, 1], [], []>} : vector<16x16xbf16>, vector<16x8xbf16>, vector<16x8xf32> -> vector<16x8xf32>
    %444 = arith.addf %436, %443 : vector<16x8xf32>
    %c6_381 = arith.constant 6 : index
    %c0_382 = arith.constant 0 : index
    %c0_383 = arith.constant 0 : index
    %445 = vector.load %arg34[%c6_381, %c0_382, %c0_383] : memref<9x32x8xbf16, #tpu.memory_space<vmem>>, vector<1x32x8xbf16>
    %446 = vector.shape_cast %445 : vector<1x32x8xbf16> to vector<32x8xbf16>
    %cst_384 = arith.constant dense<0.000000e+00> : vector<16x8xf32>
    %447 = tpu.matmul %395, %446, %cst_384 {dimension_numbers = #tpu.dot_dimension_numbers<[1], [0], [0], [1], [0, 0, 1, 1], [], []>} : vector<16x32xbf16>, vector<32x8xbf16>, vector<16x8xf32> -> vector<16x8xf32>
    %c6_385 = arith.constant 6 : index
    %c0_386 = arith.constant 0 : index
    %c0_387 = arith.constant 0 : index
    %448 = vector.load %arg5[%c6_385, %c0_386, %c0_387] : memref<9x16x16xbf16, #tpu.memory_space<vmem>>, vector<1x16x16xbf16>
    %449 = vector.shape_cast %448 : vector<1x16x16xbf16> to vector<16x16xbf16>
    %450 = arith.truncf %447 : vector<16x8xf32> to vector<16x8xbf16>
    %cst_388 = arith.constant dense<0.000000e+00> : vector<16x8xf32>
    %451 = tpu.matmul %449, %450, %cst_388 {dimension_numbers = #tpu.dot_dimension_numbers<[1], [0], [0], [1], [0, 0, 1, 1], [], []>} : vector<16x16xbf16>, vector<16x8xbf16>, vector<16x8xf32> -> vector<16x8xf32>
    %452 = arith.addf %444, %451 : vector<16x8xf32>
    %c7_389 = arith.constant 7 : index
    %c0_390 = arith.constant 0 : index
    %c0_391 = arith.constant 0 : index
    %453 = vector.load %arg34[%c7_389, %c0_390, %c0_391] : memref<9x32x8xbf16, #tpu.memory_space<vmem>>, vector<1x32x8xbf16>
    %454 = vector.shape_cast %453 : vector<1x32x8xbf16> to vector<32x8xbf16>
    %cst_392 = arith.constant dense<0.000000e+00> : vector<16x8xf32>
    %455 = tpu.matmul %395, %454, %cst_392 {dimension_numbers = #tpu.dot_dimension_numbers<[1], [0], [0], [1], [0, 0, 1, 1], [], []>} : vector<16x32xbf16>, vector<32x8xbf16>, vector<16x8xf32> -> vector<16x8xf32>
    %c7_393 = arith.constant 7 : index
    %c0_394 = arith.constant 0 : index
    %c0_395 = arith.constant 0 : index
    %456 = vector.load %arg5[%c7_393, %c0_394, %c0_395] : memref<9x16x16xbf16, #tpu.memory_space<vmem>>, vector<1x16x16xbf16>
    %457 = vector.shape_cast %456 : vector<1x16x16xbf16> to vector<16x16xbf16>
    %458 = arith.truncf %455 : vector<16x8xf32> to vector<16x8xbf16>
    %cst_396 = arith.constant dense<0.000000e+00> : vector<16x8xf32>
    %459 = tpu.matmul %457, %458, %cst_396 {dimension_numbers = #tpu.dot_dimension_numbers<[1], [0], [0], [1], [0, 0, 1, 1], [], []>} : vector<16x16xbf16>, vector<16x8xbf16>, vector<16x8xf32> -> vector<16x8xf32>
    %460 = arith.addf %452, %459 : vector<16x8xf32>
    %c8_397 = arith.constant 8 : index
    %c0_398 = arith.constant 0 : index
    %c0_399 = arith.constant 0 : index
    %461 = vector.load %arg34[%c8_397, %c0_398, %c0_399] : memref<9x32x8xbf16, #tpu.memory_space<vmem>>, vector<1x32x8xbf16>
    %462 = vector.shape_cast %461 : vector<1x32x8xbf16> to vector<32x8xbf16>
    %cst_400 = arith.constant dense<0.000000e+00> : vector<16x8xf32>
    %463 = tpu.matmul %395, %462, %cst_400 {dimension_numbers = #tpu.dot_dimension_numbers<[1], [0], [0], [1], [0, 0, 1, 1], [], []>} : vector<16x32xbf16>, vector<32x8xbf16>, vector<16x8xf32> -> vector<16x8xf32>
    %c8_401 = arith.constant 8 : index
    %c0_402 = arith.constant 0 : index
    %c0_403 = arith.constant 0 : index
    %464 = vector.load %arg5[%c8_401, %c0_402, %c0_403] : memref<9x16x16xbf16, #tpu.memory_space<vmem>>, vector<1x16x16xbf16>
    %465 = vector.shape_cast %464 : vector<1x16x16xbf16> to vector<16x16xbf16>
    %466 = arith.truncf %463 : vector<16x8xf32> to vector<16x8xbf16>
    %cst_404 = arith.constant dense<0.000000e+00> : vector<16x8xf32>
    %467 = tpu.matmul %465, %466, %cst_404 {dimension_numbers = #tpu.dot_dimension_numbers<[1], [0], [0], [1], [0, 0, 1, 1], [], []>} : vector<16x16xbf16>, vector<16x8xbf16>, vector<16x8xf32> -> vector<16x8xf32>
    %468 = arith.addf %460, %467 : vector<16x8xf32>
    %cst_405 = arith.constant 0.000000e+00 : f32
    %469 = vector.broadcast %cst_405 : f32 to vector<16x16xf32>
    %c0_406 = arith.constant 0 : index
    %c0_407 = arith.constant 0 : index
    %470 = vector.load %arg35[%c0_406, %c0_407] : memref<1x32xf32, #tpu.memory_space<vmem>>, vector<1x16xf32>
    %471 = vector.broadcast %470 : vector<1x16xf32> to vector<16x16xf32>
    %472 = arith.mulf %266, %471 : vector<16x16xf32>
    %c0_408 = arith.constant 0 : index
    %c0_409 = arith.constant 0 : index
    %473 = vector.load %arg36[%c0_408, %c0_409] : memref<1x32xf32, #tpu.memory_space<vmem>>, vector<1x16xf32>
    %474 = vector.broadcast %473 : vector<1x16xf32> to vector<16x16xf32>
    %475 = arith.addf %472, %474 : vector<16x16xf32>
    %cst_410 = arith.constant 0.000000e+00 : f32
    %476 = vector.broadcast %cst_410 : f32 to vector<16x16xf32>
    %477 = arith.maximumf %475, %476 : vector<16x16xf32>
    %c0_411 = arith.constant 0 : index
    %c0_412 = arith.constant 0 : index
    %478 = vector.load %arg37[%c0_411, %c0_412] : memref<32x16xbf16, #tpu.memory_space<vmem>>, vector<16x16xbf16>
    %479 = arith.truncf %477 : vector<16x16xf32> to vector<16x16xbf16>
    %cst_413 = arith.constant dense<0.000000e+00> : vector<16x16xf32>
    %480 = tpu.matmul %479, %478, %cst_413 {dimension_numbers = #tpu.dot_dimension_numbers<[1], [0], [0], [1], [0, 0, 1, 1], [], []>} : vector<16x16xbf16>, vector<16x16xbf16>, vector<16x16xf32> -> vector<16x16xf32>
    %481 = arith.addf %469, %480 : vector<16x16xf32>
    %c0_414 = arith.constant 0 : index
    %c16_415 = arith.constant 16 : index
    %482 = vector.load %arg35[%c0_414, %c16_415] : memref<1x32xf32, #tpu.memory_space<vmem>>, vector<1x8xf32>
    %483 = vector.broadcast %482 : vector<1x8xf32> to vector<16x8xf32>
    %484 = arith.mulf %361, %483 : vector<16x8xf32>
    %c0_416 = arith.constant 0 : index
    %c16_417 = arith.constant 16 : index
    %485 = vector.load %arg36[%c0_416, %c16_417] : memref<1x32xf32, #tpu.memory_space<vmem>>, vector<1x8xf32>
    %486 = vector.broadcast %485 : vector<1x8xf32> to vector<16x8xf32>
    %487 = arith.addf %484, %486 : vector<16x8xf32>
    %cst_418 = arith.constant 0.000000e+00 : f32
    %488 = vector.broadcast %cst_418 : f32 to vector<16x8xf32>
    %489 = arith.maximumf %487, %488 : vector<16x8xf32>
    %c16_419 = arith.constant 16 : index
    %c0_420 = arith.constant 0 : index
    %490 = vector.load %arg37[%c16_419, %c0_420] : memref<32x16xbf16, #tpu.memory_space<vmem>>, vector<8x16xbf16>
    %491 = arith.truncf %489 : vector<16x8xf32> to vector<16x8xbf16>
    %cst_421 = arith.constant dense<0.000000e+00> : vector<16x16xf32>
    %492 = tpu.matmul %491, %490, %cst_421 {dimension_numbers = #tpu.dot_dimension_numbers<[1], [0], [0], [1], [0, 0, 1, 1], [], []>} : vector<16x8xbf16>, vector<8x16xbf16>, vector<16x16xf32> -> vector<16x16xf32>
    %493 = arith.addf %481, %492 : vector<16x16xf32>
    %c0_422 = arith.constant 0 : index
    %c24_423 = arith.constant 24 : index
    %494 = vector.load %arg35[%c0_422, %c24_423] : memref<1x32xf32, #tpu.memory_space<vmem>>, vector<1x8xf32>
    %495 = vector.broadcast %494 : vector<1x8xf32> to vector<16x8xf32>
    %496 = arith.mulf %468, %495 : vector<16x8xf32>
    %c0_424 = arith.constant 0 : index
    %c24_425 = arith.constant 24 : index
    %497 = vector.load %arg36[%c0_424, %c24_425] : memref<1x32xf32, #tpu.memory_space<vmem>>, vector<1x8xf32>
    %498 = vector.broadcast %497 : vector<1x8xf32> to vector<16x8xf32>
    %499 = arith.addf %496, %498 : vector<16x8xf32>
    %cst_426 = arith.constant 0.000000e+00 : f32
    %500 = vector.broadcast %cst_426 : f32 to vector<16x8xf32>
    %501 = arith.maximumf %499, %500 : vector<16x8xf32>
    %c24_427 = arith.constant 24 : index
    %c0_428 = arith.constant 0 : index
    %502 = vector.load %arg37[%c24_427, %c0_428] : memref<32x16xbf16, #tpu.memory_space<vmem>>, vector<8x16xbf16>
    %503 = arith.truncf %501 : vector<16x8xf32> to vector<16x8xbf16>
    %cst_429 = arith.constant dense<0.000000e+00> : vector<16x16xf32>
    %504 = tpu.matmul %503, %502, %cst_429 {dimension_numbers = #tpu.dot_dimension_numbers<[1], [0], [0], [1], [0, 0, 1, 1], [], []>} : vector<16x8xbf16>, vector<8x16xbf16>, vector<16x16xf32> -> vector<16x16xf32>
    %505 = arith.addf %493, %504 : vector<16x16xf32>
    %c0_430 = arith.constant 0 : index
    %c0_431 = arith.constant 0 : index
    %c0_432 = arith.constant 0 : index
    %506 = vector.load %arg38[%c0_430, %c0_431, %c0_432] : memref<1x16x16xf32, #tpu.memory_space<vmem>>, vector<1x16x16xf32>
    %507 = vector.shape_cast %506 : vector<1x16x16xf32> to vector<16x16xf32>
    %508 = vector.shape_cast %505 : vector<16x16xf32> to vector<1x16x16xf32>
    tpu.vector_store %arg38[%c0_430, %c0_431, %c0_432], %508 {strides = array<i32>} : memref<1x16x16xf32, #tpu.memory_space<vmem>>, vector<1x16x16xf32>,
    return
  }
  func.func @transform_0(%arg0: i32) -> (i32, i32, i32) {
    %c0_i32 = arith.constant 0 : i32
    %c0_i32_0 = arith.constant 0 : i32
    %c0_i32_1 = arith.constant 0 : i32
    return %arg0, %c0_i32, %c0_i32_0 : i32, i32, i32
  }
  func.func @transform_1(%arg0: i32) -> (i32, i32, i32) {
    %c0_i32 = arith.constant 0 : i32
    %c0_i32_0 = arith.constant 0 : i32
    %c0_i32_1 = arith.constant 0 : i32
    %c0_i32_2 = arith.constant 0 : i32
    return %c0_i32, %c0_i32_0, %c0_i32_1 : i32, i32, i32
  }
  func.func @transform_2(%arg0: i32) -> (i32, i32, i32) {
    %c0_i32 = arith.constant 0 : i32
    %c0_i32_0 = arith.constant 0 : i32
    %c0_i32_1 = arith.constant 0 : i32
    %c0_i32_2 = arith.constant 0 : i32
    return %c0_i32, %c0_i32_0, %c0_i32_1 : i32, i32, i32
  }
  func.func @transform_3(%arg0: i32) -> (i32, i32) {
    %c0_i32 = arith.constant 0 : i32
    %c0_i32_0 = arith.constant 0 : i32
    %c0_i32_1 = arith.constant 0 : i32
    return %c0_i32, %c0_i32_0 : i32, i32
  }
  func.func @transform_4(%arg0: i32) -> (i32, i32, i32) {
    %c0_i32 = arith.constant 0 : i32
    %c0_i32_0 = arith.constant 0 : i32
    %c0_i32_1 = arith.constant 0 : i32
    %c0_i32_2 = arith.constant 0 : i32
    return %c0_i32, %c0_i32_0, %c0_i32_1 : i32, i32, i32
  }
  func.func @transform_5(%arg0: i32) -> (i32, i32) {
    %c0_i32 = arith.constant 0 : i32
    %c0_i32_0 = arith.constant 0 : i32
    %c0_i32_1 = arith.constant 0 : i32
    return %c0_i32, %c0_i32_0 : i32, i32
  }
  func.func @transform_6(%arg0: i32) -> (i32, i32) {
    %c0_i32 = arith.constant 0 : i32
    %c0_i32_0 = arith.constant 0 : i32
    %c0_i32_1 = arith.constant 0 : i32
    return %c0_i32, %c0_i32_0 : i32, i32
  }
  func.func @transform_7(%arg0: i32) -> (i32, i32) {
    %c0_i32 = arith.constant 0 : i32
    %c0_i32_0 = arith.constant 0 : i32
    %c0_i32_1 = arith.constant 0 : i32
    return %c0_i32, %c0_i32_0 : i32, i32
  }
  func.func @transform_8(%arg0: i32) -> (i32, i32) {
    %c0_i32 = arith.constant 0 : i32
    %c0_i32_0 = arith.constant 0 : i32
    %c0_i32_1 = arith.constant 0 : i32
    return %c0_i32, %c0_i32_0 : i32, i32
  }
  func.func @transform_9(%arg0: i32) -> (i32, i32) {
    %c0_i32 = arith.constant 0 : i32
    %c0_i32_0 = arith.constant 0 : i32
    %c0_i32_1 = arith.constant 0 : i32
    return %c0_i32, %c0_i32_0 : i32, i32
  }
  func.func @transform_10(%arg0: i32) -> (i32, i32) {
    %c0_i32 = arith.constant 0 : i32
    %c0_i32_0 = arith.constant 0 : i32
    %c0_i32_1 = arith.constant 0 : i32
    return %c0_i32, %c0_i32_0 : i32, i32
  }
  func.func @transform_11(%arg0: i32) -> (i32, i32) {
    %c0_i32 = arith.constant 0 : i32
    %c0_i32_0 = arith.constant 0 : i32
    %c0_i32_1 = arith.constant 0 : i32
    return %c0_i32, %c0_i32_0 : i32, i32
  }
  func.func @transform_12(%arg0: i32) -> (i32, i32, i32) {
    %c0_i32 = arith.constant 0 : i32
    %c0_i32_0 = arith.constant 0 : i32
    %c0_i32_1 = arith.constant 0 : i32
    %c0_i32_2 = arith.constant 0 : i32
    return %c0_i32, %c0_i32_0, %c0_i32_1 : i32, i32, i32
  }
  func.func @transform_13(%arg0: i32) -> (i32, i32) {
    %c0_i32 = arith.constant 0 : i32
    %c0_i32_0 = arith.constant 0 : i32
    %c0_i32_1 = arith.constant 0 : i32
    return %c0_i32, %c0_i32_0 : i32, i32
  }
  func.func @transform_14(%arg0: i32) -> (i32, i32) {
    %c0_i32 = arith.constant 0 : i32
    %c0_i32_0 = arith.constant 0 : i32
    %c0_i32_1 = arith.constant 0 : i32
    return %c0_i32, %c0_i32_0 : i32, i32
  }
  func.func @transform_15(%arg0: i32) -> (i32, i32) {
    %c0_i32 = arith.constant 0 : i32
    %c0_i32_0 = arith.constant 0 : i32
    %c0_i32_1 = arith.constant 0 : i32
    return %c0_i32, %c0_i32_0 : i32, i32
  }
  func.func @transform_16(%arg0: i32) -> (i32, i32) {
    %c0_i32 = arith.constant 0 : i32
    %c0_i32_0 = arith.constant 0 : i32
    %c0_i32_1 = arith.constant 0 : i32
    return %c0_i32, %c0_i32_0 : i32, i32
  }
  func.func @transform_17(%arg0: i32) -> (i32, i32) {
    %c0_i32 = arith.constant 0 : i32
    %c0_i32_0 = arith.constant 0 : i32
    %c0_i32_1 = arith.constant 0 : i32
    return %c0_i32, %c0_i32_0 : i32, i32
  }
  func.func @transform_18(%arg0: i32) -> (i32, i32, i32) {
    %c0_i32 = arith.constant 0 : i32
    %c0_i32_0 = arith.constant 0 : i32
    %c0_i32_1 = arith.constant 0 : i32
    %c0_i32_2 = arith.constant 0 : i32
    return %c0_i32, %c0_i32_0, %c0_i32_1 : i32, i32, i32
  }
  func.func @transform_19(%arg0: i32) -> (i32, i32) {
    %c0_i32 = arith.constant 0 : i32
    %c0_i32_0 = arith.constant 0 : i32
    %c0_i32_1 = arith.constant 0 : i32
    return %c0_i32, %c0_i32_0 : i32, i32
  }
  func.func @transform_20(%arg0: i32) -> (i32, i32) {
    %c0_i32 = arith.constant 0 : i32
    %c0_i32_0 = arith.constant 0 : i32
    %c0_i32_1 = arith.constant 0 : i32
    return %c0_i32, %c0_i32_0 : i32, i32
  }
  func.func @transform_21(%arg0: i32) -> (i32, i32) {
    %c0_i32 = arith.constant 0 : i32
    %c0_i32_0 = arith.constant 0 : i32
    %c0_i32_1 = arith.constant 0 : i32
    return %c0_i32, %c0_i32_0 : i32, i32
  }
  func.func @transform_22(%arg0: i32) -> (i32, i32) {
    %c0_i32 = arith.constant 0 : i32
    %c0_i32_0 = arith.constant 0 : i32
    %c0_i32_1 = arith.constant 0 : i32
    return %c0_i32, %c0_i32_0 : i32, i32
  }
  func.func @transform_23(%arg0: i32) -> (i32, i32) {
    %c0_i32 = arith.constant 0 : i32
    %c0_i32_0 = arith.constant 0 : i32
    %c0_i32_1 = arith.constant 0 : i32
    return %c0_i32, %c0_i32_0 : i32, i32
  }
  func.func @transform_24(%arg0: i32) -> (i32, i32) {
    %c0_i32 = arith.constant 0 : i32
    %c0_i32_0 = arith.constant 0 : i32
    %c0_i32_1 = arith.constant 0 : i32
    return %c0_i32, %c0_i32_0 : i32, i32
  }
  func.func @transform_25(%arg0: i32) -> (i32, i32) {
    %c0_i32 = arith.constant 0 : i32
    %c0_i32_0 = arith.constant 0 : i32
    %c0_i32_1 = arith.constant 0 : i32
    return %c0_i32, %c0_i32_0 : i32, i32
  }
  func.func @transform_26(%arg0: i32) -> (i32, i32) {
    %c0_i32 = arith.constant 0 : i32
    %c0_i32_0 = arith.constant 0 : i32
    %c0_i32_1 = arith.constant 0 : i32
    return %c0_i32, %c0_i32_0 : i32, i32
  }
  func.func @transform_27(%arg0: i32) -> (i32, i32, i32) {
    %c0_i32 = arith.constant 0 : i32
    %c0_i32_0 = arith.constant 0 : i32
    %c0_i32_1 = arith.constant 0 : i32
    %c0_i32_2 = arith.constant 0 : i32
    return %c0_i32, %c0_i32_0, %c0_i32_1 : i32, i32, i32
  }
  func.func @transform_28(%arg0: i32) -> (i32, i32) {
    %c0_i32 = arith.constant 0 : i32
    %c0_i32_0 = arith.constant 0 : i32
    %c0_i32_1 = arith.constant 0 : i32
    return %c0_i32, %c0_i32_0 : i32, i32
  }
  func.func @transform_29(%arg0: i32) -> (i32, i32) {
    %c0_i32 = arith.constant 0 : i32
    %c0_i32_0 = arith.constant 0 : i32
    %c0_i32_1 = arith.constant 0 : i32
    return %c0_i32, %c0_i32_0 : i32, i32
  }
  func.func @transform_30(%arg0: i32) -> (i32, i32) {
    %c0_i32 = arith.constant 0 : i32
    %c0_i32_0 = arith.constant 0 : i32
    %c0_i32_1 = arith.constant 0 : i32
    return %c0_i32, %c0_i32_0 : i32, i32
  }
  func.func @transform_31(%arg0: i32) -> (i32, i32) {
    %c0_i32 = arith.constant 0 : i32
    %c0_i32_0 = arith.constant 0 : i32
    %c0_i32_1 = arith.constant 0 : i32
    return %c0_i32, %c0_i32_0 : i32, i32
  }
  func.func @transform_32(%arg0: i32) -> (i32, i32) {
    %c0_i32 = arith.constant 0 : i32
    %c0_i32_0 = arith.constant 0 : i32
    %c0_i32_1 = arith.constant 0 : i32
    return %c0_i32, %c0_i32_0 : i32, i32
  }
  func.func @transform_33(%arg0: i32) -> (i32, i32, i32) {
    %c0_i32 = arith.constant 0 : i32
    %c0_i32_0 = arith.constant 0 : i32
    %c0_i32_1 = arith.constant 0 : i32
    %c0_i32_2 = arith.constant 0 : i32
    return %c0_i32, %c0_i32_0, %c0_i32_1 : i32, i32, i32
  }
  func.func @transform_34(%arg0: i32) -> (i32, i32) {
    %c0_i32 = arith.constant 0 : i32
    %c0_i32_0 = arith.constant 0 : i32
    %c0_i32_1 = arith.constant 0 : i32
    return %c0_i32, %c0_i32_0 : i32, i32
  }
  func.func @transform_35(%arg0: i32) -> (i32, i32) {
    %c0_i32 = arith.constant 0 : i32
    %c0_i32_0 = arith.constant 0 : i32
    %c0_i32_1 = arith.constant 0 : i32
    return %c0_i32, %c0_i32_0 : i32, i32
  }
  func.func @transform_36(%arg0: i32) -> (i32, i32) {
    %c0_i32 = arith.constant 0 : i32
    %c0_i32_0 = arith.constant 0 : i32
    %c0_i32_1 = arith.constant 0 : i32
    return %c0_i32, %c0_i32_0 : i32, i32
  }
  func.func @transform_37(%arg0: i32) -> (i32, i32, i32) {
    %c0_i32 = arith.constant 0 : i32
    %c0_i32_0 = arith.constant 0 : i32
    %c0_i32_1 = arith.constant 0 : i32
    return %arg0, %c0_i32, %c0_i32_0 : i32, i32, i32
  }
}

</mosaic_0001>

<llo_original>
// kernel: smaller_deep_cnn300_forward.1
$region0: #{smaller_deep_cnn300_forward.1}
  #allocation0 [shape = 'u32[]', space=smem, size = 0x4, offset = 0x4, fixed_abs, tag = 'smem constant byte address 0x4 - core index']
  #allocation1 [shape = 'u32[144,128]{1,0:T(1,128)}', space=vmem, size = 0x12000, scoped, tag = 'internal scratch']
  %s0 = inlined_call_operand.smem [shape: u32[38], index: -1, kind: input, shape index: {}]
  %s1 = sld [smem:[%s0]]
  %s2 = scalar_lea.smem %s0, 1
  %s3 = sld [smem:[%s2]]
  %s4 = scalar_lea.smem %s0, 2
  %s5 = sld [smem:[%s4]]
  %s6 = scalar_lea.smem %s0, 3
  %s7 = sld [smem:[%s6]]
  %s8 = scalar_lea.smem %s0, 4
  %s9 = sld [smem:[%s8]]
  %s10 = scalar_lea.smem %s0, 5
  %s11 = sld [smem:[%s10]]
  %s12 = scalar_lea.smem %s0, 6
  %s13 = sld [smem:[%s12]]
  %s14 = scalar_lea.smem %s0, 7
  %s15 = sld [smem:[%s14]]
  %s16 = scalar_lea.smem %s0, 8
  %s17 = sld [smem:[%s16]]
  %s18 = scalar_lea.smem %s0, 9
  %s19 = sld [smem:[%s18]]
  %s20 = scalar_lea.smem %s0, 10
  %s21 = sld [smem:[%s20]]
  %s22 = scalar_lea.smem %s0, 11
  %s23 = sld [smem:[%s22]]
  %s24 = scalar_lea.smem %s0, 12
  %s25 = sld [smem:[%s24]]
  %s26 = scalar_lea.smem %s0, 13
  %s27 = sld [smem:[%s26]]
  %s28 = scalar_lea.smem %s0, 14
  %s29 = sld [smem:[%s28]]
  %s30 = scalar_lea.smem %s0, 15
  %s31 = sld [smem:[%s30]]
  %s32 = scalar_lea.smem %s0, 16
  %s33 = sld [smem:[%s32]]
  %s34 = scalar_lea.smem %s0, 17
  %s35 = sld [smem:[%s34]]
  %s36 = scalar_lea.smem %s0, 18
  %s37 = sld [smem:[%s36]]
  %s38 = scalar_lea.smem %s0, 19
  %s39 = sld [smem:[%s38]]
  %s40 = scalar_lea.smem %s0, 20
  %s41 = sld [smem:[%s40]]
  %s42 = scalar_lea.smem %s0, 21
  %s43 = sld [smem:[%s42]]
  %s44 = scalar_lea.smem %s0, 22
  %s45 = sld [smem:[%s44]]
  %s46 = scalar_lea.smem %s0, 23
  %s47 = sld [smem:[%s46]]
  %s48 = scalar_lea.smem %s0, 24
  %s49 = sld [smem:[%s48]]
  %s50 = scalar_lea.smem %s0, 25
  %s51 = sld [smem:[%s50]]
  %s52 = scalar_lea.smem %s0, 26
  %s53 = sld [smem:[%s52]]
  %s54 = scalar_lea.smem %s0, 27
  %s55 = sld [smem:[%s54]]
  %s56 = scalar_lea.smem %s0, 28
  %s57 = sld [smem:[%s56]]
  %s58 = scalar_lea.smem %s0, 29
  %s59 = sld [smem:[%s58]]
  %s60 = scalar_lea.smem %s0, 30
  %s61 = sld [smem:[%s60]]
  %s62 = scalar_lea.smem %s0, 31
  %s63 = sld [smem:[%s62]]
  %s64 = scalar_lea.smem %s0, 32
  %s65 = sld [smem:[%s64]]
  %s66 = scalar_lea.smem %s0, 33
  %s67 = sld [smem:[%s66]]
  %s68 = scalar_lea.smem %s0, 34
  %s69 = sld [smem:[%s68]]
  %s70 = scalar_lea.smem %s0, 35
  %s71 = sld [smem:[%s70]]
  %s72 = scalar_lea.smem %s0, 36
  %s73 = sld [smem:[%s72]]
  %s74 = scalar_lea.smem %s0, 37
  %s75 = sld [smem:[%s74]]
  %s76 = sld [smem:[#allocation0]]
  $region181: #{smaller_deep_cnn300_forward.1} parent=0
    _
  %s78 = ssub.s32 1, %s76
  %s79 = scalar_select 0, %s78, %s76
  $region1: #{smaller_deep_cnn300_forward.1} parent=0
    #allocation2 [shape = 'u8[16384]{0}', space=vmem, size = 0x4000, scoped, tag = 'output window, operand 0']
    #allocation3 [shape = 's32[2]{0}', space=sflag, size = 0x8, scoped, tag = 'scoped memory for smaller_deep_cnn300_forward.1']
    %80 = vsyncpa [#allocation3], 0
    %s81 = scalar_lea.sflag [#allocation3], 1
    %82 = vsyncpa %s81, 0
    loop: start=0, step=1, limit=4
    $region2: #{smaller_deep_cnn300_forward.1} parent=1 // loop_pre_header
      _
    $region3: #{smaller_deep_cnn300_forward.1} parent=1 // loop_header
      %s84 = sphi 0, %s88
      %p85 = scmp.ge.s32.totalorder %s84, 4
      %s94 = sphi 0, %s96
      %s97 = sphi 0, %s94
      %s98 = sphi 0, %s97
      %s114 = sphi 0, %s98
      %s118 = sphi 0, %s118
      %s120 = sphi 0, %s118
      %s121 = sphi 0, %s120
      %s135 = sphi 0, %s121
      %s139 = sphi 0, %s139
      %s141 = sphi 0, %s139
      %s142 = sphi 0, %s141
      %s156 = sphi 0, %s142
      %s160 = sphi 0, %s160
      %s162 = sphi 0, %s160
      %s163 = sphi 0, %s162
      %s177 = sphi 0, %s163
      %s181 = sphi 0, %s181
      %s183 = sphi 0, %s181
      %s184 = sphi 0, %s183
      %s198 = sphi 0, %s184
      %s202 = sphi 0, %s202
      %s204 = sphi 0, %s202
      %s205 = sphi 0, %s204
      %s219 = sphi 0, %s205
      %s223 = sphi 0, %s223
      %s225 = sphi 0, %s223
      %s226 = sphi 0, %s225
      %s240 = sphi 0, %s226
      %s244 = sphi 0, %s244
      %s246 = sphi 0, %s244
      %s247 = sphi 0, %s246
      %s261 = sphi 0, %s247
      %s265 = sphi 0, %s265
      %s267 = sphi 0, %s265
      %s268 = sphi 0, %s267
      %s282 = sphi 0, %s268
      %s286 = sphi 0, %s286
      %s288 = sphi 0, %s286
      %s289 = sphi 0, %s288
      %s303 = sphi 0, %s289
      %s307 = sphi 0, %s307
      %s309 = sphi 0, %s307
      %s310 = sphi 0, %s309
      %s324 = sphi 0, %s310
      %s328 = sphi 0, %s328
      %s330 = sphi 0, %s328
      %s331 = sphi 0, %s330
      %s345 = sphi 0, %s331
      %s349 = sphi 0, %s349
      %s351 = sphi 0, %s349
      %s352 = sphi 0, %s351
      %s366 = sphi 0, %s352
      %s370 = sphi 0, %s370
      %s372 = sphi 0, %s370
      %s373 = sphi 0, %s372
      %s387 = sphi 0, %s373
      %s391 = sphi 0, %s391
      %s393 = sphi 0, %s391
      %s394 = sphi 0, %s393
      %s408 = sphi 0, %s394
      %s412 = sphi 0, %s412
      %s414 = sphi 0, %s412
      %s415 = sphi 0, %s414
      %s429 = sphi 0, %s415
      %s433 = sphi 0, %s433
      %s435 = sphi 0, %s433
      %s436 = sphi 0, %s435
      %s450 = sphi 0, %s436
      %s454 = sphi 0, %s454
      %s456 = sphi 0, %s454
      %s457 = sphi 0, %s456
      %s471 = sphi 0, %s457
      %s475 = sphi 0, %s475
      %s477 = sphi 0, %s475
      %s478 = sphi 0, %s477
      %s492 = sphi 0, %s478
      %s496 = sphi 0, %s496
      %s498 = sphi 0, %s496
      %s499 = sphi 0, %s498
      %s513 = sphi 0, %s499
      %s517 = sphi 0, %s517
      %s519 = sphi 0, %s517
      %s520 = sphi 0, %s519
      %s534 = sphi 0, %s520
      %s538 = sphi 0, %s538
      %s540 = sphi 0, %s538
      %s541 = sphi 0, %s540
      %s555 = sphi 0, %s541
      %s559 = sphi 0, %s559
      %s561 = sphi 0, %s559
      %s562 = sphi 0, %s561
      %s576 = sphi 0, %s562
      %s580 = sphi 0, %s580
      %s582 = sphi 0, %s580
      %s583 = sphi 0, %s582
      %s597 = sphi 0, %s583
      %s601 = sphi 0, %s601
      %s603 = sphi 0, %s601
      %s604 = sphi 0, %s603
      %s618 = sphi 0, %s604
      %s622 = sphi 0, %s622
      %s624 = sphi 0, %s622
      %s625 = sphi 0, %s624
      %s639 = sphi 0, %s625
      %s643 = sphi 0, %s643
      %s645 = sphi 0, %s643
      %s646 = sphi 0, %s645
      %s660 = sphi 0, %s646
      %s664 = sphi 0, %s664
      %s666 = sphi 0, %s664
      %s667 = sphi 0, %s666
      %s681 = sphi 0, %s667
      %s685 = sphi 0, %s685
      %s687 = sphi 0, %s685
      %s688 = sphi 0, %s687
      %s702 = sphi 0, %s688
      %s706 = sphi 0, %s706
      %s708 = sphi 0, %s706
      %s709 = sphi 0, %s708
      %s723 = sphi 0, %s709
      %s727 = sphi 0, %s727
      %s729 = sphi 0, %s727
      %s730 = sphi 0, %s729
      %s744 = sphi 0, %s730
      %s748 = sphi 0, %s748
      %s750 = sphi 0, %s748
      %s751 = sphi 0, %s750
      %s765 = sphi 0, %s751
      %s769 = sphi 0, %s769
      %s771 = sphi 0, %s769
      %s772 = sphi 0, %s771
      %s786 = sphi 0, %s772
      %s790 = sphi 0, %s790
      %s792 = sphi 0, %s790
      %s793 = sphi 0, %s792
      %s807 = sphi 0, %s793
      %s811 = sphi 0, %s811
      %s813 = sphi 0, %s811
      %s814 = sphi 0, %s813
      %s828 = sphi 0, %s814
      %s832 = sphi 0, %s832
      %s834 = sphi 0, %s832
      %s835 = sphi 0, %s834
      %s849 = sphi 0, %s835
      %s853 = sphi 0, %s853
      %s855 = sphi 0, %s853
      %s856 = sphi 0, %s855
      %s870 = sphi 0, %s856
      %s876 = sphi 0, %s878
      %s879 = sphi 0, %s876
      %s880 = sphi 0, %s879
      %s896 = sphi 0, %s880
    $region4: #{smaller_deep_cnn300_forward.1} parent=1 // loop_header_branch
      %87 = sbr.rel (%p85) target = $region8
    $region5: #{smaller_deep_cnn300_forward.1} parent=1 // loop_body
      %s89 = ssub.s32 %s84, 1
      %s90 = ssub.s32 %s84, 2
      %s91 = sadd.s32 %s84, 1
      %s92 = ssub.s32 %s84, %s91
      %p93 = scmp.eq.s32.totalorder %s92, 0
      %s95 = sadd.s32 %s94, 1
      %s96 = scalar_select %p93, %s94, %s95
      %p99 = pneg %p93
      %p100 = scmp.eq.s32.totalorder %s84, 1
      %p101 = por %p99, %p100
      %p102 = scmp.ne.s32.totalorder %s94, %s97
      %p103 = scmp.eq.s32.totalorder %s84, 0
      %p104 = por %p102, %p103
      %p105 = scmp.ne.s32.totalorder %s94, %s97
      %p106 = scmp.eq.s32.totalorder %s89, 1
      %p107 = por %p105, %p106
      %p108 = scmp.ne.s32.totalorder %s97, %s98
      %p109 = scmp.eq.s32.totalorder %s89, 0
      %p110 = por %p108, %p109
      %p111 = scmp.ne.s32.totalorder %s97, %s98
      %p112 = scmp.eq.s32.totalorder %s90, 1
      %p113 = por %p111, %p112
      %p115 = scmp.ne.s32.totalorder %s98, %s114
      %p116 = scmp.eq.s32.totalorder %s90, 0
      %p117 = por %p115, %p116
      %s119 = sadd.s32 %s118, 1
      %p122 = scmp.eq.s32.totalorder %s84, 1
      %p123 = scmp.ne.s32.totalorder %s118, %s120
      %p124 = scmp.eq.s32.totalorder %s84, 0
      %p125 = por %p123, %p124
      %p126 = scmp.ne.s32.totalorder %s118, %s120
      %p127 = scmp.eq.s32.totalorder %s89, 1
      %p128 = por %p126, %p127
      %p129 = scmp.ne.s32.totalorder %s120, %s121
      %p130 = scmp.eq.s32.totalorder %s89, 0
      %p131 = por %p129, %p130
      %p132 = scmp.ne.s32.totalorder %s120, %s121
      %p133 = scmp.eq.s32.totalorder %s90, 1
      %p134 = por %p132, %p133
      %p136 = scmp.ne.s32.totalorder %s121, %s135
      %p137 = scmp.eq.s32.totalorder %s90, 0
      %p138 = por %p136, %p137
      %s140 = sadd.s32 %s139, 1
      %p143 = scmp.eq.s32.totalorder %s84, 1
      %p144 = scmp.ne.s32.totalorder %s139, %s141
      %p145 = scmp.eq.s32.totalorder %s84, 0
      %p146 = por %p144, %p145
      %p147 = scmp.ne.s32.totalorder %s139, %s141
      %p148 = scmp.eq.s32.totalorder %s89, 1
      %p149 = por %p147, %p148
      %p150 = scmp.ne.s32.totalorder %s141, %s142
      %p151 = scmp.eq.s32.totalorder %s89, 0
      %p152 = por %p150, %p151
      %p153 = scmp.ne.s32.totalorder %s141, %s142
      %p154 = scmp.eq.s32.totalorder %s90, 1
      %p155 = por %p153, %p154
      %p157 = scmp.ne.s32.totalorder %s142, %s156
      %p158 = scmp.eq.s32.totalorder %s90, 0
      %p159 = por %p157, %p158
      %s161 = sadd.s32 %s160, 1
      %p164 = scmp.eq.s32.totalorder %s84, 1
      %p165 = scmp.ne.s32.totalorder %s160, %s162
      %p166 = scmp.eq.s32.totalorder %s84, 0
      %p167 = por %p165, %p166
      %p168 = scmp.ne.s32.totalorder %s160, %s162
      %p169 = scmp.eq.s32.totalorder %s89, 1
      %p170 = por %p168, %p169
      %p171 = scmp.ne.s32.totalorder %s162, %s163
      %p172 = scmp.eq.s32.totalorder %s89, 0
      %p173 = por %p171, %p172
      %p174 = scmp.ne.s32.totalorder %s162, %s163
      %p175 = scmp.eq.s32.totalorder %s90, 1
      %p176 = por %p174, %p175
      %p178 = scmp.ne.s32.totalorder %s163, %s177
      %p179 = scmp.eq.s32.totalorder %s90, 0
      %p180 = por %p178, %p179
      %s182 = sadd.s32 %s181, 1
      %p185 = scmp.eq.s32.totalorder %s84, 1
      %p186 = scmp.ne.s32.totalorder %s181, %s183
      %p187 = scmp.eq.s32.totalorder %s84, 0
      %p188 = por %p186, %p187
      %p189 = scmp.ne.s32.totalorder %s181, %s183
      %p190 = scmp.eq.s32.totalorder %s89, 1
      %p191 = por %p189, %p190
      %p192 = scmp.ne.s32.totalorder %s183, %s184
      %p193 = scmp.eq.s32.totalorder %s89, 0
      %p194 = por %p192, %p193
      %p195 = scmp.ne.s32.totalorder %s183, %s184
      %p196 = scmp.eq.s32.totalorder %s90, 1
      %p197 = por %p195, %p196
      %p199 = scmp.ne.s32.totalorder %s184, %s198
      %p200 = scmp.eq.s32.totalorder %s90, 0
      %p201 = por %p199, %p200
      %s203 = sadd.s32 %s202, 1
      %p206 = scmp.eq.s32.totalorder %s84, 1
      %p207 = scmp.ne.s32.totalorder %s202, %s204
      %p208 = scmp.eq.s32.totalorder %s84, 0
      %p209 = por %p207, %p208
      %p210 = scmp.ne.s32.totalorder %s202, %s204
      %p211 = scmp.eq.s32.totalorder %s89, 1
      %p212 = por %p210, %p211
      %p213 = scmp.ne.s32.totalorder %s204, %s205
      %p214 = scmp.eq.s32.totalorder %s89, 0
      %p215 = por %p213, %p214
      %p216 = scmp.ne.s32.totalorder %s204, %s205
      %p217 = scmp.eq.s32.totalorder %s90, 1
      %p218 = por %p216, %p217
      %p220 = scmp.ne.s32.totalorder %s205, %s219
      %p221 = scmp.eq.s32.totalorder %s90, 0
      %p222 = por %p220, %p221
      %s224 = sadd.s32 %s223, 1
      %p227 = scmp.eq.s32.totalorder %s84, 1
      %p228 = scmp.ne.s32.totalorder %s223, %s225
      %p229 = scmp.eq.s32.totalorder %s84, 0
      %p230 = por %p228, %p229
      %p231 = scmp.ne.s32.totalorder %s223, %s225
      %p232 = scmp.eq.s32.totalorder %s89, 1
      %p233 = por %p231, %p232
      %p234 = scmp.ne.s32.totalorder %s225, %s226
      %p235 = scmp.eq.s32.totalorder %s89, 0
      %p236 = por %p234, %p235
      %p237 = scmp.ne.s32.totalorder %s225, %s226
      %p238 = scmp.eq.s32.totalorder %s90, 1
      %p239 = por %p237, %p238
      %p241 = scmp.ne.s32.totalorder %s226, %s240
      %p242 = scmp.eq.s32.totalorder %s90, 0
      %p243 = por %p241, %p242
      %s245 = sadd.s32 %s244, 1
      %p248 = scmp.eq.s32.totalorder %s84, 1
      %p249 = scmp.ne.s32.totalorder %s244, %s246
      %p250 = scmp.eq.s32.totalorder %s84, 0
      %p251 = por %p249, %p250
      %p252 = scmp.ne.s32.totalorder %s244, %s246
      %p253 = scmp.eq.s32.totalorder %s89, 1
      %p254 = por %p252, %p253
      %p255 = scmp.ne.s32.totalorder %s246, %s247
      %p256 = scmp.eq.s32.totalorder %s89, 0
      %p257 = por %p255, %p256
      %p258 = scmp.ne.s32.totalorder %s246, %s247
      %p259 = scmp.eq.s32.totalorder %s90, 1
      %p260 = por %p258, %p259
      %p262 = scmp.ne.s32.totalorder %s247, %s261
      %p263 = scmp.eq.s32.totalorder %s90, 0
      %p264 = por %p262, %p263
      %s266 = sadd.s32 %s265, 1
      %p269 = scmp.eq.s32.totalorder %s84, 1
      %p270 = scmp.ne.s32.totalorder %s265, %s267
      %p271 = scmp.eq.s32.totalorder %s84, 0
      %p272 = por %p270, %p271
      %p273 = scmp.ne.s32.totalorder %s265, %s267
      %p274 = scmp.eq.s32.totalorder %s89, 1
      %p275 = por %p273, %p274
      %p276 = scmp.ne.s32.totalorder %s267, %s268
      %p277 = scmp.eq.s32.totalorder %s89, 0
      %p278 = por %p276, %p277
      %p279 = scmp.ne.s32.totalorder %s267, %s268
      %p280 = scmp.eq.s32.totalorder %s90, 1
      %p281 = por %p279, %p280
      %p283 = scmp.ne.s32.totalorder %s268, %s282
      %p284 = scmp.eq.s32.totalorder %s90, 0
      %p285 = por %p283, %p284
      %s287 = sadd.s32 %s286, 1
      %p290 = scmp.eq.s32.totalorder %s84, 1
      %p291 = scmp.ne.s32.totalorder %s286, %s288
      %p292 = scmp.eq.s32.totalorder %s84, 0
      %p293 = por %p291, %p292
      %p294 = scmp.ne.s32.totalorder %s286, %s288
      %p295 = scmp.eq.s32.totalorder %s89, 1
      %p296 = por %p294, %p295
      %p297 = scmp.ne.s32.totalorder %s288, %s289
      %p298 = scmp.eq.s32.totalorder %s89, 0
      %p299 = por %p297, %p298
      %p300 = scmp.ne.s32.totalorder %s288, %s289
      %p301 = scmp.eq.s32.totalorder %s90, 1
      %p302 = por %p300, %p301
      %p304 = scmp.ne.s32.totalorder %s289, %s303
      %p305 = scmp.eq.s32.totalorder %s90, 0
      %p306 = por %p304, %p305
      %s308 = sadd.s32 %s307, 1
      %p311 = scmp.eq.s32.totalorder %s84, 1
      %p312 = scmp.ne.s32.totalorder %s307, %s309
      %p313 = scmp.eq.s32.totalorder %s84, 0
      %p314 = por %p312, %p313
      %p315 = scmp.ne.s32.totalorder %s307, %s309
      %p316 = scmp.eq.s32.totalorder %s89, 1
      %p317 = por %p315, %p316
      %p318 = scmp.ne.s32.totalorder %s309, %s310
      %p319 = scmp.eq.s32.totalorder %s89, 0
      %p320 = por %p318, %p319
      %p321 = scmp.ne.s32.totalorder %s309, %s310
      %p322 = scmp.eq.s32.totalorder %s90, 1
      %p323 = por %p321, %p322
      %p325 = scmp.ne.s32.totalorder %s310, %s324
      %p326 = scmp.eq.s32.totalorder %s90, 0
      %p327 = por %p325, %p326
      %s329 = sadd.s32 %s328, 1
      %p332 = scmp.eq.s32.totalorder %s84, 1
      %p333 = scmp.ne.s32.totalorder %s328, %s330
      %p334 = scmp.eq.s32.totalorder %s84, 0
      %p335 = por %p333, %p334
      %p336 = scmp.ne.s32.totalorder %s328, %s330
      %p337 = scmp.eq.s32.totalorder %s89, 1
      %p338 = por %p336, %p337
      %p339 = scmp.ne.s32.totalorder %s330, %s331
      %p340 = scmp.eq.s32.totalorder %s89, 0
      %p341 = por %p339, %p340
      %p342 = scmp.ne.s32.totalorder %s330, %s331
      %p343 = scmp.eq.s32.totalorder %s90, 1
      %p344 = por %p342, %p343
      %p346 = scmp.ne.s32.totalorder %s331, %s345
      %p347 = scmp.eq.s32.totalorder %s90, 0
      %p348 = por %p346, %p347
      %s350 = sadd.s32 %s349, 1
      %p353 = scmp.eq.s32.totalorder %s84, 1
      %p354 = scmp.ne.s32.totalorder %s349, %s351
      %p355 = scmp.eq.s32.totalorder %s84, 0
      %p356 = por %p354, %p355
      %p357 = scmp.ne.s32.totalorder %s349, %s351
      %p358 = scmp.eq.s32.totalorder %s89, 1
      %p359 = por %p357, %p358
      %p360 = scmp.ne.s32.totalorder %s351, %s352
      %p361 = scmp.eq.s32.totalorder %s89, 0
      %p362 = por %p360, %p361
      %p363 = scmp.ne.s32.totalorder %s351, %s352
      %p364 = scmp.eq.s32.totalorder %s90, 1
      %p365 = por %p363, %p364
      %p367 = scmp.ne.s32.totalorder %s352, %s366
      %p368 = scmp.eq.s32.totalorder %s90, 0
      %p369 = por %p367, %p368
      %s371 = sadd.s32 %s370, 1
      %p374 = scmp.eq.s32.totalorder %s84, 1
      %p375 = scmp.ne.s32.totalorder %s370, %s372
      %p376 = scmp.eq.s32.totalorder %s84, 0
      %p377 = por %p375, %p376
      %p378 = scmp.ne.s32.totalorder %s370, %s372
      %p379 = scmp.eq.s32.totalorder %s89, 1
      %p380 = por %p378, %p379
      %p381 = scmp.ne.s32.totalorder %s372, %s373
      %p382 = scmp.eq.s32.totalorder %s89, 0
      %p383 = por %p381, %p382
      %p384 = scmp.ne.s32.totalorder %s372, %s373
      %p385 = scmp.eq.s32.totalorder %s90, 1
      %p386 = por %p384, %p385
      %p388 = scmp.ne.s32.totalorder %s373, %s387
      %p389 = scmp.eq.s32.totalorder %s90, 0
      %p390 = por %p388, %p389
      %s392 = sadd.s32 %s391, 1
      %p395 = scmp.eq.s32.totalorder %s84, 1
      %p396 = scmp.ne.s32.totalorder %s391, %s393
      %p397 = scmp.eq.s32.totalorder %s84, 0
      %p398 = por %p396, %p397
      %p399 = scmp.ne.s32.totalorder %s391, %s393
      %p400 = scmp.eq.s32.totalorder %s89, 1
      %p401 = por %p399, %p400
      %p402 = scmp.ne.s32.totalorder %s393, %s394
      %p403 = scmp.eq.s32.totalorder %s89, 0
      %p404 = por %p402, %p403
      %p405 = scmp.ne.s32.totalorder %s393, %s394
      %p406 = scmp.eq.s32.totalorder %s90, 1
      %p407 = por %p405, %p406
      %p409 = scmp.ne.s32.totalorder %s394, %s408
      %p410 = scmp.eq.s32.totalorder %s90, 0
      %p411 = por %p409, %p410
      %s413 = sadd.s32 %s412, 1
      %p416 = scmp.eq.s32.totalorder %s84, 1
      %p417 = scmp.ne.s32.totalorder %s412, %s414
      %p418 = scmp.eq.s32.totalorder %s84, 0
      %p419 = por %p417, %p418
      %p420 = scmp.ne.s32.totalorder %s412, %s414
      %p421 = scmp.eq.s32.totalorder %s89, 1
      %p422 = por %p420, %p421
      %p423 = scmp.ne.s32.totalorder %s414, %s415
      %p424 = scmp.eq.s32.totalorder %s89, 0
      %p425 = por %p423, %p424
      %p426 = scmp.ne.s32.totalorder %s414, %s415
      %p427 = scmp.eq.s32.totalorder %s90, 1
      %p428 = por %p426, %p427
      %p430 = scmp.ne.s32.totalorder %s415, %s429
      %p431 = scmp.eq.s32.totalorder %s90, 0
      %p432 = por %p430, %p431
      %s434 = sadd.s32 %s433, 1
      %p437 = scmp.eq.s32.totalorder %s84, 1
      %p438 = scmp.ne.s32.totalorder %s433, %s435
      %p439 = scmp.eq.s32.totalorder %s84, 0
      %p440 = por %p438, %p439
      %p441 = scmp.ne.s32.totalorder %s433, %s435
      %p442 = scmp.eq.s32.totalorder %s89, 1
      %p443 = por %p441, %p442
      %p444 = scmp.ne.s32.totalorder %s435, %s436
      %p445 = scmp.eq.s32.totalorder %s89, 0
      %p446 = por %p444, %p445
      %p447 = scmp.ne.s32.totalorder %s435, %s436
      %p448 = scmp.eq.s32.totalorder %s90, 1
      %p449 = por %p447, %p448
      %p451 = scmp.ne.s32.totalorder %s436, %s450
      %p452 = scmp.eq.s32.totalorder %s90, 0
      %p453 = por %p451, %p452
      %s455 = sadd.s32 %s454, 1
      %p458 = scmp.eq.s32.totalorder %s84, 1
      %p459 = scmp.ne.s32.totalorder %s454, %s456
      %p460 = scmp.eq.s32.totalorder %s84, 0
      %p461 = por %p459, %p460
      %p462 = scmp.ne.s32.totalorder %s454, %s456
      %p463 = scmp.eq.s32.totalorder %s89, 1
      %p464 = por %p462, %p463
      %p465 = scmp.ne.s32.totalorder %s456, %s457
      %p466 = scmp.eq.s32.totalorder %s89, 0
      %p467 = por %p465, %p466
      %p468 = scmp.ne.s32.totalorder %s456, %s457
      %p469 = scmp.eq.s32.totalorder %s90, 1
      %p470 = por %p468, %p469
      %p472 = scmp.ne.s32.totalorder %s457, %s471
      %p473 = scmp.eq.s32.totalorder %s90, 0
      %p474 = por %p472, %p473
      %s476 = sadd.s32 %s475, 1
      %p479 = scmp.eq.s32.totalorder %s84, 1
      %p480 = scmp.ne.s32.totalorder %s475, %s477
      %p481 = scmp.eq.s32.totalorder %s84, 0
      %p482 = por %p480, %p481
      %p483 = scmp.ne.s32.totalorder %s475, %s477
      %p484 = scmp.eq.s32.totalorder %s89, 1
      %p485 = por %p483, %p484
      %p486 = scmp.ne.s32.totalorder %s477, %s478
      %p487 = scmp.eq.s32.totalorder %s89, 0
      %p488 = por %p486, %p487
      %p489 = scmp.ne.s32.totalorder %s477, %s478
      %p490 = scmp.eq.s32.totalorder %s90, 1
      %p491 = por %p489, %p490
      %p493 = scmp.ne.s32.totalorder %s478, %s492
      %p494 = scmp.eq.s32.totalorder %s90, 0
      %p495 = por %p493, %p494
      %s497 = sadd.s32 %s496, 1
      %p500 = scmp.eq.s32.totalorder %s84, 1
      %p501 = scmp.ne.s32.totalorder %s496, %s498
      %p502 = scmp.eq.s32.totalorder %s84, 0
      %p503 = por %p501, %p502
      %p504 = scmp.ne.s32.totalorder %s496, %s498
      %p505 = scmp.eq.s32.totalorder %s89, 1
      %p506 = por %p504, %p505
      %p507 = scmp.ne.s32.totalorder %s498, %s499
      %p508 = scmp.eq.s32.totalorder %s89, 0
      %p509 = por %p507, %p508
      %p510 = scmp.ne.s32.totalorder %s498, %s499
      %p511 = scmp.eq.s32.totalorder %s90, 1
      %p512 = por %p510, %p511
      %p514 = scmp.ne.s32.totalorder %s499, %s513
      %p515 = scmp.eq.s32.totalorder %s90, 0
      %p516 = por %p514, %p515
      %s518 = sadd.s32 %s517, 1
      %p521 = scmp.eq.s32.totalorder %s84, 1
      %p522 = scmp.ne.s32.totalorder %s517, %s519
      %p523 = scmp.eq.s32.totalorder %s84, 0
      %p524 = por %p522, %p523
      %p525 = scmp.ne.s32.totalorder %s517, %s519
      %p526 = scmp.eq.s32.totalorder %s89, 1
      %p527 = por %p525, %p526
      %p528 = scmp.ne.s32.totalorder %s519, %s520
      %p529 = scmp.eq.s32.totalorder %s89, 0
      %p530 = por %p528, %p529
      %p531 = scmp.ne.s32.totalorder %s519, %s520
      %p532 = scmp.eq.s32.totalorder %s90, 1
      %p533 = por %p531, %p532
      %p535 = scmp.ne.s32.totalorder %s520, %s534
      %p536 = scmp.eq.s32.totalorder %s90, 0
      %p537 = por %p535, %p536
      %s539 = sadd.s32 %s538, 1
      %p542 = scmp.eq.s32.totalorder %s84, 1
      %p543 = scmp.ne.s32.totalorder %s538, %s540
      %p544 = scmp.eq.s32.totalorder %s84, 0
      %p545 = por %p543, %p544
      %p546 = scmp.ne.s32.totalorder %s538, %s540
      %p547 = scmp.eq.s32.totalorder %s89, 1
      %p548 = por %p546, %p547
      %p549 = scmp.ne.s32.totalorder %s540, %s541
      %p550 = scmp.eq.s32.totalorder %s89, 0
      %p551 = por %p549, %p550
      %p552 = scmp.ne.s32.totalorder %s540, %s541
      %p553 = scmp.eq.s32.totalorder %s90, 1
      %p554 = por %p552, %p553
      %p556 = scmp.ne.s32.totalorder %s541, %s555
      %p557 = scmp.eq.s32.totalorder %s90, 0
      %p558 = por %p556, %p557
      %s560 = sadd.s32 %s559, 1
      %p563 = scmp.eq.s32.totalorder %s84, 1
      %p564 = scmp.ne.s32.totalorder %s559, %s561
      %p565 = scmp.eq.s32.totalorder %s84, 0
      %p566 = por %p564, %p565
      %p567 = scmp.ne.s32.totalorder %s559, %s561
      %p568 = scmp.eq.s32.totalorder %s89, 1
      %p569 = por %p567, %p568
      %p570 = scmp.ne.s32.totalorder %s561, %s562
      %p571 = scmp.eq.s32.totalorder %s89, 0
      %p572 = por %p570, %p571
      %p573 = scmp.ne.s32.totalorder %s561, %s562
      %p574 = scmp.eq.s32.totalorder %s90, 1
      %p575 = por %p573, %p574
      %p577 = scmp.ne.s32.totalorder %s562, %s576
      %p578 = scmp.eq.s32.totalorder %s90, 0
      %p579 = por %p577, %p578
      %s581 = sadd.s32 %s580, 1
      %p584 = scmp.eq.s32.totalorder %s84, 1
      %p585 = scmp.ne.s32.totalorder %s580, %s582
      %p586 = scmp.eq.s32.totalorder %s84, 0
      %p587 = por %p585, %p586
      %p588 = scmp.ne.s32.totalorder %s580, %s582
      %p589 = scmp.eq.s32.totalorder %s89, 1
      %p590 = por %p588, %p589
      %p591 = scmp.ne.s32.totalorder %s582, %s583
      %p592 = scmp.eq.s32.totalorder %s89, 0
      %p593 = por %p591, %p592
      %p594 = scmp.ne.s32.totalorder %s582, %s583
      %p595 = scmp.eq.s32.totalorder %s90, 1
      %p596 = por %p594, %p595
      %p598 = scmp.ne.s32.totalorder %s583, %s597
      %p599 = scmp.eq.s32.totalorder %s90, 0
      %p600 = por %p598, %p599
      %s602 = sadd.s32 %s601, 1
      %p605 = scmp.eq.s32.totalorder %s84, 1
      %p606 = scmp.ne.s32.totalorder %s601, %s603
      %p607 = scmp.eq.s32.totalorder %s84, 0
      %p608 = por %p606, %p607
      %p609 = scmp.ne.s32.totalorder %s601, %s603
      %p610 = scmp.eq.s32.totalorder %s89, 1
      %p611 = por %p609, %p610
      %p612 = scmp.ne.s32.totalorder %s603, %s604
      %p613 = scmp.eq.s32.totalorder %s89, 0
      %p614 = por %p612, %p613
      %p615 = scmp.ne.s32.totalorder %s603, %s604
      %p616 = scmp.eq.s32.totalorder %s90, 1
      %p617 = por %p615, %p616
      %p619 = scmp.ne.s32.totalorder %s604, %s618
      %p620 = scmp.eq.s32.totalorder %s90, 0
      %p621 = por %p619, %p620
      %s623 = sadd.s32 %s622, 1
      %p626 = scmp.eq.s32.totalorder %s84, 1
      %p627 = scmp.ne.s32.totalorder %s622, %s624
      %p628 = scmp.eq.s32.totalorder %s84, 0
      %p629 = por %p627, %p628
      %p630 = scmp.ne.s32.totalorder %s622, %s624
      %p631 = scmp.eq.s32.totalorder %s89, 1
      %p632 = por %p630, %p631
      %p633 = scmp.ne.s32.totalorder %s624, %s625
      %p634 = scmp.eq.s32.totalorder %s89, 0
      %p635 = por %p633, %p634
      %p636 = scmp.ne.s32.totalorder %s624, %s625
      %p637 = scmp.eq.s32.totalorder %s90, 1
      %p638 = por %p636, %p637
      %p640 = scmp.ne.s32.totalorder %s625, %s639
      %p641 = scmp.eq.s32.totalorder %s90, 0
      %p642 = por %p640, %p641
      %s644 = sadd.s32 %s643, 1
      %p647 = scmp.eq.s32.totalorder %s84, 1
      %p648 = scmp.ne.s32.totalorder %s643, %s645
      %p649 = scmp.eq.s32.totalorder %s84, 0
      %p650 = por %p648, %p649
      %p651 = scmp.ne.s32.totalorder %s643, %s645
      %p652 = scmp.eq.s32.totalorder %s89, 1
      %p653 = por %p651, %p652
      %p654 = scmp.ne.s32.totalorder %s645, %s646
      %p655 = scmp.eq.s32.totalorder %s89, 0
      %p656 = por %p654, %p655
      %p657 = scmp.ne.s32.totalorder %s645, %s646
      %p658 = scmp.eq.s32.totalorder %s90, 1
      %p659 = por %p657, %p658
      %p661 = scmp.ne.s32.totalorder %s646, %s660
      %p662 = scmp.eq.s32.totalorder %s90, 0
      %p663 = por %p661, %p662
      %s665 = sadd.s32 %s664, 1
      %p668 = scmp.eq.s32.totalorder %s84, 1
      %p669 = scmp.ne.s32.totalorder %s664, %s666
      %p670 = scmp.eq.s32.totalorder %s84, 0
      %p671 = por %p669, %p670
      %p672 = scmp.ne.s32.totalorder %s664, %s666
      %p673 = scmp.eq.s32.totalorder %s89, 1
      %p674 = por %p672, %p673
      %p675 = scmp.ne.s32.totalorder %s666, %s667
      %p676 = scmp.eq.s32.totalorder %s89, 0
      %p677 = por %p675, %p676
      %p678 = scmp.ne.s32.totalorder %s666, %s667
      %p679 = scmp.eq.s32.totalorder %s90, 1
      %p680 = por %p678, %p679
      %p682 = scmp.ne.s32.totalorder %s667, %s681
      %p683 = scmp.eq.s32.totalorder %s90, 0
      %p684 = por %p682, %p683
      %s686 = sadd.s32 %s685, 1
      %p689 = scmp.eq.s32.totalorder %s84, 1
      %p690 = scmp.ne.s32.totalorder %s685, %s687
      %p691 = scmp.eq.s32.totalorder %s84, 0
      %p692 = por %p690, %p691
      %p693 = scmp.ne.s32.totalorder %s685, %s687
      %p694 = scmp.eq.s32.totalorder %s89, 1
      %p695 = por %p693, %p694
      %p696 = scmp.ne.s32.totalorder %s687, %s688
      %p697 = scmp.eq.s32.totalorder %s89, 0
      %p698 = por %p696, %p697
      %p699 = scmp.ne.s32.totalorder %s687, %s688
      %p700 = scmp.eq.s32.totalorder %s90, 1
      %p701 = por %p699, %p700
      %p703 = scmp.ne.s32.totalorder %s688, %s702
      %p704 = scmp.eq.s32.totalorder %s90, 0
      %p705 = por %p703, %p704
      %s707 = sadd.s32 %s706, 1
      %p710 = scmp.eq.s32.totalorder %s84, 1
      %p711 = scmp.ne.s32.totalorder %s706, %s708
      %p712 = scmp.eq.s32.totalorder %s84, 0
      %p713 = por %p711, %p712
      %p714 = scmp.ne.s32.totalorder %s706, %s708
      %p715 = scmp.eq.s32.totalorder %s89, 1
      %p716 = por %p714, %p715
      %p717 = scmp.ne.s32.totalorder %s708, %s709
      %p718 = scmp.eq.s32.totalorder %s89, 0
      %p719 = por %p717, %p718
      %p720 = scmp.ne.s32.totalorder %s708, %s709
      %p721 = scmp.eq.s32.totalorder %s90, 1
      %p722 = por %p720, %p721
      %p724 = scmp.ne.s32.totalorder %s709, %s723
      %p725 = scmp.eq.s32.totalorder %s90, 0
      %p726 = por %p724, %p725
      %s728 = sadd.s32 %s727, 1
      %p731 = scmp.eq.s32.totalorder %s84, 1
      %p732 = scmp.ne.s32.totalorder %s727, %s729
      %p733 = scmp.eq.s32.totalorder %s84, 0
      %p734 = por %p732, %p733
      %p735 = scmp.ne.s32.totalorder %s727, %s729
      %p736 = scmp.eq.s32.totalorder %s89, 1
      %p737 = por %p735, %p736
      %p738 = scmp.ne.s32.totalorder %s729, %s730
      %p739 = scmp.eq.s32.totalorder %s89, 0
      %p740 = por %p738, %p739
      %p741 = scmp.ne.s32.totalorder %s729, %s730
      %p742 = scmp.eq.s32.totalorder %s90, 1
      %p743 = por %p741, %p742
      %p745 = scmp.ne.s32.totalorder %s730, %s744
      %p746 = scmp.eq.s32.totalorder %s90, 0
      %p747 = por %p745, %p746
      %s749 = sadd.s32 %s748, 1
      %p752 = scmp.eq.s32.totalorder %s84, 1
      %p753 = scmp.ne.s32.totalorder %s748, %s750
      %p754 = scmp.eq.s32.totalorder %s84, 0
      %p755 = por %p753, %p754
      %p756 = scmp.ne.s32.totalorder %s748, %s750
      %p757 = scmp.eq.s32.totalorder %s89, 1
      %p758 = por %p756, %p757
      %p759 = scmp.ne.s32.totalorder %s750, %s751
      %p760 = scmp.eq.s32.totalorder %s89, 0
      %p761 = por %p759, %p760
      %p762 = scmp.ne.s32.totalorder %s750, %s751
      %p763 = scmp.eq.s32.totalorder %s90, 1
      %p764 = por %p762, %p763
      %p766 = scmp.ne.s32.totalorder %s751, %s765
      %p767 = scmp.eq.s32.totalorder %s90, 0
      %p768 = por %p766, %p767
      %s770 = sadd.s32 %s769, 1
      %p773 = scmp.eq.s32.totalorder %s84, 1
      %p774 = scmp.ne.s32.totalorder %s769, %s771
      %p775 = scmp.eq.s32.totalorder %s84, 0
      %p776 = por %p774, %p775
      %p777 = scmp.ne.s32.totalorder %s769, %s771
      %p778 = scmp.eq.s32.totalorder %s89, 1
      %p779 = por %p777, %p778
      %p780 = scmp.ne.s32.totalorder %s771, %s772
      %p781 = scmp.eq.s32.totalorder %s89, 0
      %p782 = por %p780, %p781
      %p783 = scmp.ne.s32.totalorder %s771, %s772
      %p784 = scmp.eq.s32.totalorder %s90, 1
      %p785 = por %p783, %p784
      %p787 = scmp.ne.s32.totalorder %s772, %s786
      %p788 = scmp.eq.s32.totalorder %s90, 0
      %p789 = por %p787, %p788
      %s791 = sadd.s32 %s790, 1
      %p794 = scmp.eq.s32.totalorder %s84, 1
      %p795 = scmp.ne.s32.totalorder %s790, %s792
      %p796 = scmp.eq.s32.totalorder %s84, 0
      %p797 = por %p795, %p796
      %p798 = scmp.ne.s32.totalorder %s790, %s792
      %p799 = scmp.eq.s32.totalorder %s89, 1
      %p800 = por %p798, %p799
      %p801 = scmp.ne.s32.totalorder %s792, %s793
      %p802 = scmp.eq.s32.totalorder %s89, 0
      %p803 = por %p801, %p802
      %p804 = scmp.ne.s32.totalorder %s792, %s793
      %p805 = scmp.eq.s32.totalorder %s90, 1
      %p806 = por %p804, %p805
      %p808 = scmp.ne.s32.totalorder %s793, %s807
      %p809 = scmp.eq.s32.totalorder %s90, 0
      %p810 = por %p808, %p809
      %s812 = sadd.s32 %s811, 1
      %p815 = scmp.eq.s32.totalorder %s84, 1
      %p816 = scmp.ne.s32.totalorder %s811, %s813
      %p817 = scmp.eq.s32.totalorder %s84, 0
      %p818 = por %p816, %p817
      %p819 = scmp.ne.s32.totalorder %s811, %s813
      %p820 = scmp.eq.s32.totalorder %s89, 1
      %p821 = por %p819, %p820
      %p822 = scmp.ne.s32.totalorder %s813, %s814
      %p823 = scmp.eq.s32.totalorder %s89, 0
      %p824 = por %p822, %p823
      %p825 = scmp.ne.s32.totalorder %s813, %s814
      %p826 = scmp.eq.s32.totalorder %s90, 1
      %p827 = por %p825, %p826
      %p829 = scmp.ne.s32.totalorder %s814, %s828
      %p830 = scmp.eq.s32.totalorder %s90, 0
      %p831 = por %p829, %p830
      %s833 = sadd.s32 %s832, 1
      %p836 = scmp.eq.s32.totalorder %s84, 1
      %p837 = scmp.ne.s32.totalorder %s832, %s834
      %p838 = scmp.eq.s32.totalorder %s84, 0
      %p839 = por %p837, %p838
      %p840 = scmp.ne.s32.totalorder %s832, %s834
      %p841 = scmp.eq.s32.totalorder %s89, 1
      %p842 = por %p840, %p841
      %p843 = scmp.ne.s32.totalorder %s834, %s835
      %p844 = scmp.eq.s32.totalorder %s89, 0
      %p845 = por %p843, %p844
      %p846 = scmp.ne.s32.totalorder %s834, %s835
      %p847 = scmp.eq.s32.totalorder %s90, 1
      %p848 = por %p846, %p847
      %p850 = scmp.ne.s32.totalorder %s835, %s849
      %p851 = scmp.eq.s32.totalorder %s90, 0
      %p852 = por %p850, %p851
      %s854 = sadd.s32 %s853, 1
      %p857 = scmp.eq.s32.totalorder %s84, 1
      %p858 = scmp.ne.s32.totalorder %s853, %s855
      %p859 = scmp.eq.s32.totalorder %s84, 0
      %p860 = por %p858, %p859
      %p861 = scmp.ne.s32.totalorder %s853, %s855
      %p862 = scmp.eq.s32.totalorder %s89, 1
      %p863 = por %p861, %p862
      %p864 = scmp.ne.s32.totalorder %s855, %s856
      %p865 = scmp.eq.s32.totalorder %s89, 0
      %p866 = por %p864, %p865
      %p867 = scmp.ne.s32.totalorder %s855, %s856
      %p868 = scmp.eq.s32.totalorder %s90, 1
      %p869 = por %p867, %p868
      %p871 = scmp.ne.s32.totalorder %s856, %s870
      %p872 = scmp.eq.s32.totalorder %s90, 0
      %p873 = por %p871, %p872
      %s874 = ssub.s32 %s84, %s91
      %p875 = scmp.eq.s32.totalorder %s874, 0
      %s877 = sadd.s32 %s876, 1
      %s878 = scalar_select %p875, %s876, %s877
      %p881 = pneg %p875
      %p882 = scmp.eq.s32.totalorder %s84, 1
      %p883 = por %p881, %p882
      %p884 = scmp.ne.s32.totalorder %s876, %s879
      %p885 = scmp.eq.s32.totalorder %s84, 0
      %p886 = por %p884, %p885
      %p887 = scmp.ne.s32.totalorder %s876, %s879
      %p888 = scmp.eq.s32.totalorder %s89, 1
      %p889 = por %p887, %p888
      %p890 = scmp.ne.s32.totalorder %s879, %s880
      %p891 = scmp.eq.s32.totalorder %s89, 0
      %p892 = por %p890, %p891
      %p893 = scmp.ne.s32.totalorder %s879, %s880
      %p894 = scmp.eq.s32.totalorder %s90, 1
      %p895 = por %p893, %p894
      %p897 = scmp.ne.s32.totalorder %s880, %s896
      %p898 = scmp.eq.s32.totalorder %s90, 0
      %p899 = por %p897, %p898
      %p900 = scmp.le.s32.totalorder 1, %s84
      %p901 = scmp.lt.s32.totalorder %s84, 3
      %p902 = pnand %p900, %p901
      %p903 = pneg %p902
      // Predicated region
      $region9: #{smaller_deep_cnn300_forward.1} parent=5 // pred_check
        _
      $region10: #{smaller_deep_cnn300_forward.1} parent=5 // pred_check_branch
        %905 = sbr.rel (%p902) target = $region12
      $region11: #{smaller_deep_cnn300_forward.1} parent=5 // pred_region
        %s906 = ssub.s32 %s84, 1
        // Predicated region
        $region13: #{smaller_deep_cnn300_forward.1} parent=11 // pred_check
          %p907 = pneg %p131
        $region14: #{smaller_deep_cnn300_forward.1} parent=11 // pred_check_branch
          %909 = sbr.rel (%p907) target = $region16
        $region15: #{smaller_deep_cnn300_forward.1} parent=11 // pred_region
          _
        $region16: #{smaller_deep_cnn300_forward.1} parent=11 // pred_fallthru
          _
        // Predicated region
        $region17: #{smaller_deep_cnn300_forward.1} parent=11 // pred_check
          %p910 = pneg %p152
        $region18: #{smaller_deep_cnn300_forward.1} parent=11 // pred_check_branch
          %912 = sbr.rel (%p910) target = $region20
        $region19: #{smaller_deep_cnn300_forward.1} parent=11 // pred_region
          _
        $region20: #{smaller_deep_cnn300_forward.1} parent=11 // pred_fallthru
          _
        // Predicated region
        $region21: #{smaller_deep_cnn300_forward.1} parent=11 // pred_check
          %p913 = pneg %p173
        $region22: #{smaller_deep_cnn300_forward.1} parent=11 // pred_check_branch
          %915 = sbr.rel (%p913) target = $region24
        $region23: #{smaller_deep_cnn300_forward.1} parent=11 // pred_region
          _
        $region24: #{smaller_deep_cnn300_forward.1} parent=11 // pred_fallthru
          _
        // Predicated region
        $region25: #{smaller_deep_cnn300_forward.1} parent=11 // pred_check
          %p916 = pneg %p194
        $region26: #{smaller_deep_cnn300_forward.1} parent=11 // pred_check_branch
          %918 = sbr.rel (%p916) target = $region28
        $region27: #{smaller_deep_cnn300_forward.1} parent=11 // pred_region
          _
        $region28: #{smaller_deep_cnn300_forward.1} parent=11 // pred_fallthru
          _
        // Predicated region
        $region29: #{smaller_deep_cnn300_forward.1} parent=11 // pred_check
          %p919 = pneg %p215
        $region30: #{smaller_deep_cnn300_forward.1} parent=11 // pred_check_branch
          %921 = sbr.rel (%p919) target = $region32
        $region31: #{smaller_deep_cnn300_forward.1} parent=11 // pred_region
          _
        $region32: #{smaller_deep_cnn300_forward.1} parent=11 // pred_fallthru
          _
        // Predicated region
        $region33: #{smaller_deep_cnn300_forward.1} parent=11 // pred_check
          %p922 = pneg %p236
        $region34: #{smaller_deep_cnn300_forward.1} parent=11 // pred_check_branch
          %924 = sbr.rel (%p922) target = $region36
        $region35: #{smaller_deep_cnn300_forward.1} parent=11 // pred_region
          _
        $region36: #{smaller_deep_cnn300_forward.1} parent=11 // pred_fallthru
          _
        // Predicated region
        $region37: #{smaller_deep_cnn300_forward.1} parent=11 // pred_check
          %p925 = pneg %p257
        $region38: #{smaller_deep_cnn300_forward.1} parent=11 // pred_check_branch
          %927 = sbr.rel (%p925) target = $region40
        $region39: #{smaller_deep_cnn300_forward.1} parent=11 // pred_region
          _
        $region40: #{smaller_deep_cnn300_forward.1} parent=11 // pred_fallthru
          _
        // Predicated region
        $region41: #{smaller_deep_cnn300_forward.1} parent=11 // pred_check
          %p928 = pneg %p278
        $region42: #{smaller_deep_cnn300_forward.1} parent=11 // pred_check_branch
          %930 = sbr.rel (%p928) target = $region44
        $region43: #{smaller_deep_cnn300_forward.1} parent=11 // pred_region
          _
        $region44: #{smaller_deep_cnn300_forward.1} parent=11 // pred_fallthru
          _
        // Predicated region
        $region45: #{smaller_deep_cnn300_forward.1} parent=11 // pred_check
          %p931 = pneg %p299
        $region46: #{smaller_deep_cnn300_forward.1} parent=11 // pred_check_branch
          %933 = sbr.rel (%p931) target = $region48
        $region47: #{smaller_deep_cnn300_forward.1} parent=11 // pred_region
          _
        $region48: #{smaller_deep_cnn300_forward.1} parent=11 // pred_fallthru
          _
        // Predicated region
        $region49: #{smaller_deep_cnn300_forward.1} parent=11 // pred_check
          %p934 = pneg %p320
        $region50: #{smaller_deep_cnn300_forward.1} parent=11 // pred_check_branch
          %936 = sbr.rel (%p934) target = $region52
        $region51: #{smaller_deep_cnn300_forward.1} parent=11 // pred_region
          _
        $region52: #{smaller_deep_cnn300_forward.1} parent=11 // pred_fallthru
          _
        // Predicated region
        $region53: #{smaller_deep_cnn300_forward.1} parent=11 // pred_check
          %p937 = pneg %p341
        $region54: #{smaller_deep_cnn300_forward.1} parent=11 // pred_check_branch
          %939 = sbr.rel (%p937) target = $region56
        $region55: #{smaller_deep_cnn300_forward.1} parent=11 // pred_region
          _
        $region56: #{smaller_deep_cnn300_forward.1} parent=11 // pred_fallthru
          _
        // Predicated region
        $region57: #{smaller_deep_cnn300_forward.1} parent=11 // pred_check
          %p940 = pneg %p362
        $region58: #{smaller_deep_cnn300_forward.1} parent=11 // pred_check_branch
          %942 = sbr.rel (%p940) target = $region60
        $region59: #{smaller_deep_cnn300_forward.1} parent=11 // pred_region
          _
        $region60: #{smaller_deep_cnn300_forward.1} parent=11 // pred_fallthru
          _
        // Predicated region
        $region61: #{smaller_deep_cnn300_forward.1} parent=11 // pred_check
          %p943 = pneg %p383
        $region62: #{smaller_deep_cnn300_forward.1} parent=11 // pred_check_branch
          %945 = sbr.rel (%p943) target = $region64
        $region63: #{smaller_deep_cnn300_forward.1} parent=11 // pred_region
          _
        $region64: #{smaller_deep_cnn300_forward.1} parent=11 // pred_fallthru
          _
        // Predicated region
        $region65: #{smaller_deep_cnn300_forward.1} parent=11 // pred_check
          %p946 = pneg %p404
        $region66: #{smaller_deep_cnn300_forward.1} parent=11 // pred_check_branch
          %948 = sbr.rel (%p946) target = $region68
        $region67: #{smaller_deep_cnn300_forward.1} parent=11 // pred_region
          _
        $region68: #{smaller_deep_cnn300_forward.1} parent=11 // pred_fallthru
          _
        // Predicated region
        $region69: #{smaller_deep_cnn300_forward.1} parent=11 // pred_check
          %p949 = pneg %p425
        $region70: #{smaller_deep_cnn300_forward.1} parent=11 // pred_check_branch
          %951 = sbr.rel (%p949) target = $region72
        $region71: #{smaller_deep_cnn300_forward.1} parent=11 // pred_region
          _
        $region72: #{smaller_deep_cnn300_forward.1} parent=11 // pred_fallthru
          _
        // Predicated region
        $region73: #{smaller_deep_cnn300_forward.1} parent=11 // pred_check
          %p952 = pneg %p446
        $region74: #{smaller_deep_cnn300_forward.1} parent=11 // pred_check_branch
          %954 = sbr.rel (%p952) target = $region76
        $region75: #{smaller_deep_cnn300_forward.1} parent=11 // pred_region
          _
        $region76: #{smaller_deep_cnn300_forward.1} parent=11 // pred_fallthru
          _
        // Predicated region
        $region77: #{smaller_deep_cnn300_forward.1} parent=11 // pred_check
          %p955 = pneg %p467
        $region78: #{smaller_deep_cnn300_forward.1} parent=11 // pred_check_branch
          %957 = sbr.rel (%p955) target = $region80
        $region79: #{smaller_deep_cnn300_forward.1} parent=11 // pred_region
          _
        $region80: #{smaller_deep_cnn300_forward.1} parent=11 // pred_fallthru
          _
        // Predicated region
        $region81: #{smaller_deep_cnn300_forward.1} parent=11 // pred_check
          %p958 = pneg %p488
        $region82: #{smaller_deep_cnn300_forward.1} parent=11 // pred_check_branch
          %960 = sbr.rel (%p958) target = $region84
        $region83: #{smaller_deep_cnn300_forward.1} parent=11 // pred_region
          _
        $region84: #{smaller_deep_cnn300_forward.1} parent=11 // pred_fallthru
          _
        // Predicated region
        $region85: #{smaller_deep_cnn300_forward.1} parent=11 // pred_check
          %p961 = pneg %p509
        $region86: #{smaller_deep_cnn300_forward.1} parent=11 // pred_check_branch
          %963 = sbr.rel (%p961) target = $region88
        $region87: #{smaller_deep_cnn300_forward.1} parent=11 // pred_region
          _
        $region88: #{smaller_deep_cnn300_forward.1} parent=11 // pred_fallthru
          _
        // Predicated region
        $region89: #{smaller_deep_cnn300_forward.1} parent=11 // pred_check
          %p964 = pneg %p530
        $region90: #{smaller_deep_cnn300_forward.1} parent=11 // pred_check_branch
          %966 = sbr.rel (%p964) target = $region92
        $region91: #{smaller_deep_cnn300_forward.1} parent=11 // pred_region
          _
        $region92: #{smaller_deep_cnn300_forward.1} parent=11 // pred_fallthru
          _
        // Predicated region
        $region93: #{smaller_deep_cnn300_forward.1} parent=11 // pred_check
          %p967 = pneg %p551
        $region94: #{smaller_deep_cnn300_forward.1} parent=11 // pred_check_branch
          %969 = sbr.rel (%p967) target = $region96
        $region95: #{smaller_deep_cnn300_forward.1} parent=11 // pred_region
          _
        $region96: #{smaller_deep_cnn300_forward.1} parent=11 // pred_fallthru
          _
        // Predicated region
        $region97: #{smaller_deep_cnn300_forward.1} parent=11 // pred_check
          %p970 = pneg %p572
        $region98: #{smaller_deep_cnn300_forward.1} parent=11 // pred_check_branch
          %972 = sbr.rel (%p970) target = $region100
        $region99: #{smaller_deep_cnn300_forward.1} parent=11 // pred_region
          _
        $region100: #{smaller_deep_cnn300_forward.1} parent=11 // pred_fallthru
          _
        // Predicated region
        $region101: #{smaller_deep_cnn300_forward.1} parent=11 // pred_check
          %p973 = pneg %p593
        $region102: #{smaller_deep_cnn300_forward.1} parent=11 // pred_check_branch
          %975 = sbr.rel (%p973) target = $region104
        $region103: #{smaller_deep_cnn300_forward.1} parent=11 // pred_region
          _
        $region104: #{smaller_deep_cnn300_forward.1} parent=11 // pred_fallthru
          _
        // Predicated region
        $region105: #{smaller_deep_cnn300_forward.1} parent=11 // pred_check
          %p976 = pneg %p614
        $region106: #{smaller_deep_cnn300_forward.1} parent=11 // pred_check_branch
          %978 = sbr.rel (%p976) target = $region108
        $region107: #{smaller_deep_cnn300_forward.1} parent=11 // pred_region
          _
        $region108: #{smaller_deep_cnn300_forward.1} parent=11 // pred_fallthru
          _
        // Predicated region
        $region109: #{smaller_deep_cnn300_forward.1} parent=11 // pred_check
          %p979 = pneg %p635
        $region110: #{smaller_deep_cnn300_forward.1} parent=11 // pred_check_branch
          %981 = sbr.rel (%p979) target = $region112
        $region111: #{smaller_deep_cnn300_forward.1} parent=11 // pred_region
          _
        $region112: #{smaller_deep_cnn300_forward.1} parent=11 // pred_fallthru
          _
        // Predicated region
        $region113: #{smaller_deep_cnn300_forward.1} parent=11 // pred_check
          %p982 = pneg %p656
        $region114: #{smaller_deep_cnn300_forward.1} parent=11 // pred_check_branch
          %984 = sbr.rel (%p982) target = $region116
        $region115: #{smaller_deep_cnn300_forward.1} parent=11 // pred_region
          _
        $region116: #{smaller_deep_cnn300_forward.1} parent=11 // pred_fallthru
          _
        // Predicated region
        $region117: #{smaller_deep_cnn300_forward.1} parent=11 // pred_check
          %p985 = pneg %p677
        $region118: #{smaller_deep_cnn300_forward.1} parent=11 // pred_check_branch
          %987 = sbr.rel (%p985) target = $region120
        $region119: #{smaller_deep_cnn300_forward.1} parent=11 // pred_region
          _
        $region120: #{smaller_deep_cnn300_forward.1} parent=11 // pred_fallthru
          _
        // Predicated region
        $region121: #{smaller_deep_cnn300_forward.1} parent=11 // pred_check
          %p988 = pneg %p698
        $region122: #{smaller_deep_cnn300_forward.1} parent=11 // pred_check_branch
          %990 = sbr.rel (%p988) target = $region124
        $region123: #{smaller_deep_cnn300_forward.1} parent=11 // pred_region
          _
        $region124: #{smaller_deep_cnn300_forward.1} parent=11 // pred_fallthru
          _
        // Predicated region
        $region125: #{smaller_deep_cnn300_forward.1} parent=11 // pred_check
          %p991 = pneg %p719
        $region126: #{smaller_deep_cnn300_forward.1} parent=11 // pred_check_branch
          %993 = sbr.rel (%p991) target = $region128
        $region127: #{smaller_deep_cnn300_forward.1} parent=11 // pred_region
          _
        $region128: #{smaller_deep_cnn300_forward.1} parent=11 // pred_fallthru
          _
        // Predicated region
        $region129: #{smaller_deep_cnn300_forward.1} parent=11 // pred_check
          %p994 = pneg %p740
        $region130: #{smaller_deep_cnn300_forward.1} parent=11 // pred_check_branch
          %996 = sbr.rel (%p994) target = $region132
        $region131: #{smaller_deep_cnn300_forward.1} parent=11 // pred_region
          _
        $region132: #{smaller_deep_cnn300_forward.1} parent=11 // pred_fallthru
          _
        // Predicated region
        $region133: #{smaller_deep_cnn300_forward.1} parent=11 // pred_check
          %p997 = pneg %p761
        $region134: #{smaller_deep_cnn300_forward.1} parent=11 // pred_check_branch
          %999 = sbr.rel (%p997) target = $region136
        $region135: #{smaller_deep_cnn300_forward.1} parent=11 // pred_region
          _
        $region136: #{smaller_deep_cnn300_forward.1} parent=11 // pred_fallthru
          _
        // Predicated region
        $region137: #{smaller_deep_cnn300_forward.1} parent=11 // pred_check
          %p1000 = pneg %p782
        $region138: #{smaller_deep_cnn300_forward.1} parent=11 // pred_check_branch
          %1002 = sbr.rel (%p1000) target = $region140
        $region139: #{smaller_deep_cnn300_forward.1} parent=11 // pred_region
          _
        $region140: #{smaller_deep_cnn300_forward.1} parent=11 // pred_fallthru
          _
        // Predicated region
        $region141: #{smaller_deep_cnn300_forward.1} parent=11 // pred_check
          %p1003 = pneg %p803
        $region142: #{smaller_deep_cnn300_forward.1} parent=11 // pred_check_branch
          %1005 = sbr.rel (%p1003) target = $region144
        $region143: #{smaller_deep_cnn300_forward.1} parent=11 // pred_region
          _
        $region144: #{smaller_deep_cnn300_forward.1} parent=11 // pred_fallthru
          _
        // Predicated region
        $region145: #{smaller_deep_cnn300_forward.1} parent=11 // pred_check
          %p1006 = pneg %p824
        $region146: #{smaller_deep_cnn300_forward.1} parent=11 // pred_check_branch
          %1008 = sbr.rel (%p1006) target = $region148
        $region147: #{smaller_deep_cnn300_forward.1} parent=11 // pred_region
          _
        $region148: #{smaller_deep_cnn300_forward.1} parent=11 // pred_fallthru
          _
        // Predicated region
        $region149: #{smaller_deep_cnn300_forward.1} parent=11 // pred_check
          %p1009 = pneg %p845
        $region150: #{smaller_deep_cnn300_forward.1} parent=11 // pred_check_branch
          %1011 = sbr.rel (%p1009) target = $region152
        $region151: #{smaller_deep_cnn300_forward.1} parent=11 // pred_region
          _
        $region152: #{smaller_deep_cnn300_forward.1} parent=11 // pred_fallthru
          _
        // Predicated region
        $region153: #{smaller_deep_cnn300_forward.1} parent=11 // pred_check
          %p1012 = pneg %p866
        $region154: #{smaller_deep_cnn300_forward.1} parent=11 // pred_check_branch
          %1014 = sbr.rel (%p1012) target = $region156
        $region155: #{smaller_deep_cnn300_forward.1} parent=11 // pred_region
          _
        $region156: #{smaller_deep_cnn300_forward.1} parent=11 // pred_fallthru
          _
      $region12: #{smaller_deep_cnn300_forward.1} parent=5 // pred_fallthru
        _
      %p1015 = scmp.lt.s32.totalorder %s84, 2
      // Predicated region
      $region157: #{smaller_deep_cnn300_forward.1} parent=5 // pred_check
        %p1016 = pneg %p1015
      $region158: #{smaller_deep_cnn300_forward.1} parent=5 // pred_check_branch
        %1018 = sbr.rel (%p1016) target = $region160
      $region159: #{smaller_deep_cnn300_forward.1} parent=5 // pred_region
        // Predicated region
        $region161: #{smaller_deep_cnn300_forward.1} parent=159 // pred_check
          %p1019 = pneg %p104
        $region162: #{smaller_deep_cnn300_forward.1} parent=159 // pred_check_branch
          %1021 = sbr.rel (%p1019) target = $region164
        $region163: #{smaller_deep_cnn300_forward.1} parent=159 // pred_region
          %p1022 = scmp.lt.s32.totalorder %s84, 1
          %s1023 = scalar_select %p1022, %s84, 1
          %s1024 = smul.addr %s1023, 64
          %s1025 = smul.addr %s1024, 4
          %s1026 = scalar_lea.vmem %s1, %s1025
        $region164: #{smaller_deep_cnn300_forward.1} parent=159 // pred_fallthru
          _
      $region160: #{smaller_deep_cnn300_forward.1} parent=5 // pred_fallthru
        _
      %p1027 = scmp.le.s32.totalorder 1, %s84
      %p1028 = scmp.lt.s32.totalorder %s84, 3
      %p1029 = pnand %p1027, %p1028
      %p1030 = pneg %p1029
      // Predicated region
      $region165: #{smaller_deep_cnn300_forward.1} parent=5 // pred_check
        _
      $region166: #{smaller_deep_cnn300_forward.1} parent=5 // pred_check_branch
        %1032 = sbr.rel (%p1029) target = $region168
      $region167: #{smaller_deep_cnn300_forward.1} parent=5 // pred_region
        %s1033 = ssub.s32 %s84, 1
        %p1034 = scmp.lt.s32.totalorder %s89, 1
        %s1035 = scalar_select %p1034, %s89, 1
        %s1036 = smul.addr %s1035, 64
        %s1037 = smul.addr %s1036, 4
        %s1038 = scalar_lea.vmem %s1, %s1037
        %p1039 = pneg %p110
        %p1040 = pneg %p107
        %p1041 = pneg %p131
        %p1042 = pneg %p128
        %p1043 = pneg %p152
        %p1044 = pneg %p149
        %p1045 = pneg %p173
        %p1046 = pneg %p170
        %p1047 = pneg %p194
        %p1048 = pneg %p191
        %p1049 = pneg %p215
        %p1050 = pneg %p212
        %p1051 = pneg %p236
        %p1052 = pneg %p233
        %p1053 = pneg %p257
        %p1054 = pneg %p254
        %p1055 = pneg %p278
        %p1056 = pneg %p275
        %p1057 = pneg %p299
        %p1058 = pneg %p296
        %p1059 = pneg %p320
        %p1060 = pneg %p317
        %p1061 = pneg %p341
        %p1062 = pneg %p338
        %p1063 = pneg %p362
        %p1064 = pneg %p359
        %p1065 = pneg %p383
        %p1066 = pneg %p380
        %p1067 = pneg %p404
        %p1068 = pneg %p401
        %p1069 = pneg %p425
        %p1070 = pneg %p422
        %p1071 = pneg %p446
        %p1072 = pneg %p443
        %p1073 = pneg %p467
        %p1074 = pneg %p464
        %p1075 = pneg %p488
        %p1076 = pneg %p485
        %p1077 = pneg %p509
        %p1078 = pneg %p506
        %p1079 = pneg %p530
        %p1080 = pneg %p527
        %p1081 = pneg %p551
        %p1082 = pneg %p548
        %p1083 = pneg %p572
        %p1084 = pneg %p569
        %p1085 = pneg %p593
        %p1086 = pneg %p590
        %p1087 = pneg %p614
        %p1088 = pneg %p611
        %p1089 = pneg %p635
        %p1090 = pneg %p632
        %p1091 = pneg %p656
        %p1092 = pneg %p653
        %p1093 = pneg %p677
        %p1094 = pneg %p674
        %p1095 = pneg %p698
        %p1096 = pneg %p695
        %p1097 = pneg %p719
        %p1098 = pneg %p716
        %p1099 = pneg %p740
        %p1100 = pneg %p737
        %p1101 = pneg %p761
        %p1102 = pneg %p758
        %p1103 = pneg %p782
        %p1104 = pneg %p779
        %p1105 = pneg %p803
        %p1106 = pneg %p800
        %p1107 = pneg %p824
        %p1108 = pneg %p821
        %p1109 = pneg %p845
        %p1110 = pneg %p842
        %p1111 = pneg %p866
        %p1112 = pneg %p863
        %p1113 = pneg %p892
        %p1114 = pneg %p889
        %s1115 = sand.u32 %s879, 1
        %s1116 = scalar_lea.sflag [#allocation3], %s1115
        %s1117 = sand.u32 %s879, 1
        %s1118 = smul.addr %s1117, 16
        %s1119 = scalar_lea.vmem [#allocation2], %s1118
        %p1120 = scmp.lt.s32.totalorder %s89, 1
        %s1121 = scalar_select %p1120, %s89, 1
        %s1122 = smul.addr %s1121, 64
        %s1123 = smul.addr %s1122, 4
        %s1124 = scalar_lea.vmem %s1, %s1123
        %v1126 = vld [vmem:[%s1124] sm:$0xff]
        %v1127 = vld [vmem:[%s1124 + $0x8] sm:$0xff]
        %v1128 = vld [vmem:[%s1124 + $0x10] sm:$0xff]
        %v1129 = vld [vmem:[%s1124 + $0x18] sm:$0xff]
        %v1130 = vld [vmem:[%s1124 + $0x20] sm:$0xff]
        %v1131 = vld [vmem:[%s1124 + $0x28] sm:$0xff]
        %v1132 = vld [vmem:[%s1124 + $0x30] sm:$0xff]
        %v1133 = vld [vmem:[%s1124 + $0x38] sm:$0xff]
        %v1134 = vld [vmem:[%s1124 + $0x40] sm:$0xff]
        %v1135 = vld [vmem:[%s1124 + $0x48] sm:$0xff]
        %v1136 = vld [vmem:[%s1124 + $0x50] sm:$0xff]
        %v1137 = vld [vmem:[%s1124 + $0x58] sm:$0xff]
        %v1138 = vld [vmem:[%s1124 + $0x60] sm:$0xff]
        %v1139 = vld [vmem:[%s1124 + $0x68] sm:$0xff]
        %v1140 = vld [vmem:[%s1124 + $0x70] sm:$0xff]
        %v1141 = vld [vmem:[%s1124 + $0x78] sm:$0xff]
        %v1142 = vld [vmem:[%s1124 + $0x80] sm:$0xff]
        %v1143 = vld [vmem:[%s1124 + $0x88] sm:$0xff]
        %v1144 = vld [vmem:[%s1124 + $0x90] sm:$0xff]
        %v1145 = vld [vmem:[%s1124 + $0x98] sm:$0xff]
        %v1146 = vld [vmem:[%s1124 + $0xa0] sm:$0xff]
        %v1147 = vld [vmem:[%s1124 + $0xa8] sm:$0xff]
        %v1148 = vld [vmem:[%s1124 + $0xb0] sm:$0xff]
        %v1149 = vld [vmem:[%s1124 + $0xb8] sm:$0xff]
        %v1150 = vld [vmem:[%s1124 + $0xc0] sm:$0xff]
        %v1151 = vld [vmem:[%s1124 + $0xc8] sm:$0xff]
        %v1152 = vld [vmem:[%s1124 + $0xd0] sm:$0xff]
        %v1153 = vld [vmem:[%s1124 + $0xd8] sm:$0xff]
        %v1154 = vld [vmem:[%s1124 + $0xe0] sm:$0xff]
        %v1155 = vld [vmem:[%s1124 + $0xe8] sm:$0xff]
        %v1156 = vld [vmem:[%s1124 + $0xf0] sm:$0xff]
        %v1157 = vld [vmem:[%s1124 + $0xf8] sm:$0xff]
        %v1158 = vld [vmem:[%s11] sm:$0xf]
        %v1159 = vld [vmem:[%s11 + $0x4] sm:$0xf]
        %v1160 = vld [vmem:[%s11 + $0x8] sm:$0xf]
        %v1161 = vld [vmem:[%s11 + $0xc] sm:$0xf]
        %v1162 = vld [vmem:[%s11 + $0x10] sm:$0xf]
        %v1163 = vld [vmem:[%s11 + $0x14] sm:$0xf]
        %v1164 = vld [vmem:[%s11 + $0x18] sm:$0xf]
        %v1165 = vld [vmem:[%s11 + $0x1c] sm:$0xf]
        %v1166 = vld [vmem:[%s11 + $0x20] sm:$0xf]
        %v1167 = vld [vmem:[%s11 + $0x24] sm:$0xf]
        %v1168 = vld [vmem:[%s11 + $0x28] sm:$0xf]
        %v1169 = vld [vmem:[%s11 + $0x2c] sm:$0xf]
        %v1170 = vld [vmem:[%s11 + $0x30] sm:$0xf]
        %v1171 = vld [vmem:[%s11 + $0x34] sm:$0xf]
        %v1172 = vld [vmem:[%s11 + $0x38] sm:$0xf]
        %v1173 = vld [vmem:[%s11 + $0x3c] sm:$0xf]
        %v1174 = vld [vmem:[%s11 + $0x40] sm:$0xf]
        %v1175 = vld [vmem:[%s11 + $0x44] sm:$0xf]
        %v1176 = vld [vmem:[%s11 + $0x48] sm:$0xf]
        %v1177 = vld [vmem:[%s11 + $0x4c] sm:$0xf]
        %v1178 = vld [vmem:[%s11 + $0x50] sm:$0xf]
        %v1179 = vld [vmem:[%s11 + $0x54] sm:$0xf]
        %v1180 = vld [vmem:[%s11 + $0x58] sm:$0xf]
        %v1181 = vld [vmem:[%s11 + $0x5c] sm:$0xf]
        %v1182 = vld [vmem:[%s11 + $0x60] sm:$0x3]
        %v1183 = vld [vmem:[%s13] sm:$0x1]
        %v1185 = vlaneseq
        %v1186 = vshrl.u32 %v1185, 7
        %v1187 = vsub.s32 0, %v1186
        %v1188 = vrot.slane %v1183, %v1187
        %v1222 = vunpack.c.l.b16 %v1126
        %v1223 = vunpack.c.h.b16 %v1126
        %v1224 = vunpack.c.l.b16 %v1127
        %v1225 = vunpack.c.h.b16 %v1127
        %v1226 = vunpack.c.l.b16 %v1128
        %v1227 = vunpack.c.h.b16 %v1128
        %v1228 = vunpack.c.l.b16 %v1129
        %v1229 = vunpack.c.h.b16 %v1129
        %v1230 = vunpack.c.l.b16 %v1130
        %v1231 = vunpack.c.h.b16 %v1130
        %v1232 = vunpack.c.l.b16 %v1131
        %v1233 = vunpack.c.h.b16 %v1131
        %v1234 = vunpack.c.l.b16 %v1132
        %v1235 = vunpack.c.h.b16 %v1132
        %v1236 = vunpack.c.l.b16 %v1133
        %v1237 = vunpack.c.h.b16 %v1133
        %v1238 = vunpack.c.l.b16 %v1134
        %v1239 = vunpack.c.h.b16 %v1134
        %v1240 = vunpack.c.l.b16 %v1135
        %v1241 = vunpack.c.h.b16 %v1135
        %v1242 = vunpack.c.l.b16 %v1136
        %v1243 = vunpack.c.h.b16 %v1136
        %v1244 = vunpack.c.l.b16 %v1137
        %v1245 = vunpack.c.h.b16 %v1137
        %v1246 = vunpack.c.l.b16 %v1138
        %v1247 = vunpack.c.h.b16 %v1138
        %v1248 = vunpack.c.l.b16 %v1139
        %v1249 = vunpack.c.h.b16 %v1139
        %v1250 = vunpack.c.l.b16 %v1140
        %v1251 = vunpack.c.h.b16 %v1140
        %v1252 = vunpack.c.l.b16 %v1141
        %v1253 = vunpack.c.h.b16 %v1141
        %v1254 = vunpack.c.l.b16 %v1142
        %v1255 = vunpack.c.h.b16 %v1142
        %v1256 = vunpack.c.l.b16 %v1143
        %v1257 = vunpack.c.h.b16 %v1143
        %v1258 = vunpack.c.l.b16 %v1144
        %v1259 = vunpack.c.h.b16 %v1144
        %v1260 = vunpack.c.l.b16 %v1145
        %v1261 = vunpack.c.h.b16 %v1145
        %v1262 = vunpack.c.l.b16 %v1146
        %v1263 = vunpack.c.h.b16 %v1146
        %v1264 = vunpack.c.l.b16 %v1147
        %v1265 = vunpack.c.h.b16 %v1147
        %v1266 = vunpack.c.l.b16 %v1148
        %v1267 = vunpack.c.h.b16 %v1148
        %v1268 = vunpack.c.l.b16 %v1149
        %v1269 = vunpack.c.h.b16 %v1149
        %v1270 = vunpack.c.l.b16 %v1150
        %v1271 = vunpack.c.h.b16 %v1150
        %v1272 = vunpack.c.l.b16 %v1151
        %v1273 = vunpack.c.h.b16 %v1151
        %v1274 = vunpack.c.l.b16 %v1152
        %v1275 = vunpack.c.h.b16 %v1152
        %v1276 = vunpack.c.l.b16 %v1153
        %v1277 = vunpack.c.h.b16 %v1153
        %v1278 = vunpack.c.l.b16 %v1154
        %v1279 = vunpack.c.h.b16 %v1154
        %v1280 = vunpack.c.l.b16 %v1155
        %v1281 = vunpack.c.h.b16 %v1155
        %v1282 = vunpack.c.l.b16 %v1156
        %v1283 = vunpack.c.h.b16 %v1156
        %v1284 = vunpack.c.l.b16 %v1157
        %v1285 = vunpack.c.h.b16 %v1157
        %v1286 = vpack.c.b16 %v1224, %v1222
        %v1287 = vpack.c.b16 %v1225, %v1223
        %v1288 = vpack.c.b16 %v1228, %v1226
        %v1289 = vpack.c.b16 %v1229, %v1227
        %v1290 = vpack.c.b16 %v1232, %v1230
        %v1291 = vpack.c.b16 %v1233, %v1231
        %v1292 = vpack.c.b16 %v1236, %v1234
        %v1293 = vpack.c.b16 %v1237, %v1235
        %v1294 = vpack.c.b16 %v1240, %v1238
        %v1295 = vpack.c.b16 %v1241, %v1239
        %v1296 = vpack.c.b16 %v1244, %v1242
        %v1297 = vpack.c.b16 %v1245, %v1243
        %v1298 = vpack.c.b16 %v1248, %v1246
        %v1299 = vpack.c.b16 %v1249, %v1247
        %v1300 = vpack.c.b16 %v1252, %v1250
        %v1301 = vpack.c.b16 %v1253, %v1251
        %v1302 = vpack.c.b16 %v1256, %v1254
        %v1303 = vpack.c.b16 %v1257, %v1255
        %v1304 = vpack.c.b16 %v1260, %v1258
        %v1305 = vpack.c.b16 %v1261, %v1259
        %v1306 = vpack.c.b16 %v1264, %v1262
        %v1307 = vpack.c.b16 %v1265, %v1263
        %v1308 = vpack.c.b16 %v1268, %v1266
        %v1309 = vpack.c.b16 %v1269, %v1267
        %v1310 = vpack.c.b16 %v1272, %v1270
        %v1311 = vpack.c.b16 %v1273, %v1271
        %v1312 = vpack.c.b16 %v1276, %v1274
        %v1313 = vpack.c.b16 %v1277, %v1275
        %v1314 = vpack.c.b16 %v1280, %v1278
        %v1315 = vpack.c.b16 %v1281, %v1279
        %v1316 = vpack.c.b16 %v1284, %v1282
        %v1317 = vpack.c.b16 %v1285, %v1283
        %v1359 = vunpack.c.l.b16 %v1158
        %v1360 = vunpack.c.l.b16 %v1159
        %v1361 = vunpack.c.l.b16 %v1160
        %v1362 = vunpack.c.l.b16 %v1161
        %v1363 = vunpack.c.l.b16 %v1162
        %v1364 = vunpack.c.l.b16 %v1163
        %v1365 = vunpack.c.l.b16 %v1164
        %v1366 = vunpack.c.l.b16 %v1165
        %v1367 = vunpack.c.l.b16 %v1166
        %v1368 = vunpack.c.l.b16 %v1167
        %v1369 = vunpack.c.l.b16 %v1168
        %v1370 = vunpack.c.l.b16 %v1169
        %v1371 = vunpack.c.l.b16 %v1170
        %v1372 = vunpack.c.l.b16 %v1171
        %v1373 = vunpack.c.l.b16 %v1172
        %v1374 = vunpack.c.l.b16 %v1173
        %v1375 = vunpack.c.l.b16 %v1174
        %v1376 = vunpack.c.l.b16 %v1175
        %v1377 = vunpack.c.l.b16 %v1176
        %v1378 = vunpack.c.l.b16 %v1177
        %v1379 = vunpack.c.l.b16 %v1178
        %v1380 = vunpack.c.l.b16 %v1179
        %v1381 = vunpack.c.l.b16 %v1180
        %v1382 = vunpack.c.l.b16 %v1181
        %v1383 = vunpack.c.l.b16 %v1182
        %v1384 = vpack.c.b16 %v1360, %v1359
        %v1385 = vpack.c.b16 %v1362, %v1361
        %v1386 = vpack.c.b16 %v1364, %v1363
        %v1387 = vpack.c.b16 %v1366, %v1365
        %v1388 = vpack.c.b16 %v1368, %v1367
        %v1389 = vpack.c.b16 %v1370, %v1369
        %v1390 = vpack.c.b16 %v1372, %v1371
        %v1391 = vpack.c.b16 %v1374, %v1373
        %v1392 = vpack.c.b16 %v1376, %v1375
        %v1393 = vpack.c.b16 %v1378, %v1377
        %v1394 = vpack.c.b16 %v1380, %v1379
        %v1395 = vpack.c.b16 %v1382, %v1381
        %v1396 = vpack.c.b16 %v1383, %v1383
        %vm1409 = vcmask 556032
        %v1411 = vsel %vm1409, %v1287, 0
        %v1414 = vsel %vm1409, %v1289, 0
        %v1417 = vsel %vm1409, %v1291, 0
        %v1420 = vsel %vm1409, %v1293, 0
        %v1423 = vsel %vm1409, %v1295, 0
        %v1426 = vsel %vm1409, %v1297, 0
        %v1429 = vsel %vm1409, %v1299, 0
        %v1432 = vsel %vm1409, %v1301, 0
        %v1435 = vsel %vm1409, %v1303, 0
        %v1438 = vsel %vm1409, %v1305, 0
        %v1441 = vsel %vm1409, %v1307, 0
        %v1444 = vsel %vm1409, %v1309, 0
        %v1447 = vsel %vm1409, %v1311, 0
        %v1450 = vsel %vm1409, %v1313, 0
        %v1453 = vsel %vm1409, %v1315, 0
        %v1456 = vsel %vm1409, %v1317, 0
        %vm1458 = vcmask 1041408
        %v1460 = vsel %vm1458, %v1396, 0
        %1462 = vmatprep.subr.bf16.mxu0 0
        %1463 = vmatpush1.bf16.msra.mxu0 %v1384
        %1464 = vmatprep.subr.bf16.mxu0 0
        %1465 = vmatpush1.bf16.msra.mxu0 %v1385
        %1466 = vmatprep.subr.bf16.mxu0 0
        %1467 = vmatpush1.bf16.msra.mxu0 %v1386
        %1468 = vmatprep.subr.bf16.mxu0 0
        %1469 = vmatpush1.bf16.msra.mxu0 %v1387
        %1470 = vmatprep.subr.bf16.mxu0 0
        %1471 = vmatpush1.bf16.msra.mxu0 %v1388
        %1472 = vmatprep.subr.bf16.mxu0 0
        %1473 = vmatpush1.bf16.msra.mxu0 %v1389
        %1474 = vmatprep.subr.bf16.mxu0 0
        %1475 = vmatpush1.bf16.msra.mxu0 %v1390
        %1476 = vmatprep.subr.bf16.mxu0 0
        %1477 = vmatpush1.bf16.msra.mxu0 %v1391
        %1478 = vmatprep.subr.bf16.mxu0 0
        %1479 = vmatpush1.bf16.msra.mxu0 %v1392
        %1480 = vmatprep.subr.bf16.mxu0 0
        %1481 = vmatpush1.bf16.msra.mxu0 %v1393
        %1482 = vmatprep.subr.bf16.mxu0 0
        %1483 = vmatpush1.bf16.msra.mxu0 %v1394
        %1484 = vmatprep.subr.bf16.mxu0 0
        %1485 = vmatpush1.bf16.msra.mxu0 %v1395
        %1486 = vmatprep.subr.bf16.mxu0 0
        %1487 = vmatpush1.bf16.msra.mxu0 %v1460
        %1488 = vmatprep.subr.bf16.mxu0 0
        %1489 = vmatpush1.bf16.msra.mxu0 0
        %1490 = vmatprep.subr.bf16.mxu0 0
        %1491 = vmatpush1.bf16.msra.mxu0 0
        %1492 = vmatprep.subr.bf16.mxu0 0
        %1493 = vmatpush1.bf16.msra.mxu0 0
        %1494 = vmatprep.mubr.bf16.mxu0 %v1411
        %1495 = vmatmul.mubr.bf16.gmra.mrb[0].mxu0 %v1286
        %v1496 = vpop.f32.mrb[0].mxu0
        %v1497 = vadd.f32 %v1188, %v1496
        %v1498 = vpop.f32.mrb[0].mxu0
        %v1499 = vpop.f32.mrb[0].mxu0
        %v1500 = vadd.f32 %v1188, %v1499
        %v1501 = vpop.f32.mrb[0].mxu0
        %1502 = vmatprep.mubr.bf16.mxu0 %v1414
        %1503 = vmatmul.mubr.bf16.gmra.mrb[0].mxu0 %v1288
        %v1504 = vpop.f32.mrb[0].mxu0
        %v1505 = vadd.f32 %v1188, %v1504
        %v1506 = vpop.f32.mrb[0].mxu0
        %v1507 = vpop.f32.mrb[0].mxu0
        %v1508 = vadd.f32 %v1188, %v1507
        %v1509 = vpop.f32.mrb[0].mxu0
        %1510 = vmatprep.mubr.bf16.mxu0 %v1417
        %1511 = vmatmul.mubr.bf16.gmra.mrb[0].mxu0 %v1290
        %v1512 = vpop.f32.mrb[0].mxu0
        %v1513 = vadd.f32 %v1188, %v1512
        %v1514 = vpop.f32.mrb[0].mxu0
        %v1515 = vpop.f32.mrb[0].mxu0
        %v1516 = vadd.f32 %v1188, %v1515
        %v1517 = vpop.f32.mrb[0].mxu0
        %1518 = vmatprep.mubr.bf16.mxu0 %v1420
        %1519 = vmatmul.mubr.bf16.gmra.mrb[0].mxu0 %v1292
        %v1520 = vpop.f32.mrb[0].mxu0
        %v1521 = vadd.f32 %v1188, %v1520
        %v1522 = vpop.f32.mrb[0].mxu0
        %v1523 = vpop.f32.mrb[0].mxu0
        %v1524 = vadd.f32 %v1188, %v1523
        %v1525 = vpop.f32.mrb[0].mxu0
        %1526 = vmatprep.mubr.bf16.mxu0 %v1423
        %1527 = vmatmul.mubr.bf16.gmra.mrb[0].mxu0 %v1294
        %v1528 = vpop.f32.mrb[0].mxu0
        %v1529 = vadd.f32 %v1188, %v1528
        %v1530 = vpop.f32.mrb[0].mxu0
        %v1531 = vpop.f32.mrb[0].mxu0
        %v1532 = vadd.f32 %v1188, %v1531
        %v1533 = vpop.f32.mrb[0].mxu0
        %1534 = vmatprep.mubr.bf16.mxu0 %v1426
        %1535 = vmatmul.mubr.bf16.gmra.mrb[0].mxu0 %v1296
        %v1536 = vpop.f32.mrb[0].mxu0
        %v1537 = vadd.f32 %v1188, %v1536
        %v1538 = vpop.f32.mrb[0].mxu0
        %v1539 = vpop.f32.mrb[0].mxu0
        %v1540 = vadd.f32 %v1188, %v1539
        %v1541 = vpop.f32.mrb[0].mxu0
        %1542 = vmatprep.mubr.bf16.mxu0 %v1429
        %1543 = vmatmul.mubr.bf16.gmra.mrb[0].mxu0 %v1298
        %v1544 = vpop.f32.mrb[0].mxu0
        %v1545 = vadd.f32 %v1188, %v1544
        %v1546 = vpop.f32.mrb[0].mxu0
        %v1547 = vpop.f32.mrb[0].mxu0
        %v1548 = vadd.f32 %v1188, %v1547
        %v1549 = vpop.f32.mrb[0].mxu0
        %1550 = vmatprep.mubr.bf16.mxu0 %v1432
        %1551 = vmatmul.mubr.bf16.gmra.mrb[0].mxu0 %v1300
        %v1552 = vpop.f32.mrb[0].mxu0
        %v1553 = vadd.f32 %v1188, %v1552
        %v1554 = vpop.f32.mrb[0].mxu0
        %v1555 = vpop.f32.mrb[0].mxu0
        %v1556 = vadd.f32 %v1188, %v1555
        %v1557 = vpop.f32.mrb[0].mxu0
        %1558 = vmatprep.mubr.bf16.mxu0 %v1435
        %1559 = vmatmul.mubr.bf16.gmra.mrb[0].mxu0 %v1302
        %v1560 = vpop.f32.mrb[0].mxu0
        %v1561 = vadd.f32 %v1188, %v1560
        %v1562 = vpop.f32.mrb[0].mxu0
        %v1563 = vpop.f32.mrb[0].mxu0
        %v1564 = vadd.f32 %v1188, %v1563
        %v1565 = vpop.f32.mrb[0].mxu0
        %1566 = vmatprep.mubr.bf16.mxu0 %v1438
        %1567 = vmatmul.mubr.bf16.gmra.mrb[0].mxu0 %v1304
        %v1568 = vpop.f32.mrb[0].mxu0
        %v1569 = vadd.f32 %v1188, %v1568
        %v1570 = vpop.f32.mrb[0].mxu0
        %v1571 = vpop.f32.mrb[0].mxu0
        %v1572 = vadd.f32 %v1188, %v1571
        %v1573 = vpop.f32.mrb[0].mxu0
        %1574 = vmatprep.mubr.bf16.mxu0 %v1441
        %1575 = vmatmul.mubr.bf16.gmra.mrb[0].mxu0 %v1306
        %v1576 = vpop.f32.mrb[0].mxu0
        %v1577 = vadd.f32 %v1188, %v1576
        %v1578 = vpop.f32.mrb[0].mxu0
        %v1579 = vpop.f32.mrb[0].mxu0
        %v1580 = vadd.f32 %v1188, %v1579
        %v1581 = vpop.f32.mrb[0].mxu0
        %1582 = vmatprep.mubr.bf16.mxu0 %v1444
        %1583 = vmatmul.mubr.bf16.gmra.mrb[0].mxu0 %v1308
        %v1584 = vpop.f32.mrb[0].mxu0
        %v1585 = vadd.f32 %v1188, %v1584
        %v1586 = vpop.f32.mrb[0].mxu0
        %v1587 = vpop.f32.mrb[0].mxu0
        %v1588 = vadd.f32 %v1188, %v1587
        %v1589 = vpop.f32.mrb[0].mxu0
        %1590 = vmatprep.mubr.bf16.mxu0 %v1447
        %1591 = vmatmul.mubr.bf16.gmra.mrb[0].mxu0 %v1310
        %v1592 = vpop.f32.mrb[0].mxu0
        %v1593 = vadd.f32 %v1188, %v1592
        %v1594 = vpop.f32.mrb[0].mxu0
        %v1595 = vpop.f32.mrb[0].mxu0
        %v1596 = vadd.f32 %v1188, %v1595
        %v1597 = vpop.f32.mrb[0].mxu0
        %1598 = vmatprep.mubr.bf16.mxu0 %v1450
        %1599 = vmatmul.mubr.bf16.gmra.mrb[0].mxu0 %v1312
        %v1600 = vpop.f32.mrb[0].mxu0
        %v1601 = vadd.f32 %v1188, %v1600
        %v1602 = vpop.f32.mrb[0].mxu0
        %v1603 = vpop.f32.mrb[0].mxu0
        %v1604 = vadd.f32 %v1188, %v1603
        %v1605 = vpop.f32.mrb[0].mxu0
        %1606 = vmatprep.mubr.bf16.mxu0 %v1453
        %1607 = vmatmul.mubr.bf16.gmra.mrb[0].mxu0 %v1314
        %v1608 = vpop.f32.mrb[0].mxu0
        %v1609 = vadd.f32 %v1188, %v1608
        %v1610 = vpop.f32.mrb[0].mxu0
        %v1611 = vpop.f32.mrb[0].mxu0
        %v1612 = vadd.f32 %v1188, %v1611
        %v1613 = vpop.f32.mrb[0].mxu0
        %1614 = vmatprep.mubr.bf16.mxu0 %v1456
        %1615 = vmatmul.mubr.bf16.gmra.mrb[0].mxu0 %v1316
        %v1616 = vpop.f32.mrb[0].mxu0
        %v1617 = vadd.f32 %v1188, %v1616
        %v1618 = vpop.f32.mrb[0].mxu0
        %v1619 = vpop.f32.mrb[0].mxu0
        %v1620 = vadd.f32 %v1188, %v1619
        %v1621 = vpop.f32.mrb[0].mxu0
        %1622 = vdwg.mxu0
        %v1623 = vmax.f32 %v1497, 0.0
        %v1624 = vmax.f32 %v1500, 0.0
        %v1625 = vmax.f32 %v1505, 0.0
        %v1626 = vmax.f32 %v1508, 0.0
        %v1627 = vmax.f32 %v1513, 0.0
        %v1628 = vmax.f32 %v1516, 0.0
        %v1629 = vmax.f32 %v1521, 0.0
        %v1630 = vmax.f32 %v1524, 0.0
        %v1631 = vmax.f32 %v1529, 0.0
        %v1632 = vmax.f32 %v1532, 0.0
        %v1633 = vmax.f32 %v1537, 0.0
        %v1634 = vmax.f32 %v1540, 0.0
        %v1635 = vmax.f32 %v1545, 0.0
        %v1636 = vmax.f32 %v1548, 0.0
        %v1637 = vmax.f32 %v1553, 0.0
        %v1638 = vmax.f32 %v1556, 0.0
        %v1639 = vmax.f32 %v1561, 0.0
        %v1640 = vmax.f32 %v1564, 0.0
        %v1641 = vmax.f32 %v1569, 0.0
        %v1642 = vmax.f32 %v1572, 0.0
        %v1643 = vmax.f32 %v1577, 0.0
        %v1644 = vmax.f32 %v1580, 0.0
        %v1645 = vmax.f32 %v1585, 0.0
        %v1646 = vmax.f32 %v1588, 0.0
        %v1647 = vmax.f32 %v1593, 0.0
        %v1648 = vmax.f32 %v1596, 0.0
        %v1649 = vmax.f32 %v1601, 0.0
        %v1650 = vmax.f32 %v1604, 0.0
        %v1651 = vmax.f32 %v1609, 0.0
        %v1652 = vmax.f32 %v1612, 0.0
        %v1653 = vmax.f32 %v1617, 0.0
        %v1654 = vmax.f32 %v1620, 0.0
        %v1655 = vpack.c.bf16 %v1624, %v1623
        %v1656 = vpack.c.bf16 %v1626, %v1625
        %v1657 = vpack.c.bf16 %v1628, %v1627
        %v1658 = vpack.c.bf16 %v1630, %v1629
        %v1659 = vpack.c.bf16 %v1632, %v1631
        %v1660 = vpack.c.bf16 %v1634, %v1633
        %v1661 = vpack.c.bf16 %v1636, %v1635
        %v1662 = vpack.c.bf16 %v1638, %v1637
        %v1663 = vpack.c.bf16 %v1640, %v1639
        %v1664 = vpack.c.bf16 %v1642, %v1641
        %v1665 = vpack.c.bf16 %v1644, %v1643
        %v1666 = vpack.c.bf16 %v1646, %v1645
        %v1667 = vpack.c.bf16 %v1648, %v1647
        %v1668 = vpack.c.bf16 %v1650, %v1649
        %v1669 = vpack.c.bf16 %v1652, %v1651
        %v1670 = vpack.c.bf16 %v1654, %v1653
        %v1671 = vld [vmem:[%s3] sm:$0xff]
        %v1672 = vld [vmem:[%s3 + $0x8] sm:$0xff]
        %v1673 = vld [vmem:[%s3 + $0x10] sm:$0xff]
        %v1674 = vld [vmem:[%s3 + $0x18] sm:$0xff]
        %v1675 = vld [vmem:[%s3 + $0x20] sm:$0xff]
        %v1676 = vld [vmem:[%s3 + $0x28] sm:$0xff]
        %v1677 = vld [vmem:[%s3 + $0x30] sm:$0xff]
        %v1678 = vld [vmem:[%s3 + $0x38] sm:$0xff]
        %v1687 = vunpack.c.l.b16 %v1671
        %v1688 = vunpack.c.h.b16 %v1671
        %v1689 = vunpack.c.l.b16 %v1672
        %v1690 = vunpack.c.h.b16 %v1672
        %v1691 = vunpack.c.l.b16 %v1673
        %v1692 = vunpack.c.h.b16 %v1673
        %v1693 = vunpack.c.l.b16 %v1674
        %v1694 = vunpack.c.h.b16 %v1674
        %v1695 = vunpack.c.l.b16 %v1675
        %v1696 = vunpack.c.h.b16 %v1675
        %v1697 = vunpack.c.l.b16 %v1676
        %v1698 = vunpack.c.h.b16 %v1676
        %v1699 = vunpack.c.l.b16 %v1677
        %v1700 = vunpack.c.h.b16 %v1677
        %v1701 = vunpack.c.l.b16 %v1678
        %v1702 = vunpack.c.h.b16 %v1678
        %v1703 = vpack.c.b16 %v1689, %v1687
        %v1704 = vpack.c.b16 %v1690, %v1688
        %v1705 = vpack.c.b16 %v1693, %v1691
        %v1706 = vpack.c.b16 %v1694, %v1692
        %v1707 = vpack.c.b16 %v1697, %v1695
        %v1708 = vpack.c.b16 %v1698, %v1696
        %v1709 = vpack.c.b16 %v1701, %v1699
        %v1710 = vpack.c.b16 %v1702, %v1700
        %1719 = vmatprep.subr.bf16.mxu0 0
        %1720 = vmatpush1.bf16.msra.mxu0 %v1655
        %1721 = vmatprep.subr.bf16.mxu0 0
        %1722 = vmatpush1.bf16.msra.mxu0 %v1656
        %1723 = vmatprep.subr.bf16.mxu0 0
        %1724 = vmatpush1.bf16.msra.mxu0 %v1657
        %1725 = vmatprep.subr.bf16.mxu0 0
        %1726 = vmatpush1.bf16.msra.mxu0 %v1658
        %1727 = vmatprep.subr.bf16.mxu0 0
        %1728 = vmatpush1.bf16.msra.mxu0 %v1659
        %1729 = vmatprep.subr.bf16.mxu0 0
        %1730 = vmatpush1.bf16.msra.mxu0 %v1660
        %1731 = vmatprep.subr.bf16.mxu0 0
        %1732 = vmatpush1.bf16.msra.mxu0 %v1661
        %1733 = vmatprep.subr.bf16.mxu0 0
        %1734 = vmatpush1.bf16.msra.mxu0 %v1662
        %1735 = vmatprep.subr.bf16.mxu0 0
        %1736 = vmatpush1.bf16.msra.mxu0 %v1663
        %1737 = vmatprep.subr.bf16.mxu0 0
        %1738 = vmatpush1.bf16.msra.mxu0 %v1664
        %1739 = vmatprep.subr.bf16.mxu0 0
        %1740 = vmatpush1.bf16.msra.mxu0 %v1665
        %1741 = vmatprep.subr.bf16.mxu0 0
        %1742 = vmatpush1.bf16.msra.mxu0 %v1666
        %1743 = vmatprep.subr.bf16.mxu0 0
        %1744 = vmatpush1.bf16.msra.mxu0 %v1667
        %1745 = vmatprep.subr.bf16.mxu0 0
        %1746 = vmatpush1.bf16.msra.mxu0 %v1668
        %1747 = vmatprep.subr.bf16.mxu0 0
        %1748 = vmatpush1.bf16.msra.mxu0 %v1669
        %1749 = vmatprep.subr.bf16.mxu0 0
        %1750 = vmatpush1.bf16.msra.mxu0 %v1670
        %1751 = vmatprep.mubr.bf16.mxu0 %v1704
        %1752 = vmatmul.mubr.bf16.gmra.mrb[0].mxu0 %v1703
        %v1753 = vpop.f32.mrb[0].mxu0
        %v1754 = vadd.f32 0.0, %v1753
        %v1755 = vpop.f32.mrb[0].mxu0
        %v1756 = vpop.f32.mrb[0].mxu0
        %v1757 = vadd.f32 0.0, %v1756
        %v1758 = vpop.f32.mrb[0].mxu0
        %1759 = vmatprep.mubr.bf16.mxu0 %v1706
        %1760 = vmatmul.mubr.bf16.gmra.mrb[0].mxu0 %v1705
        %v1761 = vpop.f32.mrb[0].mxu0
        %v1762 = vadd.f32 0.0, %v1761
        %v1763 = vpop.f32.mrb[0].mxu0
        %v1764 = vpop.f32.mrb[0].mxu0
        %v1765 = vadd.f32 0.0, %v1764
        %v1766 = vpop.f32.mrb[0].mxu0
        %1767 = vmatprep.mubr.bf16.mxu0 %v1708
        %1768 = vmatmul.mubr.bf16.gmra.mrb[0].mxu0 %v1707
        %v1769 = vpop.f32.mrb[0].mxu0
        %v1770 = vadd.f32 0.0, %v1769
        %v1771 = vpop.f32.mrb[0].mxu0
        %v1772 = vpop.f32.mrb[0].mxu0
        %v1773 = vadd.f32 0.0, %v1772
        %v1774 = vpop.f32.mrb[0].mxu0
        %1775 = vmatprep.mubr.bf16.mxu0 %v1710
        %1776 = vmatmul.mubr.bf16.gmra.mrb[0].mxu0 %v1709
        %v1777 = vpop.f32.mrb[0].mxu0
        %v1778 = vadd.f32 0.0, %v1777
        %v1779 = vpop.f32.mrb[0].mxu0
        %v1780 = vpop.f32.mrb[0].mxu0
        %v1781 = vadd.f32 0.0, %v1780
        %v1782 = vpop.f32.mrb[0].mxu0
        %1783 = vdwg.mxu0
        %s1784 = scalar_lea.vmem %s3, 64
        %v1785 = vld [vmem:[%s1784] sm:$0xff]
        %v1786 = vld [vmem:[%s1784 + $0x8] sm:$0xff]
        %v1787 = vld [vmem:[%s1784 + $0x10] sm:$0xff]
        %v1788 = vld [vmem:[%s1784 + $0x18] sm:$0xff]
        %v1789 = vld [vmem:[%s1784 + $0x20] sm:$0xff]
        %v1790 = vld [vmem:[%s1784 + $0x28] sm:$0xff]
        %v1791 = vld [vmem:[%s1784 + $0x30] sm:$0xff]
        %v1792 = vld [vmem:[%s1784 + $0x38] sm:$0xff]
        %v1801 = vunpack.c.l.b16 %v1785
        %v1802 = vunpack.c.h.b16 %v1785
        %v1803 = vunpack.c.l.b16 %v1786
        %v1804 = vunpack.c.h.b16 %v1786
        %v1805 = vunpack.c.l.b16 %v1787
        %v1806 = vunpack.c.h.b16 %v1787
        %v1807 = vunpack.c.l.b16 %v1788
        %v1808 = vunpack.c.h.b16 %v1788
        %v1809 = vunpack.c.l.b16 %v1789
        %v1810 = vunpack.c.h.b16 %v1789
        %v1811 = vunpack.c.l.b16 %v1790
        %v1812 = vunpack.c.h.b16 %v1790
        %v1813 = vunpack.c.l.b16 %v1791
        %v1814 = vunpack.c.h.b16 %v1791
        %v1815 = vunpack.c.l.b16 %v1792
        %v1816 = vunpack.c.h.b16 %v1792
        %v1817 = vpack.c.b16 %v1803, %v1801
        %v1818 = vpack.c.b16 %v1804, %v1802
        %v1819 = vpack.c.b16 %v1807, %v1805
        %v1820 = vpack.c.b16 %v1808, %v1806
        %v1821 = vpack.c.b16 %v1811, %v1809
        %v1822 = vpack.c.b16 %v1812, %v1810
        %v1823 = vpack.c.b16 %v1815, %v1813
        %v1824 = vpack.c.b16 %v1816, %v1814
        %1833 = vmatprep.subr.bf16.mxu0 0
        %1834 = vmatpush1.bf16.msra.mxu0 %v1655
        %1835 = vmatprep.subr.bf16.mxu0 0
        %1836 = vmatpush1.bf16.msra.mxu0 %v1656
        %1837 = vmatprep.subr.bf16.mxu0 0
        %1838 = vmatpush1.bf16.msra.mxu0 %v1657
        %1839 = vmatprep.subr.bf16.mxu0 0
        %1840 = vmatpush1.bf16.msra.mxu0 %v1658
        %1841 = vmatprep.subr.bf16.mxu0 0
        %1842 = vmatpush1.bf16.msra.mxu0 %v1659
        %1843 = vmatprep.subr.bf16.mxu0 0
        %1844 = vmatpush1.bf16.msra.mxu0 %v1660
        %1845 = vmatprep.subr.bf16.mxu0 0
        %1846 = vmatpush1.bf16.msra.mxu0 %v1661
        %1847 = vmatprep.subr.bf16.mxu0 0
        %1848 = vmatpush1.bf16.msra.mxu0 %v1662
        %1849 = vmatprep.subr.bf16.mxu0 0
        %1850 = vmatpush1.bf16.msra.mxu0 %v1663
        %1851 = vmatprep.subr.bf16.mxu0 0
        %1852 = vmatpush1.bf16.msra.mxu0 %v1664
        %1853 = vmatprep.subr.bf16.mxu0 0
        %1854 = vmatpush1.bf16.msra.mxu0 %v1665
        %1855 = vmatprep.subr.bf16.mxu0 0
        %1856 = vmatpush1.bf16.msra.mxu0 %v1666
        %1857 = vmatprep.subr.bf16.mxu0 0
        %1858 = vmatpush1.bf16.msra.mxu0 %v1667
        %1859 = vmatprep.subr.bf16.mxu0 0
        %1860 = vmatpush1.bf16.msra.mxu0 %v1668
        %1861 = vmatprep.subr.bf16.mxu0 0
        %1862 = vmatpush1.bf16.msra.mxu0 %v1669
        %1863 = vmatprep.subr.bf16.mxu0 0
        %1864 = vmatpush1.bf16.msra.mxu0 %v1670
        %1865 = vmatprep.mubr.bf16.mxu0 %v1818
        %1866 = vmatmul.mubr.bf16.gmra.mrb[0].mxu0 %v1817
        %v1867 = vpop.f32.mrb[0].mxu0
        %v1868 = vadd.f32 0.0, %v1867
        %v1869 = vpop.f32.mrb[0].mxu0
        %v1870 = vpop.f32.mrb[0].mxu0
        %v1871 = vadd.f32 0.0, %v1870
        %v1872 = vpop.f32.mrb[0].mxu0
        %1873 = vmatprep.mubr.bf16.mxu0 %v1820
        %1874 = vmatmul.mubr.bf16.gmra.mrb[0].mxu0 %v1819
        %v1875 = vpop.f32.mrb[0].mxu0
        %v1876 = vadd.f32 0.0, %v1875
        %v1877 = vpop.f32.mrb[0].mxu0
        %v1878 = vpop.f32.mrb[0].mxu0
        %v1879 = vadd.f32 0.0, %v1878
        %v1880 = vpop.f32.mrb[0].mxu0
        %1881 = vmatprep.mubr.bf16.mxu0 %v1822
        %1882 = vmatmul.mubr.bf16.gmra.mrb[0].mxu0 %v1821
        %v1883 = vpop.f32.mrb[0].mxu0
        %v1884 = vadd.f32 0.0, %v1883
        %v1885 = vpop.f32.mrb[0].mxu0
        %v1886 = vpop.f32.mrb[0].mxu0
        %v1887 = vadd.f32 0.0, %v1886
        %v1888 = vpop.f32.mrb[0].mxu0
        %1889 = vmatprep.mubr.bf16.mxu0 %v1824
        %1890 = vmatmul.mubr.bf16.gmra.mrb[0].mxu0 %v1823
        %v1891 = vpop.f32.mrb[0].mxu0
        %v1892 = vadd.f32 0.0, %v1891
        %v1893 = vpop.f32.mrb[0].mxu0
        %v1894 = vpop.f32.mrb[0].mxu0
        %v1895 = vadd.f32 0.0, %v1894
        %v1896 = vpop.f32.mrb[0].mxu0
        %1897 = vdwg.mxu0
        %v1898 = vmax.f32 %v1754, %v1868
        %v1899 = vmax.f32 %v1757, %v1871
        %v1900 = vmax.f32 %v1762, %v1876
        %v1901 = vmax.f32 %v1765, %v1879
        %v1902 = vmax.f32 %v1770, %v1884
        %v1903 = vmax.f32 %v1773, %v1887
        %v1904 = vmax.f32 %v1778, %v1892
        %v1905 = vmax.f32 %v1781, %v1895
        %s1906 = scalar_lea.vmem %s3, 128
        %v1907 = vld [vmem:[%s1906] sm:$0xff]
        %v1908 = vld [vmem:[%s1906 + $0x8] sm:$0xff]
        %v1909 = vld [vmem:[%s1906 + $0x10] sm:$0xff]
        %v1910 = vld [vmem:[%s1906 + $0x18] sm:$0xff]
        %v1911 = vld [vmem:[%s1906 + $0x20] sm:$0xff]
        %v1912 = vld [vmem:[%s1906 + $0x28] sm:$0xff]
        %v1913 = vld [vmem:[%s1906 + $0x30] sm:$0xff]
        %v1914 = vld [vmem:[%s1906 + $0x38] sm:$0xff]
        %v1923 = vunpack.c.l.b16 %v1907
        %v1924 = vunpack.c.h.b16 %v1907
        %v1925 = vunpack.c.l.b16 %v1908
        %v1926 = vunpack.c.h.b16 %v1908
        %v1927 = vunpack.c.l.b16 %v1909
        %v1928 = vunpack.c.h.b16 %v1909
        %v1929 = vunpack.c.l.b16 %v1910
        %v1930 = vunpack.c.h.b16 %v1910
        %v1931 = vunpack.c.l.b16 %v1911
        %v1932 = vunpack.c.h.b16 %v1911
        %v1933 = vunpack.c.l.b16 %v1912
        %v1934 = vunpack.c.h.b16 %v1912
        %v1935 = vunpack.c.l.b16 %v1913
        %v1936 = vunpack.c.h.b16 %v1913
        %v1937 = vunpack.c.l.b16 %v1914
        %v1938 = vunpack.c.h.b16 %v1914
        %v1939 = vpack.c.b16 %v1925, %v1923
        %v1940 = vpack.c.b16 %v1926, %v1924
        %v1941 = vpack.c.b16 %v1929, %v1927
        %v1942 = vpack.c.b16 %v1930, %v1928
        %v1943 = vpack.c.b16 %v1933, %v1931
        %v1944 = vpack.c.b16 %v1934, %v1932
        %v1945 = vpack.c.b16 %v1937, %v1935
        %v1946 = vpack.c.b16 %v1938, %v1936
        %1955 = vmatprep.subr.bf16.mxu0 0
        %1956 = vmatpush1.bf16.msra.mxu0 %v1655
        %1957 = vmatprep.subr.bf16.mxu0 0
        %1958 = vmatpush1.bf16.msra.mxu0 %v1656
        %1959 = vmatprep.subr.bf16.mxu0 0
        %1960 = vmatpush1.bf16.msra.mxu0 %v1657
        %1961 = vmatprep.subr.bf16.mxu0 0
        %1962 = vmatpush1.bf16.msra.mxu0 %v1658
        %1963 = vmatprep.subr.bf16.mxu0 0
        %1964 = vmatpush1.bf16.msra.mxu0 %v1659
        %1965 = vmatprep.subr.bf16.mxu0 0
        %1966 = vmatpush1.bf16.msra.mxu0 %v1660
        %1967 = vmatprep.subr.bf16.mxu0 0
        %1968 = vmatpush1.bf16.msra.mxu0 %v1661
        %1969 = vmatprep.subr.bf16.mxu0 0
        %1970 = vmatpush1.bf16.msra.mxu0 %v1662
        %1971 = vmatprep.subr.bf16.mxu0 0
        %1972 = vmatpush1.bf16.msra.mxu0 %v1663
        %1973 = vmatprep.subr.bf16.mxu0 0
        %1974 = vmatpush1.bf16.msra.mxu0 %v1664
        %1975 = vmatprep.subr.bf16.mxu0 0
        %1976 = vmatpush1.bf16.msra.mxu0 %v1665
        %1977 = vmatprep.subr.bf16.mxu0 0
        %1978 = vmatpush1.bf16.msra.mxu0 %v1666
        %1979 = vmatprep.subr.bf16.mxu0 0
        %1980 = vmatpush1.bf16.msra.mxu0 %v1667
        %1981 = vmatprep.subr.bf16.mxu0 0
        %1982 = vmatpush1.bf16.msra.mxu0 %v1668
        %1983 = vmatprep.subr.bf16.mxu0 0
        %1984 = vmatpush1.bf16.msra.mxu0 %v1669
        %1985 = vmatprep.subr.bf16.mxu0 0
        %1986 = vmatpush1.bf16.msra.mxu0 %v1670
        %1987 = vmatprep.mubr.bf16.mxu0 %v1940
        %1988 = vmatmul.mubr.bf16.gmra.mrb[0].mxu0 %v1939
        %v1989 = vpop.f32.mrb[0].mxu0
        %v1990 = vadd.f32 0.0, %v1989
        %v1991 = vpop.f32.mrb[0].mxu0
        %v1992 = vpop.f32.mrb[0].mxu0
        %v1993 = vadd.f32 0.0, %v1992
        %v1994 = vpop.f32.mrb[0].mxu0
        %1995 = vmatprep.mubr.bf16.mxu0 %v1942
        %1996 = vmatmul.mubr.bf16.gmra.mrb[0].mxu0 %v1941
        %v1997 = vpop.f32.mrb[0].mxu0
        %v1998 = vadd.f32 0.0, %v1997
        %v1999 = vpop.f32.mrb[0].mxu0
        %v2000 = vpop.f32.mrb[0].mxu0
        %v2001 = vadd.f32 0.0, %v2000
        %v2002 = vpop.f32.mrb[0].mxu0
        %2003 = vmatprep.mubr.bf16.mxu0 %v1944
        %2004 = vmatmul.mubr.bf16.gmra.mrb[0].mxu0 %v1943
        %v2005 = vpop.f32.mrb[0].mxu0
        %v2006 = vadd.f32 0.0, %v2005
        %v2007 = vpop.f32.mrb[0].mxu0
        %v2008 = vpop.f32.mrb[0].mxu0
        %v2009 = vadd.f32 0.0, %v2008
        %v2010 = vpop.f32.mrb[0].mxu0
        %2011 = vmatprep.mubr.bf16.mxu0 %v1946
        %2012 = vmatmul.mubr.bf16.gmra.mrb[0].mxu0 %v1945
        %v2013 = vpop.f32.mrb[0].mxu0
        %v2014 = vadd.f32 0.0, %v2013
        %v2015 = vpop.f32.mrb[0].mxu0
        %v2016 = vpop.f32.mrb[0].mxu0
        %v2017 = vadd.f32 0.0, %v2016
        %v2018 = vpop.f32.mrb[0].mxu0
        %2019 = vdwg.mxu0
        %v2020 = vmax.f32 %v1898, %v1990
        %v2021 = vmax.f32 %v1899, %v1993
        %v2022 = vmax.f32 %v1900, %v1998
        %v2023 = vmax.f32 %v1901, %v2001
        %v2024 = vmax.f32 %v1902, %v2006
        %v2025 = vmax.f32 %v1903, %v2009
        %v2026 = vmax.f32 %v1904, %v2014
        %v2027 = vmax.f32 %v1905, %v2017
        %s2028 = scalar_lea.vmem %s3, 192
        %v2029 = vld [vmem:[%s2028] sm:$0xff]
        %v2030 = vld [vmem:[%s2028 + $0x8] sm:$0xff]
        %v2031 = vld [vmem:[%s2028 + $0x10] sm:$0xff]
        %v2032 = vld [vmem:[%s2028 + $0x18] sm:$0xff]
        %v2033 = vld [vmem:[%s2028 + $0x20] sm:$0xff]
        %v2034 = vld [vmem:[%s2028 + $0x28] sm:$0xff]
        %v2035 = vld [vmem:[%s2028 + $0x30] sm:$0xff]
        %v2036 = vld [vmem:[%s2028 + $0x38] sm:$0xff]
        %v2045 = vunpack.c.l.b16 %v2029
        %v2046 = vunpack.c.h.b16 %v2029
        %v2047 = vunpack.c.l.b16 %v2030
        %v2048 = vunpack.c.h.b16 %v2030
        %v2049 = vunpack.c.l.b16 %v2031
        %v2050 = vunpack.c.h.b16 %v2031
        %v2051 = vunpack.c.l.b16 %v2032
        %v2052 = vunpack.c.h.b16 %v2032
        %v2053 = vunpack.c.l.b16 %v2033
        %v2054 = vunpack.c.h.b16 %v2033
        %v2055 = vunpack.c.l.b16 %v2034
        %v2056 = vunpack.c.h.b16 %v2034
        %v2057 = vunpack.c.l.b16 %v2035
        %v2058 = vunpack.c.h.b16 %v2035
        %v2059 = vunpack.c.l.b16 %v2036
        %v2060 = vunpack.c.h.b16 %v2036
        %v2061 = vpack.c.b16 %v2047, %v2045
        %v2062 = vpack.c.b16 %v2048, %v2046
        %v2063 = vpack.c.b16 %v2051, %v2049
        %v2064 = vpack.c.b16 %v2052, %v2050
        %v2065 = vpack.c.b16 %v2055, %v2053
        %v2066 = vpack.c.b16 %v2056, %v2054
        %v2067 = vpack.c.b16 %v2059, %v2057
        %v2068 = vpack.c.b16 %v2060, %v2058
        %2077 = vmatprep.subr.bf16.mxu0 0
        %2078 = vmatpush1.bf16.msra.mxu0 %v1655
        %2079 = vmatprep.subr.bf16.mxu0 0
        %2080 = vmatpush1.bf16.msra.mxu0 %v1656
        %2081 = vmatprep.subr.bf16.mxu0 0
        %2082 = vmatpush1.bf16.msra.mxu0 %v1657
        %2083 = vmatprep.subr.bf16.mxu0 0
        %2084 = vmatpush1.bf16.msra.mxu0 %v1658
        %2085 = vmatprep.subr.bf16.mxu0 0
        %2086 = vmatpush1.bf16.msra.mxu0 %v1659
        %2087 = vmatprep.subr.bf16.mxu0 0
        %2088 = vmatpush1.bf16.msra.mxu0 %v1660
        %2089 = vmatprep.subr.bf16.mxu0 0
        %2090 = vmatpush1.bf16.msra.mxu0 %v1661
        %2091 = vmatprep.subr.bf16.mxu0 0
        %2092 = vmatpush1.bf16.msra.mxu0 %v1662
        %2093 = vmatprep.subr.bf16.mxu0 0
        %2094 = vmatpush1.bf16.msra.mxu0 %v1663
        %2095 = vmatprep.subr.bf16.mxu0 0
        %2096 = vmatpush1.bf16.msra.mxu0 %v1664
        %2097 = vmatprep.subr.bf16.mxu0 0
        %2098 = vmatpush1.bf16.msra.mxu0 %v1665
        %2099 = vmatprep.subr.bf16.mxu0 0
        %2100 = vmatpush1.bf16.msra.mxu0 %v1666
        %2101 = vmatprep.subr.bf16.mxu0 0
        %2102 = vmatpush1.bf16.msra.mxu0 %v1667
        %2103 = vmatprep.subr.bf16.mxu0 0
        %2104 = vmatpush1.bf16.msra.mxu0 %v1668
        %2105 = vmatprep.subr.bf16.mxu0 0
        %2106 = vmatpush1.bf16.msra.mxu0 %v1669
        %2107 = vmatprep.subr.bf16.mxu0 0
        %2108 = vmatpush1.bf16.msra.mxu0 %v1670
        %2109 = vmatprep.mubr.bf16.mxu0 %v2062
        %2110 = vmatmul.mubr.bf16.gmra.mrb[0].mxu0 %v2061
        %v2111 = vpop.f32.mrb[0].mxu0
        %v2112 = vadd.f32 0.0, %v2111
        %v2113 = vpop.f32.mrb[0].mxu0
        %v2114 = vpop.f32.mrb[0].mxu0
        %v2115 = vadd.f32 0.0, %v2114
        %v2116 = vpop.f32.mrb[0].mxu0
        %2117 = vmatprep.mubr.bf16.mxu0 %v2064
        %2118 = vmatmul.mubr.bf16.gmra.mrb[0].mxu0 %v2063
        %v2119 = vpop.f32.mrb[0].mxu0
        %v2120 = vadd.f32 0.0, %v2119
        %v2121 = vpop.f32.mrb[0].mxu0
        %v2122 = vpop.f32.mrb[0].mxu0
        %v2123 = vadd.f32 0.0, %v2122
        %v2124 = vpop.f32.mrb[0].mxu0
        %2125 = vmatprep.mubr.bf16.mxu0 %v2066
        %2126 = vmatmul.mubr.bf16.gmra.mrb[0].mxu0 %v2065
        %v2127 = vpop.f32.mrb[0].mxu0
        %v2128 = vadd.f32 0.0, %v2127
        %v2129 = vpop.f32.mrb[0].mxu0
        %v2130 = vpop.f32.mrb[0].mxu0
        %v2131 = vadd.f32 0.0, %v2130
        %v2132 = vpop.f32.mrb[0].mxu0
        %2133 = vmatprep.mubr.bf16.mxu0 %v2068
        %2134 = vmatmul.mubr.bf16.gmra.mrb[0].mxu0 %v2067
        %v2135 = vpop.f32.mrb[0].mxu0
        %v2136 = vadd.f32 0.0, %v2135
        %v2137 = vpop.f32.mrb[0].mxu0
        %v2138 = vpop.f32.mrb[0].mxu0
        %v2139 = vadd.f32 0.0, %v2138
        %v2140 = vpop.f32.mrb[0].mxu0
        %2141 = vdwg.mxu0
        %v2142 = vmax.f32 %v2020, %v2112
        %v2143 = vmax.f32 %v2021, %v2115
        %v2144 = vmax.f32 %v2022, %v2120
        %v2145 = vmax.f32 %v2023, %v2123
        %v2146 = vmax.f32 %v2024, %v2128
        %v2147 = vmax.f32 %v2025, %v2131
        %v2148 = vmax.f32 %v2026, %v2136
        %v2149 = vmax.f32 %v2027, %v2139
        %v2150 = vld [vmem:[%s15] sm:$0x1]
        %v2152 = vlaneseq
        %v2153 = vshrl.u32 %v2152, 7
        %v2154 = vsub.s32 0, %v2153
        %v2155 = vrot.slane %v2150, %v2154
        %v2157 = vmul.f32 %v2142, %v2155
        %v2158 = vmul.f32 %v2143, %v2155
        %v2159 = vmul.f32 %v2144, %v2155
        %v2160 = vmul.f32 %v2145, %v2155
        %v2161 = vmul.f32 %v2146, %v2155
        %v2162 = vmul.f32 %v2147, %v2155
        %v2163 = vmul.f32 %v2148, %v2155
        %v2164 = vmul.f32 %v2149, %v2155
        %v2165 = vld [vmem:[%s17] sm:$0x1]
        %v2167 = vlaneseq
        %v2168 = vshrl.u32 %v2167, 7
        %v2169 = vsub.s32 0, %v2168
        %v2170 = vrot.slane %v2165, %v2169
        %v2172 = vadd.f32 %v2157, %v2170
        %v2173 = vadd.f32 %v2158, %v2170
        %v2174 = vadd.f32 %v2159, %v2170
        %v2175 = vadd.f32 %v2160, %v2170
        %v2176 = vadd.f32 %v2161, %v2170
        %v2177 = vadd.f32 %v2162, %v2170
        %v2178 = vadd.f32 %v2163, %v2170
        %v2179 = vadd.f32 %v2164, %v2170
        %v2180 = vmax.f32 %v2172, 0.0
        %v2181 = vmax.f32 %v2173, 0.0
        %v2182 = vmax.f32 %v2174, 0.0
        %v2183 = vmax.f32 %v2175, 0.0
        %v2184 = vmax.f32 %v2176, 0.0
        %v2185 = vmax.f32 %v2177, 0.0
        %v2186 = vmax.f32 %v2178, 0.0
        %v2187 = vmax.f32 %v2179, 0.0
        %v2188 = vld [vmem:[%s19] sm:$0xf]
        %v2189 = vld [vmem:[%s19 + $0x4] sm:$0xf]
        %v2190 = vpack.c.bf16 %v2181, %v2180
        %v2191 = vpack.c.bf16 %v2183, %v2182
        %v2192 = vpack.c.bf16 %v2185, %v2184
        %v2193 = vpack.c.bf16 %v2187, %v2186
        %v2196 = vunpack.c.l.b16 %v2188
        %v2197 = vunpack.c.l.b16 %v2189
        %v2198 = vpack.c.b16 %v2197, %v2196
        %vm2200 = vcmask 130048
        %v2202 = vsel %vm2200, %v2190, 0
        %v2205 = vsel %vm2200, %v2191, 0
        %v2208 = vsel %vm2200, %v2192, 0
        %v2211 = vsel %vm2200, %v2193, 0
        %2213 = vmatprep.subr.bf16.mxu0 0
        %2214 = vmatpush1.bf16.msra.mxu0 %v2198
        %2215 = vmatprep.subr.bf16.mxu0 0
        %2216 = vmatpush1.bf16.msra.mxu0 0
        %2217 = vmatprep.subr.bf16.mxu0 0
        %2218 = vmatpush1.bf16.msra.mxu0 0
        %2219 = vmatprep.subr.bf16.mxu0 0
        %2220 = vmatpush1.bf16.msra.mxu0 0
        %2221 = vmatprep.subr.bf16.mxu0 0
        %2222 = vmatpush1.bf16.msra.mxu0 0
        %2223 = vmatprep.subr.bf16.mxu0 0
        %2224 = vmatpush1.bf16.msra.mxu0 0
        %2225 = vmatprep.subr.bf16.mxu0 0
        %2226 = vmatpush1.bf16.msra.mxu0 0
        %2227 = vmatprep.subr.bf16.mxu0 0
        %2228 = vmatpush1.bf16.msra.mxu0 0
        %2229 = vmatprep.subr.bf16.mxu0 0
        %2230 = vmatpush1.bf16.msra.mxu0 0
        %2231 = vmatprep.subr.bf16.mxu0 0
        %2232 = vmatpush1.bf16.msra.mxu0 0
        %2233 = vmatprep.subr.bf16.mxu0 0
        %2234 = vmatpush1.bf16.msra.mxu0 0
        %2235 = vmatprep.subr.bf16.mxu0 0
        %2236 = vmatpush1.bf16.msra.mxu0 0
        %2237 = vmatprep.subr.bf16.mxu0 0
        %2238 = vmatpush1.bf16.msra.mxu0 0
        %2239 = vmatprep.subr.bf16.mxu0 0
        %2240 = vmatpush1.bf16.msra.mxu0 0
        %2241 = vmatprep.subr.bf16.mxu0 0
        %2242 = vmatpush1.bf16.msra.mxu0 0
        %2243 = vmatprep.subr.bf16.mxu0 0
        %2244 = vmatpush1.bf16.msra.mxu0 0
        %2245 = vmatprep.mubr.bf16.mxu0 0
        %2246 = vmatmul.mubr.bf16.gmra.mrb[0].mxu0 %v2202
        %v2247 = vpop.f32.mrb[0].mxu0
        %v2248 = vadd.f32 0.0, %v2247
        %v2249 = vpop.f32.mrb[0].mxu0
        %v2250 = vpop.f32.mrb[0].mxu0
        %v2251 = vadd.f32 0.0, %v2250
        %v2252 = vpop.f32.mrb[0].mxu0
        %2253 = vmatprep.mubr.bf16.mxu0 0
        %2254 = vmatmul.mubr.bf16.gmra.mrb[0].mxu0 %v2205
        %v2255 = vpop.f32.mrb[0].mxu0
        %v2256 = vadd.f32 0.0, %v2255
        %v2257 = vpop.f32.mrb[0].mxu0
        %v2258 = vpop.f32.mrb[0].mxu0
        %v2259 = vadd.f32 0.0, %v2258
        %v2260 = vpop.f32.mrb[0].mxu0
        %2261 = vmatprep.mubr.bf16.mxu0 0
        %2262 = vmatmul.mubr.bf16.gmra.mrb[0].mxu0 %v2208
        %v2263 = vpop.f32.mrb[0].mxu0
        %v2264 = vadd.f32 0.0, %v2263
        %v2265 = vpop.f32.mrb[0].mxu0
        %v2266 = vpop.f32.mrb[0].mxu0
        %v2267 = vadd.f32 0.0, %v2266
        %v2268 = vpop.f32.mrb[0].mxu0
        %2269 = vmatprep.mubr.bf16.mxu0 0
        %2270 = vmatmul.mubr.bf16.gmra.mrb[0].mxu0 %v2211
        %v2271 = vpop.f32.mrb[0].mxu0
        %v2272 = vadd.f32 0.0, %v2271
        %v2273 = vpop.f32.mrb[0].mxu0
        %v2274 = vpop.f32.mrb[0].mxu0
        %v2275 = vadd.f32 0.0, %v2274
        %v2276 = vpop.f32.mrb[0].mxu0
        %2277 = vdwg.mxu0
        %v2278 = vld [vmem:[%s21] sm:$0x1]
        %v2280 = vlaneseq
        %v2281 = vshrl.u32 %v2280, 7
        %v2282 = vsub.s32 0, %v2281
        %v2283 = vrot.slane %v2278, %v2282
        %v2285 = vmul.f32 %v2248, %v2283
        %v2286 = vmul.f32 %v2251, %v2283
        %v2287 = vmul.f32 %v2256, %v2283
        %v2288 = vmul.f32 %v2259, %v2283
        %v2289 = vmul.f32 %v2264, %v2283
        %v2290 = vmul.f32 %v2267, %v2283
        %v2291 = vmul.f32 %v2272, %v2283
        %v2292 = vmul.f32 %v2275, %v2283
        %v2293 = vld [vmem:[%s23] sm:$0x1]
        %v2295 = vlaneseq
        %v2296 = vshrl.u32 %v2295, 7
        %v2297 = vsub.s32 0, %v2296
        %v2298 = vrot.slane %v2293, %v2297
        %v2300 = vadd.f32 %v2285, %v2298
        %v2301 = vadd.f32 %v2286, %v2298
        %v2302 = vadd.f32 %v2287, %v2298
        %v2303 = vadd.f32 %v2288, %v2298
        %v2304 = vadd.f32 %v2289, %v2298
        %v2305 = vadd.f32 %v2290, %v2298
        %v2306 = vadd.f32 %v2291, %v2298
        %v2307 = vadd.f32 %v2292, %v2298
        %v2308 = vmax.f32 %v2300, 0.0
        %v2309 = vmax.f32 %v2301, 0.0
        %v2310 = vmax.f32 %v2302, 0.0
        %v2311 = vmax.f32 %v2303, 0.0
        %v2312 = vmax.f32 %v2304, 0.0
        %v2313 = vmax.f32 %v2305, 0.0
        %v2314 = vmax.f32 %v2306, 0.0
        %v2315 = vmax.f32 %v2307, 0.0
        %v2316 = vpack.c.bf16 %v2309, %v2308
        %v2317 = vpack.c.bf16 %v2311, %v2310
        %v2318 = vpack.c.bf16 %v2313, %v2312
        %v2319 = vpack.c.bf16 %v2315, %v2314
        %v2320 = vld [vmem:[%s25] sm:$0xf]
        %v2321 = vld [vmem:[%s25 + $0x4] sm:$0xf]
        %v2322 = vld [vmem:[%s25 + $0x8] sm:$0xf]
        %v2323 = vld [vmem:[%s25 + $0xc] sm:$0xf]
        %v2328 = vunpack.c.l.b16 %v2320
        %v2329 = vunpack.c.l.b16 %v2321
        %v2330 = vunpack.c.l.b16 %v2322
        %v2331 = vunpack.c.l.b16 %v2323
        %v2332 = vpack.c.b16 %v2329, %v2328
        %v2333 = vpack.c.b16 %v2331, %v2330
        %vm2336 = vcmask 261120
        %v2338 = vsel %vm2336, %v2316, 0
        %v2341 = vsel %vm2336, %v2317, 0
        %v2344 = vsel %vm2336, %v2318, 0
        %v2347 = vsel %vm2336, %v2319, 0
        %2349 = vmatprep.subr.bf16.mxu0 0
        %2350 = vmatpush1.bf16.msra.mxu0 %v2332
        %2351 = vmatprep.subr.bf16.mxu0 0
        %2352 = vmatpush1.bf16.msra.mxu0 %v2333
        %2353 = vmatprep.subr.bf16.mxu0 0
        %2354 = vmatpush1.bf16.msra.mxu0 0
        %2355 = vmatprep.subr.bf16.mxu0 0
        %2356 = vmatpush1.bf16.msra.mxu0 0
        %2357 = vmatprep.subr.bf16.mxu0 0
        %2358 = vmatpush1.bf16.msra.mxu0 0
        %2359 = vmatprep.subr.bf16.mxu0 0
        %2360 = vmatpush1.bf16.msra.mxu0 0
        %2361 = vmatprep.subr.bf16.mxu0 0
        %2362 = vmatpush1.bf16.msra.mxu0 0
        %2363 = vmatprep.subr.bf16.mxu0 0
        %2364 = vmatpush1.bf16.msra.mxu0 0
        %2365 = vmatprep.subr.bf16.mxu0 0
        %2366 = vmatpush1.bf16.msra.mxu0 0
        %2367 = vmatprep.subr.bf16.mxu0 0
        %2368 = vmatpush1.bf16.msra.mxu0 0
        %2369 = vmatprep.subr.bf16.mxu0 0
        %2370 = vmatpush1.bf16.msra.mxu0 0
        %2371 = vmatprep.subr.bf16.mxu0 0
        %2372 = vmatpush1.bf16.msra.mxu0 0
        %2373 = vmatprep.subr.bf16.mxu0 0
        %2374 = vmatpush1.bf16.msra.mxu0 0
        %2375 = vmatprep.subr.bf16.mxu0 0
        %2376 = vmatpush1.bf16.msra.mxu0 0
        %2377 = vmatprep.subr.bf16.mxu0 0
        %2378 = vmatpush1.bf16.msra.mxu0 0
        %2379 = vmatprep.subr.bf16.mxu0 0
        %2380 = vmatpush1.bf16.msra.mxu0 0
        %2381 = vmatprep.mubr.bf16.mxu0 0
        %2382 = vmatmul.mubr.bf16.gmra.mrb[0].mxu0 %v2338
        %v2383 = vpop.f32.mrb[0].mxu0
        %v2384 = vadd.f32 0.0, %v2383
        %v2385 = vpop.f32.mrb[0].mxu0
        %v2386 = vpop.f32.mrb[0].mxu0
        %v2387 = vadd.f32 0.0, %v2386
        %v2388 = vpop.f32.mrb[0].mxu0
        %2389 = vmatprep.mubr.bf16.mxu0 0
        %2390 = vmatmul.mubr.bf16.gmra.mrb[0].mxu0 %v2341
        %v2391 = vpop.f32.mrb[0].mxu0
        %v2392 = vadd.f32 0.0, %v2391
        %v2393 = vpop.f32.mrb[0].mxu0
        %v2394 = vpop.f32.mrb[0].mxu0
        %v2395 = vadd.f32 0.0, %v2394
        %v2396 = vpop.f32.mrb[0].mxu0
        %2397 = vmatprep.mubr.bf16.mxu0 0
        %2398 = vmatmul.mubr.bf16.gmra.mrb[0].mxu0 %v2344
        %v2399 = vpop.f32.mrb[0].mxu0
        %v2400 = vadd.f32 0.0, %v2399
        %v2401 = vpop.f32.mrb[0].mxu0
        %v2402 = vpop.f32.mrb[0].mxu0
        %v2403 = vadd.f32 0.0, %v2402
        %v2404 = vpop.f32.mrb[0].mxu0
        %2405 = vmatprep.mubr.bf16.mxu0 0
        %2406 = vmatmul.mubr.bf16.gmra.mrb[0].mxu0 %v2347
        %v2407 = vpop.f32.mrb[0].mxu0
        %v2408 = vadd.f32 0.0, %v2407
        %v2409 = vpop.f32.mrb[0].mxu0
        %v2410 = vpop.f32.mrb[0].mxu0
        %v2411 = vadd.f32 0.0, %v2410
        %v2412 = vpop.f32.mrb[0].mxu0
        %2413 = vdwg.mxu0
        %v2414 = vld [vmem:[%s5] sm:$0xf]
        %v2415 = vld [vmem:[%s5 + $0x4] sm:$0xf]
        %v2416 = vld [vmem:[%s5 + $0x8] sm:$0xf]
        %v2417 = vld [vmem:[%s5 + $0xc] sm:$0xf]
        %v2418 = vld [vmem:[%s5 + $0x10] sm:$0xf]
        %v2419 = vld [vmem:[%s5 + $0x14] sm:$0xf]
        %v2420 = vld [vmem:[%s5 + $0x18] sm:$0xf]
        %v2421 = vld [vmem:[%s5 + $0x1c] sm:$0xf]
        %v2422 = vpack.c.bf16 %v2387, %v2384
        %v2423 = vpack.c.bf16 %v2395, %v2392
        %v2424 = vpack.c.bf16 %v2403, %v2400
        %v2425 = vpack.c.bf16 %v2411, %v2408
        %s2426 = scalar_lea.vmem %s25, 16
        %v2427 = vld [vmem:[%s2426] sm:$0xf]
        %v2428 = vld [vmem:[%s2426 + $0x4] sm:$0xf]
        %v2429 = vld [vmem:[%s2426 + $0x8] sm:$0xf]
        %v2430 = vld [vmem:[%s2426 + $0xc] sm:$0xf]
        %v2435 = vunpack.c.l.b16 %v2427
        %v2436 = vunpack.c.l.b16 %v2428
        %v2437 = vunpack.c.l.b16 %v2429
        %v2438 = vunpack.c.l.b16 %v2430
        %v2439 = vpack.c.b16 %v2436, %v2435
        %v2440 = vpack.c.b16 %v2438, %v2437
        %2443 = vmatprep.subr.bf16.mxu0 0
        %2444 = vmatpush1.bf16.msra.mxu0 %v2439
        %2445 = vmatprep.subr.bf16.mxu0 0
        %2446 = vmatpush1.bf16.msra.mxu0 %v2440
        %2447 = vmatprep.subr.bf16.mxu0 0
        %2448 = vmatpush1.bf16.msra.mxu0 0
        %2449 = vmatprep.subr.bf16.mxu0 0
        %2450 = vmatpush1.bf16.msra.mxu0 0
        %2451 = vmatprep.subr.bf16.mxu0 0
        %2452 = vmatpush1.bf16.msra.mxu0 0
        %2453 = vmatprep.subr.bf16.mxu0 0
        %2454 = vmatpush1.bf16.msra.mxu0 0
        %2455 = vmatprep.subr.bf16.mxu0 0
        %2456 = vmatpush1.bf16.msra.mxu0 0
        %2457 = vmatprep.subr.bf16.mxu0 0
        %2458 = vmatpush1.bf16.msra.mxu0 0
        %2459 = vmatprep.subr.bf16.mxu0 0
        %2460 = vmatpush1.bf16.msra.mxu0 0
        %2461 = vmatprep.subr.bf16.mxu0 0
        %2462 = vmatpush1.bf16.msra.mxu0 0
        %2463 = vmatprep.subr.bf16.mxu0 0
        %2464 = vmatpush1.bf16.msra.mxu0 0
        %2465 = vmatprep.subr.bf16.mxu0 0
        %2466 = vmatpush1.bf16.msra.mxu0 0
        %2467 = vmatprep.subr.bf16.mxu0 0
        %2468 = vmatpush1.bf16.msra.mxu0 0
        %2469 = vmatprep.subr.bf16.mxu0 0
        %2470 = vmatpush1.bf16.msra.mxu0 0
        %2471 = vmatprep.subr.bf16.mxu0 0
        %2472 = vmatpush1.bf16.msra.mxu0 0
        %2473 = vmatprep.subr.bf16.mxu0 0
        %2474 = vmatpush1.bf16.msra.mxu0 0
        %2475 = vmatprep.mubr.bf16.mxu0 0
        %2476 = vmatmul.mubr.bf16.gmra.mrb[0].mxu0 %v2338
        %v2477 = vpop.f32.mrb[0].mxu0
        %v2478 = vadd.f32 0.0, %v2477
        %v2479 = vpop.f32.mrb[0].mxu0
        %v2480 = vpop.f32.mrb[0].mxu0
        %v2481 = vadd.f32 0.0, %v2480
        %v2482 = vpop.f32.mrb[0].mxu0
        %2483 = vmatprep.mubr.bf16.mxu0 0
        %2484 = vmatmul.mubr.bf16.gmra.mrb[0].mxu0 %v2341
        %v2485 = vpop.f32.mrb[0].mxu0
        %v2486 = vadd.f32 0.0, %v2485
        %v2487 = vpop.f32.mrb[0].mxu0
        %v2488 = vpop.f32.mrb[0].mxu0
        %v2489 = vadd.f32 0.0, %v2488
        %v2490 = vpop.f32.mrb[0].mxu0
        %2491 = vmatprep.mubr.bf16.mxu0 0
        %2492 = vmatmul.mubr.bf16.gmra.mrb[0].mxu0 %v2344
        %v2493 = vpop.f32.mrb[0].mxu0
        %v2494 = vadd.f32 0.0, %v2493
        %v2495 = vpop.f32.mrb[0].mxu0
        %v2496 = vpop.f32.mrb[0].mxu0
        %v2497 = vadd.f32 0.0, %v2496
        %v2498 = vpop.f32.mrb[0].mxu0
        %2499 = vmatprep.mubr.bf16.mxu0 0
        %2500 = vmatmul.mubr.bf16.gmra.mrb[0].mxu0 %v2347
        %v2501 = vpop.f32.mrb[0].mxu0
        %v2502 = vadd.f32 0.0, %v2501
        %v2503 = vpop.f32.mrb[0].mxu0
        %v2504 = vpop.f32.mrb[0].mxu0
        %v2505 = vadd.f32 0.0, %v2504
        %v2506 = vpop.f32.mrb[0].mxu0
        %2507 = vdwg.mxu0
        %s2508 = scalar_lea.vmem %s5, 32
        %v2509 = vld [vmem:[%s2508] sm:$0xf]
        %v2510 = vld [vmem:[%s2508 + $0x4] sm:$0xf]
        %v2511 = vld [vmem:[%s2508 + $0x8] sm:$0xf]
        %v2512 = vld [vmem:[%s2508 + $0xc] sm:$0xf]
        %v2513 = vld [vmem:[%s2508 + $0x10] sm:$0xf]
        %v2514 = vld [vmem:[%s2508 + $0x14] sm:$0xf]
        %v2515 = vld [vmem:[%s2508 + $0x18] sm:$0xf]
        %v2516 = vld [vmem:[%s2508 + $0x1c] sm:$0xf]
        %v2517 = vpack.c.bf16 %v2481, %v2478
        %v2518 = vpack.c.bf16 %v2489, %v2486
        %v2519 = vpack.c.bf16 %v2497, %v2494
        %v2520 = vpack.c.bf16 %v2505, %v2502
        %v2529 = vunpack.c.l.b16 %v2509
        %v2530 = vunpack.c.l.b16 %v2510
        %v2531 = vunpack.c.l.b16 %v2511
        %v2532 = vunpack.c.l.b16 %v2512
        %v2533 = vunpack.c.l.b16 %v2513
        %v2534 = vunpack.c.l.b16 %v2514
        %v2535 = vunpack.c.l.b16 %v2515
        %v2536 = vunpack.c.l.b16 %v2516
        %v2537 = vpack.c.b16 %v2530, %v2529
        %v2538 = vpack.c.b16 %v2532, %v2531
        %v2539 = vpack.c.b16 %v2534, %v2533
        %v2540 = vpack.c.b16 %v2536, %v2535
        %vm2541 = vcmask 523264
        %v2543 = vsel %vm2541, %v2537, 0
        %v2546 = vsel %vm2541, %v2538, 0
        %v2549 = vsel %vm2541, %v2539, 0
        %v2552 = vsel %vm2541, %v2540, 0
        %2554 = vmatprep.subr.bf16.mxu0 0
        %2555 = vmatpush1.bf16.msra.mxu0 %v2517
        %2556 = vmatprep.subr.bf16.mxu0 0
        %2557 = vmatpush1.bf16.msra.mxu0 %v2518
        %2558 = vmatprep.subr.bf16.mxu0 0
        %2559 = vmatpush1.bf16.msra.mxu0 %v2519
        %2560 = vmatprep.subr.bf16.mxu0 0
        %2561 = vmatpush1.bf16.msra.mxu0 %v2520
        %2562 = vmatprep.subr.bf16.mxu0 0
        %2563 = vmatpush1.bf16.msra.mxu0 0
        %2564 = vmatprep.subr.bf16.mxu0 0
        %2565 = vmatpush1.bf16.msra.mxu0 0
        %2566 = vmatprep.subr.bf16.mxu0 0
        %2567 = vmatpush1.bf16.msra.mxu0 0
        %2568 = vmatprep.subr.bf16.mxu0 0
        %2569 = vmatpush1.bf16.msra.mxu0 0
        %2570 = vmatprep.subr.bf16.mxu0 0
        %2571 = vmatpush1.bf16.msra.mxu0 0
        %2572 = vmatprep.subr.bf16.mxu0 0
        %2573 = vmatpush1.bf16.msra.mxu0 0
        %2574 = vmatprep.subr.bf16.mxu0 0
        %2575 = vmatpush1.bf16.msra.mxu0 0
        %2576 = vmatprep.subr.bf16.mxu0 0
        %2577 = vmatpush1.bf16.msra.mxu0 0
        %2578 = vmatprep.subr.bf16.mxu0 0
        %2579 = vmatpush1.bf16.msra.mxu0 0
        %2580 = vmatprep.subr.bf16.mxu0 0
        %2581 = vmatpush1.bf16.msra.mxu0 0
        %2582 = vmatprep.subr.bf16.mxu0 0
        %2583 = vmatpush1.bf16.msra.mxu0 0
        %2584 = vmatprep.subr.bf16.mxu0 0
        %2585 = vmatpush1.bf16.msra.mxu0 0
        %2586 = vmatprep.mubr.bf16.mxu0 0
        %2587 = vmatmul.mubr.bf16.gmra.mrb[0].mxu0 %v2543
        %v2588 = vpop.f32.mrb[0].mxu0
        %v2589 = vadd.f32 0.0, %v2588
        %v2590 = vpop.f32.mrb[0].mxu0
        %v2591 = vpop.f32.mrb[0].mxu0
        %v2592 = vadd.f32 0.0, %v2591
        %v2593 = vpop.f32.mrb[0].mxu0
        %2594 = vmatprep.mubr.bf16.mxu0 0
        %2595 = vmatmul.mubr.bf16.gmra.mrb[0].mxu0 %v2546
        %v2596 = vpop.f32.mrb[0].mxu0
        %v2597 = vadd.f32 0.0, %v2596
        %v2598 = vpop.f32.mrb[0].mxu0
        %v2599 = vpop.f32.mrb[0].mxu0
        %v2600 = vadd.f32 0.0, %v2599
        %v2601 = vpop.f32.mrb[0].mxu0
        %2602 = vmatprep.mubr.bf16.mxu0 0
        %2603 = vmatmul.mubr.bf16.gmra.mrb[0].mxu0 %v2549
        %v2604 = vpop.f32.mrb[0].mxu0
        %v2605 = vadd.f32 0.0, %v2604
        %v2606 = vpop.f32.mrb[0].mxu0
        %v2607 = vpop.f32.mrb[0].mxu0
        %v2608 = vadd.f32 0.0, %v2607
        %v2609 = vpop.f32.mrb[0].mxu0
        %2610 = vmatprep.mubr.bf16.mxu0 0
        %2611 = vmatmul.mubr.bf16.gmra.mrb[0].mxu0 %v2552
        %v2612 = vpop.f32.mrb[0].mxu0
        %v2613 = vadd.f32 0.0, %v2612
        %v2614 = vpop.f32.mrb[0].mxu0
        %v2615 = vpop.f32.mrb[0].mxu0
        %v2616 = vadd.f32 0.0, %v2615
        %v2617 = vpop.f32.mrb[0].mxu0
        %2618 = vdwg.mxu0
        %v2627 = vunpack.c.l.b16 %v2414
        %v2628 = vunpack.c.l.b16 %v2415
        %v2629 = vunpack.c.l.b16 %v2416
        %v2630 = vunpack.c.l.b16 %v2417
        %v2631 = vunpack.c.l.b16 %v2418
        %v2632 = vunpack.c.l.b16 %v2419
        %v2633 = vunpack.c.l.b16 %v2420
        %v2634 = vunpack.c.l.b16 %v2421
        %v2635 = vpack.c.b16 %v2628, %v2627
        %v2636 = vpack.c.b16 %v2630, %v2629
        %v2637 = vpack.c.b16 %v2632, %v2631
        %v2638 = vpack.c.b16 %v2634, %v2633
        %v2640 = vsel %vm2541, %v2635, 0
        %v2643 = vsel %vm2541, %v2636, 0
        %v2646 = vsel %vm2541, %v2637, 0
        %v2649 = vsel %vm2541, %v2638, 0
        %2651 = vmatprep.subr.bf16.mxu0 0
        %2652 = vmatpush1.bf16.msra.mxu0 %v2422
        %2653 = vmatprep.subr.bf16.mxu0 0
        %2654 = vmatpush1.bf16.msra.mxu0 %v2423
        %2655 = vmatprep.subr.bf16.mxu0 0
        %2656 = vmatpush1.bf16.msra.mxu0 %v2424
        %2657 = vmatprep.subr.bf16.mxu0 0
        %2658 = vmatpush1.bf16.msra.mxu0 %v2425
        %2659 = vmatprep.subr.bf16.mxu0 0
        %2660 = vmatpush1.bf16.msra.mxu0 0
        %2661 = vmatprep.subr.bf16.mxu0 0
        %2662 = vmatpush1.bf16.msra.mxu0 0
        %2663 = vmatprep.subr.bf16.mxu0 0
        %2664 = vmatpush1.bf16.msra.mxu0 0
        %2665 = vmatprep.subr.bf16.mxu0 0
        %2666 = vmatpush1.bf16.msra.mxu0 0
        %2667 = vmatprep.subr.bf16.mxu0 0
        %2668 = vmatpush1.bf16.msra.mxu0 0
        %2669 = vmatprep.subr.bf16.mxu0 0
        %2670 = vmatpush1.bf16.msra.mxu0 0
        %2671 = vmatprep.subr.bf16.mxu0 0
        %2672 = vmatpush1.bf16.msra.mxu0 0
        %2673 = vmatprep.subr.bf16.mxu0 0
        %2674 = vmatpush1.bf16.msra.mxu0 0
        %2675 = vmatprep.subr.bf16.mxu0 0
        %2676 = vmatpush1.bf16.msra.mxu0 0
        %2677 = vmatprep.subr.bf16.mxu0 0
        %2678 = vmatpush1.bf16.msra.mxu0 0
        %2679 = vmatprep.subr.bf16.mxu0 0
        %2680 = vmatpush1.bf16.msra.mxu0 0
        %2681 = vmatprep.subr.bf16.mxu0 0
        %2682 = vmatpush1.bf16.msra.mxu0 0
        %2683 = vmatprep.mubr.bf16.mxu0 0
        %2684 = vmatmul.mubr.bf16.gmra.mrb[0].mxu0 %v2640
        %v2685 = vpop.f32.mrb[0].mxu0
        %v2686 = vadd.f32 %v2589, %v2685
        %v2687 = vpop.f32.mrb[0].mxu0
        %v2688 = vpop.f32.mrb[0].mxu0
        %v2689 = vadd.f32 %v2592, %v2688
        %v2690 = vpop.f32.mrb[0].mxu0
        %2691 = vmatprep.mubr.bf16.mxu0 0
        %2692 = vmatmul.mubr.bf16.gmra.mrb[0].mxu0 %v2643
        %v2693 = vpop.f32.mrb[0].mxu0
        %v2694 = vadd.f32 %v2597, %v2693
        %v2695 = vpop.f32.mrb[0].mxu0
        %v2696 = vpop.f32.mrb[0].mxu0
        %v2697 = vadd.f32 %v2600, %v2696
        %v2698 = vpop.f32.mrb[0].mxu0
        %2699 = vmatprep.mubr.bf16.mxu0 0
        %2700 = vmatmul.mubr.bf16.gmra.mrb[0].mxu0 %v2646
        %v2701 = vpop.f32.mrb[0].mxu0
        %v2702 = vadd.f32 %v2605, %v2701
        %v2703 = vpop.f32.mrb[0].mxu0
        %v2704 = vpop.f32.mrb[0].mxu0
        %v2705 = vadd.f32 %v2608, %v2704
        %v2706 = vpop.f32.mrb[0].mxu0
        %2707 = vmatprep.mubr.bf16.mxu0 0
        %2708 = vmatmul.mubr.bf16.gmra.mrb[0].mxu0 %v2649
        %v2709 = vpop.f32.mrb[0].mxu0
        %v2710 = vadd.f32 %v2613, %v2709
        %v2711 = vpop.f32.mrb[0].mxu0
        %v2712 = vpop.f32.mrb[0].mxu0
        %v2713 = vadd.f32 %v2616, %v2712
        %v2714 = vpop.f32.mrb[0].mxu0
        %2715 = vdwg.mxu0
        %s2716 = scalar_lea.vmem %s25, 32
        %v2717 = vld [vmem:[%s2716] sm:$0xf]
        %v2718 = vld [vmem:[%s2716 + $0x4] sm:$0xf]
        %v2719 = vld [vmem:[%s2716 + $0x8] sm:$0xf]
        %v2720 = vld [vmem:[%s2716 + $0xc] sm:$0xf]
        %v2725 = vunpack.c.l.b16 %v2717
        %v2726 = vunpack.c.l.b16 %v2718
        %v2727 = vunpack.c.l.b16 %v2719
        %v2728 = vunpack.c.l.b16 %v2720
        %v2729 = vpack.c.b16 %v2726, %v2725
        %v2730 = vpack.c.b16 %v2728, %v2727
        %2733 = vmatprep.subr.bf16.mxu0 0
        %2734 = vmatpush1.bf16.msra.mxu0 %v2729
        %2735 = vmatprep.subr.bf16.mxu0 0
        %2736 = vmatpush1.bf16.msra.mxu0 %v2730
        %2737 = vmatprep.subr.bf16.mxu0 0
        %2738 = vmatpush1.bf16.msra.mxu0 0
        %2739 = vmatprep.subr.bf16.mxu0 0
        %2740 = vmatpush1.bf16.msra.mxu0 0
        %2741 = vmatprep.subr.bf16.mxu0 0
        %2742 = vmatpush1.bf16.msra.mxu0 0
        %2743 = vmatprep.subr.bf16.mxu0 0
        %2744 = vmatpush1.bf16.msra.mxu0 0
        %2745 = vmatprep.subr.bf16.mxu0 0
        %2746 = vmatpush1.bf16.msra.mxu0 0
        %2747 = vmatprep.subr.bf16.mxu0 0
        %2748 = vmatpush1.bf16.msra.mxu0 0
        %2749 = vmatprep.subr.bf16.mxu0 0
        %2750 = vmatpush1.bf16.msra.mxu0 0
        %2751 = vmatprep.subr.bf16.mxu0 0
        %2752 = vmatpush1.bf16.msra.mxu0 0
        %2753 = vmatprep.subr.bf16.mxu0 0
        %2754 = vmatpush1.bf16.msra.mxu0 0
        %2755 = vmatprep.subr.bf16.mxu0 0
        %2756 = vmatpush1.bf16.msra.mxu0 0
        %2757 = vmatprep.subr.bf16.mxu0 0
        %2758 = vmatpush1.bf16.msra.mxu0 0
        %2759 = vmatprep.subr.bf16.mxu0 0
        %2760 = vmatpush1.bf16.msra.mxu0 0
        %2761 = vmatprep.subr.bf16.mxu0 0
        %2762 = vmatpush1.bf16.msra.mxu0 0
        %2763 = vmatprep.subr.bf16.mxu0 0
        %2764 = vmatpush1.bf16.msra.mxu0 0
        %2765 = vmatprep.mubr.bf16.mxu0 0
        %2766 = vmatmul.mubr.bf16.gmra.mrb[0].mxu0 %v2338
        %v2767 = vpop.f32.mrb[0].mxu0
        %v2768 = vadd.f32 0.0, %v2767
        %v2769 = vpop.f32.mrb[0].mxu0
        %v2770 = vpop.f32.mrb[0].mxu0
        %v2771 = vadd.f32 0.0, %v2770
        %v2772 = vpop.f32.mrb[0].mxu0
        %2773 = vmatprep.mubr.bf16.mxu0 0
        %2774 = vmatmul.mubr.bf16.gmra.mrb[0].mxu0 %v2341
        %v2775 = vpop.f32.mrb[0].mxu0
        %v2776 = vadd.f32 0.0, %v2775
        %v2777 = vpop.f32.mrb[0].mxu0
        %v2778 = vpop.f32.mrb[0].mxu0
        %v2779 = vadd.f32 0.0, %v2778
        %v2780 = vpop.f32.mrb[0].mxu0
        %2781 = vmatprep.mubr.bf16.mxu0 0
        %2782 = vmatmul.mubr.bf16.gmra.mrb[0].mxu0 %v2344
        %v2783 = vpop.f32.mrb[0].mxu0
        %v2784 = vadd.f32 0.0, %v2783
        %v2785 = vpop.f32.mrb[0].mxu0
        %v2786 = vpop.f32.mrb[0].mxu0
        %v2787 = vadd.f32 0.0, %v2786
        %v2788 = vpop.f32.mrb[0].mxu0
        %2789 = vmatprep.mubr.bf16.mxu0 0
        %2790 = vmatmul.mubr.bf16.gmra.mrb[0].mxu0 %v2347
        %v2791 = vpop.f32.mrb[0].mxu0
        %v2792 = vadd.f32 0.0, %v2791
        %v2793 = vpop.f32.mrb[0].mxu0
        %v2794 = vpop.f32.mrb[0].mxu0
        %v2795 = vadd.f32 0.0, %v2794
        %v2796 = vpop.f32.mrb[0].mxu0
        %2797 = vdwg.mxu0
        %s2798 = scalar_lea.vmem %s5, 64
        %v2799 = vld [vmem:[%s2798] sm:$0xf]
        %v2800 = vld [vmem:[%s2798 + $0x4] sm:$0xf]
        %v2801 = vld [vmem:[%s2798 + $0x8] sm:$0xf]
        %v2802 = vld [vmem:[%s2798 + $0xc] sm:$0xf]
        %v2803 = vld [vmem:[%s2798 + $0x10] sm:$0xf]
        %v2804 = vld [vmem:[%s2798 + $0x14] sm:$0xf]
        %v2805 = vld [vmem:[%s2798 + $0x18] sm:$0xf]
        %v2806 = vld [vmem:[%s2798 + $0x1c] sm:$0xf]
        %v2807 = vpack.c.bf16 %v2771, %v2768
        %v2808 = vpack.c.bf16 %v2779, %v2776
        %v2809 = vpack.c.bf16 %v2787, %v2784
        %v2810 = vpack.c.bf16 %v2795, %v2792
        %v2819 = vunpack.c.l.b16 %v2799
        %v2820 = vunpack.c.l.b16 %v2800
        %v2821 = vunpack.c.l.b16 %v2801
        %v2822 = vunpack.c.l.b16 %v2802
        %v2823 = vunpack.c.l.b16 %v2803
        %v2824 = vunpack.c.l.b16 %v2804
        %v2825 = vunpack.c.l.b16 %v2805
        %v2826 = vunpack.c.l.b16 %v2806
        %v2827 = vpack.c.b16 %v2820, %v2819
        %v2828 = vpack.c.b16 %v2822, %v2821
        %v2829 = vpack.c.b16 %v2824, %v2823
        %v2830 = vpack.c.b16 %v2826, %v2825
        %v2832 = vsel %vm2541, %v2827, 0
        %v2835 = vsel %vm2541, %v2828, 0
        %v2838 = vsel %vm2541, %v2829, 0
        %v2841 = vsel %vm2541, %v2830, 0
        %2843 = vmatprep.subr.bf16.mxu0 0
        %2844 = vmatpush1.bf16.msra.mxu0 %v2807
        %2845 = vmatprep.subr.bf16.mxu0 0
        %2846 = vmatpush1.bf16.msra.mxu0 %v2808
        %2847 = vmatprep.subr.bf16.mxu0 0
        %2848 = vmatpush1.bf16.msra.mxu0 %v2809
        %2849 = vmatprep.subr.bf16.mxu0 0
        %2850 = vmatpush1.bf16.msra.mxu0 %v2810
        %2851 = vmatprep.subr.bf16.mxu0 0
        %2852 = vmatpush1.bf16.msra.mxu0 0
        %2853 = vmatprep.subr.bf16.mxu0 0
        %2854 = vmatpush1.bf16.msra.mxu0 0
        %2855 = vmatprep.subr.bf16.mxu0 0
        %2856 = vmatpush1.bf16.msra.mxu0 0
        %2857 = vmatprep.subr.bf16.mxu0 0
        %2858 = vmatpush1.bf16.msra.mxu0 0
        %2859 = vmatprep.subr.bf16.mxu0 0
        %2860 = vmatpush1.bf16.msra.mxu0 0
        %2861 = vmatprep.subr.bf16.mxu0 0
        %2862 = vmatpush1.bf16.msra.mxu0 0
        %2863 = vmatprep.subr.bf16.mxu0 0
        %2864 = vmatpush1.bf16.msra.mxu0 0
        %2865 = vmatprep.subr.bf16.mxu0 0
        %2866 = vmatpush1.bf16.msra.mxu0 0
        %2867 = vmatprep.subr.bf16.mxu0 0
        %2868 = vmatpush1.bf16.msra.mxu0 0
        %2869 = vmatprep.subr.bf16.mxu0 0
        %2870 = vmatpush1.bf16.msra.mxu0 0
        %2871 = vmatprep.subr.bf16.mxu0 0
        %2872 = vmatpush1.bf16.msra.mxu0 0
        %2873 = vmatprep.subr.bf16.mxu0 0
        %2874 = vmatpush1.bf16.msra.mxu0 0
        %2875 = vmatprep.mubr.bf16.mxu0 0
        %2876 = vmatmul.mubr.bf16.gmra.mrb[0].mxu0 %v2832
        %v2877 = vpop.f32.mrb[0].mxu0
        %v2878 = vadd.f32 0.0, %v2877
        %v2879 = vpop.f32.mrb[0].mxu0
        %v2880 = vpop.f32.mrb[0].mxu0
        %v2881 = vadd.f32 0.0, %v2880
        %v2882 = vpop.f32.mrb[0].mxu0
        %2883 = vmatprep.mubr.bf16.mxu0 0
        %2884 = vmatmul.mubr.bf16.gmra.mrb[0].mxu0 %v2835
        %v2885 = vpop.f32.mrb[0].mxu0
        %v2886 = vadd.f32 0.0, %v2885
        %v2887 = vpop.f32.mrb[0].mxu0
        %v2888 = vpop.f32.mrb[0].mxu0
        %v2889 = vadd.f32 0.0, %v2888
        %v2890 = vpop.f32.mrb[0].mxu0
        %2891 = vmatprep.mubr.bf16.mxu0 0
        %2892 = vmatmul.mubr.bf16.gmra.mrb[0].mxu0 %v2838
        %v2893 = vpop.f32.mrb[0].mxu0
        %v2894 = vadd.f32 0.0, %v2893
        %v2895 = vpop.f32.mrb[0].mxu0
        %v2896 = vpop.f32.mrb[0].mxu0
        %v2897 = vadd.f32 0.0, %v2896
        %v2898 = vpop.f32.mrb[0].mxu0
        %2899 = vmatprep.mubr.bf16.mxu0 0
        %2900 = vmatmul.mubr.bf16.gmra.mrb[0].mxu0 %v2841
        %v2901 = vpop.f32.mrb[0].mxu0
        %v2902 = vadd.f32 0.0, %v2901
        %v2903 = vpop.f32.mrb[0].mxu0
        %v2904 = vpop.f32.mrb[0].mxu0
        %v2905 = vadd.f32 0.0, %v2904
        %v2906 = vpop.f32.mrb[0].mxu0
        %2907 = vdwg.mxu0
        %v2908 = vadd.f32 %v2686, %v2878
        %v2909 = vadd.f32 %v2689, %v2881
        %v2910 = vadd.f32 %v2694, %v2886
        %v2911 = vadd.f32 %v2697, %v2889
        %v2912 = vadd.f32 %v2702, %v2894
        %v2913 = vadd.f32 %v2705, %v2897
        %v2914 = vadd.f32 %v2710, %v2902
        %v2915 = vadd.f32 %v2713, %v2905
        %s2916 = scalar_lea.vmem %s25, 48
        %v2917 = vld [vmem:[%s2916] sm:$0xf]
        %v2918 = vld [vmem:[%s2916 + $0x4] sm:$0xf]
        %v2919 = vld [vmem:[%s2916 + $0x8] sm:$0xf]
        %v2920 = vld [vmem:[%s2916 + $0xc] sm:$0xf]
        %v2925 = vunpack.c.l.b16 %v2917
        %v2926 = vunpack.c.l.b16 %v2918
        %v2927 = vunpack.c.l.b16 %v2919
        %v2928 = vunpack.c.l.b16 %v2920
        %v2929 = vpack.c.b16 %v2926, %v2925
        %v2930 = vpack.c.b16 %v2928, %v2927
        %2933 = vmatprep.subr.bf16.mxu0 0
        %2934 = vmatpush1.bf16.msra.mxu0 %v2929
        %2935 = vmatprep.subr.bf16.mxu0 0
        %2936 = vmatpush1.bf16.msra.mxu0 %v2930
        %2937 = vmatprep.subr.bf16.mxu0 0
        %2938 = vmatpush1.bf16.msra.mxu0 0
        %2939 = vmatprep.subr.bf16.mxu0 0
        %2940 = vmatpush1.bf16.msra.mxu0 0
        %2941 = vmatprep.subr.bf16.mxu0 0
        %2942 = vmatpush1.bf16.msra.mxu0 0
        %2943 = vmatprep.subr.bf16.mxu0 0
        %2944 = vmatpush1.bf16.msra.mxu0 0
        %2945 = vmatprep.subr.bf16.mxu0 0
        %2946 = vmatpush1.bf16.msra.mxu0 0
        %2947 = vmatprep.subr.bf16.mxu0 0
        %2948 = vmatpush1.bf16.msra.mxu0 0
        %2949 = vmatprep.subr.bf16.mxu0 0
        %2950 = vmatpush1.bf16.msra.mxu0 0
        %2951 = vmatprep.subr.bf16.mxu0 0
        %2952 = vmatpush1.bf16.msra.mxu0 0
        %2953 = vmatprep.subr.bf16.mxu0 0
        %2954 = vmatpush1.bf16.msra.mxu0 0
        %2955 = vmatprep.subr.bf16.mxu0 0
        %2956 = vmatpush1.bf16.msra.mxu0 0
        %2957 = vmatprep.subr.bf16.mxu0 0
        %2958 = vmatpush1.bf16.msra.mxu0 0
        %2959 = vmatprep.subr.bf16.mxu0 0
        %2960 = vmatpush1.bf16.msra.mxu0 0
        %2961 = vmatprep.subr.bf16.mxu0 0
        %2962 = vmatpush1.bf16.msra.mxu0 0
        %2963 = vmatprep.subr.bf16.mxu0 0
        %2964 = vmatpush1.bf16.msra.mxu0 0
        %2965 = vmatprep.mubr.bf16.mxu0 0
        %2966 = vmatmul.mubr.bf16.gmra.mrb[0].mxu0 %v2338
        %v2967 = vpop.f32.mrb[0].mxu0
        %v2968 = vadd.f32 0.0, %v2967
        %v2969 = vpop.f32.mrb[0].mxu0
        %v2970 = vpop.f32.mrb[0].mxu0
        %v2971 = vadd.f32 0.0, %v2970
        %v2972 = vpop.f32.mrb[0].mxu0
        %2973 = vmatprep.mubr.bf16.mxu0 0
        %2974 = vmatmul.mubr.bf16.gmra.mrb[0].mxu0 %v2341
        %v2975 = vpop.f32.mrb[0].mxu0
        %v2976 = vadd.f32 0.0, %v2975
        %v2977 = vpop.f32.mrb[0].mxu0
        %v2978 = vpop.f32.mrb[0].mxu0
        %v2979 = vadd.f32 0.0, %v2978
        %v2980 = vpop.f32.mrb[0].mxu0
        %2981 = vmatprep.mubr.bf16.mxu0 0
        %2982 = vmatmul.mubr.bf16.gmra.mrb[0].mxu0 %v2344
        %v2983 = vpop.f32.mrb[0].mxu0
        %v2984 = vadd.f32 0.0, %v2983
        %v2985 = vpop.f32.mrb[0].mxu0
        %v2986 = vpop.f32.mrb[0].mxu0
        %v2987 = vadd.f32 0.0, %v2986
        %v2988 = vpop.f32.mrb[0].mxu0
        %2989 = vmatprep.mubr.bf16.mxu0 0
        %2990 = vmatmul.mubr.bf16.gmra.mrb[0].mxu0 %v2347
        %v2991 = vpop.f32.mrb[0].mxu0
        %v2992 = vadd.f32 0.0, %v2991
        %v2993 = vpop.f32.mrb[0].mxu0
        %v2994 = vpop.f32.mrb[0].mxu0
        %v2995 = vadd.f32 0.0, %v2994
        %v2996 = vpop.f32.mrb[0].mxu0
        %2997 = vdwg.mxu0
        %s2998 = scalar_lea.vmem %s5, 96
        %v2999 = vld [vmem:[%s2998] sm:$0xf]
        %v3000 = vld [vmem:[%s2998 + $0x4] sm:$0xf]
        %v3001 = vld [vmem:[%s2998 + $0x8] sm:$0xf]
        %v3002 = vld [vmem:[%s2998 + $0xc] sm:$0xf]
        %v3003 = vld [vmem:[%s2998 + $0x10] sm:$0xf]
        %v3004 = vld [vmem:[%s2998 + $0x14] sm:$0xf]
        %v3005 = vld [vmem:[%s2998 + $0x18] sm:$0xf]
        %v3006 = vld [vmem:[%s2998 + $0x1c] sm:$0xf]
        %v3007 = vpack.c.bf16 %v2971, %v2968
        %v3008 = vpack.c.bf16 %v2979, %v2976
        %v3009 = vpack.c.bf16 %v2987, %v2984
        %v3010 = vpack.c.bf16 %v2995, %v2992
        %v3019 = vunpack.c.l.b16 %v2999
        %v3020 = vunpack.c.l.b16 %v3000
        %v3021 = vunpack.c.l.b16 %v3001
        %v3022 = vunpack.c.l.b16 %v3002
        %v3023 = vunpack.c.l.b16 %v3003
        %v3024 = vunpack.c.l.b16 %v3004
        %v3025 = vunpack.c.l.b16 %v3005
        %v3026 = vunpack.c.l.b16 %v3006
        %v3027 = vpack.c.b16 %v3020, %v3019
        %v3028 = vpack.c.b16 %v3022, %v3021
        %v3029 = vpack.c.b16 %v3024, %v3023
        %v3030 = vpack.c.b16 %v3026, %v3025
        %v3032 = vsel %vm2541, %v3027, 0
        %v3035 = vsel %vm2541, %v3028, 0
        %v3038 = vsel %vm2541, %v3029, 0
        %v3041 = vsel %vm2541, %v3030, 0
        %3043 = vmatprep.subr.bf16.mxu0 0
        %3044 = vmatpush1.bf16.msra.mxu0 %v3007
        %3045 = vmatprep.subr.bf16.mxu0 0
        %3046 = vmatpush1.bf16.msra.mxu0 %v3008
        %3047 = vmatprep.subr.bf16.mxu0 0
        %3048 = vmatpush1.bf16.msra.mxu0 %v3009
        %3049 = vmatprep.subr.bf16.mxu0 0
        %3050 = vmatpush1.bf16.msra.mxu0 %v3010
        %3051 = vmatprep.subr.bf16.mxu0 0
        %3052 = vmatpush1.bf16.msra.mxu0 0
        %3053 = vmatprep.subr.bf16.mxu0 0
        %3054 = vmatpush1.bf16.msra.mxu0 0
        %3055 = vmatprep.subr.bf16.mxu0 0
        %3056 = vmatpush1.bf16.msra.mxu0 0
        %3057 = vmatprep.subr.bf16.mxu0 0
        %3058 = vmatpush1.bf16.msra.mxu0 0
        %3059 = vmatprep.subr.bf16.mxu0 0
        %3060 = vmatpush1.bf16.msra.mxu0 0
        %3061 = vmatprep.subr.bf16.mxu0 0
        %3062 = vmatpush1.bf16.msra.mxu0 0
        %3063 = vmatprep.subr.bf16.mxu0 0
        %3064 = vmatpush1.bf16.msra.mxu0 0
        %3065 = vmatprep.subr.bf16.mxu0 0
        %3066 = vmatpush1.bf16.msra.mxu0 0
        %3067 = vmatprep.subr.bf16.mxu0 0
        %3068 = vmatpush1.bf16.msra.mxu0 0
        %3069 = vmatprep.subr.bf16.mxu0 0
        %3070 = vmatpush1.bf16.msra.mxu0 0
        %3071 = vmatprep.subr.bf16.mxu0 0
        %3072 = vmatpush1.bf16.msra.mxu0 0
        %3073 = vmatprep.subr.bf16.mxu0 0
        %3074 = vmatpush1.bf16.msra.mxu0 0
        %3075 = vmatprep.mubr.bf16.mxu0 0
        %3076 = vmatmul.mubr.bf16.gmra.mrb[0].mxu0 %v3032
        %v3077 = vpop.f32.mrb[0].mxu0
        %v3078 = vadd.f32 0.0, %v3077
        %v3079 = vpop.f32.mrb[0].mxu0
        %v3080 = vpop.f32.mrb[0].mxu0
        %v3081 = vadd.f32 0.0, %v3080
        %v3082 = vpop.f32.mrb[0].mxu0
        %3083 = vmatprep.mubr.bf16.mxu0 0
        %3084 = vmatmul.mubr.bf16.gmra.mrb[0].mxu0 %v3035
        %v3085 = vpop.f32.mrb[0].mxu0
        %v3086 = vadd.f32 0.0, %v3085
        %v3087 = vpop.f32.mrb[0].mxu0
        %v3088 = vpop.f32.mrb[0].mxu0
        %v3089 = vadd.f32 0.0, %v3088
        %v3090 = vpop.f32.mrb[0].mxu0
        %3091 = vmatprep.mubr.bf16.mxu0 0
        %3092 = vmatmul.mubr.bf16.gmra.mrb[0].mxu0 %v3038
        %v3093 = vpop.f32.mrb[0].mxu0
        %v3094 = vadd.f32 0.0, %v3093
        %v3095 = vpop.f32.mrb[0].mxu0
        %v3096 = vpop.f32.mrb[0].mxu0
        %v3097 = vadd.f32 0.0, %v3096
        %v3098 = vpop.f32.mrb[0].mxu0
        %3099 = vmatprep.mubr.bf16.mxu0 0
        %3100 = vmatmul.mubr.bf16.gmra.mrb[0].mxu0 %v3041
        %v3101 = vpop.f32.mrb[0].mxu0
        %v3102 = vadd.f32 0.0, %v3101
        %v3103 = vpop.f32.mrb[0].mxu0
        %v3104 = vpop.f32.mrb[0].mxu0
        %v3105 = vadd.f32 0.0, %v3104
        %v3106 = vpop.f32.mrb[0].mxu0
        %3107 = vdwg.mxu0
        %v3108 = vadd.f32 %v2908, %v3078
        %v3109 = vadd.f32 %v2909, %v3081
        %v3110 = vadd.f32 %v2910, %v3086
        %v3111 = vadd.f32 %v2911, %v3089
        %v3112 = vadd.f32 %v2912, %v3094
        %v3113 = vadd.f32 %v2913, %v3097
        %v3114 = vadd.f32 %v2914, %v3102
        %v3115 = vadd.f32 %v2915, %v3105
        %s3116 = scalar_lea.vmem %s25, 64
        %v3117 = vld [vmem:[%s3116] sm:$0xf]
        %v3118 = vld [vmem:[%s3116 + $0x4] sm:$0xf]
        %v3119 = vld [vmem:[%s3116 + $0x8] sm:$0xf]
        %v3120 = vld [vmem:[%s3116 + $0xc] sm:$0xf]
        %v3125 = vunpack.c.l.b16 %v3117
        %v3126 = vunpack.c.l.b16 %v3118
        %v3127 = vunpack.c.l.b16 %v3119
        %v3128 = vunpack.c.l.b16 %v3120
        %v3129 = vpack.c.b16 %v3126, %v3125
        %v3130 = vpack.c.b16 %v3128, %v3127
        %3133 = vmatprep.subr.bf16.mxu0 0
        %3134 = vmatpush1.bf16.msra.mxu0 %v3129
        %3135 = vmatprep.subr.bf16.mxu0 0
        %3136 = vmatpush1.bf16.msra.mxu0 %v3130
        %3137 = vmatprep.subr.bf16.mxu0 0
        %3138 = vmatpush1.bf16.msra.mxu0 0
        %3139 = vmatprep.subr.bf16.mxu0 0
        %3140 = vmatpush1.bf16.msra.mxu0 0
        %3141 = vmatprep.subr.bf16.mxu0 0
        %3142 = vmatpush1.bf16.msra.mxu0 0
        %3143 = vmatprep.subr.bf16.mxu0 0
        %3144 = vmatpush1.bf16.msra.mxu0 0
        %3145 = vmatprep.subr.bf16.mxu0 0
        %3146 = vmatpush1.bf16.msra.mxu0 0
        %3147 = vmatprep.subr.bf16.mxu0 0
        %3148 = vmatpush1.bf16.msra.mxu0 0
        %3149 = vmatprep.subr.bf16.mxu0 0
        %3150 = vmatpush1.bf16.msra.mxu0 0
        %3151 = vmatprep.subr.bf16.mxu0 0
        %3152 = vmatpush1.bf16.msra.mxu0 0
        %3153 = vmatprep.subr.bf16.mxu0 0
        %3154 = vmatpush1.bf16.msra.mxu0 0
        %3155 = vmatprep.subr.bf16.mxu0 0
        %3156 = vmatpush1.bf16.msra.mxu0 0
        %3157 = vmatprep.subr.bf16.mxu0 0
        %3158 = vmatpush1.bf16.msra.mxu0 0
        %3159 = vmatprep.subr.bf16.mxu0 0
        %3160 = vmatpush1.bf16.msra.mxu0 0
        %3161 = vmatprep.subr.bf16.mxu0 0
        %3162 = vmatpush1.bf16.msra.mxu0 0
        %3163 = vmatprep.subr.bf16.mxu0 0
        %3164 = vmatpush1.bf16.msra.mxu0 0
        %3165 = vmatprep.mubr.bf16.mxu0 0
        %3166 = vmatmul.mubr.bf16.gmra.mrb[0].mxu0 %v2338
        %v3167 = vpop.f32.mrb[0].mxu0
        %v3168 = vadd.f32 0.0, %v3167
        %v3169 = vpop.f32.mrb[0].mxu0
        %v3170 = vpop.f32.mrb[0].mxu0
        %v3171 = vadd.f32 0.0, %v3170
        %v3172 = vpop.f32.mrb[0].mxu0
        %3173 = vmatprep.mubr.bf16.mxu0 0
        %3174 = vmatmul.mubr.bf16.gmra.mrb[0].mxu0 %v2341
        %v3175 = vpop.f32.mrb[0].mxu0
        %v3176 = vadd.f32 0.0, %v3175
        %v3177 = vpop.f32.mrb[0].mxu0
        %v3178 = vpop.f32.mrb[0].mxu0
        %v3179 = vadd.f32 0.0, %v3178
        %v3180 = vpop.f32.mrb[0].mxu0
        %3181 = vmatprep.mubr.bf16.mxu0 0
        %3182 = vmatmul.mubr.bf16.gmra.mrb[0].mxu0 %v2344
        %v3183 = vpop.f32.mrb[0].mxu0
        %v3184 = vadd.f32 0.0, %v3183
        %v3185 = vpop.f32.mrb[0].mxu0
        %v3186 = vpop.f32.mrb[0].mxu0
        %v3187 = vadd.f32 0.0, %v3186
        %v3188 = vpop.f32.mrb[0].mxu0
        %3189 = vmatprep.mubr.bf16.mxu0 0
        %3190 = vmatmul.mubr.bf16.gmra.mrb[0].mxu0 %v2347
        %v3191 = vpop.f32.mrb[0].mxu0
        %v3192 = vadd.f32 0.0, %v3191
        %v3193 = vpop.f32.mrb[0].mxu0
        %v3194 = vpop.f32.mrb[0].mxu0
        %v3195 = vadd.f32 0.0, %v3194
        %v3196 = vpop.f32.mrb[0].mxu0
        %3197 = vdwg.mxu0
        %s3198 = scalar_lea.vmem %s5, 128
        %v3199 = vld [vmem:[%s3198] sm:$0xf]
        %v3200 = vld [vmem:[%s3198 + $0x4] sm:$0xf]
        %v3201 = vld [vmem:[%s3198 + $0x8] sm:$0xf]
        %v3202 = vld [vmem:[%s3198 + $0xc] sm:$0xf]
        %v3203 = vld [vmem:[%s3198 + $0x10] sm:$0xf]
        %v3204 = vld [vmem:[%s3198 + $0x14] sm:$0xf]
        %v3205 = vld [vmem:[%s3198 + $0x18] sm:$0xf]
        %v3206 = vld [vmem:[%s3198 + $0x1c] sm:$0xf]
        %v3207 = vpack.c.bf16 %v3171, %v3168
        %v3208 = vpack.c.bf16 %v3179, %v3176
        %v3209 = vpack.c.bf16 %v3187, %v3184
        %v3210 = vpack.c.bf16 %v3195, %v3192
        %v3219 = vunpack.c.l.b16 %v3199
        %v3220 = vunpack.c.l.b16 %v3200
        %v3221 = vunpack.c.l.b16 %v3201
        %v3222 = vunpack.c.l.b16 %v3202
        %v3223 = vunpack.c.l.b16 %v3203
        %v3224 = vunpack.c.l.b16 %v3204
        %v3225 = vunpack.c.l.b16 %v3205
        %v3226 = vunpack.c.l.b16 %v3206
        %v3227 = vpack.c.b16 %v3220, %v3219
        %v3228 = vpack.c.b16 %v3222, %v3221
        %v3229 = vpack.c.b16 %v3224, %v3223
        %v3230 = vpack.c.b16 %v3226, %v3225
        %v3232 = vsel %vm2541, %v3227, 0
        %v3235 = vsel %vm2541, %v3228, 0
        %v3238 = vsel %vm2541, %v3229, 0
        %v3241 = vsel %vm2541, %v3230, 0
        %3243 = vmatprep.subr.bf16.mxu0 0
        %3244 = vmatpush1.bf16.msra.mxu0 %v3207
        %3245 = vmatprep.subr.bf16.mxu0 0
        %3246 = vmatpush1.bf16.msra.mxu0 %v3208
        %3247 = vmatprep.subr.bf16.mxu0 0
        %3248 = vmatpush1.bf16.msra.mxu0 %v3209
        %3249 = vmatprep.subr.bf16.mxu0 0
        %3250 = vmatpush1.bf16.msra.mxu0 %v3210
        %3251 = vmatprep.subr.bf16.mxu0 0
        %3252 = vmatpush1.bf16.msra.mxu0 0
        %3253 = vmatprep.subr.bf16.mxu0 0
        %3254 = vmatpush1.bf16.msra.mxu0 0
        %3255 = vmatprep.subr.bf16.mxu0 0
        %3256 = vmatpush1.bf16.msra.mxu0 0
        %3257 = vmatprep.subr.bf16.mxu0 0
        %3258 = vmatpush1.bf16.msra.mxu0 0
        %3259 = vmatprep.subr.bf16.mxu0 0
        %3260 = vmatpush1.bf16.msra.mxu0 0
        %3261 = vmatprep.subr.bf16.mxu0 0
        %3262 = vmatpush1.bf16.msra.mxu0 0
        %3263 = vmatprep.subr.bf16.mxu0 0
        %3264 = vmatpush1.bf16.msra.mxu0 0
        %3265 = vmatprep.subr.bf16.mxu0 0
        %3266 = vmatpush1.bf16.msra.mxu0 0
        %3267 = vmatprep.subr.bf16.mxu0 0
        %3268 = vmatpush1.bf16.msra.mxu0 0
        %3269 = vmatprep.subr.bf16.mxu0 0
        %3270 = vmatpush1.bf16.msra.mxu0 0
        %3271 = vmatprep.subr.bf16.mxu0 0
        %3272 = vmatpush1.bf16.msra.mxu0 0
        %3273 = vmatprep.subr.bf16.mxu0 0
        %3274 = vmatpush1.bf16.msra.mxu0 0
        %3275 = vmatprep.mubr.bf16.mxu0 0
        %3276 = vmatmul.mubr.bf16.gmra.mrb[0].mxu0 %v3232
        %v3277 = vpop.f32.mrb[0].mxu0
        %v3278 = vadd.f32 0.0, %v3277
        %v3279 = vpop.f32.mrb[0].mxu0
        %v3280 = vpop.f32.mrb[0].mxu0
        %v3281 = vadd.f32 0.0, %v3280
        %v3282 = vpop.f32.mrb[0].mxu0
        %3283 = vmatprep.mubr.bf16.mxu0 0
        %3284 = vmatmul.mubr.bf16.gmra.mrb[0].mxu0 %v3235
        %v3285 = vpop.f32.mrb[0].mxu0
        %v3286 = vadd.f32 0.0, %v3285
        %v3287 = vpop.f32.mrb[0].mxu0
        %v3288 = vpop.f32.mrb[0].mxu0
        %v3289 = vadd.f32 0.0, %v3288
        %v3290 = vpop.f32.mrb[0].mxu0
        %3291 = vmatprep.mubr.bf16.mxu0 0
        %3292 = vmatmul.mubr.bf16.gmra.mrb[0].mxu0 %v3238
        %v3293 = vpop.f32.mrb[0].mxu0
        %v3294 = vadd.f32 0.0, %v3293
        %v3295 = vpop.f32.mrb[0].mxu0
        %v3296 = vpop.f32.mrb[0].mxu0
        %v3297 = vadd.f32 0.0, %v3296
        %v3298 = vpop.f32.mrb[0].mxu0
        %3299 = vmatprep.mubr.bf16.mxu0 0
        %3300 = vmatmul.mubr.bf16.gmra.mrb[0].mxu0 %v3241
        %v3301 = vpop.f32.mrb[0].mxu0
        %v3302 = vadd.f32 0.0, %v3301
        %v3303 = vpop.f32.mrb[0].mxu0
        %v3304 = vpop.f32.mrb[0].mxu0
        %v3305 = vadd.f32 0.0, %v3304
        %v3306 = vpop.f32.mrb[0].mxu0
        %3307 = vdwg.mxu0
        %v3308 = vadd.f32 %v3108, %v3278
        %v3309 = vadd.f32 %v3109, %v3281
        %v3310 = vadd.f32 %v3110, %v3286
        %v3311 = vadd.f32 %v3111, %v3289
        %v3312 = vadd.f32 %v3112, %v3294
        %v3313 = vadd.f32 %v3113, %v3297
        %v3314 = vadd.f32 %v3114, %v3302
        %v3315 = vadd.f32 %v3115, %v3305
        %s3316 = scalar_lea.vmem %s25, 80
        %v3317 = vld [vmem:[%s3316] sm:$0xf]
        %v3318 = vld [vmem:[%s3316 + $0x4] sm:$0xf]
        %v3319 = vld [vmem:[%s3316 + $0x8] sm:$0xf]
        %v3320 = vld [vmem:[%s3316 + $0xc] sm:$0xf]
        %v3325 = vunpack.c.l.b16 %v3317
        %v3326 = vunpack.c.l.b16 %v3318
        %v3327 = vunpack.c.l.b16 %v3319
        %v3328 = vunpack.c.l.b16 %v3320
        %v3329 = vpack.c.b16 %v3326, %v3325
        %v3330 = vpack.c.b16 %v3328, %v3327
        %3333 = vmatprep.subr.bf16.mxu0 0
        %3334 = vmatpush1.bf16.msra.mxu0 %v3329
        %3335 = vmatprep.subr.bf16.mxu0 0
        %3336 = vmatpush1.bf16.msra.mxu0 %v3330
        %3337 = vmatprep.subr.bf16.mxu0 0
        %3338 = vmatpush1.bf16.msra.mxu0 0
        %3339 = vmatprep.subr.bf16.mxu0 0
        %3340 = vmatpush1.bf16.msra.mxu0 0
        %3341 = vmatprep.subr.bf16.mxu0 0
        %3342 = vmatpush1.bf16.msra.mxu0 0
        %3343 = vmatprep.subr.bf16.mxu0 0
        %3344 = vmatpush1.bf16.msra.mxu0 0
        %3345 = vmatprep.subr.bf16.mxu0 0
        %3346 = vmatpush1.bf16.msra.mxu0 0
        %3347 = vmatprep.subr.bf16.mxu0 0
        %3348 = vmatpush1.bf16.msra.mxu0 0
        %3349 = vmatprep.subr.bf16.mxu0 0
        %3350 = vmatpush1.bf16.msra.mxu0 0
        %3351 = vmatprep.subr.bf16.mxu0 0
        %3352 = vmatpush1.bf16.msra.mxu0 0
        %3353 = vmatprep.subr.bf16.mxu0 0
        %3354 = vmatpush1.bf16.msra.mxu0 0
        %3355 = vmatprep.subr.bf16.mxu0 0
        %3356 = vmatpush1.bf16.msra.mxu0 0
        %3357 = vmatprep.subr.bf16.mxu0 0
        %3358 = vmatpush1.bf16.msra.mxu0 0
        %3359 = vmatprep.subr.bf16.mxu0 0
        %3360 = vmatpush1.bf16.msra.mxu0 0
        %3361 = vmatprep.subr.bf16.mxu0 0
        %3362 = vmatpush1.bf16.msra.mxu0 0
        %3363 = vmatprep.subr.bf16.mxu0 0
        %3364 = vmatpush1.bf16.msra.mxu0 0
        %3365 = vmatprep.mubr.bf16.mxu0 0
        %3366 = vmatmul.mubr.bf16.gmra.mrb[0].mxu0 %v2338
        %v3367 = vpop.f32.mrb[0].mxu0
        %v3368 = vadd.f32 0.0, %v3367
        %v3369 = vpop.f32.mrb[0].mxu0
        %v3370 = vpop.f32.mrb[0].mxu0
        %v3371 = vadd.f32 0.0, %v3370
        %v3372 = vpop.f32.mrb[0].mxu0
        %3373 = vmatprep.mubr.bf16.mxu0 0
        %3374 = vmatmul.mubr.bf16.gmra.mrb[0].mxu0 %v2341
        %v3375 = vpop.f32.mrb[0].mxu0
        %v3376 = vadd.f32 0.0, %v3375
        %v3377 = vpop.f32.mrb[0].mxu0
        %v3378 = vpop.f32.mrb[0].mxu0
        %v3379 = vadd.f32 0.0, %v3378
        %v3380 = vpop.f32.mrb[0].mxu0
        %3381 = vmatprep.mubr.bf16.mxu0 0
        %3382 = vmatmul.mubr.bf16.gmra.mrb[0].mxu0 %v2344
        %v3383 = vpop.f32.mrb[0].mxu0
        %v3384 = vadd.f32 0.0, %v3383
        %v3385 = vpop.f32.mrb[0].mxu0
        %v3386 = vpop.f32.mrb[0].mxu0
        %v3387 = vadd.f32 0.0, %v3386
        %v3388 = vpop.f32.mrb[0].mxu0
        %3389 = vmatprep.mubr.bf16.mxu0 0
        %3390 = vmatmul.mubr.bf16.gmra.mrb[0].mxu0 %v2347
        %v3391 = vpop.f32.mrb[0].mxu0
        %v3392 = vadd.f32 0.0, %v3391
        %v3393 = vpop.f32.mrb[0].mxu0
        %v3394 = vpop.f32.mrb[0].mxu0
        %v3395 = vadd.f32 0.0, %v3394
        %v3396 = vpop.f32.mrb[0].mxu0
        %3397 = vdwg.mxu0
        %s3398 = scalar_lea.vmem %s5, 160
        %v3399 = vld [vmem:[%s3398] sm:$0xf]
        %v3400 = vld [vmem:[%s3398 + $0x4] sm:$0xf]
        %v3401 = vld [vmem:[%s3398 + $0x8] sm:$0xf]
        %v3402 = vld [vmem:[%s3398 + $0xc] sm:$0xf]
        %v3403 = vld [vmem:[%s3398 + $0x10] sm:$0xf]
        %v3404 = vld [vmem:[%s3398 + $0x14] sm:$0xf]
        %v3405 = vld [vmem:[%s3398 + $0x18] sm:$0xf]
        %v3406 = vld [vmem:[%s3398 + $0x1c] sm:$0xf]
        %v3407 = vpack.c.bf16 %v3371, %v3368
        %v3408 = vpack.c.bf16 %v3379, %v3376
        %v3409 = vpack.c.bf16 %v3387, %v3384
        %v3410 = vpack.c.bf16 %v3395, %v3392
        %v3419 = vunpack.c.l.b16 %v3399
        %v3420 = vunpack.c.l.b16 %v3400
        %v3421 = vunpack.c.l.b16 %v3401
        %v3422 = vunpack.c.l.b16 %v3402
        %v3423 = vunpack.c.l.b16 %v3403
        %v3424 = vunpack.c.l.b16 %v3404
        %v3425 = vunpack.c.l.b16 %v3405
        %v3426 = vunpack.c.l.b16 %v3406
        %v3427 = vpack.c.b16 %v3420, %v3419
        %v3428 = vpack.c.b16 %v3422, %v3421
        %v3429 = vpack.c.b16 %v3424, %v3423
        %v3430 = vpack.c.b16 %v3426, %v3425
        %v3432 = vsel %vm2541, %v3427, 0
        %v3435 = vsel %vm2541, %v3428, 0
        %v3438 = vsel %vm2541, %v3429, 0
        %v3441 = vsel %vm2541, %v3430, 0
        %3443 = vmatprep.subr.bf16.mxu0 0
        %3444 = vmatpush1.bf16.msra.mxu0 %v3407
        %3445 = vmatprep.subr.bf16.mxu0 0
        %3446 = vmatpush1.bf16.msra.mxu0 %v3408
        %3447 = vmatprep.subr.bf16.mxu0 0
        %3448 = vmatpush1.bf16.msra.mxu0 %v3409
        %3449 = vmatprep.subr.bf16.mxu0 0
        %3450 = vmatpush1.bf16.msra.mxu0 %v3410
        %3451 = vmatprep.subr.bf16.mxu0 0
        %3452 = vmatpush1.bf16.msra.mxu0 0
        %3453 = vmatprep.subr.bf16.mxu0 0
        %3454 = vmatpush1.bf16.msra.mxu0 0
        %3455 = vmatprep.subr.bf16.mxu0 0
        %3456 = vmatpush1.bf16.msra.mxu0 0
        %3457 = vmatprep.subr.bf16.mxu0 0
        %3458 = vmatpush1.bf16.msra.mxu0 0
        %3459 = vmatprep.subr.bf16.mxu0 0
        %3460 = vmatpush1.bf16.msra.mxu0 0
        %3461 = vmatprep.subr.bf16.mxu0 0
        %3462 = vmatpush1.bf16.msra.mxu0 0
        %3463 = vmatprep.subr.bf16.mxu0 0
        %3464 = vmatpush1.bf16.msra.mxu0 0
        %3465 = vmatprep.subr.bf16.mxu0 0
        %3466 = vmatpush1.bf16.msra.mxu0 0
        %3467 = vmatprep.subr.bf16.mxu0 0
        %3468 = vmatpush1.bf16.msra.mxu0 0
        %3469 = vmatprep.subr.bf16.mxu0 0
        %3470 = vmatpush1.bf16.msra.mxu0 0
        %3471 = vmatprep.subr.bf16.mxu0 0
        %3472 = vmatpush1.bf16.msra.mxu0 0
        %3473 = vmatprep.subr.bf16.mxu0 0
        %3474 = vmatpush1.bf16.msra.mxu0 0
        %3475 = vmatprep.mubr.bf16.mxu0 0
        %3476 = vmatmul.mubr.bf16.gmra.mrb[0].mxu0 %v3432
        %v3477 = vpop.f32.mrb[0].mxu0
        %v3478 = vadd.f32 0.0, %v3477
        %v3479 = vpop.f32.mrb[0].mxu0
        %v3480 = vpop.f32.mrb[0].mxu0
        %v3481 = vadd.f32 0.0, %v3480
        %v3482 = vpop.f32.mrb[0].mxu0
        %3483 = vmatprep.mubr.bf16.mxu0 0
        %3484 = vmatmul.mubr.bf16.gmra.mrb[0].mxu0 %v3435
        %v3485 = vpop.f32.mrb[0].mxu0
        %v3486 = vadd.f32 0.0, %v3485
        %v3487 = vpop.f32.mrb[0].mxu0
        %v3488 = vpop.f32.mrb[0].mxu0
        %v3489 = vadd.f32 0.0, %v3488
        %v3490 = vpop.f32.mrb[0].mxu0
        %3491 = vmatprep.mubr.bf16.mxu0 0
        %3492 = vmatmul.mubr.bf16.gmra.mrb[0].mxu0 %v3438
        %v3493 = vpop.f32.mrb[0].mxu0
        %v3494 = vadd.f32 0.0, %v3493
        %v3495 = vpop.f32.mrb[0].mxu0
        %v3496 = vpop.f32.mrb[0].mxu0
        %v3497 = vadd.f32 0.0, %v3496
        %v3498 = vpop.f32.mrb[0].mxu0
        %3499 = vmatprep.mubr.bf16.mxu0 0
        %3500 = vmatmul.mubr.bf16.gmra.mrb[0].mxu0 %v3441
        %v3501 = vpop.f32.mrb[0].mxu0
        %v3502 = vadd.f32 0.0, %v3501
        %v3503 = vpop.f32.mrb[0].mxu0
        %v3504 = vpop.f32.mrb[0].mxu0
        %v3505 = vadd.f32 0.0, %v3504
        %v3506 = vpop.f32.mrb[0].mxu0
        %3507 = vdwg.mxu0
        %v3508 = vadd.f32 %v3308, %v3478
        %v3509 = vadd.f32 %v3309, %v3481
        %v3510 = vadd.f32 %v3310, %v3486
        %v3511 = vadd.f32 %v3311, %v3489
        %v3512 = vadd.f32 %v3312, %v3494
        %v3513 = vadd.f32 %v3313, %v3497
        %v3514 = vadd.f32 %v3314, %v3502
        %v3515 = vadd.f32 %v3315, %v3505
        %s3516 = scalar_lea.vmem %s25, 96
        %v3517 = vld [vmem:[%s3516] sm:$0xf]
        %v3518 = vld [vmem:[%s3516 + $0x4] sm:$0xf]
        %v3519 = vld [vmem:[%s3516 + $0x8] sm:$0xf]
        %v3520 = vld [vmem:[%s3516 + $0xc] sm:$0xf]
        %v3525 = vunpack.c.l.b16 %v3517
        %v3526 = vunpack.c.l.b16 %v3518
        %v3527 = vunpack.c.l.b16 %v3519
        %v3528 = vunpack.c.l.b16 %v3520
        %v3529 = vpack.c.b16 %v3526, %v3525
        %v3530 = vpack.c.b16 %v3528, %v3527
        %3533 = vmatprep.subr.bf16.mxu0 0
        %3534 = vmatpush1.bf16.msra.mxu0 %v3529
        %3535 = vmatprep.subr.bf16.mxu0 0
        %3536 = vmatpush1.bf16.msra.mxu0 %v3530
        %3537 = vmatprep.subr.bf16.mxu0 0
        %3538 = vmatpush1.bf16.msra.mxu0 0
        %3539 = vmatprep.subr.bf16.mxu0 0
        %3540 = vmatpush1.bf16.msra.mxu0 0
        %3541 = vmatprep.subr.bf16.mxu0 0
        %3542 = vmatpush1.bf16.msra.mxu0 0
        %3543 = vmatprep.subr.bf16.mxu0 0
        %3544 = vmatpush1.bf16.msra.mxu0 0
        %3545 = vmatprep.subr.bf16.mxu0 0
        %3546 = vmatpush1.bf16.msra.mxu0 0
        %3547 = vmatprep.subr.bf16.mxu0 0
        %3548 = vmatpush1.bf16.msra.mxu0 0
        %3549 = vmatprep.subr.bf16.mxu0 0
        %3550 = vmatpush1.bf16.msra.mxu0 0
        %3551 = vmatprep.subr.bf16.mxu0 0
        %3552 = vmatpush1.bf16.msra.mxu0 0
        %3553 = vmatprep.subr.bf16.mxu0 0
        %3554 = vmatpush1.bf16.msra.mxu0 0
        %3555 = vmatprep.subr.bf16.mxu0 0
        %3556 = vmatpush1.bf16.msra.mxu0 0
        %3557 = vmatprep.subr.bf16.mxu0 0
        %3558 = vmatpush1.bf16.msra.mxu0 0
        %3559 = vmatprep.subr.bf16.mxu0 0
        %3560 = vmatpush1.bf16.msra.mxu0 0
        %3561 = vmatprep.subr.bf16.mxu0 0
        %3562 = vmatpush1.bf16.msra.mxu0 0
        %3563 = vmatprep.subr.bf16.mxu0 0
        %3564 = vmatpush1.bf16.msra.mxu0 0
        %3565 = vmatprep.mubr.bf16.mxu0 0
        %3566 = vmatmul.mubr.bf16.gmra.mrb[0].mxu0 %v2338
        %v3567 = vpop.f32.mrb[0].mxu0
        %v3568 = vadd.f32 0.0, %v3567
        %v3569 = vpop.f32.mrb[0].mxu0
        %v3570 = vpop.f32.mrb[0].mxu0
        %v3571 = vadd.f32 0.0, %v3570
        %v3572 = vpop.f32.mrb[0].mxu0
        %3573 = vmatprep.mubr.bf16.mxu0 0
        %3574 = vmatmul.mubr.bf16.gmra.mrb[0].mxu0 %v2341
        %v3575 = vpop.f32.mrb[0].mxu0
        %v3576 = vadd.f32 0.0, %v3575
        %v3577 = vpop.f32.mrb[0].mxu0
        %v3578 = vpop.f32.mrb[0].mxu0
        %v3579 = vadd.f32 0.0, %v3578
        %v3580 = vpop.f32.mrb[0].mxu0
        %3581 = vmatprep.mubr.bf16.mxu0 0
        %3582 = vmatmul.mubr.bf16.gmra.mrb[0].mxu0 %v2344
        %v3583 = vpop.f32.mrb[0].mxu0
        %v3584 = vadd.f32 0.0, %v3583
        %v3585 = vpop.f32.mrb[0].mxu0
        %v3586 = vpop.f32.mrb[0].mxu0
        %v3587 = vadd.f32 0.0, %v3586
        %v3588 = vpop.f32.mrb[0].mxu0
        %3589 = vmatprep.mubr.bf16.mxu0 0
        %3590 = vmatmul.mubr.bf16.gmra.mrb[0].mxu0 %v2347
        %v3591 = vpop.f32.mrb[0].mxu0
        %v3592 = vadd.f32 0.0, %v3591
        %v3593 = vpop.f32.mrb[0].mxu0
        %v3594 = vpop.f32.mrb[0].mxu0
        %v3595 = vadd.f32 0.0, %v3594
        %v3596 = vpop.f32.mrb[0].mxu0
        %3597 = vdwg.mxu0
        %s3598 = scalar_lea.vmem %s5, 192
        %v3599 = vld [vmem:[%s3598] sm:$0xf]
        %v3600 = vld [vmem:[%s3598 + $0x4] sm:$0xf]
        %v3601 = vld [vmem:[%s3598 + $0x8] sm:$0xf]
        %v3602 = vld [vmem:[%s3598 + $0xc] sm:$0xf]
        %v3603 = vld [vmem:[%s3598 + $0x10] sm:$0xf]
        %v3604 = vld [vmem:[%s3598 + $0x14] sm:$0xf]
        %v3605 = vld [vmem:[%s3598 + $0x18] sm:$0xf]
        %v3606 = vld [vmem:[%s3598 + $0x1c] sm:$0xf]
        %v3607 = vpack.c.bf16 %v3571, %v3568
        %v3608 = vpack.c.bf16 %v3579, %v3576
        %v3609 = vpack.c.bf16 %v3587, %v3584
        %v3610 = vpack.c.bf16 %v3595, %v3592
        %v3619 = vunpack.c.l.b16 %v3599
        %v3620 = vunpack.c.l.b16 %v3600
        %v3621 = vunpack.c.l.b16 %v3601
        %v3622 = vunpack.c.l.b16 %v3602
        %v3623 = vunpack.c.l.b16 %v3603
        %v3624 = vunpack.c.l.b16 %v3604
        %v3625 = vunpack.c.l.b16 %v3605
        %v3626 = vunpack.c.l.b16 %v3606
        %v3627 = vpack.c.b16 %v3620, %v3619
        %v3628 = vpack.c.b16 %v3622, %v3621
        %v3629 = vpack.c.b16 %v3624, %v3623
        %v3630 = vpack.c.b16 %v3626, %v3625
        %v3632 = vsel %vm2541, %v3627, 0
        %v3635 = vsel %vm2541, %v3628, 0
        %v3638 = vsel %vm2541, %v3629, 0
        %v3641 = vsel %vm2541, %v3630, 0
        %3643 = vmatprep.subr.bf16.mxu0 0
        %3644 = vmatpush1.bf16.msra.mxu0 %v3607
        %3645 = vmatprep.subr.bf16.mxu0 0
        %3646 = vmatpush1.bf16.msra.mxu0 %v3608
        %3647 = vmatprep.subr.bf16.mxu0 0
        %3648 = vmatpush1.bf16.msra.mxu0 %v3609
        %3649 = vmatprep.subr.bf16.mxu0 0
        %3650 = vmatpush1.bf16.msra.mxu0 %v3610
        %3651 = vmatprep.subr.bf16.mxu0 0
        %3652 = vmatpush1.bf16.msra.mxu0 0
        %3653 = vmatprep.subr.bf16.mxu0 0
        %3654 = vmatpush1.bf16.msra.mxu0 0
        %3655 = vmatprep.subr.bf16.mxu0 0
        %3656 = vmatpush1.bf16.msra.mxu0 0
        %3657 = vmatprep.subr.bf16.mxu0 0
        %3658 = vmatpush1.bf16.msra.mxu0 0
        %3659 = vmatprep.subr.bf16.mxu0 0
        %3660 = vmatpush1.bf16.msra.mxu0 0
        %3661 = vmatprep.subr.bf16.mxu0 0
        %3662 = vmatpush1.bf16.msra.mxu0 0
        %3663 = vmatprep.subr.bf16.mxu0 0
        %3664 = vmatpush1.bf16.msra.mxu0 0
        %3665 = vmatprep.subr.bf16.mxu0 0
        %3666 = vmatpush1.bf16.msra.mxu0 0
        %3667 = vmatprep.subr.bf16.mxu0 0
        %3668 = vmatpush1.bf16.msra.mxu0 0
        %3669 = vmatprep.subr.bf16.mxu0 0
        %3670 = vmatpush1.bf16.msra.mxu0 0
        %3671 = vmatprep.subr.bf16.mxu0 0
        %3672 = vmatpush1.bf16.msra.mxu0 0
        %3673 = vmatprep.subr.bf16.mxu0 0
        %3674 = vmatpush1.bf16.msra.mxu0 0
        %3675 = vmatprep.mubr.bf16.mxu0 0
        %3676 = vmatmul.mubr.bf16.gmra.mrb[0].mxu0 %v3632
        %v3677 = vpop.f32.mrb[0].mxu0
        %v3678 = vadd.f32 0.0, %v3677
        %v3679 = vpop.f32.mrb[0].mxu0
        %v3680 = vpop.f32.mrb[0].mxu0
        %v3681 = vadd.f32 0.0, %v3680
        %v3682 = vpop.f32.mrb[0].mxu0
        %3683 = vmatprep.mubr.bf16.mxu0 0
        %3684 = vmatmul.mubr.bf16.gmra.mrb[0].mxu0 %v3635
        %v3685 = vpop.f32.mrb[0].mxu0
        %v3686 = vadd.f32 0.0, %v3685
        %v3687 = vpop.f32.mrb[0].mxu0
        %v3688 = vpop.f32.mrb[0].mxu0
        %v3689 = vadd.f32 0.0, %v3688
        %v3690 = vpop.f32.mrb[0].mxu0
        %3691 = vmatprep.mubr.bf16.mxu0 0
        %3692 = vmatmul.mubr.bf16.gmra.mrb[0].mxu0 %v3638
        %v3693 = vpop.f32.mrb[0].mxu0
        %v3694 = vadd.f32 0.0, %v3693
        %v3695 = vpop.f32.mrb[0].mxu0
        %v3696 = vpop.f32.mrb[0].mxu0
        %v3697 = vadd.f32 0.0, %v3696
        %v3698 = vpop.f32.mrb[0].mxu0
        %3699 = vmatprep.mubr.bf16.mxu0 0
        %3700 = vmatmul.mubr.bf16.gmra.mrb[0].mxu0 %v3641
        %v3701 = vpop.f32.mrb[0].mxu0
        %v3702 = vadd.f32 0.0, %v3701
        %v3703 = vpop.f32.mrb[0].mxu0
        %v3704 = vpop.f32.mrb[0].mxu0
        %v3705 = vadd.f32 0.0, %v3704
        %v3706 = vpop.f32.mrb[0].mxu0
        %3707 = vdwg.mxu0
        %v3708 = vadd.f32 %v3508, %v3678
        %v3709 = vadd.f32 %v3509, %v3681
        %v3710 = vadd.f32 %v3510, %v3686
        %v3711 = vadd.f32 %v3511, %v3689
        %v3712 = vadd.f32 %v3512, %v3694
        %v3713 = vadd.f32 %v3513, %v3697
        %v3714 = vadd.f32 %v3514, %v3702
        %v3715 = vadd.f32 %v3515, %v3705
        %s3716 = scalar_lea.vmem %s25, 112
        %v3717 = vld [vmem:[%s3716] sm:$0xf]
        %v3718 = vld [vmem:[%s3716 + $0x4] sm:$0xf]
        %v3719 = vld [vmem:[%s3716 + $0x8] sm:$0xf]
        %v3720 = vld [vmem:[%s3716 + $0xc] sm:$0xf]
        %v3725 = vunpack.c.l.b16 %v3717
        %v3726 = vunpack.c.l.b16 %v3718
        %v3727 = vunpack.c.l.b16 %v3719
        %v3728 = vunpack.c.l.b16 %v3720
        %v3729 = vpack.c.b16 %v3726, %v3725
        %v3730 = vpack.c.b16 %v3728, %v3727
        %3733 = vmatprep.subr.bf16.mxu0 0
        %3734 = vmatpush1.bf16.msra.mxu0 %v3729
        %3735 = vmatprep.subr.bf16.mxu0 0
        %3736 = vmatpush1.bf16.msra.mxu0 %v3730
        %3737 = vmatprep.subr.bf16.mxu0 0
        %3738 = vmatpush1.bf16.msra.mxu0 0
        %3739 = vmatprep.subr.bf16.mxu0 0
        %3740 = vmatpush1.bf16.msra.mxu0 0
        %3741 = vmatprep.subr.bf16.mxu0 0
        %3742 = vmatpush1.bf16.msra.mxu0 0
        %3743 = vmatprep.subr.bf16.mxu0 0
        %3744 = vmatpush1.bf16.msra.mxu0 0
        %3745 = vmatprep.subr.bf16.mxu0 0
        %3746 = vmatpush1.bf16.msra.mxu0 0
        %3747 = vmatprep.subr.bf16.mxu0 0
        %3748 = vmatpush1.bf16.msra.mxu0 0
        %3749 = vmatprep.subr.bf16.mxu0 0
        %3750 = vmatpush1.bf16.msra.mxu0 0
        %3751 = vmatprep.subr.bf16.mxu0 0
        %3752 = vmatpush1.bf16.msra.mxu0 0
        %3753 = vmatprep.subr.bf16.mxu0 0
        %3754 = vmatpush1.bf16.msra.mxu0 0
        %3755 = vmatprep.subr.bf16.mxu0 0
        %3756 = vmatpush1.bf16.msra.mxu0 0
        %3757 = vmatprep.subr.bf16.mxu0 0
        %3758 = vmatpush1.bf16.msra.mxu0 0
        %3759 = vmatprep.subr.bf16.mxu0 0
        %3760 = vmatpush1.bf16.msra.mxu0 0
        %3761 = vmatprep.subr.bf16.mxu0 0
        %3762 = vmatpush1.bf16.msra.mxu0 0
        %3763 = vmatprep.subr.bf16.mxu0 0
        %3764 = vmatpush1.bf16.msra.mxu0 0
        %3765 = vmatprep.mubr.bf16.mxu0 0
        %3766 = vmatmul.mubr.bf16.gmra.mrb[0].mxu0 %v2338
        %v3767 = vpop.f32.mrb[0].mxu0
        %v3768 = vadd.f32 0.0, %v3767
        %v3769 = vpop.f32.mrb[0].mxu0
        %v3770 = vpop.f32.mrb[0].mxu0
        %v3771 = vadd.f32 0.0, %v3770
        %v3772 = vpop.f32.mrb[0].mxu0
        %3773 = vmatprep.mubr.bf16.mxu0 0
        %3774 = vmatmul.mubr.bf16.gmra.mrb[0].mxu0 %v2341
        %v3775 = vpop.f32.mrb[0].mxu0
        %v3776 = vadd.f32 0.0, %v3775
        %v3777 = vpop.f32.mrb[0].mxu0
        %v3778 = vpop.f32.mrb[0].mxu0
        %v3779 = vadd.f32 0.0, %v3778
        %v3780 = vpop.f32.mrb[0].mxu0
        %3781 = vmatprep.mubr.bf16.mxu0 0
        %3782 = vmatmul.mubr.bf16.gmra.mrb[0].mxu0 %v2344
        %v3783 = vpop.f32.mrb[0].mxu0
        %v3784 = vadd.f32 0.0, %v3783
        %v3785 = vpop.f32.mrb[0].mxu0
        %v3786 = vpop.f32.mrb[0].mxu0
        %v3787 = vadd.f32 0.0, %v3786
        %v3788 = vpop.f32.mrb[0].mxu0
        %3789 = vmatprep.mubr.bf16.mxu0 0
        %3790 = vmatmul.mubr.bf16.gmra.mrb[0].mxu0 %v2347
        %v3791 = vpop.f32.mrb[0].mxu0
        %v3792 = vadd.f32 0.0, %v3791
        %v3793 = vpop.f32.mrb[0].mxu0
        %v3794 = vpop.f32.mrb[0].mxu0
        %v3795 = vadd.f32 0.0, %v3794
        %v3796 = vpop.f32.mrb[0].mxu0
        %3797 = vdwg.mxu0
        %s3798 = scalar_lea.vmem %s5, 224
        %v3799 = vld [vmem:[%s3798] sm:$0xf]
        %v3800 = vld [vmem:[%s3798 + $0x4] sm:$0xf]
        %v3801 = vld [vmem:[%s3798 + $0x8] sm:$0xf]
        %v3802 = vld [vmem:[%s3798 + $0xc] sm:$0xf]
        %v3803 = vld [vmem:[%s3798 + $0x10] sm:$0xf]
        %v3804 = vld [vmem:[%s3798 + $0x14] sm:$0xf]
        %v3805 = vld [vmem:[%s3798 + $0x18] sm:$0xf]
        %v3806 = vld [vmem:[%s3798 + $0x1c] sm:$0xf]
        %v3807 = vpack.c.bf16 %v3771, %v3768
        %v3808 = vpack.c.bf16 %v3779, %v3776
        %v3809 = vpack.c.bf16 %v3787, %v3784
        %v3810 = vpack.c.bf16 %v3795, %v3792
        %v3819 = vunpack.c.l.b16 %v3799
        %v3820 = vunpack.c.l.b16 %v3800
        %v3821 = vunpack.c.l.b16 %v3801
        %v3822 = vunpack.c.l.b16 %v3802
        %v3823 = vunpack.c.l.b16 %v3803
        %v3824 = vunpack.c.l.b16 %v3804
        %v3825 = vunpack.c.l.b16 %v3805
        %v3826 = vunpack.c.l.b16 %v3806
        %v3827 = vpack.c.b16 %v3820, %v3819
        %v3828 = vpack.c.b16 %v3822, %v3821
        %v3829 = vpack.c.b16 %v3824, %v3823
        %v3830 = vpack.c.b16 %v3826, %v3825
        %v3832 = vsel %vm2541, %v3827, 0
        %v3835 = vsel %vm2541, %v3828, 0
        %v3838 = vsel %vm2541, %v3829, 0
        %v3841 = vsel %vm2541, %v3830, 0
        %3843 = vmatprep.subr.bf16.mxu0 0
        %3844 = vmatpush1.bf16.msra.mxu0 %v3807
        %3845 = vmatprep.subr.bf16.mxu0 0
        %3846 = vmatpush1.bf16.msra.mxu0 %v3808
        %3847 = vmatprep.subr.bf16.mxu0 0
        %3848 = vmatpush1.bf16.msra.mxu0 %v3809
        %3849 = vmatprep.subr.bf16.mxu0 0
        %3850 = vmatpush1.bf16.msra.mxu0 %v3810
        %3851 = vmatprep.subr.bf16.mxu0 0
        %3852 = vmatpush1.bf16.msra.mxu0 0
        %3853 = vmatprep.subr.bf16.mxu0 0
        %3854 = vmatpush1.bf16.msra.mxu0 0
        %3855 = vmatprep.subr.bf16.mxu0 0
        %3856 = vmatpush1.bf16.msra.mxu0 0
        %3857 = vmatprep.subr.bf16.mxu0 0
        %3858 = vmatpush1.bf16.msra.mxu0 0
        %3859 = vmatprep.subr.bf16.mxu0 0
        %3860 = vmatpush1.bf16.msra.mxu0 0
        %3861 = vmatprep.subr.bf16.mxu0 0
        %3862 = vmatpush1.bf16.msra.mxu0 0
        %3863 = vmatprep.subr.bf16.mxu0 0
        %3864 = vmatpush1.bf16.msra.mxu0 0
        %3865 = vmatprep.subr.bf16.mxu0 0
        %3866 = vmatpush1.bf16.msra.mxu0 0
        %3867 = vmatprep.subr.bf16.mxu0 0
        %3868 = vmatpush1.bf16.msra.mxu0 0
        %3869 = vmatprep.subr.bf16.mxu0 0
        %3870 = vmatpush1.bf16.msra.mxu0 0
        %3871 = vmatprep.subr.bf16.mxu0 0
        %3872 = vmatpush1.bf16.msra.mxu0 0
        %3873 = vmatprep.subr.bf16.mxu0 0
        %3874 = vmatpush1.bf16.msra.mxu0 0
        %3875 = vmatprep.mubr.bf16.mxu0 0
        %3876 = vmatmul.mubr.bf16.gmra.mrb[0].mxu0 %v3832
        %v3877 = vpop.f32.mrb[0].mxu0
        %v3878 = vadd.f32 0.0, %v3877
        %v3879 = vpop.f32.mrb[0].mxu0
        %v3880 = vpop.f32.mrb[0].mxu0
        %v3881 = vadd.f32 0.0, %v3880
        %v3882 = vpop.f32.mrb[0].mxu0
        %3883 = vmatprep.mubr.bf16.mxu0 0
        %3884 = vmatmul.mubr.bf16.gmra.mrb[0].mxu0 %v3835
        %v3885 = vpop.f32.mrb[0].mxu0
        %v3886 = vadd.f32 0.0, %v3885
        %v3887 = vpop.f32.mrb[0].mxu0
        %v3888 = vpop.f32.mrb[0].mxu0
        %v3889 = vadd.f32 0.0, %v3888
        %v3890 = vpop.f32.mrb[0].mxu0
        %3891 = vmatprep.mubr.bf16.mxu0 0
        %3892 = vmatmul.mubr.bf16.gmra.mrb[0].mxu0 %v3838
        %v3893 = vpop.f32.mrb[0].mxu0
        %v3894 = vadd.f32 0.0, %v3893
        %v3895 = vpop.f32.mrb[0].mxu0
        %v3896 = vpop.f32.mrb[0].mxu0
        %v3897 = vadd.f32 0.0, %v3896
        %v3898 = vpop.f32.mrb[0].mxu0
        %3899 = vmatprep.mubr.bf16.mxu0 0
        %3900 = vmatmul.mubr.bf16.gmra.mrb[0].mxu0 %v3841
        %v3901 = vpop.f32.mrb[0].mxu0
        %v3902 = vadd.f32 0.0, %v3901
        %v3903 = vpop.f32.mrb[0].mxu0
        %v3904 = vpop.f32.mrb[0].mxu0
        %v3905 = vadd.f32 0.0, %v3904
        %v3906 = vpop.f32.mrb[0].mxu0
        %3907 = vdwg.mxu0
        %v3908 = vadd.f32 %v3708, %v3878
        %v3909 = vadd.f32 %v3709, %v3881
        %v3910 = vadd.f32 %v3710, %v3886
        %v3911 = vadd.f32 %v3711, %v3889
        %v3912 = vadd.f32 %v3712, %v3894
        %v3913 = vadd.f32 %v3713, %v3897
        %v3914 = vadd.f32 %v3714, %v3902
        %v3915 = vadd.f32 %v3715, %v3905
        %s3916 = scalar_lea.vmem %s25, 128
        %v3917 = vld [vmem:[%s3916] sm:$0xf]
        %v3918 = vld [vmem:[%s3916 + $0x4] sm:$0xf]
        %v3919 = vld [vmem:[%s3916 + $0x8] sm:$0xf]
        %v3920 = vld [vmem:[%s3916 + $0xc] sm:$0xf]
        %v3925 = vunpack.c.l.b16 %v3917
        %v3926 = vunpack.c.l.b16 %v3918
        %v3927 = vunpack.c.l.b16 %v3919
        %v3928 = vunpack.c.l.b16 %v3920
        %v3929 = vpack.c.b16 %v3926, %v3925
        %v3930 = vpack.c.b16 %v3928, %v3927
        %3933 = vmatprep.subr.bf16.mxu0 0
        %3934 = vmatpush1.bf16.msra.mxu0 %v3929
        %3935 = vmatprep.subr.bf16.mxu0 0
        %3936 = vmatpush1.bf16.msra.mxu0 %v3930
        %3937 = vmatprep.subr.bf16.mxu0 0
        %3938 = vmatpush1.bf16.msra.mxu0 0
        %3939 = vmatprep.subr.bf16.mxu0 0
        %3940 = vmatpush1.bf16.msra.mxu0 0
        %3941 = vmatprep.subr.bf16.mxu0 0
        %3942 = vmatpush1.bf16.msra.mxu0 0
        %3943 = vmatprep.subr.bf16.mxu0 0
        %3944 = vmatpush1.bf16.msra.mxu0 0
        %3945 = vmatprep.subr.bf16.mxu0 0
        %3946 = vmatpush1.bf16.msra.mxu0 0
        %3947 = vmatprep.subr.bf16.mxu0 0
        %3948 = vmatpush1.bf16.msra.mxu0 0
        %3949 = vmatprep.subr.bf16.mxu0 0
        %3950 = vmatpush1.bf16.msra.mxu0 0
        %3951 = vmatprep.subr.bf16.mxu0 0
        %3952 = vmatpush1.bf16.msra.mxu0 0
        %3953 = vmatprep.subr.bf16.mxu0 0
        %3954 = vmatpush1.bf16.msra.mxu0 0
        %3955 = vmatprep.subr.bf16.mxu0 0
        %3956 = vmatpush1.bf16.msra.mxu0 0
        %3957 = vmatprep.subr.bf16.mxu0 0
        %3958 = vmatpush1.bf16.msra.mxu0 0
        %3959 = vmatprep.subr.bf16.mxu0 0
        %3960 = vmatpush1.bf16.msra.mxu0 0
        %3961 = vmatprep.subr.bf16.mxu0 0
        %3962 = vmatpush1.bf16.msra.mxu0 0
        %3963 = vmatprep.subr.bf16.mxu0 0
        %3964 = vmatpush1.bf16.msra.mxu0 0
        %3965 = vmatprep.mubr.bf16.mxu0 0
        %3966 = vmatmul.mubr.bf16.gmra.mrb[0].mxu0 %v2338
        %v3967 = vpop.f32.mrb[0].mxu0
        %v3968 = vadd.f32 0.0, %v3967
        %v3969 = vpop.f32.mrb[0].mxu0
        %v3970 = vpop.f32.mrb[0].mxu0
        %v3971 = vadd.f32 0.0, %v3970
        %v3972 = vpop.f32.mrb[0].mxu0
        %3973 = vmatprep.mubr.bf16.mxu0 0
        %3974 = vmatmul.mubr.bf16.gmra.mrb[0].mxu0 %v2341
        %v3975 = vpop.f32.mrb[0].mxu0
        %v3976 = vadd.f32 0.0, %v3975
        %v3977 = vpop.f32.mrb[0].mxu0
        %v3978 = vpop.f32.mrb[0].mxu0
        %v3979 = vadd.f32 0.0, %v3978
        %v3980 = vpop.f32.mrb[0].mxu0
        %3981 = vmatprep.mubr.bf16.mxu0 0
        %3982 = vmatmul.mubr.bf16.gmra.mrb[0].mxu0 %v2344
        %v3983 = vpop.f32.mrb[0].mxu0
        %v3984 = vadd.f32 0.0, %v3983
        %v3985 = vpop.f32.mrb[0].mxu0
        %v3986 = vpop.f32.mrb[0].mxu0
        %v3987 = vadd.f32 0.0, %v3986
        %v3988 = vpop.f32.mrb[0].mxu0
        %3989 = vmatprep.mubr.bf16.mxu0 0
        %3990 = vmatmul.mubr.bf16.gmra.mrb[0].mxu0 %v2347
        %v3991 = vpop.f32.mrb[0].mxu0
        %v3992 = vadd.f32 0.0, %v3991
        %v3993 = vpop.f32.mrb[0].mxu0
        %v3994 = vpop.f32.mrb[0].mxu0
        %v3995 = vadd.f32 0.0, %v3994
        %v3996 = vpop.f32.mrb[0].mxu0
        %3997 = vdwg.mxu0
        %s3998 = scalar_lea.vmem %s5, 256
        %v3999 = vld [vmem:[%s3998] sm:$0xf]
        %v4000 = vld [vmem:[%s3998 + $0x4] sm:$0xf]
        %v4001 = vld [vmem:[%s3998 + $0x8] sm:$0xf]
        %v4002 = vld [vmem:[%s3998 + $0xc] sm:$0xf]
        %v4003 = vld [vmem:[%s3998 + $0x10] sm:$0xf]
        %v4004 = vld [vmem:[%s3998 + $0x14] sm:$0xf]
        %v4005 = vld [vmem:[%s3998 + $0x18] sm:$0xf]
        %v4006 = vld [vmem:[%s3998 + $0x1c] sm:$0xf]
        %v4007 = vpack.c.bf16 %v3971, %v3968
        %v4008 = vpack.c.bf16 %v3979, %v3976
        %v4009 = vpack.c.bf16 %v3987, %v3984
        %v4010 = vpack.c.bf16 %v3995, %v3992
        %v4019 = vunpack.c.l.b16 %v3999
        %v4020 = vunpack.c.l.b16 %v4000
        %v4021 = vunpack.c.l.b16 %v4001
        %v4022 = vunpack.c.l.b16 %v4002
        %v4023 = vunpack.c.l.b16 %v4003
        %v4024 = vunpack.c.l.b16 %v4004
        %v4025 = vunpack.c.l.b16 %v4005
        %v4026 = vunpack.c.l.b16 %v4006
        %v4027 = vpack.c.b16 %v4020, %v4019
        %v4028 = vpack.c.b16 %v4022, %v4021
        %v4029 = vpack.c.b16 %v4024, %v4023
        %v4030 = vpack.c.b16 %v4026, %v4025
        %v4032 = vsel %vm2541, %v4027, 0
        %v4035 = vsel %vm2541, %v4028, 0
        %v4038 = vsel %vm2541, %v4029, 0
        %v4041 = vsel %vm2541, %v4030, 0
        %4043 = vmatprep.subr.bf16.mxu0 0
        %4044 = vmatpush1.bf16.msra.mxu0 %v4007
        %4045 = vmatprep.subr.bf16.mxu0 0
        %4046 = vmatpush1.bf16.msra.mxu0 %v4008
        %4047 = vmatprep.subr.bf16.mxu0 0
        %4048 = vmatpush1.bf16.msra.mxu0 %v4009
        %4049 = vmatprep.subr.bf16.mxu0 0
        %4050 = vmatpush1.bf16.msra.mxu0 %v4010
        %4051 = vmatprep.subr.bf16.mxu0 0
        %4052 = vmatpush1.bf16.msra.mxu0 0
        %4053 = vmatprep.subr.bf16.mxu0 0
        %4054 = vmatpush1.bf16.msra.mxu0 0
        %4055 = vmatprep.subr.bf16.mxu0 0
        %4056 = vmatpush1.bf16.msra.mxu0 0
        %4057 = vmatprep.subr.bf16.mxu0 0
        %4058 = vmatpush1.bf16.msra.mxu0 0
        %4059 = vmatprep.subr.bf16.mxu0 0
        %4060 = vmatpush1.bf16.msra.mxu0 0
        %4061 = vmatprep.subr.bf16.mxu0 0
        %4062 = vmatpush1.bf16.msra.mxu0 0
        %4063 = vmatprep.subr.bf16.mxu0 0
        %4064 = vmatpush1.bf16.msra.mxu0 0
        %4065 = vmatprep.subr.bf16.mxu0 0
        %4066 = vmatpush1.bf16.msra.mxu0 0
        %4067 = vmatprep.subr.bf16.mxu0 0
        %4068 = vmatpush1.bf16.msra.mxu0 0
        %4069 = vmatprep.subr.bf16.mxu0 0
        %4070 = vmatpush1.bf16.msra.mxu0 0
        %4071 = vmatprep.subr.bf16.mxu0 0
        %4072 = vmatpush1.bf16.msra.mxu0 0
        %4073 = vmatprep.subr.bf16.mxu0 0
        %4074 = vmatpush1.bf16.msra.mxu0 0
        %4075 = vmatprep.mubr.bf16.mxu0 0
        %4076 = vmatmul.mubr.bf16.gmra.mrb[0].mxu0 %v4032
        %v4077 = vpop.f32.mrb[0].mxu0
        %v4078 = vadd.f32 0.0, %v4077
        %v4079 = vpop.f32.mrb[0].mxu0
        %v4080 = vpop.f32.mrb[0].mxu0
        %v4081 = vadd.f32 0.0, %v4080
        %v4082 = vpop.f32.mrb[0].mxu0
        %4083 = vmatprep.mubr.bf16.mxu0 0
        %4084 = vmatmul.mubr.bf16.gmra.mrb[0].mxu0 %v4035
        %v4085 = vpop.f32.mrb[0].mxu0
        %v4086 = vadd.f32 0.0, %v4085
        %v4087 = vpop.f32.mrb[0].mxu0
        %v4088 = vpop.f32.mrb[0].mxu0
        %v4089 = vadd.f32 0.0, %v4088
        %v4090 = vpop.f32.mrb[0].mxu0
        %4091 = vmatprep.mubr.bf16.mxu0 0
        %4092 = vmatmul.mubr.bf16.gmra.mrb[0].mxu0 %v4038
        %v4093 = vpop.f32.mrb[0].mxu0
        %v4094 = vadd.f32 0.0, %v4093
        %v4095 = vpop.f32.mrb[0].mxu0
        %v4096 = vpop.f32.mrb[0].mxu0
        %v4097 = vadd.f32 0.0, %v4096
        %v4098 = vpop.f32.mrb[0].mxu0
        %4099 = vmatprep.mubr.bf16.mxu0 0
        %4100 = vmatmul.mubr.bf16.gmra.mrb[0].mxu0 %v4041
        %v4101 = vpop.f32.mrb[0].mxu0
        %v4102 = vadd.f32 0.0, %v4101
        %v4103 = vpop.f32.mrb[0].mxu0
        %v4104 = vpop.f32.mrb[0].mxu0
        %v4105 = vadd.f32 0.0, %v4104
        %v4106 = vpop.f32.mrb[0].mxu0
        %4107 = vdwg.mxu0
        %v4108 = vadd.f32 %v3908, %v4078
        %v4109 = vadd.f32 %v3909, %v4081
        %v4110 = vadd.f32 %v3910, %v4086
        %v4111 = vadd.f32 %v3911, %v4089
        %v4112 = vadd.f32 %v3912, %v4094
        %v4113 = vadd.f32 %v3913, %v4097
        %v4114 = vadd.f32 %v3914, %v4102
        %v4115 = vadd.f32 %v3915, %v4105
        %v4116 = vld [vmem:[%s27] sm:$0x1]
        %v4118 = vlaneseq
        %v4119 = vshrl.u32 %v4118, 7
        %v4120 = vsub.s32 0, %v4119
        %v4121 = vrot.slane %v4116, %v4120
        %v4123 = vmul.f32 %v2142, %v4121
        %v4124 = vmul.f32 %v2143, %v4121
        %v4125 = vmul.f32 %v2144, %v4121
        %v4126 = vmul.f32 %v2145, %v4121
        %v4127 = vmul.f32 %v2146, %v4121
        %v4128 = vmul.f32 %v2147, %v4121
        %v4129 = vmul.f32 %v2148, %v4121
        %v4130 = vmul.f32 %v2149, %v4121
        %v4131 = vld [vmem:[%s29] sm:$0x1]
        %v4133 = vlaneseq
        %v4134 = vshrl.u32 %v4133, 7
        %v4135 = vsub.s32 0, %v4134
        %v4136 = vrot.slane %v4131, %v4135
        %v4138 = vadd.f32 %v4123, %v4136
        %v4139 = vadd.f32 %v4124, %v4136
        %v4140 = vadd.f32 %v4125, %v4136
        %v4141 = vadd.f32 %v4126, %v4136
        %v4142 = vadd.f32 %v4127, %v4136
        %v4143 = vadd.f32 %v4128, %v4136
        %v4144 = vadd.f32 %v4129, %v4136
        %v4145 = vadd.f32 %v4130, %v4136
        %v4146 = vmax.f32 %v4138, 0.0
        %v4147 = vmax.f32 %v4139, 0.0
        %v4148 = vmax.f32 %v4140, 0.0
        %v4149 = vmax.f32 %v4141, 0.0
        %v4150 = vmax.f32 %v4142, 0.0
        %v4151 = vmax.f32 %v4143, 0.0
        %v4152 = vmax.f32 %v4144, 0.0
        %v4153 = vmax.f32 %v4145, 0.0
        %v4154 = vld [vmem:[%s31] sm:$0xf]
        %v4155 = vld [vmem:[%s31 + $0x4] sm:$0xf]
        %v4156 = vpack.c.bf16 %v4147, %v4146
        %v4157 = vpack.c.bf16 %v4149, %v4148
        %v4158 = vpack.c.bf16 %v4151, %v4150
        %v4159 = vpack.c.bf16 %v4153, %v4152
        %4160 = vrot.lane.b32.xlu0 %v4121, 112
        %v4161 = vpop.permute.xlu0 %4160
        %v4163 = vmul.f32 %v4108, %v4161
        %v4164 = vmul.f32 %v4109, %v4161
        %v4165 = vmul.f32 %v4110, %v4161
        %v4166 = vmul.f32 %v4111, %v4161
        %v4167 = vmul.f32 %v4112, %v4161
        %v4168 = vmul.f32 %v4113, %v4161
        %v4169 = vmul.f32 %v4114, %v4161
        %v4170 = vmul.f32 %v4115, %v4161
        %4171 = vrot.lane.b32.xlu0 %v4136, 112
        %v4172 = vpop.permute.xlu0 %4171
        %v4174 = vadd.f32 %v4163, %v4172
        %v4175 = vadd.f32 %v4164, %v4172
        %v4176 = vadd.f32 %v4165, %v4172
        %v4177 = vadd.f32 %v4166, %v4172
        %v4178 = vadd.f32 %v4167, %v4172
        %v4179 = vadd.f32 %v4168, %v4172
        %v4180 = vadd.f32 %v4169, %v4172
        %v4181 = vadd.f32 %v4170, %v4172
        %v4182 = vmax.f32 %v4174, 0.0
        %v4183 = vmax.f32 %v4175, 0.0
        %v4184 = vmax.f32 %v4176, 0.0
        %v4185 = vmax.f32 %v4177, 0.0
        %v4186 = vmax.f32 %v4178, 0.0
        %v4187 = vmax.f32 %v4179, 0.0
        %v4188 = vmax.f32 %v4180, 0.0
        %v4189 = vmax.f32 %v4181, 0.0
        %v4190 = vld [vmem:[%s31 + $0x8] sm:$0xf]
        %v4191 = vpack.c.bf16 %v4183, %v4182
        %v4192 = vpack.c.bf16 %v4185, %v4184
        %v4193 = vpack.c.bf16 %v4187, %v4186
        %v4194 = vpack.c.bf16 %v4189, %v4188
        %vm4195 = vcmask 64512
        %v4197 = vsel %vm4195, %v4191, 0
        %v4200 = vsel %vm4195, %v4192, 0
        %v4203 = vsel %vm4195, %v4193, 0
        %v4206 = vsel %vm4195, %v4194, 0
        %vm4208 = vcmask 1043456
        %v4210 = vsel %vm4208, %v4190, 0
        %4212 = vmatprep.subr.bf16.mxu0 0
        %4213 = vmatpush1.bf16.msra.mxu0 %v4210
        %4214 = vmatprep.subr.bf16.mxu0 0
        %4215 = vmatpush1.bf16.msra.mxu0 0
        %4216 = vmatprep.subr.bf16.mxu0 0
        %4217 = vmatpush1.bf16.msra.mxu0 0
        %4218 = vmatprep.subr.bf16.mxu0 0
        %4219 = vmatpush1.bf16.msra.mxu0 0
        %4220 = vmatprep.subr.bf16.mxu0 0
        %4221 = vmatpush1.bf16.msra.mxu0 0
        %4222 = vmatprep.subr.bf16.mxu0 0
        %4223 = vmatpush1.bf16.msra.mxu0 0
        %4224 = vmatprep.subr.bf16.mxu0 0
        %4225 = vmatpush1.bf16.msra.mxu0 0
        %4226 = vmatprep.subr.bf16.mxu0 0
        %4227 = vmatpush1.bf16.msra.mxu0 0
        %4228 = vmatprep.subr.bf16.mxu0 0
        %4229 = vmatpush1.bf16.msra.mxu0 0
        %4230 = vmatprep.subr.bf16.mxu0 0
        %4231 = vmatpush1.bf16.msra.mxu0 0
        %4232 = vmatprep.subr.bf16.mxu0 0
        %4233 = vmatpush1.bf16.msra.mxu0 0
        %4234 = vmatprep.subr.bf16.mxu0 0
        %4235 = vmatpush1.bf16.msra.mxu0 0
        %4236 = vmatprep.subr.bf16.mxu0 0
        %4237 = vmatpush1.bf16.msra.mxu0 0
        %4238 = vmatprep.subr.bf16.mxu0 0
        %4239 = vmatpush1.bf16.msra.mxu0 0
        %4240 = vmatprep.subr.bf16.mxu0 0
        %4241 = vmatpush1.bf16.msra.mxu0 0
        %4242 = vmatprep.subr.bf16.mxu0 0
        %4243 = vmatpush1.bf16.msra.mxu0 0
        %4244 = vmatprep.mubr.bf16.mxu0 0
        %4245 = vmatmul.mubr.bf16.gmra.mrb[0].mxu0 %v4197
        %v4246 = vpop.f32.mrb[0].mxu0
        %v4247 = vadd.f32 0.0, %v4246
        %v4248 = vpop.f32.mrb[0].mxu0
        %v4249 = vpop.f32.mrb[0].mxu0
        %v4250 = vadd.f32 0.0, %v4249
        %v4251 = vpop.f32.mrb[0].mxu0
        %4252 = vmatprep.mubr.bf16.mxu0 0
        %4253 = vmatmul.mubr.bf16.gmra.mrb[0].mxu0 %v4200
        %v4254 = vpop.f32.mrb[0].mxu0
        %v4255 = vadd.f32 0.0, %v4254
        %v4256 = vpop.f32.mrb[0].mxu0
        %v4257 = vpop.f32.mrb[0].mxu0
        %v4258 = vadd.f32 0.0, %v4257
        %v4259 = vpop.f32.mrb[0].mxu0
        %4260 = vmatprep.mubr.bf16.mxu0 0
        %4261 = vmatmul.mubr.bf16.gmra.mrb[0].mxu0 %v4203
        %v4262 = vpop.f32.mrb[0].mxu0
        %v4263 = vadd.f32 0.0, %v4262
        %v4264 = vpop.f32.mrb[0].mxu0
        %v4265 = vpop.f32.mrb[0].mxu0
        %v4266 = vadd.f32 0.0, %v4265
        %v4267 = vpop.f32.mrb[0].mxu0
        %4268 = vmatprep.mubr.bf16.mxu0 0
        %4269 = vmatmul.mubr.bf16.gmra.mrb[0].mxu0 %v4206
        %v4270 = vpop.f32.mrb[0].mxu0
        %v4271 = vadd.f32 0.0, %v4270
        %v4272 = vpop.f32.mrb[0].mxu0
        %v4273 = vpop.f32.mrb[0].mxu0
        %v4274 = vadd.f32 0.0, %v4273
        %v4275 = vpop.f32.mrb[0].mxu0
        %4276 = vdwg.mxu0
        %v4279 = vunpack.c.l.b16 %v4154
        %v4280 = vunpack.c.l.b16 %v4155
        %v4281 = vpack.c.b16 %v4280, %v4279
        %v4284 = vsel %vm2200, %v4156, 0
        %v4287 = vsel %vm2200, %v4157, 0
        %v4290 = vsel %vm2200, %v4158, 0
        %v4293 = vsel %vm2200, %v4159, 0
        %4295 = vmatprep.subr.bf16.mxu0 0
        %4296 = vmatpush1.bf16.msra.mxu0 %v4281
        %4297 = vmatprep.subr.bf16.mxu0 0
        %4298 = vmatpush1.bf16.msra.mxu0 0
        %4299 = vmatprep.subr.bf16.mxu0 0
        %4300 = vmatpush1.bf16.msra.mxu0 0
        %4301 = vmatprep.subr.bf16.mxu0 0
        %4302 = vmatpush1.bf16.msra.mxu0 0
        %4303 = vmatprep.subr.bf16.mxu0 0
        %4304 = vmatpush1.bf16.msra.mxu0 0
        %4305 = vmatprep.subr.bf16.mxu0 0
        %4306 = vmatpush1.bf16.msra.mxu0 0
        %4307 = vmatprep.subr.bf16.mxu0 0
        %4308 = vmatpush1.bf16.msra.mxu0 0
        %4309 = vmatprep.subr.bf16.mxu0 0
        %4310 = vmatpush1.bf16.msra.mxu0 0
        %4311 = vmatprep.subr.bf16.mxu0 0
        %4312 = vmatpush1.bf16.msra.mxu0 0
        %4313 = vmatprep.subr.bf16.mxu0 0
        %4314 = vmatpush1.bf16.msra.mxu0 0
        %4315 = vmatprep.subr.bf16.mxu0 0
        %4316 = vmatpush1.bf16.msra.mxu0 0
        %4317 = vmatprep.subr.bf16.mxu0 0
        %4318 = vmatpush1.bf16.msra.mxu0 0
        %4319 = vmatprep.subr.bf16.mxu0 0
        %4320 = vmatpush1.bf16.msra.mxu0 0
        %4321 = vmatprep.subr.bf16.mxu0 0
        %4322 = vmatpush1.bf16.msra.mxu0 0
        %4323 = vmatprep.subr.bf16.mxu0 0
        %4324 = vmatpush1.bf16.msra.mxu0 0
        %4325 = vmatprep.subr.bf16.mxu0 0
        %4326 = vmatpush1.bf16.msra.mxu0 0
        %4327 = vmatprep.mubr.bf16.mxu0 0
        %4328 = vmatmul.mubr.bf16.gmra.mrb[0].mxu0 %v4284
        %v4329 = vpop.f32.mrb[0].mxu0
        %v4330 = vadd.f32 %v4247, %v4329
        %v4331 = vpop.f32.mrb[0].mxu0
        %v4332 = vpop.f32.mrb[0].mxu0
        %v4333 = vadd.f32 %v4250, %v4332
        %v4334 = vpop.f32.mrb[0].mxu0
        %4335 = vmatprep.mubr.bf16.mxu0 0
        %4336 = vmatmul.mubr.bf16.gmra.mrb[0].mxu0 %v4287
        %v4337 = vpop.f32.mrb[0].mxu0
        %v4338 = vadd.f32 %v4255, %v4337
        %v4339 = vpop.f32.mrb[0].mxu0
        %v4340 = vpop.f32.mrb[0].mxu0
        %v4341 = vadd.f32 %v4258, %v4340
        %v4342 = vpop.f32.mrb[0].mxu0
        %4343 = vmatprep.mubr.bf16.mxu0 0
        %4344 = vmatmul.mubr.bf16.gmra.mrb[0].mxu0 %v4290
        %v4345 = vpop.f32.mrb[0].mxu0
        %v4346 = vadd.f32 %v4263, %v4345
        %v4347 = vpop.f32.mrb[0].mxu0
        %v4348 = vpop.f32.mrb[0].mxu0
        %v4349 = vadd.f32 %v4266, %v4348
        %v4350 = vpop.f32.mrb[0].mxu0
        %4351 = vmatprep.mubr.bf16.mxu0 0
        %4352 = vmatmul.mubr.bf16.gmra.mrb[0].mxu0 %v4293
        %v4353 = vpop.f32.mrb[0].mxu0
        %v4354 = vadd.f32 %v4271, %v4353
        %v4355 = vpop.f32.mrb[0].mxu0
        %v4356 = vpop.f32.mrb[0].mxu0
        %v4357 = vadd.f32 %v4274, %v4356
        %v4358 = vpop.f32.mrb[0].mxu0
        %4359 = vdwg.mxu0
        %v4360 = vld [vmem:[%s33] sm:$0x1]
        %v4362 = vlaneseq
        %v4363 = vshrl.u32 %v4362, 7
        %v4364 = vsub.s32 0, %v4363
        %v4365 = vrot.slane %v4360, %v4364
        %v4367 = vmul.f32 %v4330, %v4365
        %v4368 = vmul.f32 %v4333, %v4365
        %v4369 = vmul.f32 %v4338, %v4365
        %v4370 = vmul.f32 %v4341, %v4365
        %v4371 = vmul.f32 %v4346, %v4365
        %v4372 = vmul.f32 %v4349, %v4365
        %v4373 = vmul.f32 %v4354, %v4365
        %v4374 = vmul.f32 %v4357, %v4365
        %v4375 = vld [vmem:[%s35] sm:$0x1]
        %v4377 = vlaneseq
        %v4378 = vshrl.u32 %v4377, 7
        %v4379 = vsub.s32 0, %v4378
        %v4380 = vrot.slane %v4375, %v4379
        %v4382 = vadd.f32 %v4367, %v4380
        %v4383 = vadd.f32 %v4368, %v4380
        %v4384 = vadd.f32 %v4369, %v4380
        %v4385 = vadd.f32 %v4370, %v4380
        %v4386 = vadd.f32 %v4371, %v4380
        %v4387 = vadd.f32 %v4372, %v4380
        %v4388 = vadd.f32 %v4373, %v4380
        %v4389 = vadd.f32 %v4374, %v4380
        %v4390 = vmax.f32 %v4382, 0.0
        %v4391 = vmax.f32 %v4383, 0.0
        %v4392 = vmax.f32 %v4384, 0.0
        %v4393 = vmax.f32 %v4385, 0.0
        %v4394 = vmax.f32 %v4386, 0.0
        %v4395 = vmax.f32 %v4387, 0.0
        %v4396 = vmax.f32 %v4388, 0.0
        %v4397 = vmax.f32 %v4389, 0.0
        %v4398 = vpack.c.bf16 %v4391, %v4390
        %v4399 = vpack.c.bf16 %v4393, %v4392
        %v4400 = vpack.c.bf16 %v4395, %v4394
        %v4401 = vpack.c.bf16 %v4397, %v4396
        %v4402 = vld [vmem:[%s37] sm:$0xf]
        %v4403 = vld [vmem:[%s37 + $0x4] sm:$0xf]
        %v4404 = vld [vmem:[%s37 + $0x8] sm:$0xf]
        %v4405 = vld [vmem:[%s37 + $0xc] sm:$0xf]
        %v4410 = vunpack.c.l.b16 %v4402
        %v4411 = vunpack.c.l.b16 %v4403
        %v4412 = vunpack.c.l.b16 %v4404
        %v4413 = vunpack.c.l.b16 %v4405
        %v4414 = vpack.c.b16 %v4411, %v4410
        %v4415 = vpack.c.b16 %v4413, %v4412
        %v4419 = vsel %vm2336, %v4398, 0
        %v4422 = vsel %vm2336, %v4399, 0
        %v4425 = vsel %vm2336, %v4400, 0
        %v4428 = vsel %vm2336, %v4401, 0
        %4430 = vmatprep.subr.bf16.mxu0 0
        %4431 = vmatpush1.bf16.msra.mxu0 %v4414
        %4432 = vmatprep.subr.bf16.mxu0 0
        %4433 = vmatpush1.bf16.msra.mxu0 %v4415
        %4434 = vmatprep.subr.bf16.mxu0 0
        %4435 = vmatpush1.bf16.msra.mxu0 0
        %4436 = vmatprep.subr.bf16.mxu0 0
        %4437 = vmatpush1.bf16.msra.mxu0 0
        %4438 = vmatprep.subr.bf16.mxu0 0
        %4439 = vmatpush1.bf16.msra.mxu0 0
        %4440 = vmatprep.subr.bf16.mxu0 0
        %4441 = vmatpush1.bf16.msra.mxu0 0
        %4442 = vmatprep.subr.bf16.mxu0 0
        %4443 = vmatpush1.bf16.msra.mxu0 0
        %4444 = vmatprep.subr.bf16.mxu0 0
        %4445 = vmatpush1.bf16.msra.mxu0 0
        %4446 = vmatprep.subr.bf16.mxu0 0
        %4447 = vmatpush1.bf16.msra.mxu0 0
        %4448 = vmatprep.subr.bf16.mxu0 0
        %4449 = vmatpush1.bf16.msra.mxu0 0
        %4450 = vmatprep.subr.bf16.mxu0 0
        %4451 = vmatpush1.bf16.msra.mxu0 0
        %4452 = vmatprep.subr.bf16.mxu0 0
        %4453 = vmatpush1.bf16.msra.mxu0 0
        %4454 = vmatprep.subr.bf16.mxu0 0
        %4455 = vmatpush1.bf16.msra.mxu0 0
        %4456 = vmatprep.subr.bf16.mxu0 0
        %4457 = vmatpush1.bf16.msra.mxu0 0
        %4458 = vmatprep.subr.bf16.mxu0 0
        %4459 = vmatpush1.bf16.msra.mxu0 0
        %4460 = vmatprep.subr.bf16.mxu0 0
        %4461 = vmatpush1.bf16.msra.mxu0 0
        %4462 = vmatprep.mubr.bf16.mxu0 0
        %4463 = vmatmul.mubr.bf16.gmra.mrb[0].mxu0 %v4419
        %v4464 = vpop.f32.mrb[0].mxu0
        %v4465 = vadd.f32 0.0, %v4464
        %v4466 = vpop.f32.mrb[0].mxu0
        %v4467 = vpop.f32.mrb[0].mxu0
        %v4468 = vadd.f32 0.0, %v4467
        %v4469 = vpop.f32.mrb[0].mxu0
        %4470 = vmatprep.mubr.bf16.mxu0 0
        %4471 = vmatmul.mubr.bf16.gmra.mrb[0].mxu0 %v4422
        %v4472 = vpop.f32.mrb[0].mxu0
        %v4473 = vadd.f32 0.0, %v4472
        %v4474 = vpop.f32.mrb[0].mxu0
        %v4475 = vpop.f32.mrb[0].mxu0
        %v4476 = vadd.f32 0.0, %v4475
        %v4477 = vpop.f32.mrb[0].mxu0
        %4478 = vmatprep.mubr.bf16.mxu0 0
        %4479 = vmatmul.mubr.bf16.gmra.mrb[0].mxu0 %v4425
        %v4480 = vpop.f32.mrb[0].mxu0
        %v4481 = vadd.f32 0.0, %v4480
        %v4482 = vpop.f32.mrb[0].mxu0
        %v4483 = vpop.f32.mrb[0].mxu0
        %v4484 = vadd.f32 0.0, %v4483
        %v4485 = vpop.f32.mrb[0].mxu0
        %4486 = vmatprep.mubr.bf16.mxu0 0
        %4487 = vmatmul.mubr.bf16.gmra.mrb[0].mxu0 %v4428
        %v4488 = vpop.f32.mrb[0].mxu0
        %v4489 = vadd.f32 0.0, %v4488
        %v4490 = vpop.f32.mrb[0].mxu0
        %v4491 = vpop.f32.mrb[0].mxu0
        %v4492 = vadd.f32 0.0, %v4491
        %v4493 = vpop.f32.mrb[0].mxu0
        %4494 = vdwg.mxu0
        %v4495 = vpack.c.bf16 %v4468, %v4465
        %v4496 = vpack.c.bf16 %v4476, %v4473
        %v4497 = vpack.c.bf16 %v4484, %v4481
        %v4498 = vpack.c.bf16 %v4492, %v4489
        %s4499 = scalar_lea.vmem %s37, 16
        %v4500 = vld [vmem:[%s4499] sm:$0xf]
        %v4501 = vld [vmem:[%s4499 + $0x4] sm:$0xf]
        %v4502 = vld [vmem:[%s4499 + $0x8] sm:$0xf]
        %v4503 = vld [vmem:[%s4499 + $0xc] sm:$0xf]
        %v4508 = vunpack.c.l.b16 %v4500
        %v4509 = vunpack.c.l.b16 %v4501
        %v4510 = vunpack.c.l.b16 %v4502
        %v4511 = vunpack.c.l.b16 %v4503
        %v4512 = vpack.c.b16 %v4509, %v4508
        %v4513 = vpack.c.b16 %v4511, %v4510
        %4516 = vmatprep.subr.bf16.mxu0 0
        %4517 = vmatpush1.bf16.msra.mxu0 %v4512
        %4518 = vmatprep.subr.bf16.mxu0 0
        %4519 = vmatpush1.bf16.msra.mxu0 %v4513
        %4520 = vmatprep.subr.bf16.mxu0 0
        %4521 = vmatpush1.bf16.msra.mxu0 0
        %4522 = vmatprep.subr.bf16.mxu0 0
        %4523 = vmatpush1.bf16.msra.mxu0 0
        %4524 = vmatprep.subr.bf16.mxu0 0
        %4525 = vmatpush1.bf16.msra.mxu0 0
        %4526 = vmatprep.subr.bf16.mxu0 0
        %4527 = vmatpush1.bf16.msra.mxu0 0
        %4528 = vmatprep.subr.bf16.mxu0 0
        %4529 = vmatpush1.bf16.msra.mxu0 0
        %4530 = vmatprep.subr.bf16.mxu0 0
        %4531 = vmatpush1.bf16.msra.mxu0 0
        %4532 = vmatprep.subr.bf16.mxu0 0
        %4533 = vmatpush1.bf16.msra.mxu0 0
        %4534 = vmatprep.subr.bf16.mxu0 0
        %4535 = vmatpush1.bf16.msra.mxu0 0
        %4536 = vmatprep.subr.bf16.mxu0 0
        %4537 = vmatpush1.bf16.msra.mxu0 0
        %4538 = vmatprep.subr.bf16.mxu0 0
        %4539 = vmatpush1.bf16.msra.mxu0 0
        %4540 = vmatprep.subr.bf16.mxu0 0
        %4541 = vmatpush1.bf16.msra.mxu0 0
        %4542 = vmatprep.subr.bf16.mxu0 0
        %4543 = vmatpush1.bf16.msra.mxu0 0
        %4544 = vmatprep.subr.bf16.mxu0 0
        %4545 = vmatpush1.bf16.msra.mxu0 0
        %4546 = vmatprep.subr.bf16.mxu0 0
        %4547 = vmatpush1.bf16.msra.mxu0 0
        %4548 = vmatprep.mubr.bf16.mxu0 0
        %4549 = vmatmul.mubr.bf16.gmra.mrb[0].mxu0 %v4419
        %v4550 = vpop.f32.mrb[0].mxu0
        %v4551 = vadd.f32 0.0, %v4550
        %v4552 = vpop.f32.mrb[0].mxu0
        %v4553 = vpop.f32.mrb[0].mxu0
        %v4554 = vadd.f32 0.0, %v4553
        %v4555 = vpop.f32.mrb[0].mxu0
        %4556 = vmatprep.mubr.bf16.mxu0 0
        %4557 = vmatmul.mubr.bf16.gmra.mrb[0].mxu0 %v4422
        %v4558 = vpop.f32.mrb[0].mxu0
        %v4559 = vadd.f32 0.0, %v4558
        %v4560 = vpop.f32.mrb[0].mxu0
        %v4561 = vpop.f32.mrb[0].mxu0
        %v4562 = vadd.f32 0.0, %v4561
        %v4563 = vpop.f32.mrb[0].mxu0
        %4564 = vmatprep.mubr.bf16.mxu0 0
        %4565 = vmatmul.mubr.bf16.gmra.mrb[0].mxu0 %v4425
        %v4566 = vpop.f32.mrb[0].mxu0
        %v4567 = vadd.f32 0.0, %v4566
        %v4568 = vpop.f32.mrb[0].mxu0
        %v4569 = vpop.f32.mrb[0].mxu0
        %v4570 = vadd.f32 0.0, %v4569
        %v4571 = vpop.f32.mrb[0].mxu0
        %4572 = vmatprep.mubr.bf16.mxu0 0
        %4573 = vmatmul.mubr.bf16.gmra.mrb[0].mxu0 %v4428
        %v4574 = vpop.f32.mrb[0].mxu0
        %v4575 = vadd.f32 0.0, %v4574
        %v4576 = vpop.f32.mrb[0].mxu0
        %v4577 = vpop.f32.mrb[0].mxu0
        %v4578 = vadd.f32 0.0, %v4577
        %v4579 = vpop.f32.mrb[0].mxu0
        %4580 = vdwg.mxu0
        %v4581 = vpack.c.bf16 %v4554, %v4551
        %v4582 = vpack.c.bf16 %v4562, %v4559
        %v4583 = vpack.c.bf16 %v4570, %v4567
        %v4584 = vpack.c.bf16 %v4578, %v4575
        %4585 = vmatprep.subr.bf16.mxu0 0
        %4586 = vmatpush1.bf16.msra.mxu0 %v4581
        %4587 = vmatprep.subr.bf16.mxu0 0
        %4588 = vmatpush1.bf16.msra.mxu0 %v4582
        %4589 = vmatprep.subr.bf16.mxu0 0
        %4590 = vmatpush1.bf16.msra.mxu0 %v4583
        %4591 = vmatprep.subr.bf16.mxu0 0
        %4592 = vmatpush1.bf16.msra.mxu0 %v4584
        %4593 = vmatprep.subr.bf16.mxu0 0
        %4594 = vmatpush1.bf16.msra.mxu0 0
        %4595 = vmatprep.subr.bf16.mxu0 0
        %4596 = vmatpush1.bf16.msra.mxu0 0
        %4597 = vmatprep.subr.bf16.mxu0 0
        %4598 = vmatpush1.bf16.msra.mxu0 0
        %4599 = vmatprep.subr.bf16.mxu0 0
        %4600 = vmatpush1.bf16.msra.mxu0 0
        %4601 = vmatprep.subr.bf16.mxu0 0
        %4602 = vmatpush1.bf16.msra.mxu0 0
        %4603 = vmatprep.subr.bf16.mxu0 0
        %4604 = vmatpush1.bf16.msra.mxu0 0
        %4605 = vmatprep.subr.bf16.mxu0 0
        %4606 = vmatpush1.bf16.msra.mxu0 0
        %4607 = vmatprep.subr.bf16.mxu0 0
        %4608 = vmatpush1.bf16.msra.mxu0 0
        %4609 = vmatprep.subr.bf16.mxu0 0
        %4610 = vmatpush1.bf16.msra.mxu0 0
        %4611 = vmatprep.subr.bf16.mxu0 0
        %4612 = vmatpush1.bf16.msra.mxu0 0
        %4613 = vmatprep.subr.bf16.mxu0 0
        %4614 = vmatpush1.bf16.msra.mxu0 0
        %4615 = vmatprep.subr.bf16.mxu0 0
        %4616 = vmatpush1.bf16.msra.mxu0 0
        %4617 = vmatprep.mubr.bf16.mxu0 0
        %4618 = vmatmul.mubr.bf16.gmra.mrb[0].mxu0 %v2543
        %v4619 = vpop.f32.mrb[0].mxu0
        %v4620 = vadd.f32 0.0, %v4619
        %v4621 = vpop.f32.mrb[0].mxu0
        %v4622 = vpop.f32.mrb[0].mxu0
        %v4623 = vadd.f32 0.0, %v4622
        %v4624 = vpop.f32.mrb[0].mxu0
        %4625 = vmatprep.mubr.bf16.mxu0 0
        %4626 = vmatmul.mubr.bf16.gmra.mrb[0].mxu0 %v2546
        %v4627 = vpop.f32.mrb[0].mxu0
        %v4628 = vadd.f32 0.0, %v4627
        %v4629 = vpop.f32.mrb[0].mxu0
        %v4630 = vpop.f32.mrb[0].mxu0
        %v4631 = vadd.f32 0.0, %v4630
        %v4632 = vpop.f32.mrb[0].mxu0
        %4633 = vmatprep.mubr.bf16.mxu0 0
        %4634 = vmatmul.mubr.bf16.gmra.mrb[0].mxu0 %v2549
        %v4635 = vpop.f32.mrb[0].mxu0
        %v4636 = vadd.f32 0.0, %v4635
        %v4637 = vpop.f32.mrb[0].mxu0
        %v4638 = vpop.f32.mrb[0].mxu0
        %v4639 = vadd.f32 0.0, %v4638
        %v4640 = vpop.f32.mrb[0].mxu0
        %4641 = vmatprep.mubr.bf16.mxu0 0
        %4642 = vmatmul.mubr.bf16.gmra.mrb[0].mxu0 %v2552
        %v4643 = vpop.f32.mrb[0].mxu0
        %v4644 = vadd.f32 0.0, %v4643
        %v4645 = vpop.f32.mrb[0].mxu0
        %v4646 = vpop.f32.mrb[0].mxu0
        %v4647 = vadd.f32 0.0, %v4646
        %v4648 = vpop.f32.mrb[0].mxu0
        %4649 = vdwg.mxu0
        %4650 = vmatprep.subr.bf16.mxu0 0
        %4651 = vmatpush1.bf16.msra.mxu0 %v4495
        %4652 = vmatprep.subr.bf16.mxu0 0
        %4653 = vmatpush1.bf16.msra.mxu0 %v4496
        %4654 = vmatprep.subr.bf16.mxu0 0
        %4655 = vmatpush1.bf16.msra.mxu0 %v4497
        %4656 = vmatprep.subr.bf16.mxu0 0
        %4657 = vmatpush1.bf16.msra.mxu0 %v4498
        %4658 = vmatprep.subr.bf16.mxu0 0
        %4659 = vmatpush1.bf16.msra.mxu0 0
        %4660 = vmatprep.subr.bf16.mxu0 0
        %4661 = vmatpush1.bf16.msra.mxu0 0
        %4662 = vmatprep.subr.bf16.mxu0 0
        %4663 = vmatpush1.bf16.msra.mxu0 0
        %4664 = vmatprep.subr.bf16.mxu0 0
        %4665 = vmatpush1.bf16.msra.mxu0 0
        %4666 = vmatprep.subr.bf16.mxu0 0
        %4667 = vmatpush1.bf16.msra.mxu0 0
        %4668 = vmatprep.subr.bf16.mxu0 0
        %4669 = vmatpush1.bf16.msra.mxu0 0
        %4670 = vmatprep.subr.bf16.mxu0 0
        %4671 = vmatpush1.bf16.msra.mxu0 0
        %4672 = vmatprep.subr.bf16.mxu0 0
        %4673 = vmatpush1.bf16.msra.mxu0 0
        %4674 = vmatprep.subr.bf16.mxu0 0
        %4675 = vmatpush1.bf16.msra.mxu0 0
        %4676 = vmatprep.subr.bf16.mxu0 0
        %4677 = vmatpush1.bf16.msra.mxu0 0
        %4678 = vmatprep.subr.bf16.mxu0 0
        %4679 = vmatpush1.bf16.msra.mxu0 0
        %4680 = vmatprep.subr.bf16.mxu0 0
        %4681 = vmatpush1.bf16.msra.mxu0 0
        %4682 = vmatprep.mubr.bf16.mxu0 0
        %4683 = vmatmul.mubr.bf16.gmra.mrb[0].mxu0 %v2640
        %v4684 = vpop.f32.mrb[0].mxu0
        %v4685 = vadd.f32 %v4620, %v4684
        %v4686 = vpop.f32.mrb[0].mxu0
        %v4687 = vpop.f32.mrb[0].mxu0
        %v4688 = vadd.f32 %v4623, %v4687
        %v4689 = vpop.f32.mrb[0].mxu0
        %4690 = vmatprep.mubr.bf16.mxu0 0
        %4691 = vmatmul.mubr.bf16.gmra.mrb[0].mxu0 %v2643
        %v4692 = vpop.f32.mrb[0].mxu0
        %v4693 = vadd.f32 %v4628, %v4692
        %v4694 = vpop.f32.mrb[0].mxu0
        %v4695 = vpop.f32.mrb[0].mxu0
        %v4696 = vadd.f32 %v4631, %v4695
        %v4697 = vpop.f32.mrb[0].mxu0
        %4698 = vmatprep.mubr.bf16.mxu0 0
        %4699 = vmatmul.mubr.bf16.gmra.mrb[0].mxu0 %v2646
        %v4700 = vpop.f32.mrb[0].mxu0
        %v4701 = vadd.f32 %v4636, %v4700
        %v4702 = vpop.f32.mrb[0].mxu0
        %v4703 = vpop.f32.mrb[0].mxu0
        %v4704 = vadd.f32 %v4639, %v4703
        %v4705 = vpop.f32.mrb[0].mxu0
        %4706 = vmatprep.mubr.bf16.mxu0 0
        %4707 = vmatmul.mubr.bf16.gmra.mrb[0].mxu0 %v2649
        %v4708 = vpop.f32.mrb[0].mxu0
        %v4709 = vadd.f32 %v4644, %v4708
        %v4710 = vpop.f32.mrb[0].mxu0
        %v4711 = vpop.f32.mrb[0].mxu0
        %v4712 = vadd.f32 %v4647, %v4711
        %v4713 = vpop.f32.mrb[0].mxu0
        %4714 = vdwg.mxu0
        %s4715 = scalar_lea.vmem %s37, 32
        %v4716 = vld [vmem:[%s4715] sm:$0xf]
        %v4717 = vld [vmem:[%s4715 + $0x4] sm:$0xf]
        %v4718 = vld [vmem:[%s4715 + $0x8] sm:$0xf]
        %v4719 = vld [vmem:[%s4715 + $0xc] sm:$0xf]
        %v4724 = vunpack.c.l.b16 %v4716
        %v4725 = vunpack.c.l.b16 %v4717
        %v4726 = vunpack.c.l.b16 %v4718
        %v4727 = vunpack.c.l.b16 %v4719
        %v4728 = vpack.c.b16 %v4725, %v4724
        %v4729 = vpack.c.b16 %v4727, %v4726
        %4732 = vmatprep.subr.bf16.mxu0 0
        %4733 = vmatpush1.bf16.msra.mxu0 %v4728
        %4734 = vmatprep.subr.bf16.mxu0 0
        %4735 = vmatpush1.bf16.msra.mxu0 %v4729
        %4736 = vmatprep.subr.bf16.mxu0 0
        %4737 = vmatpush1.bf16.msra.mxu0 0
        %4738 = vmatprep.subr.bf16.mxu0 0
        %4739 = vmatpush1.bf16.msra.mxu0 0
        %4740 = vmatprep.subr.bf16.mxu0 0
        %4741 = vmatpush1.bf16.msra.mxu0 0
        %4742 = vmatprep.subr.bf16.mxu0 0
        %4743 = vmatpush1.bf16.msra.mxu0 0
        %4744 = vmatprep.subr.bf16.mxu0 0
        %4745 = vmatpush1.bf16.msra.mxu0 0
        %4746 = vmatprep.subr.bf16.mxu0 0
        %4747 = vmatpush1.bf16.msra.mxu0 0
        %4748 = vmatprep.subr.bf16.mxu0 0
        %4749 = vmatpush1.bf16.msra.mxu0 0
        %4750 = vmatprep.subr.bf16.mxu0 0
        %4751 = vmatpush1.bf16.msra.mxu0 0
        %4752 = vmatprep.subr.bf16.mxu0 0
        %4753 = vmatpush1.bf16.msra.mxu0 0
        %4754 = vmatprep.subr.bf16.mxu0 0
        %4755 = vmatpush1.bf16.msra.mxu0 0
        %4756 = vmatprep.subr.bf16.mxu0 0
        %4757 = vmatpush1.bf16.msra.mxu0 0
        %4758 = vmatprep.subr.bf16.mxu0 0
        %4759 = vmatpush1.bf16.msra.mxu0 0
        %4760 = vmatprep.subr.bf16.mxu0 0
        %4761 = vmatpush1.bf16.msra.mxu0 0
        %4762 = vmatprep.subr.bf16.mxu0 0
        %4763 = vmatpush1.bf16.msra.mxu0 0
        %4764 = vmatprep.mubr.bf16.mxu0 0
        %4765 = vmatmul.mubr.bf16.gmra.mrb[0].mxu0 %v4419
        %v4766 = vpop.f32.mrb[0].mxu0
        %v4767 = vadd.f32 0.0, %v4766
        %v4768 = vpop.f32.mrb[0].mxu0
        %v4769 = vpop.f32.mrb[0].mxu0
        %v4770 = vadd.f32 0.0, %v4769
        %v4771 = vpop.f32.mrb[0].mxu0
        %4772 = vmatprep.mubr.bf16.mxu0 0
        %4773 = vmatmul.mubr.bf16.gmra.mrb[0].mxu0 %v4422
        %v4774 = vpop.f32.mrb[0].mxu0
        %v4775 = vadd.f32 0.0, %v4774
        %v4776 = vpop.f32.mrb[0].mxu0
        %v4777 = vpop.f32.mrb[0].mxu0
        %v4778 = vadd.f32 0.0, %v4777
        %v4779 = vpop.f32.mrb[0].mxu0
        %4780 = vmatprep.mubr.bf16.mxu0 0
        %4781 = vmatmul.mubr.bf16.gmra.mrb[0].mxu0 %v4425
        %v4782 = vpop.f32.mrb[0].mxu0
        %v4783 = vadd.f32 0.0, %v4782
        %v4784 = vpop.f32.mrb[0].mxu0
        %v4785 = vpop.f32.mrb[0].mxu0
        %v4786 = vadd.f32 0.0, %v4785
        %v4787 = vpop.f32.mrb[0].mxu0
        %4788 = vmatprep.mubr.bf16.mxu0 0
        %4789 = vmatmul.mubr.bf16.gmra.mrb[0].mxu0 %v4428
        %v4790 = vpop.f32.mrb[0].mxu0
        %v4791 = vadd.f32 0.0, %v4790
        %v4792 = vpop.f32.mrb[0].mxu0
        %v4793 = vpop.f32.mrb[0].mxu0
        %v4794 = vadd.f32 0.0, %v4793
        %v4795 = vpop.f32.mrb[0].mxu0
        %4796 = vdwg.mxu0
        %v4797 = vpack.c.bf16 %v4770, %v4767
        %v4798 = vpack.c.bf16 %v4778, %v4775
        %v4799 = vpack.c.bf16 %v4786, %v4783
        %v4800 = vpack.c.bf16 %v4794, %v4791
        %4801 = vmatprep.subr.bf16.mxu0 0
        %4802 = vmatpush1.bf16.msra.mxu0 %v4797
        %4803 = vmatprep.subr.bf16.mxu0 0
        %4804 = vmatpush1.bf16.msra.mxu0 %v4798
        %4805 = vmatprep.subr.bf16.mxu0 0
        %4806 = vmatpush1.bf16.msra.mxu0 %v4799
        %4807 = vmatprep.subr.bf16.mxu0 0
        %4808 = vmatpush1.bf16.msra.mxu0 %v4800
        %4809 = vmatprep.subr.bf16.mxu0 0
        %4810 = vmatpush1.bf16.msra.mxu0 0
        %4811 = vmatprep.subr.bf16.mxu0 0
        %4812 = vmatpush1.bf16.msra.mxu0 0
        %4813 = vmatprep.subr.bf16.mxu0 0
        %4814 = vmatpush1.bf16.msra.mxu0 0
        %4815 = vmatprep.subr.bf16.mxu0 0
        %4816 = vmatpush1.bf16.msra.mxu0 0
        %4817 = vmatprep.subr.bf16.mxu0 0
        %4818 = vmatpush1.bf16.msra.mxu0 0
        %4819 = vmatprep.subr.bf16.mxu0 0
        %4820 = vmatpush1.bf16.msra.mxu0 0
        %4821 = vmatprep.subr.bf16.mxu0 0
        %4822 = vmatpush1.bf16.msra.mxu0 0
        %4823 = vmatprep.subr.bf16.mxu0 0
        %4824 = vmatpush1.bf16.msra.mxu0 0
        %4825 = vmatprep.subr.bf16.mxu0 0
        %4826 = vmatpush1.bf16.msra.mxu0 0
        %4827 = vmatprep.subr.bf16.mxu0 0
        %4828 = vmatpush1.bf16.msra.mxu0 0
        %4829 = vmatprep.subr.bf16.mxu0 0
        %4830 = vmatpush1.bf16.msra.mxu0 0
        %4831 = vmatprep.subr.bf16.mxu0 0
        %4832 = vmatpush1.bf16.msra.mxu0 0
        %4833 = vmatprep.mubr.bf16.mxu0 0
        %4834 = vmatmul.mubr.bf16.gmra.mrb[0].mxu0 %v2832
        %v4835 = vpop.f32.mrb[0].mxu0
        %v4836 = vadd.f32 0.0, %v4835
        %v4837 = vpop.f32.mrb[0].mxu0
        %v4838 = vpop.f32.mrb[0].mxu0
        %v4839 = vadd.f32 0.0, %v4838
        %v4840 = vpop.f32.mrb[0].mxu0
        %4841 = vmatprep.mubr.bf16.mxu0 0
        %4842 = vmatmul.mubr.bf16.gmra.mrb[0].mxu0 %v2835
        %v4843 = vpop.f32.mrb[0].mxu0
        %v4844 = vadd.f32 0.0, %v4843
        %v4845 = vpop.f32.mrb[0].mxu0
        %v4846 = vpop.f32.mrb[0].mxu0
        %v4847 = vadd.f32 0.0, %v4846
        %v4848 = vpop.f32.mrb[0].mxu0
        %4849 = vmatprep.mubr.bf16.mxu0 0
        %4850 = vmatmul.mubr.bf16.gmra.mrb[0].mxu0 %v2838
        %v4851 = vpop.f32.mrb[0].mxu0
        %v4852 = vadd.f32 0.0, %v4851
        %v4853 = vpop.f32.mrb[0].mxu0
        %v4854 = vpop.f32.mrb[0].mxu0
        %v4855 = vadd.f32 0.0, %v4854
        %v4856 = vpop.f32.mrb[0].mxu0
        %4857 = vmatprep.mubr.bf16.mxu0 0
        %4858 = vmatmul.mubr.bf16.gmra.mrb[0].mxu0 %v2841
        %v4859 = vpop.f32.mrb[0].mxu0
        %v4860 = vadd.f32 0.0, %v4859
        %v4861 = vpop.f32.mrb[0].mxu0
        %v4862 = vpop.f32.mrb[0].mxu0
        %v4863 = vadd.f32 0.0, %v4862
        %v4864 = vpop.f32.mrb[0].mxu0
        %4865 = vdwg.mxu0
        %v4866 = vadd.f32 %v4685, %v4836
        %v4867 = vadd.f32 %v4688, %v4839
        %v4868 = vadd.f32 %v4693, %v4844
        %v4869 = vadd.f32 %v4696, %v4847
        %v4870 = vadd.f32 %v4701, %v4852
        %v4871 = vadd.f32 %v4704, %v4855
        %v4872 = vadd.f32 %v4709, %v4860
        %v4873 = vadd.f32 %v4712, %v4863
        %s4874 = scalar_lea.vmem %s37, 48
        %v4875 = vld [vmem:[%s4874] sm:$0xf]
        %v4876 = vld [vmem:[%s4874 + $0x4] sm:$0xf]
        %v4877 = vld [vmem:[%s4874 + $0x8] sm:$0xf]
        %v4878 = vld [vmem:[%s4874 + $0xc] sm:$0xf]
        %v4883 = vunpack.c.l.b16 %v4875
        %v4884 = vunpack.c.l.b16 %v4876
        %v4885 = vunpack.c.l.b16 %v4877
        %v4886 = vunpack.c.l.b16 %v4878
        %v4887 = vpack.c.b16 %v4884, %v4883
        %v4888 = vpack.c.b16 %v4886, %v4885
        %4891 = vmatprep.subr.bf16.mxu0 0
        %4892 = vmatpush1.bf16.msra.mxu0 %v4887
        %4893 = vmatprep.subr.bf16.mxu0 0
        %4894 = vmatpush1.bf16.msra.mxu0 %v4888
        %4895 = vmatprep.subr.bf16.mxu0 0
        %4896 = vmatpush1.bf16.msra.mxu0 0
        %4897 = vmatprep.subr.bf16.mxu0 0
        %4898 = vmatpush1.bf16.msra.mxu0 0
        %4899 = vmatprep.subr.bf16.mxu0 0
        %4900 = vmatpush1.bf16.msra.mxu0 0
        %4901 = vmatprep.subr.bf16.mxu0 0
        %4902 = vmatpush1.bf16.msra.mxu0 0
        %4903 = vmatprep.subr.bf16.mxu0 0
        %4904 = vmatpush1.bf16.msra.mxu0 0
        %4905 = vmatprep.subr.bf16.mxu0 0
        %4906 = vmatpush1.bf16.msra.mxu0 0
        %4907 = vmatprep.subr.bf16.mxu0 0
        %4908 = vmatpush1.bf16.msra.mxu0 0
        %4909 = vmatprep.subr.bf16.mxu0 0
        %4910 = vmatpush1.bf16.msra.mxu0 0
        %4911 = vmatprep.subr.bf16.mxu0 0
        %4912 = vmatpush1.bf16.msra.mxu0 0
        %4913 = vmatprep.subr.bf16.mxu0 0
        %4914 = vmatpush1.bf16.msra.mxu0 0
        %4915 = vmatprep.subr.bf16.mxu0 0
        %4916 = vmatpush1.bf16.msra.mxu0 0
        %4917 = vmatprep.subr.bf16.mxu0 0
        %4918 = vmatpush1.bf16.msra.mxu0 0
        %4919 = vmatprep.subr.bf16.mxu0 0
        %4920 = vmatpush1.bf16.msra.mxu0 0
        %4921 = vmatprep.subr.bf16.mxu0 0
        %4922 = vmatpush1.bf16.msra.mxu0 0
        %4923 = vmatprep.mubr.bf16.mxu0 0
        %4924 = vmatmul.mubr.bf16.gmra.mrb[0].mxu0 %v4419
        %v4925 = vpop.f32.mrb[0].mxu0
        %v4926 = vadd.f32 0.0, %v4925
        %v4927 = vpop.f32.mrb[0].mxu0
        %v4928 = vpop.f32.mrb[0].mxu0
        %v4929 = vadd.f32 0.0, %v4928
        %v4930 = vpop.f32.mrb[0].mxu0
        %4931 = vmatprep.mubr.bf16.mxu0 0
        %4932 = vmatmul.mubr.bf16.gmra.mrb[0].mxu0 %v4422
        %v4933 = vpop.f32.mrb[0].mxu0
        %v4934 = vadd.f32 0.0, %v4933
        %v4935 = vpop.f32.mrb[0].mxu0
        %v4936 = vpop.f32.mrb[0].mxu0
        %v4937 = vadd.f32 0.0, %v4936
        %v4938 = vpop.f32.mrb[0].mxu0
        %4939 = vmatprep.mubr.bf16.mxu0 0
        %4940 = vmatmul.mubr.bf16.gmra.mrb[0].mxu0 %v4425
        %v4941 = vpop.f32.mrb[0].mxu0
        %v4942 = vadd.f32 0.0, %v4941
        %v4943 = vpop.f32.mrb[0].mxu0
        %v4944 = vpop.f32.mrb[0].mxu0
        %v4945 = vadd.f32 0.0, %v4944
        %v4946 = vpop.f32.mrb[0].mxu0
        %4947 = vmatprep.mubr.bf16.mxu0 0
        %4948 = vmatmul.mubr.bf16.gmra.mrb[0].mxu0 %v4428
        %v4949 = vpop.f32.mrb[0].mxu0
        %v4950 = vadd.f32 0.0, %v4949
        %v4951 = vpop.f32.mrb[0].mxu0
        %v4952 = vpop.f32.mrb[0].mxu0
        %v4953 = vadd.f32 0.0, %v4952
        %v4954 = vpop.f32.mrb[0].mxu0
        %4955 = vdwg.mxu0
        %v4956 = vpack.c.bf16 %v4929, %v4926
        %v4957 = vpack.c.bf16 %v4937, %v4934
        %v4958 = vpack.c.bf16 %v4945, %v4942
        %v4959 = vpack.c.bf16 %v4953, %v4950
        %4960 = vmatprep.subr.bf16.mxu0 0
        %4961 = vmatpush1.bf16.msra.mxu0 %v4956
        %4962 = vmatprep.subr.bf16.mxu0 0
        %4963 = vmatpush1.bf16.msra.mxu0 %v4957
        %4964 = vmatprep.subr.bf16.mxu0 0
        %4965 = vmatpush1.bf16.msra.mxu0 %v4958
        %4966 = vmatprep.subr.bf16.mxu0 0
        %4967 = vmatpush1.bf16.msra.mxu0 %v4959
        %4968 = vmatprep.subr.bf16.mxu0 0
        %4969 = vmatpush1.bf16.msra.mxu0 0
        %4970 = vmatprep.subr.bf16.mxu0 0
        %4971 = vmatpush1.bf16.msra.mxu0 0
        %4972 = vmatprep.subr.bf16.mxu0 0
        %4973 = vmatpush1.bf16.msra.mxu0 0
        %4974 = vmatprep.subr.bf16.mxu0 0
        %4975 = vmatpush1.bf16.msra.mxu0 0
        %4976 = vmatprep.subr.bf16.mxu0 0
        %4977 = vmatpush1.bf16.msra.mxu0 0
        %4978 = vmatprep.subr.bf16.mxu0 0
        %4979 = vmatpush1.bf16.msra.mxu0 0
        %4980 = vmatprep.subr.bf16.mxu0 0
        %4981 = vmatpush1.bf16.msra.mxu0 0
        %4982 = vmatprep.subr.bf16.mxu0 0
        %4983 = vmatpush1.bf16.msra.mxu0 0
        %4984 = vmatprep.subr.bf16.mxu0 0
        %4985 = vmatpush1.bf16.msra.mxu0 0
        %4986 = vmatprep.subr.bf16.mxu0 0
        %4987 = vmatpush1.bf16.msra.mxu0 0
        %4988 = vmatprep.subr.bf16.mxu0 0
        %4989 = vmatpush1.bf16.msra.mxu0 0
        %4990 = vmatprep.subr.bf16.mxu0 0
        %4991 = vmatpush1.bf16.msra.mxu0 0
        %4992 = vmatprep.mubr.bf16.mxu0 0
        %4993 = vmatmul.mubr.bf16.gmra.mrb[0].mxu0 %v3032
        %v4994 = vpop.f32.mrb[0].mxu0
        %v4995 = vadd.f32 0.0, %v4994
        %v4996 = vpop.f32.mrb[0].mxu0
        %v4997 = vpop.f32.mrb[0].mxu0
        %v4998 = vadd.f32 0.0, %v4997
        %v4999 = vpop.f32.mrb[0].mxu0
        %5000 = vmatprep.mubr.bf16.mxu0 0
        %5001 = vmatmul.mubr.bf16.gmra.mrb[0].mxu0 %v3035
        %v5002 = vpop.f32.mrb[0].mxu0
        %v5003 = vadd.f32 0.0, %v5002
        %v5004 = vpop.f32.mrb[0].mxu0
        %v5005 = vpop.f32.mrb[0].mxu0
        %v5006 = vadd.f32 0.0, %v5005
        %v5007 = vpop.f32.mrb[0].mxu0
        %5008 = vmatprep.mubr.bf16.mxu0 0
        %5009 = vmatmul.mubr.bf16.gmra.mrb[0].mxu0 %v3038
        %v5010 = vpop.f32.mrb[0].mxu0
        %v5011 = vadd.f32 0.0, %v5010
        %v5012 = vpop.f32.mrb[0].mxu0
        %v5013 = vpop.f32.mrb[0].mxu0
        %v5014 = vadd.f32 0.0, %v5013
        %v5015 = vpop.f32.mrb[0].mxu0
        %5016 = vmatprep.mubr.bf16.mxu0 0
        %5017 = vmatmul.mubr.bf16.gmra.mrb[0].mxu0 %v3041
        %v5018 = vpop.f32.mrb[0].mxu0
        %v5019 = vadd.f32 0.0, %v5018
        %v5020 = vpop.f32.mrb[0].mxu0
        %v5021 = vpop.f32.mrb[0].mxu0
        %v5022 = vadd.f32 0.0, %v5021
        %v5023 = vpop.f32.mrb[0].mxu0
        %5024 = vdwg.mxu0
        %v5025 = vadd.f32 %v4866, %v4995
        %v5026 = vadd.f32 %v4867, %v4998
        %v5027 = vadd.f32 %v4868, %v5003
        %v5028 = vadd.f32 %v4869, %v5006
        %v5029 = vadd.f32 %v4870, %v5011
        %v5030 = vadd.f32 %v4871, %v5014
        %v5031 = vadd.f32 %v4872, %v5019
        %v5032 = vadd.f32 %v4873, %v5022
        %s5033 = scalar_lea.vmem %s37, 64
        %v5034 = vld [vmem:[%s5033] sm:$0xf]
        %v5035 = vld [vmem:[%s5033 + $0x4] sm:$0xf]
        %v5036 = vld [vmem:[%s5033 + $0x8] sm:$0xf]
        %v5037 = vld [vmem:[%s5033 + $0xc] sm:$0xf]
        %v5042 = vunpack.c.l.b16 %v5034
        %v5043 = vunpack.c.l.b16 %v5035
        %v5044 = vunpack.c.l.b16 %v5036
        %v5045 = vunpack.c.l.b16 %v5037
        %v5046 = vpack.c.b16 %v5043, %v5042
        %v5047 = vpack.c.b16 %v5045, %v5044
        %5050 = vmatprep.subr.bf16.mxu0 0
        %5051 = vmatpush1.bf16.msra.mxu0 %v5046
        %5052 = vmatprep.subr.bf16.mxu0 0
        %5053 = vmatpush1.bf16.msra.mxu0 %v5047
        %5054 = vmatprep.subr.bf16.mxu0 0
        %5055 = vmatpush1.bf16.msra.mxu0 0
        %5056 = vmatprep.subr.bf16.mxu0 0
        %5057 = vmatpush1.bf16.msra.mxu0 0
        %5058 = vmatprep.subr.bf16.mxu0 0
        %5059 = vmatpush1.bf16.msra.mxu0 0
        %5060 = vmatprep.subr.bf16.mxu0 0
        %5061 = vmatpush1.bf16.msra.mxu0 0
        %5062 = vmatprep.subr.bf16.mxu0 0
        %5063 = vmatpush1.bf16.msra.mxu0 0
        %5064 = vmatprep.subr.bf16.mxu0 0
        %5065 = vmatpush1.bf16.msra.mxu0 0
        %5066 = vmatprep.subr.bf16.mxu0 0
        %5067 = vmatpush1.bf16.msra.mxu0 0
        %5068 = vmatprep.subr.bf16.mxu0 0
        %5069 = vmatpush1.bf16.msra.mxu0 0
        %5070 = vmatprep.subr.bf16.mxu0 0
        %5071 = vmatpush1.bf16.msra.mxu0 0
        %5072 = vmatprep.subr.bf16.mxu0 0
        %5073 = vmatpush1.bf16.msra.mxu0 0
        %5074 = vmatprep.subr.bf16.mxu0 0
        %5075 = vmatpush1.bf16.msra.mxu0 0
        %5076 = vmatprep.subr.bf16.mxu0 0
        %5077 = vmatpush1.bf16.msra.mxu0 0
        %5078 = vmatprep.subr.bf16.mxu0 0
        %5079 = vmatpush1.bf16.msra.mxu0 0
        %5080 = vmatprep.subr.bf16.mxu0 0
        %5081 = vmatpush1.bf16.msra.mxu0 0
        %5082 = vmatprep.mubr.bf16.mxu0 0
        %5083 = vmatmul.mubr.bf16.gmra.mrb[0].mxu0 %v4419
        %v5084 = vpop.f32.mrb[0].mxu0
        %v5085 = vadd.f32 0.0, %v5084
        %v5086 = vpop.f32.mrb[0].mxu0
        %v5087 = vpop.f32.mrb[0].mxu0
        %v5088 = vadd.f32 0.0, %v5087
        %v5089 = vpop.f32.mrb[0].mxu0
        %5090 = vmatprep.mubr.bf16.mxu0 0
        %5091 = vmatmul.mubr.bf16.gmra.mrb[0].mxu0 %v4422
        %v5092 = vpop.f32.mrb[0].mxu0
        %v5093 = vadd.f32 0.0, %v5092
        %v5094 = vpop.f32.mrb[0].mxu0
        %v5095 = vpop.f32.mrb[0].mxu0
        %v5096 = vadd.f32 0.0, %v5095
        %v5097 = vpop.f32.mrb[0].mxu0
        %5098 = vmatprep.mubr.bf16.mxu0 0
        %5099 = vmatmul.mubr.bf16.gmra.mrb[0].mxu0 %v4425
        %v5100 = vpop.f32.mrb[0].mxu0
        %v5101 = vadd.f32 0.0, %v5100
        %v5102 = vpop.f32.mrb[0].mxu0
        %v5103 = vpop.f32.mrb[0].mxu0
        %v5104 = vadd.f32 0.0, %v5103
        %v5105 = vpop.f32.mrb[0].mxu0
        %5106 = vmatprep.mubr.bf16.mxu0 0
        %5107 = vmatmul.mubr.bf16.gmra.mrb[0].mxu0 %v4428
        %v5108 = vpop.f32.mrb[0].mxu0
        %v5109 = vadd.f32 0.0, %v5108
        %v5110 = vpop.f32.mrb[0].mxu0
        %v5111 = vpop.f32.mrb[0].mxu0
        %v5112 = vadd.f32 0.0, %v5111
        %v5113 = vpop.f32.mrb[0].mxu0
        %5114 = vdwg.mxu0
        %v5115 = vpack.c.bf16 %v5088, %v5085
        %v5116 = vpack.c.bf16 %v5096, %v5093
        %v5117 = vpack.c.bf16 %v5104, %v5101
        %v5118 = vpack.c.bf16 %v5112, %v5109
        %5119 = vmatprep.subr.bf16.mxu0 0
        %5120 = vmatpush1.bf16.msra.mxu0 %v5115
        %5121 = vmatprep.subr.bf16.mxu0 0
        %5122 = vmatpush1.bf16.msra.mxu0 %v5116
        %5123 = vmatprep.subr.bf16.mxu0 0
        %5124 = vmatpush1.bf16.msra.mxu0 %v5117
        %5125 = vmatprep.subr.bf16.mxu0 0
        %5126 = vmatpush1.bf16.msra.mxu0 %v5118
        %5127 = vmatprep.subr.bf16.mxu0 0
        %5128 = vmatpush1.bf16.msra.mxu0 0
        %5129 = vmatprep.subr.bf16.mxu0 0
        %5130 = vmatpush1.bf16.msra.mxu0 0
        %5131 = vmatprep.subr.bf16.mxu0 0
        %5132 = vmatpush1.bf16.msra.mxu0 0
        %5133 = vmatprep.subr.bf16.mxu0 0
        %5134 = vmatpush1.bf16.msra.mxu0 0
        %5135 = vmatprep.subr.bf16.mxu0 0
        %5136 = vmatpush1.bf16.msra.mxu0 0
        %5137 = vmatprep.subr.bf16.mxu0 0
        %5138 = vmatpush1.bf16.msra.mxu0 0
        %5139 = vmatprep.subr.bf16.mxu0 0
        %5140 = vmatpush1.bf16.msra.mxu0 0
        %5141 = vmatprep.subr.bf16.mxu0 0
        %5142 = vmatpush1.bf16.msra.mxu0 0
        %5143 = vmatprep.subr.bf16.mxu0 0
        %5144 = vmatpush1.bf16.msra.mxu0 0
        %5145 = vmatprep.subr.bf16.mxu0 0
        %5146 = vmatpush1.bf16.msra.mxu0 0
        %5147 = vmatprep.subr.bf16.mxu0 0
        %5148 = vmatpush1.bf16.msra.mxu0 0
        %5149 = vmatprep.subr.bf16.mxu0 0
        %5150 = vmatpush1.bf16.msra.mxu0 0
        %5151 = vmatprep.mubr.bf16.mxu0 0
        %5152 = vmatmul.mubr.bf16.gmra.mrb[0].mxu0 %v3232
        %v5153 = vpop.f32.mrb[0].mxu0
        %v5154 = vadd.f32 0.0, %v5153
        %v5155 = vpop.f32.mrb[0].mxu0
        %v5156 = vpop.f32.mrb[0].mxu0
        %v5157 = vadd.f32 0.0, %v5156
        %v5158 = vpop.f32.mrb[0].mxu0
        %5159 = vmatprep.mubr.bf16.mxu0 0
        %5160 = vmatmul.mubr.bf16.gmra.mrb[0].mxu0 %v3235
        %v5161 = vpop.f32.mrb[0].mxu0
        %v5162 = vadd.f32 0.0, %v5161
        %v5163 = vpop.f32.mrb[0].mxu0
        %v5164 = vpop.f32.mrb[0].mxu0
        %v5165 = vadd.f32 0.0, %v5164
        %v5166 = vpop.f32.mrb[0].mxu0
        %5167 = vmatprep.mubr.bf16.mxu0 0
        %5168 = vmatmul.mubr.bf16.gmra.mrb[0].mxu0 %v3238
        %v5169 = vpop.f32.mrb[0].mxu0
        %v5170 = vadd.f32 0.0, %v5169
        %v5171 = vpop.f32.mrb[0].mxu0
        %v5172 = vpop.f32.mrb[0].mxu0
        %v5173 = vadd.f32 0.0, %v5172
        %v5174 = vpop.f32.mrb[0].mxu0
        %5175 = vmatprep.mubr.bf16.mxu0 0
        %5176 = vmatmul.mubr.bf16.gmra.mrb[0].mxu0 %v3241
        %v5177 = vpop.f32.mrb[0].mxu0
        %v5178 = vadd.f32 0.0, %v5177
        %v5179 = vpop.f32.mrb[0].mxu0
        %v5180 = vpop.f32.mrb[0].mxu0
        %v5181 = vadd.f32 0.0, %v5180
        %v5182 = vpop.f32.mrb[0].mxu0
        %5183 = vdwg.mxu0
        %v5184 = vadd.f32 %v5025, %v5154
        %v5185 = vadd.f32 %v5026, %v5157
        %v5186 = vadd.f32 %v5027, %v5162
        %v5187 = vadd.f32 %v5028, %v5165
        %v5188 = vadd.f32 %v5029, %v5170
        %v5189 = vadd.f32 %v5030, %v5173
        %v5190 = vadd.f32 %v5031, %v5178
        %v5191 = vadd.f32 %v5032, %v5181
        %s5192 = scalar_lea.vmem %s37, 80
        %v5193 = vld [vmem:[%s5192] sm:$0xf]
        %v5194 = vld [vmem:[%s5192 + $0x4] sm:$0xf]
        %v5195 = vld [vmem:[%s5192 + $0x8] sm:$0xf]
        %v5196 = vld [vmem:[%s5192 + $0xc] sm:$0xf]
        %v5201 = vunpack.c.l.b16 %v5193
        %v5202 = vunpack.c.l.b16 %v5194
        %v5203 = vunpack.c.l.b16 %v5195
        %v5204 = vunpack.c.l.b16 %v5196
        %v5205 = vpack.c.b16 %v5202, %v5201
        %v5206 = vpack.c.b16 %v5204, %v5203
        %5209 = vmatprep.subr.bf16.mxu0 0
        %5210 = vmatpush1.bf16.msra.mxu0 %v5205
        %5211 = vmatprep.subr.bf16.mxu0 0
        %5212 = vmatpush1.bf16.msra.mxu0 %v5206
        %5213 = vmatprep.subr.bf16.mxu0 0
        %5214 = vmatpush1.bf16.msra.mxu0 0
        %5215 = vmatprep.subr.bf16.mxu0 0
        %5216 = vmatpush1.bf16.msra.mxu0 0
        %5217 = vmatprep.subr.bf16.mxu0 0
        %5218 = vmatpush1.bf16.msra.mxu0 0
        %5219 = vmatprep.subr.bf16.mxu0 0
        %5220 = vmatpush1.bf16.msra.mxu0 0
        %5221 = vmatprep.subr.bf16.mxu0 0
        %5222 = vmatpush1.bf16.msra.mxu0 0
        %5223 = vmatprep.subr.bf16.mxu0 0
        %5224 = vmatpush1.bf16.msra.mxu0 0
        %5225 = vmatprep.subr.bf16.mxu0 0
        %5226 = vmatpush1.bf16.msra.mxu0 0
        %5227 = vmatprep.subr.bf16.mxu0 0
        %5228 = vmatpush1.bf16.msra.mxu0 0
        %5229 = vmatprep.subr.bf16.mxu0 0
        %5230 = vmatpush1.bf16.msra.mxu0 0
        %5231 = vmatprep.subr.bf16.mxu0 0
        %5232 = vmatpush1.bf16.msra.mxu0 0
        %5233 = vmatprep.subr.bf16.mxu0 0
        %5234 = vmatpush1.bf16.msra.mxu0 0
        %5235 = vmatprep.subr.bf16.mxu0 0
        %5236 = vmatpush1.bf16.msra.mxu0 0
        %5237 = vmatprep.subr.bf16.mxu0 0
        %5238 = vmatpush1.bf16.msra.mxu0 0
        %5239 = vmatprep.subr.bf16.mxu0 0
        %5240 = vmatpush1.bf16.msra.mxu0 0
        %5241 = vmatprep.mubr.bf16.mxu0 0
        %5242 = vmatmul.mubr.bf16.gmra.mrb[0].mxu0 %v4419
        %v5243 = vpop.f32.mrb[0].mxu0
        %v5244 = vadd.f32 0.0, %v5243
        %v5245 = vpop.f32.mrb[0].mxu0
        %v5246 = vpop.f32.mrb[0].mxu0
        %v5247 = vadd.f32 0.0, %v5246
        %v5248 = vpop.f32.mrb[0].mxu0
        %5249 = vmatprep.mubr.bf16.mxu0 0
        %5250 = vmatmul.mubr.bf16.gmra.mrb[0].mxu0 %v4422
        %v5251 = vpop.f32.mrb[0].mxu0
        %v5252 = vadd.f32 0.0, %v5251
        %v5253 = vpop.f32.mrb[0].mxu0
        %v5254 = vpop.f32.mrb[0].mxu0
        %v5255 = vadd.f32 0.0, %v5254
        %v5256 = vpop.f32.mrb[0].mxu0
        %5257 = vmatprep.mubr.bf16.mxu0 0
        %5258 = vmatmul.mubr.bf16.gmra.mrb[0].mxu0 %v4425
        %v5259 = vpop.f32.mrb[0].mxu0
        %v5260 = vadd.f32 0.0, %v5259
        %v5261 = vpop.f32.mrb[0].mxu0
        %v5262 = vpop.f32.mrb[0].mxu0
        %v5263 = vadd.f32 0.0, %v5262
        %v5264 = vpop.f32.mrb[0].mxu0
        %5265 = vmatprep.mubr.bf16.mxu0 0
        %5266 = vmatmul.mubr.bf16.gmra.mrb[0].mxu0 %v4428
        %v5267 = vpop.f32.mrb[0].mxu0
        %v5268 = vadd.f32 0.0, %v5267
        %v5269 = vpop.f32.mrb[0].mxu0
        %v5270 = vpop.f32.mrb[0].mxu0
        %v5271 = vadd.f32 0.0, %v5270
        %v5272 = vpop.f32.mrb[0].mxu0
        %5273 = vdwg.mxu0
        %v5274 = vpack.c.bf16 %v5247, %v5244
        %v5275 = vpack.c.bf16 %v5255, %v5252
        %v5276 = vpack.c.bf16 %v5263, %v5260
        %v5277 = vpack.c.bf16 %v5271, %v5268
        %5278 = vmatprep.subr.bf16.mxu0 0
        %5279 = vmatpush1.bf16.msra.mxu0 %v5274
        %5280 = vmatprep.subr.bf16.mxu0 0
        %5281 = vmatpush1.bf16.msra.mxu0 %v5275
        %5282 = vmatprep.subr.bf16.mxu0 0
        %5283 = vmatpush1.bf16.msra.mxu0 %v5276
        %5284 = vmatprep.subr.bf16.mxu0 0
        %5285 = vmatpush1.bf16.msra.mxu0 %v5277
        %5286 = vmatprep.subr.bf16.mxu0 0
        %5287 = vmatpush1.bf16.msra.mxu0 0
        %5288 = vmatprep.subr.bf16.mxu0 0
        %5289 = vmatpush1.bf16.msra.mxu0 0
        %5290 = vmatprep.subr.bf16.mxu0 0
        %5291 = vmatpush1.bf16.msra.mxu0 0
        %5292 = vmatprep.subr.bf16.mxu0 0
        %5293 = vmatpush1.bf16.msra.mxu0 0
        %5294 = vmatprep.subr.bf16.mxu0 0
        %5295 = vmatpush1.bf16.msra.mxu0 0
        %5296 = vmatprep.subr.bf16.mxu0 0
        %5297 = vmatpush1.bf16.msra.mxu0 0
        %5298 = vmatprep.subr.bf16.mxu0 0
        %5299 = vmatpush1.bf16.msra.mxu0 0
        %5300 = vmatprep.subr.bf16.mxu0 0
        %5301 = vmatpush1.bf16.msra.mxu0 0
        %5302 = vmatprep.subr.bf16.mxu0 0
        %5303 = vmatpush1.bf16.msra.mxu0 0
        %5304 = vmatprep.subr.bf16.mxu0 0
        %5305 = vmatpush1.bf16.msra.mxu0 0
        %5306 = vmatprep.subr.bf16.mxu0 0
        %5307 = vmatpush1.bf16.msra.mxu0 0
        %5308 = vmatprep.subr.bf16.mxu0 0
        %5309 = vmatpush1.bf16.msra.mxu0 0
        %5310 = vmatprep.mubr.bf16.mxu0 0
        %5311 = vmatmul.mubr.bf16.gmra.mrb[0].mxu0 %v3432
        %v5312 = vpop.f32.mrb[0].mxu0
        %v5313 = vadd.f32 0.0, %v5312
        %v5314 = vpop.f32.mrb[0].mxu0
        %v5315 = vpop.f32.mrb[0].mxu0
        %v5316 = vadd.f32 0.0, %v5315
        %v5317 = vpop.f32.mrb[0].mxu0
        %5318 = vmatprep.mubr.bf16.mxu0 0
        %5319 = vmatmul.mubr.bf16.gmra.mrb[0].mxu0 %v3435
        %v5320 = vpop.f32.mrb[0].mxu0
        %v5321 = vadd.f32 0.0, %v5320
        %v5322 = vpop.f32.mrb[0].mxu0
        %v5323 = vpop.f32.mrb[0].mxu0
        %v5324 = vadd.f32 0.0, %v5323
        %v5325 = vpop.f32.mrb[0].mxu0
        %5326 = vmatprep.mubr.bf16.mxu0 0
        %5327 = vmatmul.mubr.bf16.gmra.mrb[0].mxu0 %v3438
        %v5328 = vpop.f32.mrb[0].mxu0
        %v5329 = vadd.f32 0.0, %v5328
        %v5330 = vpop.f32.mrb[0].mxu0
        %v5331 = vpop.f32.mrb[0].mxu0
        %v5332 = vadd.f32 0.0, %v5331
        %v5333 = vpop.f32.mrb[0].mxu0
        %5334 = vmatprep.mubr.bf16.mxu0 0
        %5335 = vmatmul.mubr.bf16.gmra.mrb[0].mxu0 %v3441
        %v5336 = vpop.f32.mrb[0].mxu0
        %v5337 = vadd.f32 0.0, %v5336
        %v5338 = vpop.f32.mrb[0].mxu0
        %v5339 = vpop.f32.mrb[0].mxu0
        %v5340 = vadd.f32 0.0, %v5339
        %v5341 = vpop.f32.mrb[0].mxu0
        %5342 = vdwg.mxu0
        %v5343 = vadd.f32 %v5184, %v5313
        %v5344 = vadd.f32 %v5185, %v5316
        %v5345 = vadd.f32 %v5186, %v5321
        %v5346 = vadd.f32 %v5187, %v5324
        %v5347 = vadd.f32 %v5188, %v5329
        %v5348 = vadd.f32 %v5189, %v5332
        %v5349 = vadd.f32 %v5190, %v5337
        %v5350 = vadd.f32 %v5191, %v5340
        %s5351 = scalar_lea.vmem %s37, 96
        %v5352 = vld [vmem:[%s5351] sm:$0xf]
        %v5353 = vld [vmem:[%s5351 + $0x4] sm:$0xf]
        %v5354 = vld [vmem:[%s5351 + $0x8] sm:$0xf]
        %v5355 = vld [vmem:[%s5351 + $0xc] sm:$0xf]
        %v5360 = vunpack.c.l.b16 %v5352
        %v5361 = vunpack.c.l.b16 %v5353
        %v5362 = vunpack.c.l.b16 %v5354
        %v5363 = vunpack.c.l.b16 %v5355
        %v5364 = vpack.c.b16 %v5361, %v5360
        %v5365 = vpack.c.b16 %v5363, %v5362
        %5368 = vmatprep.subr.bf16.mxu0 0
        %5369 = vmatpush1.bf16.msra.mxu0 %v5364
        %5370 = vmatprep.subr.bf16.mxu0 0
        %5371 = vmatpush1.bf16.msra.mxu0 %v5365
        %5372 = vmatprep.subr.bf16.mxu0 0
        %5373 = vmatpush1.bf16.msra.mxu0 0
        %5374 = vmatprep.subr.bf16.mxu0 0
        %5375 = vmatpush1.bf16.msra.mxu0 0
        %5376 = vmatprep.subr.bf16.mxu0 0
        %5377 = vmatpush1.bf16.msra.mxu0 0
        %5378 = vmatprep.subr.bf16.mxu0 0
        %5379 = vmatpush1.bf16.msra.mxu0 0
        %5380 = vmatprep.subr.bf16.mxu0 0
        %5381 = vmatpush1.bf16.msra.mxu0 0
        %5382 = vmatprep.subr.bf16.mxu0 0
        %5383 = vmatpush1.bf16.msra.mxu0 0
        %5384 = vmatprep.subr.bf16.mxu0 0
        %5385 = vmatpush1.bf16.msra.mxu0 0
        %5386 = vmatprep.subr.bf16.mxu0 0
        %5387 = vmatpush1.bf16.msra.mxu0 0
        %5388 = vmatprep.subr.bf16.mxu0 0
        %5389 = vmatpush1.bf16.msra.mxu0 0
        %5390 = vmatprep.subr.bf16.mxu0 0
        %5391 = vmatpush1.bf16.msra.mxu0 0
        %5392 = vmatprep.subr.bf16.mxu0 0
        %5393 = vmatpush1.bf16.msra.mxu0 0
        %5394 = vmatprep.subr.bf16.mxu0 0
        %5395 = vmatpush1.bf16.msra.mxu0 0
        %5396 = vmatprep.subr.bf16.mxu0 0
        %5397 = vmatpush1.bf16.msra.mxu0 0
        %5398 = vmatprep.subr.bf16.mxu0 0
        %5399 = vmatpush1.bf16.msra.mxu0 0
        %5400 = vmatprep.mubr.bf16.mxu0 0
        %5401 = vmatmul.mubr.bf16.gmra.mrb[0].mxu0 %v4419
        %v5402 = vpop.f32.mrb[0].mxu0
        %v5403 = vadd.f32 0.0, %v5402
        %v5404 = vpop.f32.mrb[0].mxu0
        %v5405 = vpop.f32.mrb[0].mxu0
        %v5406 = vadd.f32 0.0, %v5405
        %v5407 = vpop.f32.mrb[0].mxu0
        %5408 = vmatprep.mubr.bf16.mxu0 0
        %5409 = vmatmul.mubr.bf16.gmra.mrb[0].mxu0 %v4422
        %v5410 = vpop.f32.mrb[0].mxu0
        %v5411 = vadd.f32 0.0, %v5410
        %v5412 = vpop.f32.mrb[0].mxu0
        %v5413 = vpop.f32.mrb[0].mxu0
        %v5414 = vadd.f32 0.0, %v5413
        %v5415 = vpop.f32.mrb[0].mxu0
        %5416 = vmatprep.mubr.bf16.mxu0 0
        %5417 = vmatmul.mubr.bf16.gmra.mrb[0].mxu0 %v4425
        %v5418 = vpop.f32.mrb[0].mxu0
        %v5419 = vadd.f32 0.0, %v5418
        %v5420 = vpop.f32.mrb[0].mxu0
        %v5421 = vpop.f32.mrb[0].mxu0
        %v5422 = vadd.f32 0.0, %v5421
        %v5423 = vpop.f32.mrb[0].mxu0
        %5424 = vmatprep.mubr.bf16.mxu0 0
        %5425 = vmatmul.mubr.bf16.gmra.mrb[0].mxu0 %v4428
        %v5426 = vpop.f32.mrb[0].mxu0
        %v5427 = vadd.f32 0.0, %v5426
        %v5428 = vpop.f32.mrb[0].mxu0
        %v5429 = vpop.f32.mrb[0].mxu0
        %v5430 = vadd.f32 0.0, %v5429
        %v5431 = vpop.f32.mrb[0].mxu0
        %5432 = vdwg.mxu0
        %v5433 = vpack.c.bf16 %v5406, %v5403
        %v5434 = vpack.c.bf16 %v5414, %v5411
        %v5435 = vpack.c.bf16 %v5422, %v5419
        %v5436 = vpack.c.bf16 %v5430, %v5427
        %5437 = vmatprep.subr.bf16.mxu0 0
        %5438 = vmatpush1.bf16.msra.mxu0 %v5433
        %5439 = vmatprep.subr.bf16.mxu0 0
        %5440 = vmatpush1.bf16.msra.mxu0 %v5434
        %5441 = vmatprep.subr.bf16.mxu0 0
        %5442 = vmatpush1.bf16.msra.mxu0 %v5435
        %5443 = vmatprep.subr.bf16.mxu0 0
        %5444 = vmatpush1.bf16.msra.mxu0 %v5436
        %5445 = vmatprep.subr.bf16.mxu0 0
        %5446 = vmatpush1.bf16.msra.mxu0 0
        %5447 = vmatprep.subr.bf16.mxu0 0
        %5448 = vmatpush1.bf16.msra.mxu0 0
        %5449 = vmatprep.subr.bf16.mxu0 0
        %5450 = vmatpush1.bf16.msra.mxu0 0
        %5451 = vmatprep.subr.bf16.mxu0 0
        %5452 = vmatpush1.bf16.msra.mxu0 0
        %5453 = vmatprep.subr.bf16.mxu0 0
        %5454 = vmatpush1.bf16.msra.mxu0 0
        %5455 = vmatprep.subr.bf16.mxu0 0
        %5456 = vmatpush1.bf16.msra.mxu0 0
        %5457 = vmatprep.subr.bf16.mxu0 0
        %5458 = vmatpush1.bf16.msra.mxu0 0
        %5459 = vmatprep.subr.bf16.mxu0 0
        %5460 = vmatpush1.bf16.msra.mxu0 0
        %5461 = vmatprep.subr.bf16.mxu0 0
        %5462 = vmatpush1.bf16.msra.mxu0 0
        %5463 = vmatprep.subr.bf16.mxu0 0
        %5464 = vmatpush1.bf16.msra.mxu0 0
        %5465 = vmatprep.subr.bf16.mxu0 0
        %5466 = vmatpush1.bf16.msra.mxu0 0
        %5467 = vmatprep.subr.bf16.mxu0 0
        %5468 = vmatpush1.bf16.msra.mxu0 0
        %5469 = vmatprep.mubr.bf16.mxu0 0
        %5470 = vmatmul.mubr.bf16.gmra.mrb[0].mxu0 %v3632
        %v5471 = vpop.f32.mrb[0].mxu0
        %v5472 = vadd.f32 0.0, %v5471
        %v5473 = vpop.f32.mrb[0].mxu0
        %v5474 = vpop.f32.mrb[0].mxu0
        %v5475 = vadd.f32 0.0, %v5474
        %v5476 = vpop.f32.mrb[0].mxu0
        %5477 = vmatprep.mubr.bf16.mxu0 0
        %5478 = vmatmul.mubr.bf16.gmra.mrb[0].mxu0 %v3635
        %v5479 = vpop.f32.mrb[0].mxu0
        %v5480 = vadd.f32 0.0, %v5479
        %v5481 = vpop.f32.mrb[0].mxu0
        %v5482 = vpop.f32.mrb[0].mxu0
        %v5483 = vadd.f32 0.0, %v5482
        %v5484 = vpop.f32.mrb[0].mxu0
        %5485 = vmatprep.mubr.bf16.mxu0 0
        %5486 = vmatmul.mubr.bf16.gmra.mrb[0].mxu0 %v3638
        %v5487 = vpop.f32.mrb[0].mxu0
        %v5488 = vadd.f32 0.0, %v5487
        %v5489 = vpop.f32.mrb[0].mxu0
        %v5490 = vpop.f32.mrb[0].mxu0
        %v5491 = vadd.f32 0.0, %v5490
        %v5492 = vpop.f32.mrb[0].mxu0
        %5493 = vmatprep.mubr.bf16.mxu0 0
        %5494 = vmatmul.mubr.bf16.gmra.mrb[0].mxu0 %v3641
        %v5495 = vpop.f32.mrb[0].mxu0
        %v5496 = vadd.f32 0.0, %v5495
        %v5497 = vpop.f32.mrb[0].mxu0
        %v5498 = vpop.f32.mrb[0].mxu0
        %v5499 = vadd.f32 0.0, %v5498
        %v5500 = vpop.f32.mrb[0].mxu0
        %5501 = vdwg.mxu0
        %v5502 = vadd.f32 %v5343, %v5472
        %v5503 = vadd.f32 %v5344, %v5475
        %v5504 = vadd.f32 %v5345, %v5480
        %v5505 = vadd.f32 %v5346, %v5483
        %v5506 = vadd.f32 %v5347, %v5488
        %v5507 = vadd.f32 %v5348, %v5491
        %v5508 = vadd.f32 %v5349, %v5496
        %v5509 = vadd.f32 %v5350, %v5499
        %s5510 = scalar_lea.vmem %s37, 112
        %v5511 = vld [vmem:[%s5510] sm:$0xf]
        %v5512 = vld [vmem:[%s5510 + $0x4] sm:$0xf]
        %v5513 = vld [vmem:[%s5510 + $0x8] sm:$0xf]
        %v5514 = vld [vmem:[%s5510 + $0xc] sm:$0xf]
        %v5519 = vunpack.c.l.b16 %v5511
        %v5520 = vunpack.c.l.b16 %v5512
        %v5521 = vunpack.c.l.b16 %v5513
        %v5522 = vunpack.c.l.b16 %v5514
        %v5523 = vpack.c.b16 %v5520, %v5519
        %v5524 = vpack.c.b16 %v5522, %v5521
        %5527 = vmatprep.subr.bf16.mxu0 0
        %5528 = vmatpush1.bf16.msra.mxu0 %v5523
        %5529 = vmatprep.subr.bf16.mxu0 0
        %5530 = vmatpush1.bf16.msra.mxu0 %v5524
        %5531 = vmatprep.subr.bf16.mxu0 0
        %5532 = vmatpush1.bf16.msra.mxu0 0
        %5533 = vmatprep.subr.bf16.mxu0 0
        %5534 = vmatpush1.bf16.msra.mxu0 0
        %5535 = vmatprep.subr.bf16.mxu0 0
        %5536 = vmatpush1.bf16.msra.mxu0 0
        %5537 = vmatprep.subr.bf16.mxu0 0
        %5538 = vmatpush1.bf16.msra.mxu0 0
        %5539 = vmatprep.subr.bf16.mxu0 0
        %5540 = vmatpush1.bf16.msra.mxu0 0
        %5541 = vmatprep.subr.bf16.mxu0 0
        %5542 = vmatpush1.bf16.msra.mxu0 0
        %5543 = vmatprep.subr.bf16.mxu0 0
        %5544 = vmatpush1.bf16.msra.mxu0 0
        %5545 = vmatprep.subr.bf16.mxu0 0
        %5546 = vmatpush1.bf16.msra.mxu0 0
        %5547 = vmatprep.subr.bf16.mxu0 0
        %5548 = vmatpush1.bf16.msra.mxu0 0
        %5549 = vmatprep.subr.bf16.mxu0 0
        %5550 = vmatpush1.bf16.msra.mxu0 0
        %5551 = vmatprep.subr.bf16.mxu0 0
        %5552 = vmatpush1.bf16.msra.mxu0 0
        %5553 = vmatprep.subr.bf16.mxu0 0
        %5554 = vmatpush1.bf16.msra.mxu0 0
        %5555 = vmatprep.subr.bf16.mxu0 0
        %5556 = vmatpush1.bf16.msra.mxu0 0
        %5557 = vmatprep.subr.bf16.mxu0 0
        %5558 = vmatpush1.bf16.msra.mxu0 0
        %5559 = vmatprep.mubr.bf16.mxu0 0
        %5560 = vmatmul.mubr.bf16.gmra.mrb[0].mxu0 %v4419
        %v5561 = vpop.f32.mrb[0].mxu0
        %v5562 = vadd.f32 0.0, %v5561
        %v5563 = vpop.f32.mrb[0].mxu0
        %v5564 = vpop.f32.mrb[0].mxu0
        %v5565 = vadd.f32 0.0, %v5564
        %v5566 = vpop.f32.mrb[0].mxu0
        %5567 = vmatprep.mubr.bf16.mxu0 0
        %5568 = vmatmul.mubr.bf16.gmra.mrb[0].mxu0 %v4422
        %v5569 = vpop.f32.mrb[0].mxu0
        %v5570 = vadd.f32 0.0, %v5569
        %v5571 = vpop.f32.mrb[0].mxu0
        %v5572 = vpop.f32.mrb[0].mxu0
        %v5573 = vadd.f32 0.0, %v5572
        %v5574 = vpop.f32.mrb[0].mxu0
        %5575 = vmatprep.mubr.bf16.mxu0 0
        %5576 = vmatmul.mubr.bf16.gmra.mrb[0].mxu0 %v4425
        %v5577 = vpop.f32.mrb[0].mxu0
        %v5578 = vadd.f32 0.0, %v5577
        %v5579 = vpop.f32.mrb[0].mxu0
        %v5580 = vpop.f32.mrb[0].mxu0
        %v5581 = vadd.f32 0.0, %v5580
        %v5582 = vpop.f32.mrb[0].mxu0
        %5583 = vmatprep.mubr.bf16.mxu0 0
        %5584 = vmatmul.mubr.bf16.gmra.mrb[0].mxu0 %v4428
        %v5585 = vpop.f32.mrb[0].mxu0
        %v5586 = vadd.f32 0.0, %v5585
        %v5587 = vpop.f32.mrb[0].mxu0
        %v5588 = vpop.f32.mrb[0].mxu0
        %v5589 = vadd.f32 0.0, %v5588
        %v5590 = vpop.f32.mrb[0].mxu0
        %5591 = vdwg.mxu0
        %v5592 = vpack.c.bf16 %v5565, %v5562
        %v5593 = vpack.c.bf16 %v5573, %v5570
        %v5594 = vpack.c.bf16 %v5581, %v5578
        %v5595 = vpack.c.bf16 %v5589, %v5586
        %5596 = vmatprep.subr.bf16.mxu0 0
        %5597 = vmatpush1.bf16.msra.mxu0 %v5592
        %5598 = vmatprep.subr.bf16.mxu0 0
        %5599 = vmatpush1.bf16.msra.mxu0 %v5593
        %5600 = vmatprep.subr.bf16.mxu0 0
        %5601 = vmatpush1.bf16.msra.mxu0 %v5594
        %5602 = vmatprep.subr.bf16.mxu0 0
        %5603 = vmatpush1.bf16.msra.mxu0 %v5595
        %5604 = vmatprep.subr.bf16.mxu0 0
        %5605 = vmatpush1.bf16.msra.mxu0 0
        %5606 = vmatprep.subr.bf16.mxu0 0
        %5607 = vmatpush1.bf16.msra.mxu0 0
        %5608 = vmatprep.subr.bf16.mxu0 0
        %5609 = vmatpush1.bf16.msra.mxu0 0
        %5610 = vmatprep.subr.bf16.mxu0 0
        %5611 = vmatpush1.bf16.msra.mxu0 0
        %5612 = vmatprep.subr.bf16.mxu0 0
        %5613 = vmatpush1.bf16.msra.mxu0 0
        %5614 = vmatprep.subr.bf16.mxu0 0
        %5615 = vmatpush1.bf16.msra.mxu0 0
        %5616 = vmatprep.subr.bf16.mxu0 0
        %5617 = vmatpush1.bf16.msra.mxu0 0
        %5618 = vmatprep.subr.bf16.mxu0 0
        %5619 = vmatpush1.bf16.msra.mxu0 0
        %5620 = vmatprep.subr.bf16.mxu0 0
        %5621 = vmatpush1.bf16.msra.mxu0 0
        %5622 = vmatprep.subr.bf16.mxu0 0
        %5623 = vmatpush1.bf16.msra.mxu0 0
        %5624 = vmatprep.subr.bf16.mxu0 0
        %5625 = vmatpush1.bf16.msra.mxu0 0
        %5626 = vmatprep.subr.bf16.mxu0 0
        %5627 = vmatpush1.bf16.msra.mxu0 0
        %5628 = vmatprep.mubr.bf16.mxu0 0
        %5629 = vmatmul.mubr.bf16.gmra.mrb[0].mxu0 %v3832
        %v5630 = vpop.f32.mrb[0].mxu0
        %v5631 = vadd.f32 0.0, %v5630
        %v5632 = vpop.f32.mrb[0].mxu0
        %v5633 = vpop.f32.mrb[0].mxu0
        %v5634 = vadd.f32 0.0, %v5633
        %v5635 = vpop.f32.mrb[0].mxu0
        %5636 = vmatprep.mubr.bf16.mxu0 0
        %5637 = vmatmul.mubr.bf16.gmra.mrb[0].mxu0 %v3835
        %v5638 = vpop.f32.mrb[0].mxu0
        %v5639 = vadd.f32 0.0, %v5638
        %v5640 = vpop.f32.mrb[0].mxu0
        %v5641 = vpop.f32.mrb[0].mxu0
        %v5642 = vadd.f32 0.0, %v5641
        %v5643 = vpop.f32.mrb[0].mxu0
        %5644 = vmatprep.mubr.bf16.mxu0 0
        %5645 = vmatmul.mubr.bf16.gmra.mrb[0].mxu0 %v3838
        %v5646 = vpop.f32.mrb[0].mxu0
        %v5647 = vadd.f32 0.0, %v5646
        %v5648 = vpop.f32.mrb[0].mxu0
        %v5649 = vpop.f32.mrb[0].mxu0
        %v5650 = vadd.f32 0.0, %v5649
        %v5651 = vpop.f32.mrb[0].mxu0
        %5652 = vmatprep.mubr.bf16.mxu0 0
        %5653 = vmatmul.mubr.bf16.gmra.mrb[0].mxu0 %v3841
        %v5654 = vpop.f32.mrb[0].mxu0
        %v5655 = vadd.f32 0.0, %v5654
        %v5656 = vpop.f32.mrb[0].mxu0
        %v5657 = vpop.f32.mrb[0].mxu0
        %v5658 = vadd.f32 0.0, %v5657
        %v5659 = vpop.f32.mrb[0].mxu0
        %5660 = vdwg.mxu0
        %v5661 = vadd.f32 %v5502, %v5631
        %v5662 = vadd.f32 %v5503, %v5634
        %v5663 = vadd.f32 %v5504, %v5639
        %v5664 = vadd.f32 %v5505, %v5642
        %v5665 = vadd.f32 %v5506, %v5647
        %v5666 = vadd.f32 %v5507, %v5650
        %v5667 = vadd.f32 %v5508, %v5655
        %v5668 = vadd.f32 %v5509, %v5658
        %s5669 = scalar_lea.vmem %s37, 128
        %v5670 = vld [vmem:[%s5669] sm:$0xf]
        %v5671 = vld [vmem:[%s5669 + $0x4] sm:$0xf]
        %v5672 = vld [vmem:[%s5669 + $0x8] sm:$0xf]
        %v5673 = vld [vmem:[%s5669 + $0xc] sm:$0xf]
        %v5678 = vunpack.c.l.b16 %v5670
        %v5679 = vunpack.c.l.b16 %v5671
        %v5680 = vunpack.c.l.b16 %v5672
        %v5681 = vunpack.c.l.b16 %v5673
        %v5682 = vpack.c.b16 %v5679, %v5678
        %v5683 = vpack.c.b16 %v5681, %v5680
        %5686 = vmatprep.subr.bf16.mxu0 0
        %5687 = vmatpush1.bf16.msra.mxu0 %v5682
        %5688 = vmatprep.subr.bf16.mxu0 0
        %5689 = vmatpush1.bf16.msra.mxu0 %v5683
        %5690 = vmatprep.subr.bf16.mxu0 0
        %5691 = vmatpush1.bf16.msra.mxu0 0
        %5692 = vmatprep.subr.bf16.mxu0 0
        %5693 = vmatpush1.bf16.msra.mxu0 0
        %5694 = vmatprep.subr.bf16.mxu0 0
        %5695 = vmatpush1.bf16.msra.mxu0 0
        %5696 = vmatprep.subr.bf16.mxu0 0
        %5697 = vmatpush1.bf16.msra.mxu0 0
        %5698 = vmatprep.subr.bf16.mxu0 0
        %5699 = vmatpush1.bf16.msra.mxu0 0
        %5700 = vmatprep.subr.bf16.mxu0 0
        %5701 = vmatpush1.bf16.msra.mxu0 0
        %5702 = vmatprep.subr.bf16.mxu0 0
        %5703 = vmatpush1.bf16.msra.mxu0 0
        %5704 = vmatprep.subr.bf16.mxu0 0
        %5705 = vmatpush1.bf16.msra.mxu0 0
        %5706 = vmatprep.subr.bf16.mxu0 0
        %5707 = vmatpush1.bf16.msra.mxu0 0
        %5708 = vmatprep.subr.bf16.mxu0 0
        %5709 = vmatpush1.bf16.msra.mxu0 0
        %5710 = vmatprep.subr.bf16.mxu0 0
        %5711 = vmatpush1.bf16.msra.mxu0 0
        %5712 = vmatprep.subr.bf16.mxu0 0
        %5713 = vmatpush1.bf16.msra.mxu0 0
        %5714 = vmatprep.subr.bf16.mxu0 0
        %5715 = vmatpush1.bf16.msra.mxu0 0
        %5716 = vmatprep.subr.bf16.mxu0 0
        %5717 = vmatpush1.bf16.msra.mxu0 0
        %5718 = vmatprep.mubr.bf16.mxu0 0
        %5719 = vmatmul.mubr.bf16.gmra.mrb[0].mxu0 %v4419
        %v5720 = vpop.f32.mrb[0].mxu0
        %v5721 = vadd.f32 0.0, %v5720
        %v5722 = vpop.f32.mrb[0].mxu0
        %v5723 = vpop.f32.mrb[0].mxu0
        %v5724 = vadd.f32 0.0, %v5723
        %v5725 = vpop.f32.mrb[0].mxu0
        %5726 = vmatprep.mubr.bf16.mxu0 0
        %5727 = vmatmul.mubr.bf16.gmra.mrb[0].mxu0 %v4422
        %v5728 = vpop.f32.mrb[0].mxu0
        %v5729 = vadd.f32 0.0, %v5728
        %v5730 = vpop.f32.mrb[0].mxu0
        %v5731 = vpop.f32.mrb[0].mxu0
        %v5732 = vadd.f32 0.0, %v5731
        %v5733 = vpop.f32.mrb[0].mxu0
        %5734 = vmatprep.mubr.bf16.mxu0 0
        %5735 = vmatmul.mubr.bf16.gmra.mrb[0].mxu0 %v4425
        %v5736 = vpop.f32.mrb[0].mxu0
        %v5737 = vadd.f32 0.0, %v5736
        %v5738 = vpop.f32.mrb[0].mxu0
        %v5739 = vpop.f32.mrb[0].mxu0
        %v5740 = vadd.f32 0.0, %v5739
        %v5741 = vpop.f32.mrb[0].mxu0
        %5742 = vmatprep.mubr.bf16.mxu0 0
        %5743 = vmatmul.mubr.bf16.gmra.mrb[0].mxu0 %v4428
        %v5744 = vpop.f32.mrb[0].mxu0
        %v5745 = vadd.f32 0.0, %v5744
        %v5746 = vpop.f32.mrb[0].mxu0
        %v5747 = vpop.f32.mrb[0].mxu0
        %v5748 = vadd.f32 0.0, %v5747
        %v5749 = vpop.f32.mrb[0].mxu0
        %5750 = vdwg.mxu0
        %v5751 = vpack.c.bf16 %v5724, %v5721
        %v5752 = vpack.c.bf16 %v5732, %v5729
        %v5753 = vpack.c.bf16 %v5740, %v5737
        %v5754 = vpack.c.bf16 %v5748, %v5745
        %5755 = vmatprep.subr.bf16.mxu0 0
        %5756 = vmatpush1.bf16.msra.mxu0 %v5751
        %5757 = vmatprep.subr.bf16.mxu0 0
        %5758 = vmatpush1.bf16.msra.mxu0 %v5752
        %5759 = vmatprep.subr.bf16.mxu0 0
        %5760 = vmatpush1.bf16.msra.mxu0 %v5753
        %5761 = vmatprep.subr.bf16.mxu0 0
        %5762 = vmatpush1.bf16.msra.mxu0 %v5754
        %5763 = vmatprep.subr.bf16.mxu0 0
        %5764 = vmatpush1.bf16.msra.mxu0 0
        %5765 = vmatprep.subr.bf16.mxu0 0
        %5766 = vmatpush1.bf16.msra.mxu0 0
        %5767 = vmatprep.subr.bf16.mxu0 0
        %5768 = vmatpush1.bf16.msra.mxu0 0
        %5769 = vmatprep.subr.bf16.mxu0 0
        %5770 = vmatpush1.bf16.msra.mxu0 0
        %5771 = vmatprep.subr.bf16.mxu0 0
        %5772 = vmatpush1.bf16.msra.mxu0 0
        %5773 = vmatprep.subr.bf16.mxu0 0
        %5774 = vmatpush1.bf16.msra.mxu0 0
        %5775 = vmatprep.subr.bf16.mxu0 0
        %5776 = vmatpush1.bf16.msra.mxu0 0
        %5777 = vmatprep.subr.bf16.mxu0 0
        %5778 = vmatpush1.bf16.msra.mxu0 0
        %5779 = vmatprep.subr.bf16.mxu0 0
        %5780 = vmatpush1.bf16.msra.mxu0 0
        %5781 = vmatprep.subr.bf16.mxu0 0
        %5782 = vmatpush1.bf16.msra.mxu0 0
        %5783 = vmatprep.subr.bf16.mxu0 0
        %5784 = vmatpush1.bf16.msra.mxu0 0
        %5785 = vmatprep.subr.bf16.mxu0 0
        %5786 = vmatpush1.bf16.msra.mxu0 0
        %5787 = vmatprep.mubr.bf16.mxu0 0
        %5788 = vmatmul.mubr.bf16.gmra.mrb[0].mxu0 %v4032
        %v5789 = vpop.f32.mrb[0].mxu0
        %v5790 = vadd.f32 0.0, %v5789
        %v5791 = vpop.f32.mrb[0].mxu0
        %v5792 = vpop.f32.mrb[0].mxu0
        %v5793 = vadd.f32 0.0, %v5792
        %v5794 = vpop.f32.mrb[0].mxu0
        %5795 = vmatprep.mubr.bf16.mxu0 0
        %5796 = vmatmul.mubr.bf16.gmra.mrb[0].mxu0 %v4035
        %v5797 = vpop.f32.mrb[0].mxu0
        %v5798 = vadd.f32 0.0, %v5797
        %v5799 = vpop.f32.mrb[0].mxu0
        %v5800 = vpop.f32.mrb[0].mxu0
        %v5801 = vadd.f32 0.0, %v5800
        %v5802 = vpop.f32.mrb[0].mxu0
        %5803 = vmatprep.mubr.bf16.mxu0 0
        %5804 = vmatmul.mubr.bf16.gmra.mrb[0].mxu0 %v4038
        %v5805 = vpop.f32.mrb[0].mxu0
        %v5806 = vadd.f32 0.0, %v5805
        %v5807 = vpop.f32.mrb[0].mxu0
        %v5808 = vpop.f32.mrb[0].mxu0
        %v5809 = vadd.f32 0.0, %v5808
        %v5810 = vpop.f32.mrb[0].mxu0
        %5811 = vmatprep.mubr.bf16.mxu0 0
        %5812 = vmatmul.mubr.bf16.gmra.mrb[0].mxu0 %v4041
        %v5813 = vpop.f32.mrb[0].mxu0
        %v5814 = vadd.f32 0.0, %v5813
        %v5815 = vpop.f32.mrb[0].mxu0
        %v5816 = vpop.f32.mrb[0].mxu0
        %v5817 = vadd.f32 0.0, %v5816
        %v5818 = vpop.f32.mrb[0].mxu0
        %5819 = vdwg.mxu0
        %v5820 = vadd.f32 %v5661, %v5790
        %v5821 = vadd.f32 %v5662, %v5793
        %v5822 = vadd.f32 %v5663, %v5798
        %v5823 = vadd.f32 %v5664, %v5801
        %v5824 = vadd.f32 %v5665, %v5806
        %v5825 = vadd.f32 %v5666, %v5809
        %v5826 = vadd.f32 %v5667, %v5814
        %v5827 = vadd.f32 %v5668, %v5817
        %v5828 = vld [vmem:[%s39] sm:$0x1]
        %v5830 = vlaneseq
        %v5831 = vshrl.u32 %v5830, 7
        %v5832 = vsub.s32 0, %v5831
        %v5833 = vrot.slane %v5828, %v5832
        %v5835 = vmul.f32 %v2142, %v5833
        %v5836 = vmul.f32 %v2143, %v5833
        %v5837 = vmul.f32 %v2144, %v5833
        %v5838 = vmul.f32 %v2145, %v5833
        %v5839 = vmul.f32 %v2146, %v5833
        %v5840 = vmul.f32 %v2147, %v5833
        %v5841 = vmul.f32 %v2148, %v5833
        %v5842 = vmul.f32 %v2149, %v5833
        %v5843 = vld [vmem:[%s41] sm:$0x1]
        %v5845 = vlaneseq
        %v5846 = vshrl.u32 %v5845, 7
        %v5847 = vsub.s32 0, %v5846
        %v5848 = vrot.slane %v5843, %v5847
        %v5850 = vadd.f32 %v5835, %v5848
        %v5851 = vadd.f32 %v5836, %v5848
        %v5852 = vadd.f32 %v5837, %v5848
        %v5853 = vadd.f32 %v5838, %v5848
        %v5854 = vadd.f32 %v5839, %v5848
        %v5855 = vadd.f32 %v5840, %v5848
        %v5856 = vadd.f32 %v5841, %v5848
        %v5857 = vadd.f32 %v5842, %v5848
        %v5858 = vmax.f32 %v5850, 0.0
        %v5859 = vmax.f32 %v5851, 0.0
        %v5860 = vmax.f32 %v5852, 0.0
        %v5861 = vmax.f32 %v5853, 0.0
        %v5862 = vmax.f32 %v5854, 0.0
        %v5863 = vmax.f32 %v5855, 0.0
        %v5864 = vmax.f32 %v5856, 0.0
        %v5865 = vmax.f32 %v5857, 0.0
        %v5866 = vld [vmem:[%s43] sm:$0xf]
        %v5867 = vld [vmem:[%s43 + $0x4] sm:$0xf]
        %v5868 = vpack.c.bf16 %v5859, %v5858
        %v5869 = vpack.c.bf16 %v5861, %v5860
        %v5870 = vpack.c.bf16 %v5863, %v5862
        %v5871 = vpack.c.bf16 %v5865, %v5864
        %5872 = vrot.lane.b32.xlu0 %v5833, 112
        %v5873 = vpop.permute.xlu0 %5872
        %v5875 = vmul.f32 %v4108, %v5873
        %v5876 = vmul.f32 %v4109, %v5873
        %v5877 = vmul.f32 %v4110, %v5873
        %v5878 = vmul.f32 %v4111, %v5873
        %v5879 = vmul.f32 %v4112, %v5873
        %v5880 = vmul.f32 %v4113, %v5873
        %v5881 = vmul.f32 %v4114, %v5873
        %v5882 = vmul.f32 %v4115, %v5873
        %5883 = vrot.lane.b32.xlu0 %v5848, 112
        %v5884 = vpop.permute.xlu0 %5883
        %v5886 = vadd.f32 %v5875, %v5884
        %v5887 = vadd.f32 %v5876, %v5884
        %v5888 = vadd.f32 %v5877, %v5884
        %v5889 = vadd.f32 %v5878, %v5884
        %v5890 = vadd.f32 %v5879, %v5884
        %v5891 = vadd.f32 %v5880, %v5884
        %v5892 = vadd.f32 %v5881, %v5884
        %v5893 = vadd.f32 %v5882, %v5884
        %v5894 = vmax.f32 %v5886, 0.0
        %v5895 = vmax.f32 %v5887, 0.0
        %v5896 = vmax.f32 %v5888, 0.0
        %v5897 = vmax.f32 %v5889, 0.0
        %v5898 = vmax.f32 %v5890, 0.0
        %v5899 = vmax.f32 %v5891, 0.0
        %v5900 = vmax.f32 %v5892, 0.0
        %v5901 = vmax.f32 %v5893, 0.0
        %v5902 = vld [vmem:[%s43 + $0x8] sm:$0xf]
        %v5903 = vpack.c.bf16 %v5895, %v5894
        %v5904 = vpack.c.bf16 %v5897, %v5896
        %v5905 = vpack.c.bf16 %v5899, %v5898
        %v5906 = vpack.c.bf16 %v5901, %v5900
        %v5908 = vsel %vm4195, %v5903, 0
        %v5911 = vsel %vm4195, %v5904, 0
        %v5914 = vsel %vm4195, %v5905, 0
        %v5917 = vsel %vm4195, %v5906, 0
        %v5920 = vsel %vm4208, %v5902, 0
        %5922 = vmatprep.subr.bf16.mxu0 0
        %5923 = vmatpush1.bf16.msra.mxu0 %v5920
        %5924 = vmatprep.subr.bf16.mxu0 0
        %5925 = vmatpush1.bf16.msra.mxu0 0
        %5926 = vmatprep.subr.bf16.mxu0 0
        %5927 = vmatpush1.bf16.msra.mxu0 0
        %5928 = vmatprep.subr.bf16.mxu0 0
        %5929 = vmatpush1.bf16.msra.mxu0 0
        %5930 = vmatprep.subr.bf16.mxu0 0
        %5931 = vmatpush1.bf16.msra.mxu0 0
        %5932 = vmatprep.subr.bf16.mxu0 0
        %5933 = vmatpush1.bf16.msra.mxu0 0
        %5934 = vmatprep.subr.bf16.mxu0 0
        %5935 = vmatpush1.bf16.msra.mxu0 0
        %5936 = vmatprep.subr.bf16.mxu0 0
        %5937 = vmatpush1.bf16.msra.mxu0 0
        %5938 = vmatprep.subr.bf16.mxu0 0
        %5939 = vmatpush1.bf16.msra.mxu0 0
        %5940 = vmatprep.subr.bf16.mxu0 0
        %5941 = vmatpush1.bf16.msra.mxu0 0
        %5942 = vmatprep.subr.bf16.mxu0 0
        %5943 = vmatpush1.bf16.msra.mxu0 0
        %5944 = vmatprep.subr.bf16.mxu0 0
        %5945 = vmatpush1.bf16.msra.mxu0 0
        %5946 = vmatprep.subr.bf16.mxu0 0
        %5947 = vmatpush1.bf16.msra.mxu0 0
        %5948 = vmatprep.subr.bf16.mxu0 0
        %5949 = vmatpush1.bf16.msra.mxu0 0
        %5950 = vmatprep.subr.bf16.mxu0 0
        %5951 = vmatpush1.bf16.msra.mxu0 0
        %5952 = vmatprep.subr.bf16.mxu0 0
        %5953 = vmatpush1.bf16.msra.mxu0 0
        %5954 = vmatprep.mubr.bf16.mxu0 0
        %5955 = vmatmul.mubr.bf16.gmra.mrb[0].mxu0 %v5908
        %v5956 = vpop.f32.mrb[0].mxu0
        %v5957 = vadd.f32 0.0, %v5956
        %v5958 = vpop.f32.mrb[0].mxu0
        %v5959 = vpop.f32.mrb[0].mxu0
        %v5960 = vadd.f32 0.0, %v5959
        %v5961 = vpop.f32.mrb[0].mxu0
        %5962 = vmatprep.mubr.bf16.mxu0 0
        %5963 = vmatmul.mubr.bf16.gmra.mrb[0].mxu0 %v5911
        %v5964 = vpop.f32.mrb[0].mxu0
        %v5965 = vadd.f32 0.0, %v5964
        %v5966 = vpop.f32.mrb[0].mxu0
        %v5967 = vpop.f32.mrb[0].mxu0
        %v5968 = vadd.f32 0.0, %v5967
        %v5969 = vpop.f32.mrb[0].mxu0
        %5970 = vmatprep.mubr.bf16.mxu0 0
        %5971 = vmatmul.mubr.bf16.gmra.mrb[0].mxu0 %v5914
        %v5972 = vpop.f32.mrb[0].mxu0
        %v5973 = vadd.f32 0.0, %v5972
        %v5974 = vpop.f32.mrb[0].mxu0
        %v5975 = vpop.f32.mrb[0].mxu0
        %v5976 = vadd.f32 0.0, %v5975
        %v5977 = vpop.f32.mrb[0].mxu0
        %5978 = vmatprep.mubr.bf16.mxu0 0
        %5979 = vmatmul.mubr.bf16.gmra.mrb[0].mxu0 %v5917
        %v5980 = vpop.f32.mrb[0].mxu0
        %v5981 = vadd.f32 0.0, %v5980
        %v5982 = vpop.f32.mrb[0].mxu0
        %v5983 = vpop.f32.mrb[0].mxu0
        %v5984 = vadd.f32 0.0, %v5983
        %v5985 = vpop.f32.mrb[0].mxu0
        %5986 = vdwg.mxu0
        %v5989 = vunpack.c.l.b16 %v5866
        %v5990 = vunpack.c.l.b16 %v5867
        %v5991 = vpack.c.b16 %v5990, %v5989
        %v5994 = vsel %vm2200, %v5868, 0
        %v5997 = vsel %vm2200, %v5869, 0
        %v6000 = vsel %vm2200, %v5870, 0
        %v6003 = vsel %vm2200, %v5871, 0
        %6005 = vmatprep.subr.bf16.mxu0 0
        %6006 = vmatpush1.bf16.msra.mxu0 %v5991
        %6007 = vmatprep.subr.bf16.mxu0 0
        %6008 = vmatpush1.bf16.msra.mxu0 0
        %6009 = vmatprep.subr.bf16.mxu0 0
        %6010 = vmatpush1.bf16.msra.mxu0 0
        %6011 = vmatprep.subr.bf16.mxu0 0
        %6012 = vmatpush1.bf16.msra.mxu0 0
        %6013 = vmatprep.subr.bf16.mxu0 0
        %6014 = vmatpush1.bf16.msra.mxu0 0
        %6015 = vmatprep.subr.bf16.mxu0 0
        %6016 = vmatpush1.bf16.msra.mxu0 0
        %6017 = vmatprep.subr.bf16.mxu0 0
        %6018 = vmatpush1.bf16.msra.mxu0 0
        %6019 = vmatprep.subr.bf16.mxu0 0
        %6020 = vmatpush1.bf16.msra.mxu0 0
        %6021 = vmatprep.subr.bf16.mxu0 0
        %6022 = vmatpush1.bf16.msra.mxu0 0
        %6023 = vmatprep.subr.bf16.mxu0 0
        %6024 = vmatpush1.bf16.msra.mxu0 0
        %6025 = vmatprep.subr.bf16.mxu0 0
        %6026 = vmatpush1.bf16.msra.mxu0 0
        %6027 = vmatprep.subr.bf16.mxu0 0
        %6028 = vmatpush1.bf16.msra.mxu0 0
        %6029 = vmatprep.subr.bf16.mxu0 0
        %6030 = vmatpush1.bf16.msra.mxu0 0
        %6031 = vmatprep.subr.bf16.mxu0 0
        %6032 = vmatpush1.bf16.msra.mxu0 0
        %6033 = vmatprep.subr.bf16.mxu0 0
        %6034 = vmatpush1.bf16.msra.mxu0 0
        %6035 = vmatprep.subr.bf16.mxu0 0
        %6036 = vmatpush1.bf16.msra.mxu0 0
        %6037 = vmatprep.mubr.bf16.mxu0 0
        %6038 = vmatmul.mubr.bf16.gmra.mrb[0].mxu0 %v5994
        %v6039 = vpop.f32.mrb[0].mxu0
        %v6040 = vadd.f32 %v5957, %v6039
        %v6041 = vpop.f32.mrb[0].mxu0
        %v6042 = vpop.f32.mrb[0].mxu0
        %v6043 = vadd.f32 %v5960, %v6042
        %v6044 = vpop.f32.mrb[0].mxu0
        %6045 = vmatprep.mubr.bf16.mxu0 0
        %6046 = vmatmul.mubr.bf16.gmra.mrb[0].mxu0 %v5997
        %v6047 = vpop.f32.mrb[0].mxu0
        %v6048 = vadd.f32 %v5965, %v6047
        %v6049 = vpop.f32.mrb[0].mxu0
        %v6050 = vpop.f32.mrb[0].mxu0
        %v6051 = vadd.f32 %v5968, %v6050
        %v6052 = vpop.f32.mrb[0].mxu0
        %6053 = vmatprep.mubr.bf16.mxu0 0
        %6054 = vmatmul.mubr.bf16.gmra.mrb[0].mxu0 %v6000
        %v6055 = vpop.f32.mrb[0].mxu0
        %v6056 = vadd.f32 %v5973, %v6055
        %v6057 = vpop.f32.mrb[0].mxu0
        %v6058 = vpop.f32.mrb[0].mxu0
        %v6059 = vadd.f32 %v5976, %v6058
        %v6060 = vpop.f32.mrb[0].mxu0
        %6061 = vmatprep.mubr.bf16.mxu0 0
        %6062 = vmatmul.mubr.bf16.gmra.mrb[0].mxu0 %v6003
        %v6063 = vpop.f32.mrb[0].mxu0
        %v6064 = vadd.f32 %v5981, %v6063
        %v6065 = vpop.f32.mrb[0].mxu0
        %v6066 = vpop.f32.mrb[0].mxu0
        %v6067 = vadd.f32 %v5984, %v6066
        %v6068 = vpop.f32.mrb[0].mxu0
        %6069 = vdwg.mxu0
        %6070 = vrot.lane.b32.xlu0 %v5833, 104
        %v6071 = vpop.permute.xlu0 %6070
        %v6073 = vmul.f32 %v5820, %v6071
        %v6074 = vmul.f32 %v5821, %v6071
        %v6075 = vmul.f32 %v5822, %v6071
        %v6076 = vmul.f32 %v5823, %v6071
        %v6077 = vmul.f32 %v5824, %v6071
        %v6078 = vmul.f32 %v5825, %v6071
        %v6079 = vmul.f32 %v5826, %v6071
        %v6080 = vmul.f32 %v5827, %v6071
        %6081 = vrot.lane.b32.xlu0 %v5848, 104
        %v6082 = vpop.permute.xlu0 %6081
        %v6084 = vadd.f32 %v6073, %v6082
        %v6085 = vadd.f32 %v6074, %v6082
        %v6086 = vadd.f32 %v6075, %v6082
        %v6087 = vadd.f32 %v6076, %v6082
        %v6088 = vadd.f32 %v6077, %v6082
        %v6089 = vadd.f32 %v6078, %v6082
        %v6090 = vadd.f32 %v6079, %v6082
        %v6091 = vadd.f32 %v6080, %v6082
        %v6092 = vmax.f32 %v6084, 0.0
        %v6093 = vmax.f32 %v6085, 0.0
        %v6094 = vmax.f32 %v6086, 0.0
        %v6095 = vmax.f32 %v6087, 0.0
        %v6096 = vmax.f32 %v6088, 0.0
        %v6097 = vmax.f32 %v6089, 0.0
        %v6098 = vmax.f32 %v6090, 0.0
        %v6099 = vmax.f32 %v6091, 0.0
        %v6100 = vld [vmem:[%s43 + $0xc] sm:$0xf]
        %v6101 = vpack.c.bf16 %v6093, %v6092
        %v6102 = vpack.c.bf16 %v6095, %v6094
        %v6103 = vpack.c.bf16 %v6097, %v6096
        %v6104 = vpack.c.bf16 %v6099, %v6098
        %v6106 = vsel %vm4195, %v6101, 0
        %v6109 = vsel %vm4195, %v6102, 0
        %v6112 = vsel %vm4195, %v6103, 0
        %v6115 = vsel %vm4195, %v6104, 0
        %v6118 = vsel %vm4208, %v6100, 0
        %6120 = vmatprep.subr.bf16.mxu0 0
        %6121 = vmatpush1.bf16.msra.mxu0 %v6118
        %6122 = vmatprep.subr.bf16.mxu0 0
        %6123 = vmatpush1.bf16.msra.mxu0 0
        %6124 = vmatprep.subr.bf16.mxu0 0
        %6125 = vmatpush1.bf16.msra.mxu0 0
        %6126 = vmatprep.subr.bf16.mxu0 0
        %6127 = vmatpush1.bf16.msra.mxu0 0
        %6128 = vmatprep.subr.bf16.mxu0 0
        %6129 = vmatpush1.bf16.msra.mxu0 0
        %6130 = vmatprep.subr.bf16.mxu0 0
        %6131 = vmatpush1.bf16.msra.mxu0 0
        %6132 = vmatprep.subr.bf16.mxu0 0
        %6133 = vmatpush1.bf16.msra.mxu0 0
        %6134 = vmatprep.subr.bf16.mxu0 0
        %6135 = vmatpush1.bf16.msra.mxu0 0
        %6136 = vmatprep.subr.bf16.mxu0 0
        %6137 = vmatpush1.bf16.msra.mxu0 0
        %6138 = vmatprep.subr.bf16.mxu0 0
        %6139 = vmatpush1.bf16.msra.mxu0 0
        %6140 = vmatprep.subr.bf16.mxu0 0
        %6141 = vmatpush1.bf16.msra.mxu0 0
        %6142 = vmatprep.subr.bf16.mxu0 0
        %6143 = vmatpush1.bf16.msra.mxu0 0
        %6144 = vmatprep.subr.bf16.mxu0 0
        %6145 = vmatpush1.bf16.msra.mxu0 0
        %6146 = vmatprep.subr.bf16.mxu0 0
        %6147 = vmatpush1.bf16.msra.mxu0 0
        %6148 = vmatprep.subr.bf16.mxu0 0
        %6149 = vmatpush1.bf16.msra.mxu0 0
        %6150 = vmatprep.subr.bf16.mxu0 0
        %6151 = vmatpush1.bf16.msra.mxu0 0
        %6152 = vmatprep.mubr.bf16.mxu0 0
        %6153 = vmatmul.mubr.bf16.gmra.mrb[0].mxu0 %v6106
        %v6154 = vpop.f32.mrb[0].mxu0
        %v6155 = vadd.f32 0.0, %v6154
        %v6156 = vpop.f32.mrb[0].mxu0
        %v6157 = vpop.f32.mrb[0].mxu0
        %v6158 = vadd.f32 0.0, %v6157
        %v6159 = vpop.f32.mrb[0].mxu0
        %6160 = vmatprep.mubr.bf16.mxu0 0
        %6161 = vmatmul.mubr.bf16.gmra.mrb[0].mxu0 %v6109
        %v6162 = vpop.f32.mrb[0].mxu0
        %v6163 = vadd.f32 0.0, %v6162
        %v6164 = vpop.f32.mrb[0].mxu0
        %v6165 = vpop.f32.mrb[0].mxu0
        %v6166 = vadd.f32 0.0, %v6165
        %v6167 = vpop.f32.mrb[0].mxu0
        %6168 = vmatprep.mubr.bf16.mxu0 0
        %6169 = vmatmul.mubr.bf16.gmra.mrb[0].mxu0 %v6112
        %v6170 = vpop.f32.mrb[0].mxu0
        %v6171 = vadd.f32 0.0, %v6170
        %v6172 = vpop.f32.mrb[0].mxu0
        %v6173 = vpop.f32.mrb[0].mxu0
        %v6174 = vadd.f32 0.0, %v6173
        %v6175 = vpop.f32.mrb[0].mxu0
        %6176 = vmatprep.mubr.bf16.mxu0 0
        %6177 = vmatmul.mubr.bf16.gmra.mrb[0].mxu0 %v6115
        %v6178 = vpop.f32.mrb[0].mxu0
        %v6179 = vadd.f32 0.0, %v6178
        %v6180 = vpop.f32.mrb[0].mxu0
        %v6181 = vpop.f32.mrb[0].mxu0
        %v6182 = vadd.f32 0.0, %v6181
        %v6183 = vpop.f32.mrb[0].mxu0
        %6184 = vdwg.mxu0
        %v6185 = vadd.f32 %v6040, %v6155
        %v6186 = vadd.f32 %v6043, %v6158
        %v6187 = vadd.f32 %v6048, %v6163
        %v6188 = vadd.f32 %v6051, %v6166
        %v6189 = vadd.f32 %v6056, %v6171
        %v6190 = vadd.f32 %v6059, %v6174
        %v6191 = vadd.f32 %v6064, %v6179
        %v6192 = vadd.f32 %v6067, %v6182
        %v6193 = vld [vmem:[%s7] sm:$0xf]
        %v6194 = vld [vmem:[%s7 + $0x4] sm:$0xf]
        %v6195 = vpack.c.bf16 %v6186, %v6185
        %v6196 = vpack.c.bf16 %v6188, %v6187
        %v6197 = vpack.c.bf16 %v6190, %v6189
        %v6198 = vpack.c.bf16 %v6192, %v6191
        %v6201 = vunpack.c.l.b16 %v6193
        %v6202 = vunpack.c.l.b16 %v6194
        %v6203 = vpack.c.b16 %v6202, %v6201
        %v6205 = vsel %vm2541, %v6203, 0
        %6207 = vmatprep.subr.bf16.mxu0 0
        %6208 = vmatpush1.bf16.msra.mxu0 %v6195
        %6209 = vmatprep.subr.bf16.mxu0 0
        %6210 = vmatpush1.bf16.msra.mxu0 %v6196
        %6211 = vmatprep.subr.bf16.mxu0 0
        %6212 = vmatpush1.bf16.msra.mxu0 %v6197
        %6213 = vmatprep.subr.bf16.mxu0 0
        %6214 = vmatpush1.bf16.msra.mxu0 %v6198
        %6215 = vmatprep.subr.bf16.mxu0 0
        %6216 = vmatpush1.bf16.msra.mxu0 0
        %6217 = vmatprep.subr.bf16.mxu0 0
        %6218 = vmatpush1.bf16.msra.mxu0 0
        %6219 = vmatprep.subr.bf16.mxu0 0
        %6220 = vmatpush1.bf16.msra.mxu0 0
        %6221 = vmatprep.subr.bf16.mxu0 0
        %6222 = vmatpush1.bf16.msra.mxu0 0
        %6223 = vmatprep.subr.bf16.mxu0 0
        %6224 = vmatpush1.bf16.msra.mxu0 0
        %6225 = vmatprep.subr.bf16.mxu0 0
        %6226 = vmatpush1.bf16.msra.mxu0 0
        %6227 = vmatprep.subr.bf16.mxu0 0
        %6228 = vmatpush1.bf16.msra.mxu0 0
        %6229 = vmatprep.subr.bf16.mxu0 0
        %6230 = vmatpush1.bf16.msra.mxu0 0
        %6231 = vmatprep.subr.bf16.mxu0 0
        %6232 = vmatpush1.bf16.msra.mxu0 0
        %6233 = vmatprep.subr.bf16.mxu0 0
        %6234 = vmatpush1.bf16.msra.mxu0 0
        %6235 = vmatprep.subr.bf16.mxu0 0
        %6236 = vmatpush1.bf16.msra.mxu0 0
        %6237 = vmatprep.subr.bf16.mxu0 0
        %6238 = vmatpush1.bf16.msra.mxu0 0
        %6239 = vmatprep.mubr.bf16.mxu0 0
        %6240 = vmatmul.mubr.bf16.gmra.mrb[0].mxu0 %v6205
        %v6241 = vpop.f32.mrb[0].mxu0
        %v6242 = vadd.f32 0.0, %v6241
        %v6243 = vpop.f32.mrb[0].mxu0
        %v6244 = vpop.f32.mrb[0].mxu0
        %v6245 = vadd.f32 0.0, %v6244
        %v6246 = vpop.f32.mrb[0].mxu0
        %6247 = vdwg.mxu0
        %v6248 = vld [vmem:[%s45] sm:$0x1]
        %v6250 = vlaneseq
        %v6251 = vshrl.u32 %v6250, 7
        %v6252 = vsub.s32 0, %v6251
        %v6253 = vrot.slane %v6248, %v6252
        %v6255 = vmul.f32 %v6242, %v6253
        %v6256 = vmul.f32 %v6245, %v6253
        %v6257 = vld [vmem:[%s47] sm:$0x1]
        %v6259 = vlaneseq
        %v6260 = vshrl.u32 %v6259, 7
        %v6261 = vsub.s32 0, %v6260
        %v6262 = vrot.slane %v6257, %v6261
        %v6264 = vadd.f32 %v6255, %v6262
        %v6265 = vadd.f32 %v6256, %v6262
        %v6266 = vmax.f32 %v6264, 0.0
        %v6267 = vmax.f32 %v6265, 0.0
        %v6268 = vld [vmem:[%s49] sm:$0xf]
        %v6269 = vld [vmem:[%s49 + $0x4] sm:$0xf]
        %v6270 = vpack.c.bf16 %v6267, %v6266
        %v6273 = vunpack.c.l.b16 %v6268
        %v6274 = vunpack.c.l.b16 %v6269
        %v6275 = vpack.c.b16 %v6274, %v6273
        %v6278 = vsel %vm2200, %v6270, 0
        %6280 = vmatprep.subr.bf16.mxu0 0
        %6281 = vmatpush1.bf16.msra.mxu0 %v6275
        %6282 = vmatprep.subr.bf16.mxu0 0
        %6283 = vmatpush1.bf16.msra.mxu0 0
        %6284 = vmatprep.subr.bf16.mxu0 0
        %6285 = vmatpush1.bf16.msra.mxu0 0
        %6286 = vmatprep.subr.bf16.mxu0 0
        %6287 = vmatpush1.bf16.msra.mxu0 0
        %6288 = vmatprep.subr.bf16.mxu0 0
        %6289 = vmatpush1.bf16.msra.mxu0 0
        %6290 = vmatprep.subr.bf16.mxu0 0
        %6291 = vmatpush1.bf16.msra.mxu0 0
        %6292 = vmatprep.subr.bf16.mxu0 0
        %6293 = vmatpush1.bf16.msra.mxu0 0
        %6294 = vmatprep.subr.bf16.mxu0 0
        %6295 = vmatpush1.bf16.msra.mxu0 0
        %6296 = vmatprep.subr.bf16.mxu0 0
        %6297 = vmatpush1.bf16.msra.mxu0 0
        %6298 = vmatprep.subr.bf16.mxu0 0
        %6299 = vmatpush1.bf16.msra.mxu0 0
        %6300 = vmatprep.subr.bf16.mxu0 0
        %6301 = vmatpush1.bf16.msra.mxu0 0
        %6302 = vmatprep.subr.bf16.mxu0 0
        %6303 = vmatpush1.bf16.msra.mxu0 0
        %6304 = vmatprep.subr.bf16.mxu0 0
        %6305 = vmatpush1.bf16.msra.mxu0 0
        %6306 = vmatprep.subr.bf16.mxu0 0
        %6307 = vmatpush1.bf16.msra.mxu0 0
        %6308 = vmatprep.subr.bf16.mxu0 0
        %6309 = vmatpush1.bf16.msra.mxu0 0
        %6310 = vmatprep.subr.bf16.mxu0 0
        %6311 = vmatpush1.bf16.msra.mxu0 0
        %6312 = vmatprep.mubr.bf16.mxu0 0
        %6313 = vmatmul.mubr.bf16.gmra.mrb[0].mxu0 %v6278
        %v6314 = vpop.f32.mrb[0].mxu0
        %v6315 = vadd.f32 0.0, %v6314
        %v6316 = vpop.f32.mrb[0].mxu0
        %v6317 = vpop.f32.mrb[0].mxu0
        %v6318 = vadd.f32 0.0, %v6317
        %v6319 = vpop.f32.mrb[0].mxu0
        %6320 = vdwg.mxu0
        %v6321 = vld [vmem:[%s51] sm:$0x1]
        %v6323 = vlaneseq
        %v6324 = vshrl.u32 %v6323, 7
        %v6325 = vsub.s32 0, %v6324
        %v6326 = vrot.slane %v6321, %v6325
        %v6328 = vmul.f32 %v6315, %v6326
        %v6329 = vmul.f32 %v6318, %v6326
        %v6330 = vld [vmem:[%s53] sm:$0x1]
        %v6332 = vlaneseq
        %v6333 = vshrl.u32 %v6332, 7
        %v6334 = vsub.s32 0, %v6333
        %v6335 = vrot.slane %v6330, %v6334
        %v6337 = vadd.f32 %v6328, %v6335
        %v6338 = vadd.f32 %v6329, %v6335
        %v6339 = vmax.f32 %v6337, 0.0
        %v6340 = vmax.f32 %v6338, 0.0
        %v6341 = vpack.c.bf16 %v6340, %v6339
        %v6342 = vld [vmem:[%s55] sm:$0xf]
        %v6343 = vld [vmem:[%s55 + $0x4] sm:$0xf]
        %v6344 = vld [vmem:[%s55 + $0x8] sm:$0xf]
        %v6345 = vld [vmem:[%s55 + $0xc] sm:$0xf]
        %v6350 = vunpack.c.l.b16 %v6342
        %v6351 = vunpack.c.l.b16 %v6343
        %v6352 = vunpack.c.l.b16 %v6344
        %v6353 = vunpack.c.l.b16 %v6345
        %v6354 = vpack.c.b16 %v6351, %v6350
        %v6355 = vpack.c.b16 %v6353, %v6352
        %v6359 = vsel %vm2336, %v6341, 0
        %6361 = vmatprep.subr.bf16.mxu0 0
        %6362 = vmatpush1.bf16.msra.mxu0 %v6354
        %6363 = vmatprep.subr.bf16.mxu0 0
        %6364 = vmatpush1.bf16.msra.mxu0 %v6355
        %6365 = vmatprep.subr.bf16.mxu0 0
        %6366 = vmatpush1.bf16.msra.mxu0 0
        %6367 = vmatprep.subr.bf16.mxu0 0
        %6368 = vmatpush1.bf16.msra.mxu0 0
        %6369 = vmatprep.subr.bf16.mxu0 0
        %6370 = vmatpush1.bf16.msra.mxu0 0
        %6371 = vmatprep.subr.bf16.mxu0 0
        %6372 = vmatpush1.bf16.msra.mxu0 0
        %6373 = vmatprep.subr.bf16.mxu0 0
        %6374 = vmatpush1.bf16.msra.mxu0 0
        %6375 = vmatprep.subr.bf16.mxu0 0
        %6376 = vmatpush1.bf16.msra.mxu0 0
        %6377 = vmatprep.subr.bf16.mxu0 0
        %6378 = vmatpush1.bf16.msra.mxu0 0
        %6379 = vmatprep.subr.bf16.mxu0 0
        %6380 = vmatpush1.bf16.msra.mxu0 0
        %6381 = vmatprep.subr.bf16.mxu0 0
        %6382 = vmatpush1.bf16.msra.mxu0 0
        %6383 = vmatprep.subr.bf16.mxu0 0
        %6384 = vmatpush1.bf16.msra.mxu0 0
        %6385 = vmatprep.subr.bf16.mxu0 0
        %6386 = vmatpush1.bf16.msra.mxu0 0
        %6387 = vmatprep.subr.bf16.mxu0 0
        %6388 = vmatpush1.bf16.msra.mxu0 0
        %6389 = vmatprep.subr.bf16.mxu0 0
        %6390 = vmatpush1.bf16.msra.mxu0 0
        %6391 = vmatprep.subr.bf16.mxu0 0
        %6392 = vmatpush1.bf16.msra.mxu0 0
        %6393 = vmatprep.mubr.bf16.mxu0 0
        %6394 = vmatmul.mubr.bf16.gmra.mrb[0].mxu0 %v6359
        %v6395 = vpop.f32.mrb[0].mxu0
        %v6396 = vadd.f32 0.0, %v6395
        %v6397 = vpop.f32.mrb[0].mxu0
        %v6398 = vpop.f32.mrb[0].mxu0
        %v6399 = vadd.f32 0.0, %v6398
        %v6400 = vpop.f32.mrb[0].mxu0
        %6401 = vdwg.mxu0
        %v6402 = vld [vmem:[%s9] sm:$0xf]
        %v6403 = vld [vmem:[%s9 + $0x4] sm:$0xf]
        %v6404 = vpack.c.bf16 %v6399, %v6396
        %s6405 = scalar_lea.vmem %s55, 16
        %v6406 = vld [vmem:[%s6405] sm:$0xf]
        %v6407 = vld [vmem:[%s6405 + $0x4] sm:$0xf]
        %v6408 = vld [vmem:[%s6405 + $0x8] sm:$0xf]
        %v6409 = vld [vmem:[%s6405 + $0xc] sm:$0xf]
        %v6414 = vunpack.c.l.b16 %v6406
        %v6415 = vunpack.c.l.b16 %v6407
        %v6416 = vunpack.c.l.b16 %v6408
        %v6417 = vunpack.c.l.b16 %v6409
        %v6418 = vpack.c.b16 %v6415, %v6414
        %v6419 = vpack.c.b16 %v6417, %v6416
        %6422 = vmatprep.subr.bf16.mxu0 0
        %6423 = vmatpush1.bf16.msra.mxu0 %v6418
        %6424 = vmatprep.subr.bf16.mxu0 0
        %6425 = vmatpush1.bf16.msra.mxu0 %v6419
        %6426 = vmatprep.subr.bf16.mxu0 0
        %6427 = vmatpush1.bf16.msra.mxu0 0
        %6428 = vmatprep.subr.bf16.mxu0 0
        %6429 = vmatpush1.bf16.msra.mxu0 0
        %6430 = vmatprep.subr.bf16.mxu0 0
        %6431 = vmatpush1.bf16.msra.mxu0 0
        %6432 = vmatprep.subr.bf16.mxu0 0
        %6433 = vmatpush1.bf16.msra.mxu0 0
        %6434 = vmatprep.subr.bf16.mxu0 0
        %6435 = vmatpush1.bf16.msra.mxu0 0
        %6436 = vmatprep.subr.bf16.mxu0 0
        %6437 = vmatpush1.bf16.msra.mxu0 0
        %6438 = vmatprep.subr.bf16.mxu0 0
        %6439 = vmatpush1.bf16.msra.mxu0 0
        %6440 = vmatprep.subr.bf16.mxu0 0
        %6441 = vmatpush1.bf16.msra.mxu0 0
        %6442 = vmatprep.subr.bf16.mxu0 0
        %6443 = vmatpush1.bf16.msra.mxu0 0
        %6444 = vmatprep.subr.bf16.mxu0 0
        %6445 = vmatpush1.bf16.msra.mxu0 0
        %6446 = vmatprep.subr.bf16.mxu0 0
        %6447 = vmatpush1.bf16.msra.mxu0 0
        %6448 = vmatprep.subr.bf16.mxu0 0
        %6449 = vmatpush1.bf16.msra.mxu0 0
        %6450 = vmatprep.subr.bf16.mxu0 0
        %6451 = vmatpush1.bf16.msra.mxu0 0
        %6452 = vmatprep.subr.bf16.mxu0 0
        %6453 = vmatpush1.bf16.msra.mxu0 0
        %6454 = vmatprep.mubr.bf16.mxu0 0
        %6455 = vmatmul.mubr.bf16.gmra.mrb[0].mxu0 %v6359
        %v6456 = vpop.f32.mrb[0].mxu0
        %v6457 = vadd.f32 0.0, %v6456
        %v6458 = vpop.f32.mrb[0].mxu0
        %v6459 = vpop.f32.mrb[0].mxu0
        %v6460 = vadd.f32 0.0, %v6459
        %v6461 = vpop.f32.mrb[0].mxu0
        %6462 = vdwg.mxu0
        %s6463 = scalar_lea.vmem %s9, 8
        %v6464 = vld [vmem:[%s6463] sm:$0xf]
        %v6465 = vld [vmem:[%s6463 + $0x4] sm:$0xf]
        %v6466 = vpack.c.bf16 %v6460, %v6457
        %v6469 = vunpack.c.l.b16 %v6464
        %v6470 = vunpack.c.l.b16 %v6465
        %v6471 = vpack.c.b16 %v6470, %v6469
        %v6473 = vsel %vm2200, %v6471, 0
        %6475 = vmatprep.subr.bf16.mxu0 0
        %6476 = vmatpush1.bf16.msra.mxu0 %v6466
        %6477 = vmatprep.subr.bf16.mxu0 0
        %6478 = vmatpush1.bf16.msra.mxu0 0
        %6479 = vmatprep.subr.bf16.mxu0 0
        %6480 = vmatpush1.bf16.msra.mxu0 0
        %6481 = vmatprep.subr.bf16.mxu0 0
        %6482 = vmatpush1.bf16.msra.mxu0 0
        %6483 = vmatprep.subr.bf16.mxu0 0
        %6484 = vmatpush1.bf16.msra.mxu0 0
        %6485 = vmatprep.subr.bf16.mxu0 0
        %6486 = vmatpush1.bf16.msra.mxu0 0
        %6487 = vmatprep.subr.bf16.mxu0 0
        %6488 = vmatpush1.bf16.msra.mxu0 0
        %6489 = vmatprep.subr.bf16.mxu0 0
        %6490 = vmatpush1.bf16.msra.mxu0 0
        %6491 = vmatprep.subr.bf16.mxu0 0
        %6492 = vmatpush1.bf16.msra.mxu0 0
        %6493 = vmatprep.subr.bf16.mxu0 0
        %6494 = vmatpush1.bf16.msra.mxu0 0
        %6495 = vmatprep.subr.bf16.mxu0 0
        %6496 = vmatpush1.bf16.msra.mxu0 0
        %6497 = vmatprep.subr.bf16.mxu0 0
        %6498 = vmatpush1.bf16.msra.mxu0 0
        %6499 = vmatprep.subr.bf16.mxu0 0
        %6500 = vmatpush1.bf16.msra.mxu0 0
        %6501 = vmatprep.subr.bf16.mxu0 0
        %6502 = vmatpush1.bf16.msra.mxu0 0
        %6503 = vmatprep.subr.bf16.mxu0 0
        %6504 = vmatpush1.bf16.msra.mxu0 0
        %6505 = vmatprep.subr.bf16.mxu0 0
        %6506 = vmatpush1.bf16.msra.mxu0 0
        %6507 = vmatprep.mubr.bf16.mxu0 0
        %6508 = vmatmul.mubr.bf16.gmra.mrb[0].mxu0 %v6473
        %v6509 = vpop.f32.mrb[0].mxu0
        %v6510 = vadd.f32 0.0, %v6509
        %v6511 = vpop.f32.mrb[0].mxu0
        %v6512 = vpop.f32.mrb[0].mxu0
        %v6513 = vadd.f32 0.0, %v6512
        %v6514 = vpop.f32.mrb[0].mxu0
        %6515 = vdwg.mxu0
        %v6518 = vunpack.c.l.b16 %v6402
        %v6519 = vunpack.c.l.b16 %v6403
        %v6520 = vpack.c.b16 %v6519, %v6518
        %v6522 = vsel %vm2200, %v6520, 0
        %6524 = vmatprep.subr.bf16.mxu0 0
        %6525 = vmatpush1.bf16.msra.mxu0 %v6404
        %6526 = vmatprep.subr.bf16.mxu0 0
        %6527 = vmatpush1.bf16.msra.mxu0 0
        %6528 = vmatprep.subr.bf16.mxu0 0
        %6529 = vmatpush1.bf16.msra.mxu0 0
        %6530 = vmatprep.subr.bf16.mxu0 0
        %6531 = vmatpush1.bf16.msra.mxu0 0
        %6532 = vmatprep.subr.bf16.mxu0 0
        %6533 = vmatpush1.bf16.msra.mxu0 0
        %6534 = vmatprep.subr.bf16.mxu0 0
        %6535 = vmatpush1.bf16.msra.mxu0 0
        %6536 = vmatprep.subr.bf16.mxu0 0
        %6537 = vmatpush1.bf16.msra.mxu0 0
        %6538 = vmatprep.subr.bf16.mxu0 0
        %6539 = vmatpush1.bf16.msra.mxu0 0
        %6540 = vmatprep.subr.bf16.mxu0 0
        %6541 = vmatpush1.bf16.msra.mxu0 0
        %6542 = vmatprep.subr.bf16.mxu0 0
        %6543 = vmatpush1.bf16.msra.mxu0 0
        %6544 = vmatprep.subr.bf16.mxu0 0
        %6545 = vmatpush1.bf16.msra.mxu0 0
        %6546 = vmatprep.subr.bf16.mxu0 0
        %6547 = vmatpush1.bf16.msra.mxu0 0
        %6548 = vmatprep.subr.bf16.mxu0 0
        %6549 = vmatpush1.bf16.msra.mxu0 0
        %6550 = vmatprep.subr.bf16.mxu0 0
        %6551 = vmatpush1.bf16.msra.mxu0 0
        %6552 = vmatprep.subr.bf16.mxu0 0
        %6553 = vmatpush1.bf16.msra.mxu0 0
        %6554 = vmatprep.subr.bf16.mxu0 0
        %6555 = vmatpush1.bf16.msra.mxu0 0
        %6556 = vmatprep.mubr.bf16.mxu0 0
        %6557 = vmatmul.mubr.bf16.gmra.mrb[0].mxu0 %v6522
        %v6558 = vpop.f32.mrb[0].mxu0
        %v6559 = vadd.f32 %v6510, %v6558
        %v6560 = vpop.f32.mrb[0].mxu0
        %v6561 = vpop.f32.mrb[0].mxu0
        %v6562 = vadd.f32 %v6513, %v6561
        %v6563 = vpop.f32.mrb[0].mxu0
        %6564 = vdwg.mxu0
        %s6565 = scalar_lea.vmem %s55, 32
        %v6566 = vld [vmem:[%s6565] sm:$0xf]
        %v6567 = vld [vmem:[%s6565 + $0x4] sm:$0xf]
        %v6568 = vld [vmem:[%s6565 + $0x8] sm:$0xf]
        %v6569 = vld [vmem:[%s6565 + $0xc] sm:$0xf]
        %v6574 = vunpack.c.l.b16 %v6566
        %v6575 = vunpack.c.l.b16 %v6567
        %v6576 = vunpack.c.l.b16 %v6568
        %v6577 = vunpack.c.l.b16 %v6569
        %v6578 = vpack.c.b16 %v6575, %v6574
        %v6579 = vpack.c.b16 %v6577, %v6576
        %6582 = vmatprep.subr.bf16.mxu0 0
        %6583 = vmatpush1.bf16.msra.mxu0 %v6578
        %6584 = vmatprep.subr.bf16.mxu0 0
        %6585 = vmatpush1.bf16.msra.mxu0 %v6579
        %6586 = vmatprep.subr.bf16.mxu0 0
        %6587 = vmatpush1.bf16.msra.mxu0 0
        %6588 = vmatprep.subr.bf16.mxu0 0
        %6589 = vmatpush1.bf16.msra.mxu0 0
        %6590 = vmatprep.subr.bf16.mxu0 0
        %6591 = vmatpush1.bf16.msra.mxu0 0
        %6592 = vmatprep.subr.bf16.mxu0 0
        %6593 = vmatpush1.bf16.msra.mxu0 0
        %6594 = vmatprep.subr.bf16.mxu0 0
        %6595 = vmatpush1.bf16.msra.mxu0 0
        %6596 = vmatprep.subr.bf16.mxu0 0
        %6597 = vmatpush1.bf16.msra.mxu0 0
        %6598 = vmatprep.subr.bf16.mxu0 0
        %6599 = vmatpush1.bf16.msra.mxu0 0
        %6600 = vmatprep.subr.bf16.mxu0 0
        %6601 = vmatpush1.bf16.msra.mxu0 0
        %6602 = vmatprep.subr.bf16.mxu0 0
        %6603 = vmatpush1.bf16.msra.mxu0 0
        %6604 = vmatprep.subr.bf16.mxu0 0
        %6605 = vmatpush1.bf16.msra.mxu0 0
        %6606 = vmatprep.subr.bf16.mxu0 0
        %6607 = vmatpush1.bf16.msra.mxu0 0
        %6608 = vmatprep.subr.bf16.mxu0 0
        %6609 = vmatpush1.bf16.msra.mxu0 0
        %6610 = vmatprep.subr.bf16.mxu0 0
        %6611 = vmatpush1.bf16.msra.mxu0 0
        %6612 = vmatprep.subr.bf16.mxu0 0
        %6613 = vmatpush1.bf16.msra.mxu0 0
        %6614 = vmatprep.mubr.bf16.mxu0 0
        %6615 = vmatmul.mubr.bf16.gmra.mrb[0].mxu0 %v6359
        %v6616 = vpop.f32.mrb[0].mxu0
        %v6617 = vadd.f32 0.0, %v6616
        %v6618 = vpop.f32.mrb[0].mxu0
        %v6619 = vpop.f32.mrb[0].mxu0
        %v6620 = vadd.f32 0.0, %v6619
        %v6621 = vpop.f32.mrb[0].mxu0
        %6622 = vdwg.mxu0
        %s6623 = scalar_lea.vmem %s9, 16
        %v6624 = vld [vmem:[%s6623] sm:$0xf]
        %v6625 = vld [vmem:[%s6623 + $0x4] sm:$0xf]
        %v6626 = vpack.c.bf16 %v6620, %v6617
        %v6629 = vunpack.c.l.b16 %v6624
        %v6630 = vunpack.c.l.b16 %v6625
        %v6631 = vpack.c.b16 %v6630, %v6629
        %v6633 = vsel %vm2200, %v6631, 0
        %6635 = vmatprep.subr.bf16.mxu0 0
        %6636 = vmatpush1.bf16.msra.mxu0 %v6626
        %6637 = vmatprep.subr.bf16.mxu0 0
        %6638 = vmatpush1.bf16.msra.mxu0 0
        %6639 = vmatprep.subr.bf16.mxu0 0
        %6640 = vmatpush1.bf16.msra.mxu0 0
        %6641 = vmatprep.subr.bf16.mxu0 0
        %6642 = vmatpush1.bf16.msra.mxu0 0
        %6643 = vmatprep.subr.bf16.mxu0 0
        %6644 = vmatpush1.bf16.msra.mxu0 0
        %6645 = vmatprep.subr.bf16.mxu0 0
        %6646 = vmatpush1.bf16.msra.mxu0 0
        %6647 = vmatprep.subr.bf16.mxu0 0
        %6648 = vmatpush1.bf16.msra.mxu0 0
        %6649 = vmatprep.subr.bf16.mxu0 0
        %6650 = vmatpush1.bf16.msra.mxu0 0
        %6651 = vmatprep.subr.bf16.mxu0 0
        %6652 = vmatpush1.bf16.msra.mxu0 0
        %6653 = vmatprep.subr.bf16.mxu0 0
        %6654 = vmatpush1.bf16.msra.mxu0 0
        %6655 = vmatprep.subr.bf16.mxu0 0
        %6656 = vmatpush1.bf16.msra.mxu0 0
        %6657 = vmatprep.subr.bf16.mxu0 0
        %6658 = vmatpush1.bf16.msra.mxu0 0
        %6659 = vmatprep.subr.bf16.mxu0 0
        %6660 = vmatpush1.bf16.msra.mxu0 0
        %6661 = vmatprep.subr.bf16.mxu0 0
        %6662 = vmatpush1.bf16.msra.mxu0 0
        %6663 = vmatprep.subr.bf16.mxu0 0
        %6664 = vmatpush1.bf16.msra.mxu0 0
        %6665 = vmatprep.subr.bf16.mxu0 0
        %6666 = vmatpush1.bf16.msra.mxu0 0
        %6667 = vmatprep.mubr.bf16.mxu0 0
        %6668 = vmatmul.mubr.bf16.gmra.mrb[0].mxu0 %v6633
        %v6669 = vpop.f32.mrb[0].mxu0
        %v6670 = vadd.f32 0.0, %v6669
        %v6671 = vpop.f32.mrb[0].mxu0
        %v6672 = vpop.f32.mrb[0].mxu0
        %v6673 = vadd.f32 0.0, %v6672
        %v6674 = vpop.f32.mrb[0].mxu0
        %6675 = vdwg.mxu0
        %v6676 = vadd.f32 %v6559, %v6670
        %v6677 = vadd.f32 %v6562, %v6673
        %s6678 = scalar_lea.vmem %s55, 48
        %v6679 = vld [vmem:[%s6678] sm:$0xf]
        %v6680 = vld [vmem:[%s6678 + $0x4] sm:$0xf]
        %v6681 = vld [vmem:[%s6678 + $0x8] sm:$0xf]
        %v6682 = vld [vmem:[%s6678 + $0xc] sm:$0xf]
        %v6687 = vunpack.c.l.b16 %v6679
        %v6688 = vunpack.c.l.b16 %v6680
        %v6689 = vunpack.c.l.b16 %v6681
        %v6690 = vunpack.c.l.b16 %v6682
        %v6691 = vpack.c.b16 %v6688, %v6687
        %v6692 = vpack.c.b16 %v6690, %v6689
        %6695 = vmatprep.subr.bf16.mxu0 0
        %6696 = vmatpush1.bf16.msra.mxu0 %v6691
        %6697 = vmatprep.subr.bf16.mxu0 0
        %6698 = vmatpush1.bf16.msra.mxu0 %v6692
        %6699 = vmatprep.subr.bf16.mxu0 0
        %6700 = vmatpush1.bf16.msra.mxu0 0
        %6701 = vmatprep.subr.bf16.mxu0 0
        %6702 = vmatpush1.bf16.msra.mxu0 0
        %6703 = vmatprep.subr.bf16.mxu0 0
        %6704 = vmatpush1.bf16.msra.mxu0 0
        %6705 = vmatprep.subr.bf16.mxu0 0
        %6706 = vmatpush1.bf16.msra.mxu0 0
        %6707 = vmatprep.subr.bf16.mxu0 0
        %6708 = vmatpush1.bf16.msra.mxu0 0
        %6709 = vmatprep.subr.bf16.mxu0 0
        %6710 = vmatpush1.bf16.msra.mxu0 0
        %6711 = vmatprep.subr.bf16.mxu0 0
        %6712 = vmatpush1.bf16.msra.mxu0 0
        %6713 = vmatprep.subr.bf16.mxu0 0
        %6714 = vmatpush1.bf16.msra.mxu0 0
        %6715 = vmatprep.subr.bf16.mxu0 0
        %6716 = vmatpush1.bf16.msra.mxu0 0
        %6717 = vmatprep.subr.bf16.mxu0 0
        %6718 = vmatpush1.bf16.msra.mxu0 0
        %6719 = vmatprep.subr.bf16.mxu0 0
        %6720 = vmatpush1.bf16.msra.mxu0 0
        %6721 = vmatprep.subr.bf16.mxu0 0
        %6722 = vmatpush1.bf16.msra.mxu0 0
        %6723 = vmatprep.subr.bf16.mxu0 0
        %6724 = vmatpush1.bf16.msra.mxu0 0
        %6725 = vmatprep.subr.bf16.mxu0 0
        %6726 = vmatpush1.bf16.msra.mxu0 0
        %6727 = vmatprep.mubr.bf16.mxu0 0
        %6728 = vmatmul.mubr.bf16.gmra.mrb[0].mxu0 %v6359
        %v6729 = vpop.f32.mrb[0].mxu0
        %v6730 = vadd.f32 0.0, %v6729
        %v6731 = vpop.f32.mrb[0].mxu0
        %v6732 = vpop.f32.mrb[0].mxu0
        %v6733 = vadd.f32 0.0, %v6732
        %v6734 = vpop.f32.mrb[0].mxu0
        %6735 = vdwg.mxu0
        %s6736 = scalar_lea.vmem %s9, 24
        %v6737 = vld [vmem:[%s6736] sm:$0xf]
        %v6738 = vld [vmem:[%s6736 + $0x4] sm:$0xf]
        %v6739 = vpack.c.bf16 %v6733, %v6730
        %v6742 = vunpack.c.l.b16 %v6737
        %v6743 = vunpack.c.l.b16 %v6738
        %v6744 = vpack.c.b16 %v6743, %v6742
        %v6746 = vsel %vm2200, %v6744, 0
        %6748 = vmatprep.subr.bf16.mxu0 0
        %6749 = vmatpush1.bf16.msra.mxu0 %v6739
        %6750 = vmatprep.subr.bf16.mxu0 0
        %6751 = vmatpush1.bf16.msra.mxu0 0
        %6752 = vmatprep.subr.bf16.mxu0 0
        %6753 = vmatpush1.bf16.msra.mxu0 0
        %6754 = vmatprep.subr.bf16.mxu0 0
        %6755 = vmatpush1.bf16.msra.mxu0 0
        %6756 = vmatprep.subr.bf16.mxu0 0
        %6757 = vmatpush1.bf16.msra.mxu0 0
        %6758 = vmatprep.subr.bf16.mxu0 0
        %6759 = vmatpush1.bf16.msra.mxu0 0
        %6760 = vmatprep.subr.bf16.mxu0 0
        %6761 = vmatpush1.bf16.msra.mxu0 0
        %6762 = vmatprep.subr.bf16.mxu0 0
        %6763 = vmatpush1.bf16.msra.mxu0 0
        %6764 = vmatprep.subr.bf16.mxu0 0
        %6765 = vmatpush1.bf16.msra.mxu0 0
        %6766 = vmatprep.subr.bf16.mxu0 0
        %6767 = vmatpush1.bf16.msra.mxu0 0
        %6768 = vmatprep.subr.bf16.mxu0 0
        %6769 = vmatpush1.bf16.msra.mxu0 0
        %6770 = vmatprep.subr.bf16.mxu0 0
        %6771 = vmatpush1.bf16.msra.mxu0 0
        %6772 = vmatprep.subr.bf16.mxu0 0
        %6773 = vmatpush1.bf16.msra.mxu0 0
        %6774 = vmatprep.subr.bf16.mxu0 0
        %6775 = vmatpush1.bf16.msra.mxu0 0
        %6776 = vmatprep.subr.bf16.mxu0 0
        %6777 = vmatpush1.bf16.msra.mxu0 0
        %6778 = vmatprep.subr.bf16.mxu0 0
        %6779 = vmatpush1.bf16.msra.mxu0 0
        %6780 = vmatprep.mubr.bf16.mxu0 0
        %6781 = vmatmul.mubr.bf16.gmra.mrb[0].mxu0 %v6746
        %v6782 = vpop.f32.mrb[0].mxu0
        %v6783 = vadd.f32 0.0, %v6782
        %v6784 = vpop.f32.mrb[0].mxu0
        %v6785 = vpop.f32.mrb[0].mxu0
        %v6786 = vadd.f32 0.0, %v6785
        %v6787 = vpop.f32.mrb[0].mxu0
        %6788 = vdwg.mxu0
        %v6789 = vadd.f32 %v6676, %v6783
        %v6790 = vadd.f32 %v6677, %v6786
        %s6791 = scalar_lea.vmem %s55, 64
        %v6792 = vld [vmem:[%s6791] sm:$0xf]
        %v6793 = vld [vmem:[%s6791 + $0x4] sm:$0xf]
        %v6794 = vld [vmem:[%s6791 + $0x8] sm:$0xf]
        %v6795 = vld [vmem:[%s6791 + $0xc] sm:$0xf]
        %v6800 = vunpack.c.l.b16 %v6792
        %v6801 = vunpack.c.l.b16 %v6793
        %v6802 = vunpack.c.l.b16 %v6794
        %v6803 = vunpack.c.l.b16 %v6795
        %v6804 = vpack.c.b16 %v6801, %v6800
        %v6805 = vpack.c.b16 %v6803, %v6802
        %6808 = vmatprep.subr.bf16.mxu0 0
        %6809 = vmatpush1.bf16.msra.mxu0 %v6804
        %6810 = vmatprep.subr.bf16.mxu0 0
        %6811 = vmatpush1.bf16.msra.mxu0 %v6805
        %6812 = vmatprep.subr.bf16.mxu0 0
        %6813 = vmatpush1.bf16.msra.mxu0 0
        %6814 = vmatprep.subr.bf16.mxu0 0
        %6815 = vmatpush1.bf16.msra.mxu0 0
        %6816 = vmatprep.subr.bf16.mxu0 0
        %6817 = vmatpush1.bf16.msra.mxu0 0
        %6818 = vmatprep.subr.bf16.mxu0 0
        %6819 = vmatpush1.bf16.msra.mxu0 0
        %6820 = vmatprep.subr.bf16.mxu0 0
        %6821 = vmatpush1.bf16.msra.mxu0 0
        %6822 = vmatprep.subr.bf16.mxu0 0
        %6823 = vmatpush1.bf16.msra.mxu0 0
        %6824 = vmatprep.subr.bf16.mxu0 0
        %6825 = vmatpush1.bf16.msra.mxu0 0
        %6826 = vmatprep.subr.bf16.mxu0 0
        %6827 = vmatpush1.bf16.msra.mxu0 0
        %6828 = vmatprep.subr.bf16.mxu0 0
        %6829 = vmatpush1.bf16.msra.mxu0 0
        %6830 = vmatprep.subr.bf16.mxu0 0
        %6831 = vmatpush1.bf16.msra.mxu0 0
        %6832 = vmatprep.subr.bf16.mxu0 0
        %6833 = vmatpush1.bf16.msra.mxu0 0
        %6834 = vmatprep.subr.bf16.mxu0 0
        %6835 = vmatpush1.bf16.msra.mxu0 0
        %6836 = vmatprep.subr.bf16.mxu0 0
        %6837 = vmatpush1.bf16.msra.mxu0 0
        %6838 = vmatprep.subr.bf16.mxu0 0
        %6839 = vmatpush1.bf16.msra.mxu0 0
        %6840 = vmatprep.mubr.bf16.mxu0 0
        %6841 = vmatmul.mubr.bf16.gmra.mrb[0].mxu0 %v6359
        %v6842 = vpop.f32.mrb[0].mxu0
        %v6843 = vadd.f32 0.0, %v6842
        %v6844 = vpop.f32.mrb[0].mxu0
        %v6845 = vpop.f32.mrb[0].mxu0
        %v6846 = vadd.f32 0.0, %v6845
        %v6847 = vpop.f32.mrb[0].mxu0
        %6848 = vdwg.mxu0
        %s6849 = scalar_lea.vmem %s9, 32
        %v6850 = vld [vmem:[%s6849] sm:$0xf]
        %v6851 = vld [vmem:[%s6849 + $0x4] sm:$0xf]
        %v6852 = vpack.c.bf16 %v6846, %v6843
        %v6855 = vunpack.c.l.b16 %v6850
        %v6856 = vunpack.c.l.b16 %v6851
        %v6857 = vpack.c.b16 %v6856, %v6855
        %v6859 = vsel %vm2200, %v6857, 0
        %6861 = vmatprep.subr.bf16.mxu0 0
        %6862 = vmatpush1.bf16.msra.mxu0 %v6852
        %6863 = vmatprep.subr.bf16.mxu0 0
        %6864 = vmatpush1.bf16.msra.mxu0 0
        %6865 = vmatprep.subr.bf16.mxu0 0
        %6866 = vmatpush1.bf16.msra.mxu0 0
        %6867 = vmatprep.subr.bf16.mxu0 0
        %6868 = vmatpush1.bf16.msra.mxu0 0
        %6869 = vmatprep.subr.bf16.mxu0 0
        %6870 = vmatpush1.bf16.msra.mxu0 0
        %6871 = vmatprep.subr.bf16.mxu0 0
        %6872 = vmatpush1.bf16.msra.mxu0 0
        %6873 = vmatprep.subr.bf16.mxu0 0
        %6874 = vmatpush1.bf16.msra.mxu0 0
        %6875 = vmatprep.subr.bf16.mxu0 0
        %6876 = vmatpush1.bf16.msra.mxu0 0
        %6877 = vmatprep.subr.bf16.mxu0 0
        %6878 = vmatpush1.bf16.msra.mxu0 0
        %6879 = vmatprep.subr.bf16.mxu0 0
        %6880 = vmatpush1.bf16.msra.mxu0 0
        %6881 = vmatprep.subr.bf16.mxu0 0
        %6882 = vmatpush1.bf16.msra.mxu0 0
        %6883 = vmatprep.subr.bf16.mxu0 0
        %6884 = vmatpush1.bf16.msra.mxu0 0
        %6885 = vmatprep.subr.bf16.mxu0 0
        %6886 = vmatpush1.bf16.msra.mxu0 0
        %6887 = vmatprep.subr.bf16.mxu0 0
        %6888 = vmatpush1.bf16.msra.mxu0 0
        %6889 = vmatprep.subr.bf16.mxu0 0
        %6890 = vmatpush1.bf16.msra.mxu0 0
        %6891 = vmatprep.subr.bf16.mxu0 0
        %6892 = vmatpush1.bf16.msra.mxu0 0
        %6893 = vmatprep.mubr.bf16.mxu0 0
        %6894 = vmatmul.mubr.bf16.gmra.mrb[0].mxu0 %v6859
        %v6895 = vpop.f32.mrb[0].mxu0
        %v6896 = vadd.f32 0.0, %v6895
        %v6897 = vpop.f32.mrb[0].mxu0
        %v6898 = vpop.f32.mrb[0].mxu0
        %v6899 = vadd.f32 0.0, %v6898
        %v6900 = vpop.f32.mrb[0].mxu0
        %6901 = vdwg.mxu0
        %v6902 = vadd.f32 %v6789, %v6896
        %v6903 = vadd.f32 %v6790, %v6899
        %s6904 = scalar_lea.vmem %s55, 80
        %v6905 = vld [vmem:[%s6904] sm:$0xf]
        %v6906 = vld [vmem:[%s6904 + $0x4] sm:$0xf]
        %v6907 = vld [vmem:[%s6904 + $0x8] sm:$0xf]
        %v6908 = vld [vmem:[%s6904 + $0xc] sm:$0xf]
        %v6913 = vunpack.c.l.b16 %v6905
        %v6914 = vunpack.c.l.b16 %v6906
        %v6915 = vunpack.c.l.b16 %v6907
        %v6916 = vunpack.c.l.b16 %v6908
        %v6917 = vpack.c.b16 %v6914, %v6913
        %v6918 = vpack.c.b16 %v6916, %v6915
        %6921 = vmatprep.subr.bf16.mxu0 0
        %6922 = vmatpush1.bf16.msra.mxu0 %v6917
        %6923 = vmatprep.subr.bf16.mxu0 0
        %6924 = vmatpush1.bf16.msra.mxu0 %v6918
        %6925 = vmatprep.subr.bf16.mxu0 0
        %6926 = vmatpush1.bf16.msra.mxu0 0
        %6927 = vmatprep.subr.bf16.mxu0 0
        %6928 = vmatpush1.bf16.msra.mxu0 0
        %6929 = vmatprep.subr.bf16.mxu0 0
        %6930 = vmatpush1.bf16.msra.mxu0 0
        %6931 = vmatprep.subr.bf16.mxu0 0
        %6932 = vmatpush1.bf16.msra.mxu0 0
        %6933 = vmatprep.subr.bf16.mxu0 0
        %6934 = vmatpush1.bf16.msra.mxu0 0
        %6935 = vmatprep.subr.bf16.mxu0 0
        %6936 = vmatpush1.bf16.msra.mxu0 0
        %6937 = vmatprep.subr.bf16.mxu0 0
        %6938 = vmatpush1.bf16.msra.mxu0 0
        %6939 = vmatprep.subr.bf16.mxu0 0
        %6940 = vmatpush1.bf16.msra.mxu0 0
        %6941 = vmatprep.subr.bf16.mxu0 0
        %6942 = vmatpush1.bf16.msra.mxu0 0
        %6943 = vmatprep.subr.bf16.mxu0 0
        %6944 = vmatpush1.bf16.msra.mxu0 0
        %6945 = vmatprep.subr.bf16.mxu0 0
        %6946 = vmatpush1.bf16.msra.mxu0 0
        %6947 = vmatprep.subr.bf16.mxu0 0
        %6948 = vmatpush1.bf16.msra.mxu0 0
        %6949 = vmatprep.subr.bf16.mxu0 0
        %6950 = vmatpush1.bf16.msra.mxu0 0
        %6951 = vmatprep.subr.bf16.mxu0 0
        %6952 = vmatpush1.bf16.msra.mxu0 0
        %6953 = vmatprep.mubr.bf16.mxu0 0
        %6954 = vmatmul.mubr.bf16.gmra.mrb[0].mxu0 %v6359
        %v6955 = vpop.f32.mrb[0].mxu0
        %v6956 = vadd.f32 0.0, %v6955
        %v6957 = vpop.f32.mrb[0].mxu0
        %v6958 = vpop.f32.mrb[0].mxu0
        %v6959 = vadd.f32 0.0, %v6958
        %v6960 = vpop.f32.mrb[0].mxu0
        %6961 = vdwg.mxu0
        %s6962 = scalar_lea.vmem %s9, 40
        %v6963 = vld [vmem:[%s6962] sm:$0xf]
        %v6964 = vld [vmem:[%s6962 + $0x4] sm:$0xf]
        %v6965 = vpack.c.bf16 %v6959, %v6956
        %v6968 = vunpack.c.l.b16 %v6963
        %v6969 = vunpack.c.l.b16 %v6964
        %v6970 = vpack.c.b16 %v6969, %v6968
        %v6972 = vsel %vm2200, %v6970, 0
        %6974 = vmatprep.subr.bf16.mxu0 0
        %6975 = vmatpush1.bf16.msra.mxu0 %v6965
        %6976 = vmatprep.subr.bf16.mxu0 0
        %6977 = vmatpush1.bf16.msra.mxu0 0
        %6978 = vmatprep.subr.bf16.mxu0 0
        %6979 = vmatpush1.bf16.msra.mxu0 0
        %6980 = vmatprep.subr.bf16.mxu0 0
        %6981 = vmatpush1.bf16.msra.mxu0 0
        %6982 = vmatprep.subr.bf16.mxu0 0
        %6983 = vmatpush1.bf16.msra.mxu0 0
        %6984 = vmatprep.subr.bf16.mxu0 0
        %6985 = vmatpush1.bf16.msra.mxu0 0
        %6986 = vmatprep.subr.bf16.mxu0 0
        %6987 = vmatpush1.bf16.msra.mxu0 0
        %6988 = vmatprep.subr.bf16.mxu0 0
        %6989 = vmatpush1.bf16.msra.mxu0 0
        %6990 = vmatprep.subr.bf16.mxu0 0
        %6991 = vmatpush1.bf16.msra.mxu0 0
        %6992 = vmatprep.subr.bf16.mxu0 0
        %6993 = vmatpush1.bf16.msra.mxu0 0
        %6994 = vmatprep.subr.bf16.mxu0 0
        %6995 = vmatpush1.bf16.msra.mxu0 0
        %6996 = vmatprep.subr.bf16.mxu0 0
        %6997 = vmatpush1.bf16.msra.mxu0 0
        %6998 = vmatprep.subr.bf16.mxu0 0
        %6999 = vmatpush1.bf16.msra.mxu0 0
        %7000 = vmatprep.subr.bf16.mxu0 0
        %7001 = vmatpush1.bf16.msra.mxu0 0
        %7002 = vmatprep.subr.bf16.mxu0 0
        %7003 = vmatpush1.bf16.msra.mxu0 0
        %7004 = vmatprep.subr.bf16.mxu0 0
        %7005 = vmatpush1.bf16.msra.mxu0 0
        %7006 = vmatprep.mubr.bf16.mxu0 0
        %7007 = vmatmul.mubr.bf16.gmra.mrb[0].mxu0 %v6972
        %v7008 = vpop.f32.mrb[0].mxu0
        %v7009 = vadd.f32 0.0, %v7008
        %v7010 = vpop.f32.mrb[0].mxu0
        %v7011 = vpop.f32.mrb[0].mxu0
        %v7012 = vadd.f32 0.0, %v7011
        %v7013 = vpop.f32.mrb[0].mxu0
        %7014 = vdwg.mxu0
        %v7015 = vadd.f32 %v6902, %v7009
        %v7016 = vadd.f32 %v6903, %v7012
        %s7017 = scalar_lea.vmem %s55, 96
        %v7018 = vld [vmem:[%s7017] sm:$0xf]
        %v7019 = vld [vmem:[%s7017 + $0x4] sm:$0xf]
        %v7020 = vld [vmem:[%s7017 + $0x8] sm:$0xf]
        %v7021 = vld [vmem:[%s7017 + $0xc] sm:$0xf]
        %v7026 = vunpack.c.l.b16 %v7018
        %v7027 = vunpack.c.l.b16 %v7019
        %v7028 = vunpack.c.l.b16 %v7020
        %v7029 = vunpack.c.l.b16 %v7021
        %v7030 = vpack.c.b16 %v7027, %v7026
        %v7031 = vpack.c.b16 %v7029, %v7028
        %7034 = vmatprep.subr.bf16.mxu0 0
        %7035 = vmatpush1.bf16.msra.mxu0 %v7030
        %7036 = vmatprep.subr.bf16.mxu0 0
        %7037 = vmatpush1.bf16.msra.mxu0 %v7031
        %7038 = vmatprep.subr.bf16.mxu0 0
        %7039 = vmatpush1.bf16.msra.mxu0 0
        %7040 = vmatprep.subr.bf16.mxu0 0
        %7041 = vmatpush1.bf16.msra.mxu0 0
        %7042 = vmatprep.subr.bf16.mxu0 0
        %7043 = vmatpush1.bf16.msra.mxu0 0
        %7044 = vmatprep.subr.bf16.mxu0 0
        %7045 = vmatpush1.bf16.msra.mxu0 0
        %7046 = vmatprep.subr.bf16.mxu0 0
        %7047 = vmatpush1.bf16.msra.mxu0 0
        %7048 = vmatprep.subr.bf16.mxu0 0
        %7049 = vmatpush1.bf16.msra.mxu0 0
        %7050 = vmatprep.subr.bf16.mxu0 0
        %7051 = vmatpush1.bf16.msra.mxu0 0
        %7052 = vmatprep.subr.bf16.mxu0 0
        %7053 = vmatpush1.bf16.msra.mxu0 0
        %7054 = vmatprep.subr.bf16.mxu0 0
        %7055 = vmatpush1.bf16.msra.mxu0 0
        %7056 = vmatprep.subr.bf16.mxu0 0
        %7057 = vmatpush1.bf16.msra.mxu0 0
        %7058 = vmatprep.subr.bf16.mxu0 0
        %7059 = vmatpush1.bf16.msra.mxu0 0
        %7060 = vmatprep.subr.bf16.mxu0 0
        %7061 = vmatpush1.bf16.msra.mxu0 0
        %7062 = vmatprep.subr.bf16.mxu0 0
        %7063 = vmatpush1.bf16.msra.mxu0 0
        %7064 = vmatprep.subr.bf16.mxu0 0
        %7065 = vmatpush1.bf16.msra.mxu0 0
        %7066 = vmatprep.mubr.bf16.mxu0 0
        %7067 = vmatmul.mubr.bf16.gmra.mrb[0].mxu0 %v6359
        %v7068 = vpop.f32.mrb[0].mxu0
        %v7069 = vadd.f32 0.0, %v7068
        %v7070 = vpop.f32.mrb[0].mxu0
        %v7071 = vpop.f32.mrb[0].mxu0
        %v7072 = vadd.f32 0.0, %v7071
        %v7073 = vpop.f32.mrb[0].mxu0
        %7074 = vdwg.mxu0
        %s7075 = scalar_lea.vmem %s9, 48
        %v7076 = vld [vmem:[%s7075] sm:$0xf]
        %v7077 = vld [vmem:[%s7075 + $0x4] sm:$0xf]
        %v7078 = vpack.c.bf16 %v7072, %v7069
        %v7081 = vunpack.c.l.b16 %v7076
        %v7082 = vunpack.c.l.b16 %v7077
        %v7083 = vpack.c.b16 %v7082, %v7081
        %v7085 = vsel %vm2200, %v7083, 0
        %7087 = vmatprep.subr.bf16.mxu0 0
        %7088 = vmatpush1.bf16.msra.mxu0 %v7078
        %7089 = vmatprep.subr.bf16.mxu0 0
        %7090 = vmatpush1.bf16.msra.mxu0 0
        %7091 = vmatprep.subr.bf16.mxu0 0
        %7092 = vmatpush1.bf16.msra.mxu0 0
        %7093 = vmatprep.subr.bf16.mxu0 0
        %7094 = vmatpush1.bf16.msra.mxu0 0
        %7095 = vmatprep.subr.bf16.mxu0 0
        %7096 = vmatpush1.bf16.msra.mxu0 0
        %7097 = vmatprep.subr.bf16.mxu0 0
        %7098 = vmatpush1.bf16.msra.mxu0 0
        %7099 = vmatprep.subr.bf16.mxu0 0
        %7100 = vmatpush1.bf16.msra.mxu0 0
        %7101 = vmatprep.subr.bf16.mxu0 0
        %7102 = vmatpush1.bf16.msra.mxu0 0
        %7103 = vmatprep.subr.bf16.mxu0 0
        %7104 = vmatpush1.bf16.msra.mxu0 0
        %7105 = vmatprep.subr.bf16.mxu0 0
        %7106 = vmatpush1.bf16.msra.mxu0 0
        %7107 = vmatprep.subr.bf16.mxu0 0
        %7108 = vmatpush1.bf16.msra.mxu0 0
        %7109 = vmatprep.subr.bf16.mxu0 0
        %7110 = vmatpush1.bf16.msra.mxu0 0
        %7111 = vmatprep.subr.bf16.mxu0 0
        %7112 = vmatpush1.bf16.msra.mxu0 0
        %7113 = vmatprep.subr.bf16.mxu0 0
        %7114 = vmatpush1.bf16.msra.mxu0 0
        %7115 = vmatprep.subr.bf16.mxu0 0
        %7116 = vmatpush1.bf16.msra.mxu0 0
        %7117 = vmatprep.subr.bf16.mxu0 0
        %7118 = vmatpush1.bf16.msra.mxu0 0
        %7119 = vmatprep.mubr.bf16.mxu0 0
        %7120 = vmatmul.mubr.bf16.gmra.mrb[0].mxu0 %v7085
        %v7121 = vpop.f32.mrb[0].mxu0
        %v7122 = vadd.f32 0.0, %v7121
        %v7123 = vpop.f32.mrb[0].mxu0
        %v7124 = vpop.f32.mrb[0].mxu0
        %v7125 = vadd.f32 0.0, %v7124
        %v7126 = vpop.f32.mrb[0].mxu0
        %7127 = vdwg.mxu0
        %v7128 = vadd.f32 %v7015, %v7122
        %v7129 = vadd.f32 %v7016, %v7125
        %s7130 = scalar_lea.vmem %s55, 112
        %v7131 = vld [vmem:[%s7130] sm:$0xf]
        %v7132 = vld [vmem:[%s7130 + $0x4] sm:$0xf]
        %v7133 = vld [vmem:[%s7130 + $0x8] sm:$0xf]
        %v7134 = vld [vmem:[%s7130 + $0xc] sm:$0xf]
        %v7139 = vunpack.c.l.b16 %v7131
        %v7140 = vunpack.c.l.b16 %v7132
        %v7141 = vunpack.c.l.b16 %v7133
        %v7142 = vunpack.c.l.b16 %v7134
        %v7143 = vpack.c.b16 %v7140, %v7139
        %v7144 = vpack.c.b16 %v7142, %v7141
        %7147 = vmatprep.subr.bf16.mxu0 0
        %7148 = vmatpush1.bf16.msra.mxu0 %v7143
        %7149 = vmatprep.subr.bf16.mxu0 0
        %7150 = vmatpush1.bf16.msra.mxu0 %v7144
        %7151 = vmatprep.subr.bf16.mxu0 0
        %7152 = vmatpush1.bf16.msra.mxu0 0
        %7153 = vmatprep.subr.bf16.mxu0 0
        %7154 = vmatpush1.bf16.msra.mxu0 0
        %7155 = vmatprep.subr.bf16.mxu0 0
        %7156 = vmatpush1.bf16.msra.mxu0 0
        %7157 = vmatprep.subr.bf16.mxu0 0
        %7158 = vmatpush1.bf16.msra.mxu0 0
        %7159 = vmatprep.subr.bf16.mxu0 0
        %7160 = vmatpush1.bf16.msra.mxu0 0
        %7161 = vmatprep.subr.bf16.mxu0 0
        %7162 = vmatpush1.bf16.msra.mxu0 0
        %7163 = vmatprep.subr.bf16.mxu0 0
        %7164 = vmatpush1.bf16.msra.mxu0 0
        %7165 = vmatprep.subr.bf16.mxu0 0
        %7166 = vmatpush1.bf16.msra.mxu0 0
        %7167 = vmatprep.subr.bf16.mxu0 0
        %7168 = vmatpush1.bf16.msra.mxu0 0
        %7169 = vmatprep.subr.bf16.mxu0 0
        %7170 = vmatpush1.bf16.msra.mxu0 0
        %7171 = vmatprep.subr.bf16.mxu0 0
        %7172 = vmatpush1.bf16.msra.mxu0 0
        %7173 = vmatprep.subr.bf16.mxu0 0
        %7174 = vmatpush1.bf16.msra.mxu0 0
        %7175 = vmatprep.subr.bf16.mxu0 0
        %7176 = vmatpush1.bf16.msra.mxu0 0
        %7177 = vmatprep.subr.bf16.mxu0 0
        %7178 = vmatpush1.bf16.msra.mxu0 0
        %7179 = vmatprep.mubr.bf16.mxu0 0
        %7180 = vmatmul.mubr.bf16.gmra.mrb[0].mxu0 %v6359
        %v7181 = vpop.f32.mrb[0].mxu0
        %v7182 = vadd.f32 0.0, %v7181
        %v7183 = vpop.f32.mrb[0].mxu0
        %v7184 = vpop.f32.mrb[0].mxu0
        %v7185 = vadd.f32 0.0, %v7184
        %v7186 = vpop.f32.mrb[0].mxu0
        %7187 = vdwg.mxu0
        %s7188 = scalar_lea.vmem %s9, 56
        %v7189 = vld [vmem:[%s7188] sm:$0xf]
        %v7190 = vld [vmem:[%s7188 + $0x4] sm:$0xf]
        %v7191 = vpack.c.bf16 %v7185, %v7182
        %v7194 = vunpack.c.l.b16 %v7189
        %v7195 = vunpack.c.l.b16 %v7190
        %v7196 = vpack.c.b16 %v7195, %v7194
        %v7198 = vsel %vm2200, %v7196, 0
        %7200 = vmatprep.subr.bf16.mxu0 0
        %7201 = vmatpush1.bf16.msra.mxu0 %v7191
        %7202 = vmatprep.subr.bf16.mxu0 0
        %7203 = vmatpush1.bf16.msra.mxu0 0
        %7204 = vmatprep.subr.bf16.mxu0 0
        %7205 = vmatpush1.bf16.msra.mxu0 0
        %7206 = vmatprep.subr.bf16.mxu0 0
        %7207 = vmatpush1.bf16.msra.mxu0 0
        %7208 = vmatprep.subr.bf16.mxu0 0
        %7209 = vmatpush1.bf16.msra.mxu0 0
        %7210 = vmatprep.subr.bf16.mxu0 0
        %7211 = vmatpush1.bf16.msra.mxu0 0
        %7212 = vmatprep.subr.bf16.mxu0 0
        %7213 = vmatpush1.bf16.msra.mxu0 0
        %7214 = vmatprep.subr.bf16.mxu0 0
        %7215 = vmatpush1.bf16.msra.mxu0 0
        %7216 = vmatprep.subr.bf16.mxu0 0
        %7217 = vmatpush1.bf16.msra.mxu0 0
        %7218 = vmatprep.subr.bf16.mxu0 0
        %7219 = vmatpush1.bf16.msra.mxu0 0
        %7220 = vmatprep.subr.bf16.mxu0 0
        %7221 = vmatpush1.bf16.msra.mxu0 0
        %7222 = vmatprep.subr.bf16.mxu0 0
        %7223 = vmatpush1.bf16.msra.mxu0 0
        %7224 = vmatprep.subr.bf16.mxu0 0
        %7225 = vmatpush1.bf16.msra.mxu0 0
        %7226 = vmatprep.subr.bf16.mxu0 0
        %7227 = vmatpush1.bf16.msra.mxu0 0
        %7228 = vmatprep.subr.bf16.mxu0 0
        %7229 = vmatpush1.bf16.msra.mxu0 0
        %7230 = vmatprep.subr.bf16.mxu0 0
        %7231 = vmatpush1.bf16.msra.mxu0 0
        %7232 = vmatprep.mubr.bf16.mxu0 0
        %7233 = vmatmul.mubr.bf16.gmra.mrb[0].mxu0 %v7198
        %v7234 = vpop.f32.mrb[0].mxu0
        %v7235 = vadd.f32 0.0, %v7234
        %v7236 = vpop.f32.mrb[0].mxu0
        %v7237 = vpop.f32.mrb[0].mxu0
        %v7238 = vadd.f32 0.0, %v7237
        %v7239 = vpop.f32.mrb[0].mxu0
        %7240 = vdwg.mxu0
        %v7241 = vadd.f32 %v7128, %v7235
        %v7242 = vadd.f32 %v7129, %v7238
        %s7243 = scalar_lea.vmem %s55, 128
        %v7244 = vld [vmem:[%s7243] sm:$0xf]
        %v7245 = vld [vmem:[%s7243 + $0x4] sm:$0xf]
        %v7246 = vld [vmem:[%s7243 + $0x8] sm:$0xf]
        %v7247 = vld [vmem:[%s7243 + $0xc] sm:$0xf]
        %v7252 = vunpack.c.l.b16 %v7244
        %v7253 = vunpack.c.l.b16 %v7245
        %v7254 = vunpack.c.l.b16 %v7246
        %v7255 = vunpack.c.l.b16 %v7247
        %v7256 = vpack.c.b16 %v7253, %v7252
        %v7257 = vpack.c.b16 %v7255, %v7254
        %7260 = vmatprep.subr.bf16.mxu0 0
        %7261 = vmatpush1.bf16.msra.mxu0 %v7256
        %7262 = vmatprep.subr.bf16.mxu0 0
        %7263 = vmatpush1.bf16.msra.mxu0 %v7257
        %7264 = vmatprep.subr.bf16.mxu0 0
        %7265 = vmatpush1.bf16.msra.mxu0 0
        %7266 = vmatprep.subr.bf16.mxu0 0
        %7267 = vmatpush1.bf16.msra.mxu0 0
        %7268 = vmatprep.subr.bf16.mxu0 0
        %7269 = vmatpush1.bf16.msra.mxu0 0
        %7270 = vmatprep.subr.bf16.mxu0 0
        %7271 = vmatpush1.bf16.msra.mxu0 0
        %7272 = vmatprep.subr.bf16.mxu0 0
        %7273 = vmatpush1.bf16.msra.mxu0 0
        %7274 = vmatprep.subr.bf16.mxu0 0
        %7275 = vmatpush1.bf16.msra.mxu0 0
        %7276 = vmatprep.subr.bf16.mxu0 0
        %7277 = vmatpush1.bf16.msra.mxu0 0
        %7278 = vmatprep.subr.bf16.mxu0 0
        %7279 = vmatpush1.bf16.msra.mxu0 0
        %7280 = vmatprep.subr.bf16.mxu0 0
        %7281 = vmatpush1.bf16.msra.mxu0 0
        %7282 = vmatprep.subr.bf16.mxu0 0
        %7283 = vmatpush1.bf16.msra.mxu0 0
        %7284 = vmatprep.subr.bf16.mxu0 0
        %7285 = vmatpush1.bf16.msra.mxu0 0
        %7286 = vmatprep.subr.bf16.mxu0 0
        %7287 = vmatpush1.bf16.msra.mxu0 0
        %7288 = vmatprep.subr.bf16.mxu0 0
        %7289 = vmatpush1.bf16.msra.mxu0 0
        %7290 = vmatprep.subr.bf16.mxu0 0
        %7291 = vmatpush1.bf16.msra.mxu0 0
        %7292 = vmatprep.mubr.bf16.mxu0 0
        %7293 = vmatmul.mubr.bf16.gmra.mrb[0].mxu0 %v6359
        %v7294 = vpop.f32.mrb[0].mxu0
        %v7295 = vadd.f32 0.0, %v7294
        %v7296 = vpop.f32.mrb[0].mxu0
        %v7297 = vpop.f32.mrb[0].mxu0
        %v7298 = vadd.f32 0.0, %v7297
        %v7299 = vpop.f32.mrb[0].mxu0
        %7300 = vdwg.mxu0
        %s7301 = scalar_lea.vmem %s9, 64
        %v7302 = vld [vmem:[%s7301] sm:$0xf]
        %v7303 = vld [vmem:[%s7301 + $0x4] sm:$0xf]
        %v7304 = vpack.c.bf16 %v7298, %v7295
        %v7307 = vunpack.c.l.b16 %v7302
        %v7308 = vunpack.c.l.b16 %v7303
        %v7309 = vpack.c.b16 %v7308, %v7307
        %v7311 = vsel %vm2200, %v7309, 0
        %7313 = vmatprep.subr.bf16.mxu0 0
        %7314 = vmatpush1.bf16.msra.mxu0 %v7304
        %7315 = vmatprep.subr.bf16.mxu0 0
        %7316 = vmatpush1.bf16.msra.mxu0 0
        %7317 = vmatprep.subr.bf16.mxu0 0
        %7318 = vmatpush1.bf16.msra.mxu0 0
        %7319 = vmatprep.subr.bf16.mxu0 0
        %7320 = vmatpush1.bf16.msra.mxu0 0
        %7321 = vmatprep.subr.bf16.mxu0 0
        %7322 = vmatpush1.bf16.msra.mxu0 0
        %7323 = vmatprep.subr.bf16.mxu0 0
        %7324 = vmatpush1.bf16.msra.mxu0 0
        %7325 = vmatprep.subr.bf16.mxu0 0
        %7326 = vmatpush1.bf16.msra.mxu0 0
        %7327 = vmatprep.subr.bf16.mxu0 0
        %7328 = vmatpush1.bf16.msra.mxu0 0
        %7329 = vmatprep.subr.bf16.mxu0 0
        %7330 = vmatpush1.bf16.msra.mxu0 0
        %7331 = vmatprep.subr.bf16.mxu0 0
        %7332 = vmatpush1.bf16.msra.mxu0 0
        %7333 = vmatprep.subr.bf16.mxu0 0
        %7334 = vmatpush1.bf16.msra.mxu0 0
        %7335 = vmatprep.subr.bf16.mxu0 0
        %7336 = vmatpush1.bf16.msra.mxu0 0
        %7337 = vmatprep.subr.bf16.mxu0 0
        %7338 = vmatpush1.bf16.msra.mxu0 0
        %7339 = vmatprep.subr.bf16.mxu0 0
        %7340 = vmatpush1.bf16.msra.mxu0 0
        %7341 = vmatprep.subr.bf16.mxu0 0
        %7342 = vmatpush1.bf16.msra.mxu0 0
        %7343 = vmatprep.subr.bf16.mxu0 0
        %7344 = vmatpush1.bf16.msra.mxu0 0
        %7345 = vmatprep.mubr.bf16.mxu0 0
        %7346 = vmatmul.mubr.bf16.gmra.mrb[0].mxu0 %v7311
        %v7347 = vpop.f32.mrb[0].mxu0
        %v7348 = vadd.f32 0.0, %v7347
        %v7349 = vpop.f32.mrb[0].mxu0
        %v7350 = vpop.f32.mrb[0].mxu0
        %v7351 = vadd.f32 0.0, %v7350
        %v7352 = vpop.f32.mrb[0].mxu0
        %7353 = vdwg.mxu0
        %v7354 = vadd.f32 %v7241, %v7348
        %v7355 = vadd.f32 %v7242, %v7351
        %v7356 = vld [vmem:[%s57] sm:$0x1]
        %v7358 = vlaneseq
        %v7359 = vshrl.u32 %v7358, 7
        %v7360 = vsub.s32 0, %v7359
        %v7361 = vrot.slane %v7356, %v7360
        %v7363 = vmul.f32 %v6242, %v7361
        %v7364 = vmul.f32 %v6245, %v7361
        %v7365 = vld [vmem:[%s59] sm:$0x1]
        %v7367 = vlaneseq
        %v7368 = vshrl.u32 %v7367, 7
        %v7369 = vsub.s32 0, %v7368
        %v7370 = vrot.slane %v7365, %v7369
        %v7372 = vadd.f32 %v7363, %v7370
        %v7373 = vadd.f32 %v7364, %v7370
        %v7374 = vmax.f32 %v7372, 0.0
        %v7375 = vmax.f32 %v7373, 0.0
        %v7376 = vld [vmem:[%s61] sm:$0xf]
        %v7377 = vld [vmem:[%s61 + $0x4] sm:$0xf]
        %v7378 = vpack.c.bf16 %v7375, %v7374
        %7379 = vrot.lane.b32.xlu0 %v7361, 112
        %v7380 = vpop.permute.xlu0 %7379
        %v7382 = vmul.f32 %v7354, %v7380
        %v7383 = vmul.f32 %v7355, %v7380
        %7384 = vrot.lane.b32.xlu0 %v7370, 112
        %v7385 = vpop.permute.xlu0 %7384
        %v7387 = vadd.f32 %v7382, %v7385
        %v7388 = vadd.f32 %v7383, %v7385
        %v7389 = vmax.f32 %v7387, 0.0
        %v7390 = vmax.f32 %v7388, 0.0
        %v7391 = vld [vmem:[%s61 + $0x8] sm:$0xf]
        %v7392 = vpack.c.bf16 %v7390, %v7389
        %v7394 = vsel %vm4195, %v7392, 0
        %v7397 = vsel %vm4208, %v7391, 0
        %7399 = vmatprep.subr.bf16.mxu0 0
        %7400 = vmatpush1.bf16.msra.mxu0 %v7397
        %7401 = vmatprep.subr.bf16.mxu0 0
        %7402 = vmatpush1.bf16.msra.mxu0 0
        %7403 = vmatprep.subr.bf16.mxu0 0
        %7404 = vmatpush1.bf16.msra.mxu0 0
        %7405 = vmatprep.subr.bf16.mxu0 0
        %7406 = vmatpush1.bf16.msra.mxu0 0
        %7407 = vmatprep.subr.bf16.mxu0 0
        %7408 = vmatpush1.bf16.msra.mxu0 0
        %7409 = vmatprep.subr.bf16.mxu0 0
        %7410 = vmatpush1.bf16.msra.mxu0 0
        %7411 = vmatprep.subr.bf16.mxu0 0
        %7412 = vmatpush1.bf16.msra.mxu0 0
        %7413 = vmatprep.subr.bf16.mxu0 0
        %7414 = vmatpush1.bf16.msra.mxu0 0
        %7415 = vmatprep.subr.bf16.mxu0 0
        %7416 = vmatpush1.bf16.msra.mxu0 0
        %7417 = vmatprep.subr.bf16.mxu0 0
        %7418 = vmatpush1.bf16.msra.mxu0 0
        %7419 = vmatprep.subr.bf16.mxu0 0
        %7420 = vmatpush1.bf16.msra.mxu0 0
        %7421 = vmatprep.subr.bf16.mxu0 0
        %7422 = vmatpush1.bf16.msra.mxu0 0
        %7423 = vmatprep.subr.bf16.mxu0 0
        %7424 = vmatpush1.bf16.msra.mxu0 0
        %7425 = vmatprep.subr.bf16.mxu0 0
        %7426 = vmatpush1.bf16.msra.mxu0 0
        %7427 = vmatprep.subr.bf16.mxu0 0
        %7428 = vmatpush1.bf16.msra.mxu0 0
        %7429 = vmatprep.subr.bf16.mxu0 0
        %7430 = vmatpush1.bf16.msra.mxu0 0
        %7431 = vmatprep.mubr.bf16.mxu0 0
        %7432 = vmatmul.mubr.bf16.gmra.mrb[0].mxu0 %v7394
        %v7433 = vpop.f32.mrb[0].mxu0
        %v7434 = vadd.f32 0.0, %v7433
        %v7435 = vpop.f32.mrb[0].mxu0
        %v7436 = vpop.f32.mrb[0].mxu0
        %v7437 = vadd.f32 0.0, %v7436
        %v7438 = vpop.f32.mrb[0].mxu0
        %7439 = vdwg.mxu0
        %v7442 = vunpack.c.l.b16 %v7376
        %v7443 = vunpack.c.l.b16 %v7377
        %v7444 = vpack.c.b16 %v7443, %v7442
        %v7447 = vsel %vm2200, %v7378, 0
        %7449 = vmatprep.subr.bf16.mxu0 0
        %7450 = vmatpush1.bf16.msra.mxu0 %v7444
        %7451 = vmatprep.subr.bf16.mxu0 0
        %7452 = vmatpush1.bf16.msra.mxu0 0
        %7453 = vmatprep.subr.bf16.mxu0 0
        %7454 = vmatpush1.bf16.msra.mxu0 0
        %7455 = vmatprep.subr.bf16.mxu0 0
        %7456 = vmatpush1.bf16.msra.mxu0 0
        %7457 = vmatprep.subr.bf16.mxu0 0
        %7458 = vmatpush1.bf16.msra.mxu0 0
        %7459 = vmatprep.subr.bf16.mxu0 0
        %7460 = vmatpush1.bf16.msra.mxu0 0
        %7461 = vmatprep.subr.bf16.mxu0 0
        %7462 = vmatpush1.bf16.msra.mxu0 0
        %7463 = vmatprep.subr.bf16.mxu0 0
        %7464 = vmatpush1.bf16.msra.mxu0 0
        %7465 = vmatprep.subr.bf16.mxu0 0
        %7466 = vmatpush1.bf16.msra.mxu0 0
        %7467 = vmatprep.subr.bf16.mxu0 0
        %7468 = vmatpush1.bf16.msra.mxu0 0
        %7469 = vmatprep.subr.bf16.mxu0 0
        %7470 = vmatpush1.bf16.msra.mxu0 0
        %7471 = vmatprep.subr.bf16.mxu0 0
        %7472 = vmatpush1.bf16.msra.mxu0 0
        %7473 = vmatprep.subr.bf16.mxu0 0
        %7474 = vmatpush1.bf16.msra.mxu0 0
        %7475 = vmatprep.subr.bf16.mxu0 0
        %7476 = vmatpush1.bf16.msra.mxu0 0
        %7477 = vmatprep.subr.bf16.mxu0 0
        %7478 = vmatpush1.bf16.msra.mxu0 0
        %7479 = vmatprep.subr.bf16.mxu0 0
        %7480 = vmatpush1.bf16.msra.mxu0 0
        %7481 = vmatprep.mubr.bf16.mxu0 0
        %7482 = vmatmul.mubr.bf16.gmra.mrb[0].mxu0 %v7447
        %v7483 = vpop.f32.mrb[0].mxu0
        %v7484 = vadd.f32 %v7434, %v7483
        %v7485 = vpop.f32.mrb[0].mxu0
        %v7486 = vpop.f32.mrb[0].mxu0
        %v7487 = vadd.f32 %v7437, %v7486
        %v7488 = vpop.f32.mrb[0].mxu0
        %7489 = vdwg.mxu0
        %v7490 = vld [vmem:[%s63] sm:$0x1]
        %v7492 = vlaneseq
        %v7493 = vshrl.u32 %v7492, 7
        %v7494 = vsub.s32 0, %v7493
        %v7495 = vrot.slane %v7490, %v7494
        %v7497 = vmul.f32 %v7484, %v7495
        %v7498 = vmul.f32 %v7487, %v7495
        %v7499 = vld [vmem:[%s65] sm:$0x1]
        %v7501 = vlaneseq
        %v7502 = vshrl.u32 %v7501, 7
        %v7503 = vsub.s32 0, %v7502
        %v7504 = vrot.slane %v7499, %v7503
        %v7506 = vadd.f32 %v7497, %v7504
        %v7507 = vadd.f32 %v7498, %v7504
        %v7508 = vmax.f32 %v7506, 0.0
        %v7509 = vmax.f32 %v7507, 0.0
        %v7510 = vpack.c.bf16 %v7509, %v7508
        %v7511 = vld [vmem:[%s67] sm:$0xf]
        %v7512 = vld [vmem:[%s67 + $0x4] sm:$0xf]
        %v7513 = vld [vmem:[%s67 + $0x8] sm:$0xf]
        %v7514 = vld [vmem:[%s67 + $0xc] sm:$0xf]
        %v7519 = vunpack.c.l.b16 %v7511
        %v7520 = vunpack.c.l.b16 %v7512
        %v7521 = vunpack.c.l.b16 %v7513
        %v7522 = vunpack.c.l.b16 %v7514
        %v7523 = vpack.c.b16 %v7520, %v7519
        %v7524 = vpack.c.b16 %v7522, %v7521
        %v7528 = vsel %vm2336, %v7510, 0
        %7530 = vmatprep.subr.bf16.mxu0 0
        %7531 = vmatpush1.bf16.msra.mxu0 %v7523
        %7532 = vmatprep.subr.bf16.mxu0 0
        %7533 = vmatpush1.bf16.msra.mxu0 %v7524
        %7534 = vmatprep.subr.bf16.mxu0 0
        %7535 = vmatpush1.bf16.msra.mxu0 0
        %7536 = vmatprep.subr.bf16.mxu0 0
        %7537 = vmatpush1.bf16.msra.mxu0 0
        %7538 = vmatprep.subr.bf16.mxu0 0
        %7539 = vmatpush1.bf16.msra.mxu0 0
        %7540 = vmatprep.subr.bf16.mxu0 0
        %7541 = vmatpush1.bf16.msra.mxu0 0
        %7542 = vmatprep.subr.bf16.mxu0 0
        %7543 = vmatpush1.bf16.msra.mxu0 0
        %7544 = vmatprep.subr.bf16.mxu0 0
        %7545 = vmatpush1.bf16.msra.mxu0 0
        %7546 = vmatprep.subr.bf16.mxu0 0
        %7547 = vmatpush1.bf16.msra.mxu0 0
        %7548 = vmatprep.subr.bf16.mxu0 0
        %7549 = vmatpush1.bf16.msra.mxu0 0
        %7550 = vmatprep.subr.bf16.mxu0 0
        %7551 = vmatpush1.bf16.msra.mxu0 0
        %7552 = vmatprep.subr.bf16.mxu0 0
        %7553 = vmatpush1.bf16.msra.mxu0 0
        %7554 = vmatprep.subr.bf16.mxu0 0
        %7555 = vmatpush1.bf16.msra.mxu0 0
        %7556 = vmatprep.subr.bf16.mxu0 0
        %7557 = vmatpush1.bf16.msra.mxu0 0
        %7558 = vmatprep.subr.bf16.mxu0 0
        %7559 = vmatpush1.bf16.msra.mxu0 0
        %7560 = vmatprep.subr.bf16.mxu0 0
        %7561 = vmatpush1.bf16.msra.mxu0 0
        %7562 = vmatprep.mubr.bf16.mxu0 0
        %7563 = vmatmul.mubr.bf16.gmra.mrb[0].mxu0 %v7528
        %v7564 = vpop.f32.mrb[0].mxu0
        %v7565 = vadd.f32 0.0, %v7564
        %v7566 = vpop.f32.mrb[0].mxu0
        %v7567 = vpop.f32.mrb[0].mxu0
        %v7568 = vadd.f32 0.0, %v7567
        %v7569 = vpop.f32.mrb[0].mxu0
        %7570 = vdwg.mxu0
        %v7571 = vpack.c.bf16 %v7568, %v7565
        %s7572 = scalar_lea.vmem %s67, 16
        %v7573 = vld [vmem:[%s7572] sm:$0xf]
        %v7574 = vld [vmem:[%s7572 + $0x4] sm:$0xf]
        %v7575 = vld [vmem:[%s7572 + $0x8] sm:$0xf]
        %v7576 = vld [vmem:[%s7572 + $0xc] sm:$0xf]
        %v7581 = vunpack.c.l.b16 %v7573
        %v7582 = vunpack.c.l.b16 %v7574
        %v7583 = vunpack.c.l.b16 %v7575
        %v7584 = vunpack.c.l.b16 %v7576
        %v7585 = vpack.c.b16 %v7582, %v7581
        %v7586 = vpack.c.b16 %v7584, %v7583
        %7589 = vmatprep.subr.bf16.mxu0 0
        %7590 = vmatpush1.bf16.msra.mxu0 %v7585
        %7591 = vmatprep.subr.bf16.mxu0 0
        %7592 = vmatpush1.bf16.msra.mxu0 %v7586
        %7593 = vmatprep.subr.bf16.mxu0 0
        %7594 = vmatpush1.bf16.msra.mxu0 0
        %7595 = vmatprep.subr.bf16.mxu0 0
        %7596 = vmatpush1.bf16.msra.mxu0 0
        %7597 = vmatprep.subr.bf16.mxu0 0
        %7598 = vmatpush1.bf16.msra.mxu0 0
        %7599 = vmatprep.subr.bf16.mxu0 0
        %7600 = vmatpush1.bf16.msra.mxu0 0
        %7601 = vmatprep.subr.bf16.mxu0 0
        %7602 = vmatpush1.bf16.msra.mxu0 0
        %7603 = vmatprep.subr.bf16.mxu0 0
        %7604 = vmatpush1.bf16.msra.mxu0 0
        %7605 = vmatprep.subr.bf16.mxu0 0
        %7606 = vmatpush1.bf16.msra.mxu0 0
        %7607 = vmatprep.subr.bf16.mxu0 0
        %7608 = vmatpush1.bf16.msra.mxu0 0
        %7609 = vmatprep.subr.bf16.mxu0 0
        %7610 = vmatpush1.bf16.msra.mxu0 0
        %7611 = vmatprep.subr.bf16.mxu0 0
        %7612 = vmatpush1.bf16.msra.mxu0 0
        %7613 = vmatprep.subr.bf16.mxu0 0
        %7614 = vmatpush1.bf16.msra.mxu0 0
        %7615 = vmatprep.subr.bf16.mxu0 0
        %7616 = vmatpush1.bf16.msra.mxu0 0
        %7617 = vmatprep.subr.bf16.mxu0 0
        %7618 = vmatpush1.bf16.msra.mxu0 0
        %7619 = vmatprep.subr.bf16.mxu0 0
        %7620 = vmatpush1.bf16.msra.mxu0 0
        %7621 = vmatprep.mubr.bf16.mxu0 0
        %7622 = vmatmul.mubr.bf16.gmra.mrb[0].mxu0 %v7528
        %v7623 = vpop.f32.mrb[0].mxu0
        %v7624 = vadd.f32 0.0, %v7623
        %v7625 = vpop.f32.mrb[0].mxu0
        %v7626 = vpop.f32.mrb[0].mxu0
        %v7627 = vadd.f32 0.0, %v7626
        %v7628 = vpop.f32.mrb[0].mxu0
        %7629 = vdwg.mxu0
        %v7630 = vpack.c.bf16 %v7627, %v7624
        %7631 = vmatprep.subr.bf16.mxu0 0
        %7632 = vmatpush1.bf16.msra.mxu0 %v7630
        %7633 = vmatprep.subr.bf16.mxu0 0
        %7634 = vmatpush1.bf16.msra.mxu0 0
        %7635 = vmatprep.subr.bf16.mxu0 0
        %7636 = vmatpush1.bf16.msra.mxu0 0
        %7637 = vmatprep.subr.bf16.mxu0 0
        %7638 = vmatpush1.bf16.msra.mxu0 0
        %7639 = vmatprep.subr.bf16.mxu0 0
        %7640 = vmatpush1.bf16.msra.mxu0 0
        %7641 = vmatprep.subr.bf16.mxu0 0
        %7642 = vmatpush1.bf16.msra.mxu0 0
        %7643 = vmatprep.subr.bf16.mxu0 0
        %7644 = vmatpush1.bf16.msra.mxu0 0
        %7645 = vmatprep.subr.bf16.mxu0 0
        %7646 = vmatpush1.bf16.msra.mxu0 0
        %7647 = vmatprep.subr.bf16.mxu0 0
        %7648 = vmatpush1.bf16.msra.mxu0 0
        %7649 = vmatprep.subr.bf16.mxu0 0
        %7650 = vmatpush1.bf16.msra.mxu0 0
        %7651 = vmatprep.subr.bf16.mxu0 0
        %7652 = vmatpush1.bf16.msra.mxu0 0
        %7653 = vmatprep.subr.bf16.mxu0 0
        %7654 = vmatpush1.bf16.msra.mxu0 0
        %7655 = vmatprep.subr.bf16.mxu0 0
        %7656 = vmatpush1.bf16.msra.mxu0 0
        %7657 = vmatprep.subr.bf16.mxu0 0
        %7658 = vmatpush1.bf16.msra.mxu0 0
        %7659 = vmatprep.subr.bf16.mxu0 0
        %7660 = vmatpush1.bf16.msra.mxu0 0
        %7661 = vmatprep.subr.bf16.mxu0 0
        %7662 = vmatpush1.bf16.msra.mxu0 0
        %7663 = vmatprep.mubr.bf16.mxu0 0
        %7664 = vmatmul.mubr.bf16.gmra.mrb[0].mxu0 %v6473
        %v7665 = vpop.f32.mrb[0].mxu0
        %v7666 = vadd.f32 0.0, %v7665
        %v7667 = vpop.f32.mrb[0].mxu0
        %v7668 = vpop.f32.mrb[0].mxu0
        %v7669 = vadd.f32 0.0, %v7668
        %v7670 = vpop.f32.mrb[0].mxu0
        %7671 = vdwg.mxu0
        %7672 = vmatprep.subr.bf16.mxu0 0
        %7673 = vmatpush1.bf16.msra.mxu0 %v7571
        %7674 = vmatprep.subr.bf16.mxu0 0
        %7675 = vmatpush1.bf16.msra.mxu0 0
        %7676 = vmatprep.subr.bf16.mxu0 0
        %7677 = vmatpush1.bf16.msra.mxu0 0
        %7678 = vmatprep.subr.bf16.mxu0 0
        %7679 = vmatpush1.bf16.msra.mxu0 0
        %7680 = vmatprep.subr.bf16.mxu0 0
        %7681 = vmatpush1.bf16.msra.mxu0 0
        %7682 = vmatprep.subr.bf16.mxu0 0
        %7683 = vmatpush1.bf16.msra.mxu0 0
        %7684 = vmatprep.subr.bf16.mxu0 0
        %7685 = vmatpush1.bf16.msra.mxu0 0
        %7686 = vmatprep.subr.bf16.mxu0 0
        %7687 = vmatpush1.bf16.msra.mxu0 0
        %7688 = vmatprep.subr.bf16.mxu0 0
        %7689 = vmatpush1.bf16.msra.mxu0 0
        %7690 = vmatprep.subr.bf16.mxu0 0
        %7691 = vmatpush1.bf16.msra.mxu0 0
        %7692 = vmatprep.subr.bf16.mxu0 0
        %7693 = vmatpush1.bf16.msra.mxu0 0
        %7694 = vmatprep.subr.bf16.mxu0 0
        %7695 = vmatpush1.bf16.msra.mxu0 0
        %7696 = vmatprep.subr.bf16.mxu0 0
        %7697 = vmatpush1.bf16.msra.mxu0 0
        %7698 = vmatprep.subr.bf16.mxu0 0
        %7699 = vmatpush1.bf16.msra.mxu0 0
        %7700 = vmatprep.subr.bf16.mxu0 0
        %7701 = vmatpush1.bf16.msra.mxu0 0
        %7702 = vmatprep.subr.bf16.mxu0 0
        %7703 = vmatpush1.bf16.msra.mxu0 0
        %7704 = vmatprep.mubr.bf16.mxu0 0
        %7705 = vmatmul.mubr.bf16.gmra.mrb[0].mxu0 %v6522
        %v7706 = vpop.f32.mrb[0].mxu0
        %v7707 = vadd.f32 %v7666, %v7706
        %v7708 = vpop.f32.mrb[0].mxu0
        %v7709 = vpop.f32.mrb[0].mxu0
        %v7710 = vadd.f32 %v7669, %v7709
        %v7711 = vpop.f32.mrb[0].mxu0
        %7712 = vdwg.mxu0
        %s7713 = scalar_lea.vmem %s67, 32
        %v7714 = vld [vmem:[%s7713] sm:$0xf]
        %v7715 = vld [vmem:[%s7713 + $0x4] sm:$0xf]
        %v7716 = vld [vmem:[%s7713 + $0x8] sm:$0xf]
        %v7717 = vld [vmem:[%s7713 + $0xc] sm:$0xf]
        %v7722 = vunpack.c.l.b16 %v7714
        %v7723 = vunpack.c.l.b16 %v7715
        %v7724 = vunpack.c.l.b16 %v7716
        %v7725 = vunpack.c.l.b16 %v7717
        %v7726 = vpack.c.b16 %v7723, %v7722
        %v7727 = vpack.c.b16 %v7725, %v7724
        %7730 = vmatprep.subr.bf16.mxu0 0
        %7731 = vmatpush1.bf16.msra.mxu0 %v7726
        %7732 = vmatprep.subr.bf16.mxu0 0
        %7733 = vmatpush1.bf16.msra.mxu0 %v7727
        %7734 = vmatprep.subr.bf16.mxu0 0
        %7735 = vmatpush1.bf16.msra.mxu0 0
        %7736 = vmatprep.subr.bf16.mxu0 0
        %7737 = vmatpush1.bf16.msra.mxu0 0
        %7738 = vmatprep.subr.bf16.mxu0 0
        %7739 = vmatpush1.bf16.msra.mxu0 0
        %7740 = vmatprep.subr.bf16.mxu0 0
        %7741 = vmatpush1.bf16.msra.mxu0 0
        %7742 = vmatprep.subr.bf16.mxu0 0
        %7743 = vmatpush1.bf16.msra.mxu0 0
        %7744 = vmatprep.subr.bf16.mxu0 0
        %7745 = vmatpush1.bf16.msra.mxu0 0
        %7746 = vmatprep.subr.bf16.mxu0 0
        %7747 = vmatpush1.bf16.msra.mxu0 0
        %7748 = vmatprep.subr.bf16.mxu0 0
        %7749 = vmatpush1.bf16.msra.mxu0 0
        %7750 = vmatprep.subr.bf16.mxu0 0
        %7751 = vmatpush1.bf16.msra.mxu0 0
        %7752 = vmatprep.subr.bf16.mxu0 0
        %7753 = vmatpush1.bf16.msra.mxu0 0
        %7754 = vmatprep.subr.bf16.mxu0 0
        %7755 = vmatpush1.bf16.msra.mxu0 0
        %7756 = vmatprep.subr.bf16.mxu0 0
        %7757 = vmatpush1.bf16.msra.mxu0 0
        %7758 = vmatprep.subr.bf16.mxu0 0
        %7759 = vmatpush1.bf16.msra.mxu0 0
        %7760 = vmatprep.subr.bf16.mxu0 0
        %7761 = vmatpush1.bf16.msra.mxu0 0
        %7762 = vmatprep.mubr.bf16.mxu0 0
        %7763 = vmatmul.mubr.bf16.gmra.mrb[0].mxu0 %v7528
        %v7764 = vpop.f32.mrb[0].mxu0
        %v7765 = vadd.f32 0.0, %v7764
        %v7766 = vpop.f32.mrb[0].mxu0
        %v7767 = vpop.f32.mrb[0].mxu0
        %v7768 = vadd.f32 0.0, %v7767
        %v7769 = vpop.f32.mrb[0].mxu0
        %7770 = vdwg.mxu0
        %v7771 = vpack.c.bf16 %v7768, %v7765
        %7772 = vmatprep.subr.bf16.mxu0 0
        %7773 = vmatpush1.bf16.msra.mxu0 %v7771
        %7774 = vmatprep.subr.bf16.mxu0 0
        %7775 = vmatpush1.bf16.msra.mxu0 0
        %7776 = vmatprep.subr.bf16.mxu0 0
        %7777 = vmatpush1.bf16.msra.mxu0 0
        %7778 = vmatprep.subr.bf16.mxu0 0
        %7779 = vmatpush1.bf16.msra.mxu0 0
        %7780 = vmatprep.subr.bf16.mxu0 0
        %7781 = vmatpush1.bf16.msra.mxu0 0
        %7782 = vmatprep.subr.bf16.mxu0 0
        %7783 = vmatpush1.bf16.msra.mxu0 0
        %7784 = vmatprep.subr.bf16.mxu0 0
        %7785 = vmatpush1.bf16.msra.mxu0 0
        %7786 = vmatprep.subr.bf16.mxu0 0
        %7787 = vmatpush1.bf16.msra.mxu0 0
        %7788 = vmatprep.subr.bf16.mxu0 0
        %7789 = vmatpush1.bf16.msra.mxu0 0
        %7790 = vmatprep.subr.bf16.mxu0 0
        %7791 = vmatpush1.bf16.msra.mxu0 0
        %7792 = vmatprep.subr.bf16.mxu0 0
        %7793 = vmatpush1.bf16.msra.mxu0 0
        %7794 = vmatprep.subr.bf16.mxu0 0
        %7795 = vmatpush1.bf16.msra.mxu0 0
        %7796 = vmatprep.subr.bf16.mxu0 0
        %7797 = vmatpush1.bf16.msra.mxu0 0
        %7798 = vmatprep.subr.bf16.mxu0 0
        %7799 = vmatpush1.bf16.msra.mxu0 0
        %7800 = vmatprep.subr.bf16.mxu0 0
        %7801 = vmatpush1.bf16.msra.mxu0 0
        %7802 = vmatprep.subr.bf16.mxu0 0
        %7803 = vmatpush1.bf16.msra.mxu0 0
        %7804 = vmatprep.mubr.bf16.mxu0 0
        %7805 = vmatmul.mubr.bf16.gmra.mrb[0].mxu0 %v6633
        %v7806 = vpop.f32.mrb[0].mxu0
        %v7807 = vadd.f32 0.0, %v7806
        %v7808 = vpop.f32.mrb[0].mxu0
        %v7809 = vpop.f32.mrb[0].mxu0
        %v7810 = vadd.f32 0.0, %v7809
        %v7811 = vpop.f32.mrb[0].mxu0
        %7812 = vdwg.mxu0
        %v7813 = vadd.f32 %v7707, %v7807
        %v7814 = vadd.f32 %v7710, %v7810
        %s7815 = scalar_lea.vmem %s67, 48
        %v7816 = vld [vmem:[%s7815] sm:$0xf]
        %v7817 = vld [vmem:[%s7815 + $0x4] sm:$0xf]
        %v7818 = vld [vmem:[%s7815 + $0x8] sm:$0xf]
        %v7819 = vld [vmem:[%s7815 + $0xc] sm:$0xf]
        %v7824 = vunpack.c.l.b16 %v7816
        %v7825 = vunpack.c.l.b16 %v7817
        %v7826 = vunpack.c.l.b16 %v7818
        %v7827 = vunpack.c.l.b16 %v7819
        %v7828 = vpack.c.b16 %v7825, %v7824
        %v7829 = vpack.c.b16 %v7827, %v7826
        %7832 = vmatprep.subr.bf16.mxu0 0
        %7833 = vmatpush1.bf16.msra.mxu0 %v7828
        %7834 = vmatprep.subr.bf16.mxu0 0
        %7835 = vmatpush1.bf16.msra.mxu0 %v7829
        %7836 = vmatprep.subr.bf16.mxu0 0
        %7837 = vmatpush1.bf16.msra.mxu0 0
        %7838 = vmatprep.subr.bf16.mxu0 0
        %7839 = vmatpush1.bf16.msra.mxu0 0
        %7840 = vmatprep.subr.bf16.mxu0 0
        %7841 = vmatpush1.bf16.msra.mxu0 0
        %7842 = vmatprep.subr.bf16.mxu0 0
        %7843 = vmatpush1.bf16.msra.mxu0 0
        %7844 = vmatprep.subr.bf16.mxu0 0
        %7845 = vmatpush1.bf16.msra.mxu0 0
        %7846 = vmatprep.subr.bf16.mxu0 0
        %7847 = vmatpush1.bf16.msra.mxu0 0
        %7848 = vmatprep.subr.bf16.mxu0 0
        %7849 = vmatpush1.bf16.msra.mxu0 0
        %7850 = vmatprep.subr.bf16.mxu0 0
        %7851 = vmatpush1.bf16.msra.mxu0 0
        %7852 = vmatprep.subr.bf16.mxu0 0
        %7853 = vmatpush1.bf16.msra.mxu0 0
        %7854 = vmatprep.subr.bf16.mxu0 0
        %7855 = vmatpush1.bf16.msra.mxu0 0
        %7856 = vmatprep.subr.bf16.mxu0 0
        %7857 = vmatpush1.bf16.msra.mxu0 0
        %7858 = vmatprep.subr.bf16.mxu0 0
        %7859 = vmatpush1.bf16.msra.mxu0 0
        %7860 = vmatprep.subr.bf16.mxu0 0
        %7861 = vmatpush1.bf16.msra.mxu0 0
        %7862 = vmatprep.subr.bf16.mxu0 0
        %7863 = vmatpush1.bf16.msra.mxu0 0
        %7864 = vmatprep.mubr.bf16.mxu0 0
        %7865 = vmatmul.mubr.bf16.gmra.mrb[0].mxu0 %v7528
        %v7866 = vpop.f32.mrb[0].mxu0
        %v7867 = vadd.f32 0.0, %v7866
        %v7868 = vpop.f32.mrb[0].mxu0
        %v7869 = vpop.f32.mrb[0].mxu0
        %v7870 = vadd.f32 0.0, %v7869
        %v7871 = vpop.f32.mrb[0].mxu0
        %7872 = vdwg.mxu0
        %v7873 = vpack.c.bf16 %v7870, %v7867
        %7874 = vmatprep.subr.bf16.mxu0 0
        %7875 = vmatpush1.bf16.msra.mxu0 %v7873
        %7876 = vmatprep.subr.bf16.mxu0 0
        %7877 = vmatpush1.bf16.msra.mxu0 0
        %7878 = vmatprep.subr.bf16.mxu0 0
        %7879 = vmatpush1.bf16.msra.mxu0 0
        %7880 = vmatprep.subr.bf16.mxu0 0
        %7881 = vmatpush1.bf16.msra.mxu0 0
        %7882 = vmatprep.subr.bf16.mxu0 0
        %7883 = vmatpush1.bf16.msra.mxu0 0
        %7884 = vmatprep.subr.bf16.mxu0 0
        %7885 = vmatpush1.bf16.msra.mxu0 0
        %7886 = vmatprep.subr.bf16.mxu0 0
        %7887 = vmatpush1.bf16.msra.mxu0 0
        %7888 = vmatprep.subr.bf16.mxu0 0
        %7889 = vmatpush1.bf16.msra.mxu0 0
        %7890 = vmatprep.subr.bf16.mxu0 0
        %7891 = vmatpush1.bf16.msra.mxu0 0
        %7892 = vmatprep.subr.bf16.mxu0 0
        %7893 = vmatpush1.bf16.msra.mxu0 0
        %7894 = vmatprep.subr.bf16.mxu0 0
        %7895 = vmatpush1.bf16.msra.mxu0 0
        %7896 = vmatprep.subr.bf16.mxu0 0
        %7897 = vmatpush1.bf16.msra.mxu0 0
        %7898 = vmatprep.subr.bf16.mxu0 0
        %7899 = vmatpush1.bf16.msra.mxu0 0
        %7900 = vmatprep.subr.bf16.mxu0 0
        %7901 = vmatpush1.bf16.msra.mxu0 0
        %7902 = vmatprep.subr.bf16.mxu0 0
        %7903 = vmatpush1.bf16.msra.mxu0 0
        %7904 = vmatprep.subr.bf16.mxu0 0
        %7905 = vmatpush1.bf16.msra.mxu0 0
        %7906 = vmatprep.mubr.bf16.mxu0 0
        %7907 = vmatmul.mubr.bf16.gmra.mrb[0].mxu0 %v6746
        %v7908 = vpop.f32.mrb[0].mxu0
        %v7909 = vadd.f32 0.0, %v7908
        %v7910 = vpop.f32.mrb[0].mxu0
        %v7911 = vpop.f32.mrb[0].mxu0
        %v7912 = vadd.f32 0.0, %v7911
        %v7913 = vpop.f32.mrb[0].mxu0
        %7914 = vdwg.mxu0
        %v7915 = vadd.f32 %v7813, %v7909
        %v7916 = vadd.f32 %v7814, %v7912
        %s7917 = scalar_lea.vmem %s67, 64
        %v7918 = vld [vmem:[%s7917] sm:$0xf]
        %v7919 = vld [vmem:[%s7917 + $0x4] sm:$0xf]
        %v7920 = vld [vmem:[%s7917 + $0x8] sm:$0xf]
        %v7921 = vld [vmem:[%s7917 + $0xc] sm:$0xf]
        %v7926 = vunpack.c.l.b16 %v7918
        %v7927 = vunpack.c.l.b16 %v7919
        %v7928 = vunpack.c.l.b16 %v7920
        %v7929 = vunpack.c.l.b16 %v7921
        %v7930 = vpack.c.b16 %v7927, %v7926
        %v7931 = vpack.c.b16 %v7929, %v7928
        %7934 = vmatprep.subr.bf16.mxu0 0
        %7935 = vmatpush1.bf16.msra.mxu0 %v7930
        %7936 = vmatprep.subr.bf16.mxu0 0
        %7937 = vmatpush1.bf16.msra.mxu0 %v7931
        %7938 = vmatprep.subr.bf16.mxu0 0
        %7939 = vmatpush1.bf16.msra.mxu0 0
        %7940 = vmatprep.subr.bf16.mxu0 0
        %7941 = vmatpush1.bf16.msra.mxu0 0
        %7942 = vmatprep.subr.bf16.mxu0 0
        %7943 = vmatpush1.bf16.msra.mxu0 0
        %7944 = vmatprep.subr.bf16.mxu0 0
        %7945 = vmatpush1.bf16.msra.mxu0 0
        %7946 = vmatprep.subr.bf16.mxu0 0
        %7947 = vmatpush1.bf16.msra.mxu0 0
        %7948 = vmatprep.subr.bf16.mxu0 0
        %7949 = vmatpush1.bf16.msra.mxu0 0
        %7950 = vmatprep.subr.bf16.mxu0 0
        %7951 = vmatpush1.bf16.msra.mxu0 0
        %7952 = vmatprep.subr.bf16.mxu0 0
        %7953 = vmatpush1.bf16.msra.mxu0 0
        %7954 = vmatprep.subr.bf16.mxu0 0
        %7955 = vmatpush1.bf16.msra.mxu0 0
        %7956 = vmatprep.subr.bf16.mxu0 0
        %7957 = vmatpush1.bf16.msra.mxu0 0
        %7958 = vmatprep.subr.bf16.mxu0 0
        %7959 = vmatpush1.bf16.msra.mxu0 0
        %7960 = vmatprep.subr.bf16.mxu0 0
        %7961 = vmatpush1.bf16.msra.mxu0 0
        %7962 = vmatprep.subr.bf16.mxu0 0
        %7963 = vmatpush1.bf16.msra.mxu0 0
        %7964 = vmatprep.subr.bf16.mxu0 0
        %7965 = vmatpush1.bf16.msra.mxu0 0
        %7966 = vmatprep.mubr.bf16.mxu0 0
        %7967 = vmatmul.mubr.bf16.gmra.mrb[0].mxu0 %v7528
        %v7968 = vpop.f32.mrb[0].mxu0
        %v7969 = vadd.f32 0.0, %v7968
        %v7970 = vpop.f32.mrb[0].mxu0
        %v7971 = vpop.f32.mrb[0].mxu0
        %v7972 = vadd.f32 0.0, %v7971
        %v7973 = vpop.f32.mrb[0].mxu0
        %7974 = vdwg.mxu0
        %v7975 = vpack.c.bf16 %v7972, %v7969
        %7976 = vmatprep.subr.bf16.mxu0 0
        %7977 = vmatpush1.bf16.msra.mxu0 %v7975
        %7978 = vmatprep.subr.bf16.mxu0 0
        %7979 = vmatpush1.bf16.msra.mxu0 0
        %7980 = vmatprep.subr.bf16.mxu0 0
        %7981 = vmatpush1.bf16.msra.mxu0 0
        %7982 = vmatprep.subr.bf16.mxu0 0
        %7983 = vmatpush1.bf16.msra.mxu0 0
        %7984 = vmatprep.subr.bf16.mxu0 0
        %7985 = vmatpush1.bf16.msra.mxu0 0
        %7986 = vmatprep.subr.bf16.mxu0 0
        %7987 = vmatpush1.bf16.msra.mxu0 0
        %7988 = vmatprep.subr.bf16.mxu0 0
        %7989 = vmatpush1.bf16.msra.mxu0 0
        %7990 = vmatprep.subr.bf16.mxu0 0
        %7991 = vmatpush1.bf16.msra.mxu0 0
        %7992 = vmatprep.subr.bf16.mxu0 0
        %7993 = vmatpush1.bf16.msra.mxu0 0
        %7994 = vmatprep.subr.bf16.mxu0 0
        %7995 = vmatpush1.bf16.msra.mxu0 0
        %7996 = vmatprep.subr.bf16.mxu0 0
        %7997 = vmatpush1.bf16.msra.mxu0 0
        %7998 = vmatprep.subr.bf16.mxu0 0
        %7999 = vmatpush1.bf16.msra.mxu0 0
        %8000 = vmatprep.subr.bf16.mxu0 0
        %8001 = vmatpush1.bf16.msra.mxu0 0
        %8002 = vmatprep.subr.bf16.mxu0 0
        %8003 = vmatpush1.bf16.msra.mxu0 0
        %8004 = vmatprep.subr.bf16.mxu0 0
        %8005 = vmatpush1.bf16.msra.mxu0 0
        %8006 = vmatprep.subr.bf16.mxu0 0
        %8007 = vmatpush1.bf16.msra.mxu0 0
        %8008 = vmatprep.mubr.bf16.mxu0 0
        %8009 = vmatmul.mubr.bf16.gmra.mrb[0].mxu0 %v6859
        %v8010 = vpop.f32.mrb[0].mxu0
        %v8011 = vadd.f32 0.0, %v8010
        %v8012 = vpop.f32.mrb[0].mxu0
        %v8013 = vpop.f32.mrb[0].mxu0
        %v8014 = vadd.f32 0.0, %v8013
        %v8015 = vpop.f32.mrb[0].mxu0
        %8016 = vdwg.mxu0
        %v8017 = vadd.f32 %v7915, %v8011
        %v8018 = vadd.f32 %v7916, %v8014
        %s8019 = scalar_lea.vmem %s67, 80
        %v8020 = vld [vmem:[%s8019] sm:$0xf]
        %v8021 = vld [vmem:[%s8019 + $0x4] sm:$0xf]
        %v8022 = vld [vmem:[%s8019 + $0x8] sm:$0xf]
        %v8023 = vld [vmem:[%s8019 + $0xc] sm:$0xf]
        %v8028 = vunpack.c.l.b16 %v8020
        %v8029 = vunpack.c.l.b16 %v8021
        %v8030 = vunpack.c.l.b16 %v8022
        %v8031 = vunpack.c.l.b16 %v8023
        %v8032 = vpack.c.b16 %v8029, %v8028
        %v8033 = vpack.c.b16 %v8031, %v8030
        %8036 = vmatprep.subr.bf16.mxu0 0
        %8037 = vmatpush1.bf16.msra.mxu0 %v8032
        %8038 = vmatprep.subr.bf16.mxu0 0
        %8039 = vmatpush1.bf16.msra.mxu0 %v8033
        %8040 = vmatprep.subr.bf16.mxu0 0
        %8041 = vmatpush1.bf16.msra.mxu0 0
        %8042 = vmatprep.subr.bf16.mxu0 0
        %8043 = vmatpush1.bf16.msra.mxu0 0
        %8044 = vmatprep.subr.bf16.mxu0 0
        %8045 = vmatpush1.bf16.msra.mxu0 0
        %8046 = vmatprep.subr.bf16.mxu0 0
        %8047 = vmatpush1.bf16.msra.mxu0 0
        %8048 = vmatprep.subr.bf16.mxu0 0
        %8049 = vmatpush1.bf16.msra.mxu0 0
        %8050 = vmatprep.subr.bf16.mxu0 0
        %8051 = vmatpush1.bf16.msra.mxu0 0
        %8052 = vmatprep.subr.bf16.mxu0 0
        %8053 = vmatpush1.bf16.msra.mxu0 0
        %8054 = vmatprep.subr.bf16.mxu0 0
        %8055 = vmatpush1.bf16.msra.mxu0 0
        %8056 = vmatprep.subr.bf16.mxu0 0
        %8057 = vmatpush1.bf16.msra.mxu0 0
        %8058 = vmatprep.subr.bf16.mxu0 0
        %8059 = vmatpush1.bf16.msra.mxu0 0
        %8060 = vmatprep.subr.bf16.mxu0 0
        %8061 = vmatpush1.bf16.msra.mxu0 0
        %8062 = vmatprep.subr.bf16.mxu0 0
        %8063 = vmatpush1.bf16.msra.mxu0 0
        %8064 = vmatprep.subr.bf16.mxu0 0
        %8065 = vmatpush1.bf16.msra.mxu0 0
        %8066 = vmatprep.subr.bf16.mxu0 0
        %8067 = vmatpush1.bf16.msra.mxu0 0
        %8068 = vmatprep.mubr.bf16.mxu0 0
        %8069 = vmatmul.mubr.bf16.gmra.mrb[0].mxu0 %v7528
        %v8070 = vpop.f32.mrb[0].mxu0
        %v8071 = vadd.f32 0.0, %v8070
        %v8072 = vpop.f32.mrb[0].mxu0
        %v8073 = vpop.f32.mrb[0].mxu0
        %v8074 = vadd.f32 0.0, %v8073
        %v8075 = vpop.f32.mrb[0].mxu0
        %8076 = vdwg.mxu0
        %v8077 = vpack.c.bf16 %v8074, %v8071
        %8078 = vmatprep.subr.bf16.mxu0 0
        %8079 = vmatpush1.bf16.msra.mxu0 %v8077
        %8080 = vmatprep.subr.bf16.mxu0 0
        %8081 = vmatpush1.bf16.msra.mxu0 0
        %8082 = vmatprep.subr.bf16.mxu0 0
        %8083 = vmatpush1.bf16.msra.mxu0 0
        %8084 = vmatprep.subr.bf16.mxu0 0
        %8085 = vmatpush1.bf16.msra.mxu0 0
        %8086 = vmatprep.subr.bf16.mxu0 0
        %8087 = vmatpush1.bf16.msra.mxu0 0
        %8088 = vmatprep.subr.bf16.mxu0 0
        %8089 = vmatpush1.bf16.msra.mxu0 0
        %8090 = vmatprep.subr.bf16.mxu0 0
        %8091 = vmatpush1.bf16.msra.mxu0 0
        %8092 = vmatprep.subr.bf16.mxu0 0
        %8093 = vmatpush1.bf16.msra.mxu0 0
        %8094 = vmatprep.subr.bf16.mxu0 0
        %8095 = vmatpush1.bf16.msra.mxu0 0
        %8096 = vmatprep.subr.bf16.mxu0 0
        %8097 = vmatpush1.bf16.msra.mxu0 0
        %8098 = vmatprep.subr.bf16.mxu0 0
        %8099 = vmatpush1.bf16.msra.mxu0 0
        %8100 = vmatprep.subr.bf16.mxu0 0
        %8101 = vmatpush1.bf16.msra.mxu0 0
        %8102 = vmatprep.subr.bf16.mxu0 0
        %8103 = vmatpush1.bf16.msra.mxu0 0
        %8104 = vmatprep.subr.bf16.mxu0 0
        %8105 = vmatpush1.bf16.msra.mxu0 0
        %8106 = vmatprep.subr.bf16.mxu0 0
        %8107 = vmatpush1.bf16.msra.mxu0 0
        %8108 = vmatprep.subr.bf16.mxu0 0
        %8109 = vmatpush1.bf16.msra.mxu0 0
        %8110 = vmatprep.mubr.bf16.mxu0 0
        %8111 = vmatmul.mubr.bf16.gmra.mrb[0].mxu0 %v6972
        %v8112 = vpop.f32.mrb[0].mxu0
        %v8113 = vadd.f32 0.0, %v8112
        %v8114 = vpop.f32.mrb[0].mxu0
        %v8115 = vpop.f32.mrb[0].mxu0
        %v8116 = vadd.f32 0.0, %v8115
        %v8117 = vpop.f32.mrb[0].mxu0
        %8118 = vdwg.mxu0
        %v8119 = vadd.f32 %v8017, %v8113
        %v8120 = vadd.f32 %v8018, %v8116
        %s8121 = scalar_lea.vmem %s67, 96
        %v8122 = vld [vmem:[%s8121] sm:$0xf]
        %v8123 = vld [vmem:[%s8121 + $0x4] sm:$0xf]
        %v8124 = vld [vmem:[%s8121 + $0x8] sm:$0xf]
        %v8125 = vld [vmem:[%s8121 + $0xc] sm:$0xf]
        %v8130 = vunpack.c.l.b16 %v8122
        %v8131 = vunpack.c.l.b16 %v8123
        %v8132 = vunpack.c.l.b16 %v8124
        %v8133 = vunpack.c.l.b16 %v8125
        %v8134 = vpack.c.b16 %v8131, %v8130
        %v8135 = vpack.c.b16 %v8133, %v8132
        %8138 = vmatprep.subr.bf16.mxu0 0
        %8139 = vmatpush1.bf16.msra.mxu0 %v8134
        %8140 = vmatprep.subr.bf16.mxu0 0
        %8141 = vmatpush1.bf16.msra.mxu0 %v8135
        %8142 = vmatprep.subr.bf16.mxu0 0
        %8143 = vmatpush1.bf16.msra.mxu0 0
        %8144 = vmatprep.subr.bf16.mxu0 0
        %8145 = vmatpush1.bf16.msra.mxu0 0
        %8146 = vmatprep.subr.bf16.mxu0 0
        %8147 = vmatpush1.bf16.msra.mxu0 0
        %8148 = vmatprep.subr.bf16.mxu0 0
        %8149 = vmatpush1.bf16.msra.mxu0 0
        %8150 = vmatprep.subr.bf16.mxu0 0
        %8151 = vmatpush1.bf16.msra.mxu0 0
        %8152 = vmatprep.subr.bf16.mxu0 0
        %8153 = vmatpush1.bf16.msra.mxu0 0
        %8154 = vmatprep.subr.bf16.mxu0 0
        %8155 = vmatpush1.bf16.msra.mxu0 0
        %8156 = vmatprep.subr.bf16.mxu0 0
        %8157 = vmatpush1.bf16.msra.mxu0 0
        %8158 = vmatprep.subr.bf16.mxu0 0
        %8159 = vmatpush1.bf16.msra.mxu0 0
        %8160 = vmatprep.subr.bf16.mxu0 0
        %8161 = vmatpush1.bf16.msra.mxu0 0
        %8162 = vmatprep.subr.bf16.mxu0 0
        %8163 = vmatpush1.bf16.msra.mxu0 0
        %8164 = vmatprep.subr.bf16.mxu0 0
        %8165 = vmatpush1.bf16.msra.mxu0 0
        %8166 = vmatprep.subr.bf16.mxu0 0
        %8167 = vmatpush1.bf16.msra.mxu0 0
        %8168 = vmatprep.subr.bf16.mxu0 0
        %8169 = vmatpush1.bf16.msra.mxu0 0
        %8170 = vmatprep.mubr.bf16.mxu0 0
        %8171 = vmatmul.mubr.bf16.gmra.mrb[0].mxu0 %v7528
        %v8172 = vpop.f32.mrb[0].mxu0
        %v8173 = vadd.f32 0.0, %v8172
        %v8174 = vpop.f32.mrb[0].mxu0
        %v8175 = vpop.f32.mrb[0].mxu0
        %v8176 = vadd.f32 0.0, %v8175
        %v8177 = vpop.f32.mrb[0].mxu0
        %8178 = vdwg.mxu0
        %v8179 = vpack.c.bf16 %v8176, %v8173
        %8180 = vmatprep.subr.bf16.mxu0 0
        %8181 = vmatpush1.bf16.msra.mxu0 %v8179
        %8182 = vmatprep.subr.bf16.mxu0 0
        %8183 = vmatpush1.bf16.msra.mxu0 0
        %8184 = vmatprep.subr.bf16.mxu0 0
        %8185 = vmatpush1.bf16.msra.mxu0 0
        %8186 = vmatprep.subr.bf16.mxu0 0
        %8187 = vmatpush1.bf16.msra.mxu0 0
        %8188 = vmatprep.subr.bf16.mxu0 0
        %8189 = vmatpush1.bf16.msra.mxu0 0
        %8190 = vmatprep.subr.bf16.mxu0 0
        %8191 = vmatpush1.bf16.msra.mxu0 0
        %8192 = vmatprep.subr.bf16.mxu0 0
        %8193 = vmatpush1.bf16.msra.mxu0 0
        %8194 = vmatprep.subr.bf16.mxu0 0
        %8195 = vmatpush1.bf16.msra.mxu0 0
        %8196 = vmatprep.subr.bf16.mxu0 0
        %8197 = vmatpush1.bf16.msra.mxu0 0
        %8198 = vmatprep.subr.bf16.mxu0 0
        %8199 = vmatpush1.bf16.msra.mxu0 0
        %8200 = vmatprep.subr.bf16.mxu0 0
        %8201 = vmatpush1.bf16.msra.mxu0 0
        %8202 = vmatprep.subr.bf16.mxu0 0
        %8203 = vmatpush1.bf16.msra.mxu0 0
        %8204 = vmatprep.subr.bf16.mxu0 0
        %8205 = vmatpush1.bf16.msra.mxu0 0
        %8206 = vmatprep.subr.bf16.mxu0 0
        %8207 = vmatpush1.bf16.msra.mxu0 0
        %8208 = vmatprep.subr.bf16.mxu0 0
        %8209 = vmatpush1.bf16.msra.mxu0 0
        %8210 = vmatprep.subr.bf16.mxu0 0
        %8211 = vmatpush1.bf16.msra.mxu0 0
        %8212 = vmatprep.mubr.bf16.mxu0 0
        %8213 = vmatmul.mubr.bf16.gmra.mrb[0].mxu0 %v7085
        %v8214 = vpop.f32.mrb[0].mxu0
        %v8215 = vadd.f32 0.0, %v8214
        %v8216 = vpop.f32.mrb[0].mxu0
        %v8217 = vpop.f32.mrb[0].mxu0
        %v8218 = vadd.f32 0.0, %v8217
        %v8219 = vpop.f32.mrb[0].mxu0
        %8220 = vdwg.mxu0
        %v8221 = vadd.f32 %v8119, %v8215
        %v8222 = vadd.f32 %v8120, %v8218
        %s8223 = scalar_lea.vmem %s67, 112
        %v8224 = vld [vmem:[%s8223] sm:$0xf]
        %v8225 = vld [vmem:[%s8223 + $0x4] sm:$0xf]
        %v8226 = vld [vmem:[%s8223 + $0x8] sm:$0xf]
        %v8227 = vld [vmem:[%s8223 + $0xc] sm:$0xf]
        %v8232 = vunpack.c.l.b16 %v8224
        %v8233 = vunpack.c.l.b16 %v8225
        %v8234 = vunpack.c.l.b16 %v8226
        %v8235 = vunpack.c.l.b16 %v8227
        %v8236 = vpack.c.b16 %v8233, %v8232
        %v8237 = vpack.c.b16 %v8235, %v8234
        %8240 = vmatprep.subr.bf16.mxu0 0
        %8241 = vmatpush1.bf16.msra.mxu0 %v8236
        %8242 = vmatprep.subr.bf16.mxu0 0
        %8243 = vmatpush1.bf16.msra.mxu0 %v8237
        %8244 = vmatprep.subr.bf16.mxu0 0
        %8245 = vmatpush1.bf16.msra.mxu0 0
        %8246 = vmatprep.subr.bf16.mxu0 0
        %8247 = vmatpush1.bf16.msra.mxu0 0
        %8248 = vmatprep.subr.bf16.mxu0 0
        %8249 = vmatpush1.bf16.msra.mxu0 0
        %8250 = vmatprep.subr.bf16.mxu0 0
        %8251 = vmatpush1.bf16.msra.mxu0 0
        %8252 = vmatprep.subr.bf16.mxu0 0
        %8253 = vmatpush1.bf16.msra.mxu0 0
        %8254 = vmatprep.subr.bf16.mxu0 0
        %8255 = vmatpush1.bf16.msra.mxu0 0
        %8256 = vmatprep.subr.bf16.mxu0 0
        %8257 = vmatpush1.bf16.msra.mxu0 0
        %8258 = vmatprep.subr.bf16.mxu0 0
        %8259 = vmatpush1.bf16.msra.mxu0 0
        %8260 = vmatprep.subr.bf16.mxu0 0
        %8261 = vmatpush1.bf16.msra.mxu0 0
        %8262 = vmatprep.subr.bf16.mxu0 0
        %8263 = vmatpush1.bf16.msra.mxu0 0
        %8264 = vmatprep.subr.bf16.mxu0 0
        %8265 = vmatpush1.bf16.msra.mxu0 0
        %8266 = vmatprep.subr.bf16.mxu0 0
        %8267 = vmatpush1.bf16.msra.mxu0 0
        %8268 = vmatprep.subr.bf16.mxu0 0
        %8269 = vmatpush1.bf16.msra.mxu0 0
        %8270 = vmatprep.subr.bf16.mxu0 0
        %8271 = vmatpush1.bf16.msra.mxu0 0
        %8272 = vmatprep.mubr.bf16.mxu0 0
        %8273 = vmatmul.mubr.bf16.gmra.mrb[0].mxu0 %v7528
        %v8274 = vpop.f32.mrb[0].mxu0
        %v8275 = vadd.f32 0.0, %v8274
        %v8276 = vpop.f32.mrb[0].mxu0
        %v8277 = vpop.f32.mrb[0].mxu0
        %v8278 = vadd.f32 0.0, %v8277
        %v8279 = vpop.f32.mrb[0].mxu0
        %8280 = vdwg.mxu0
        %v8281 = vpack.c.bf16 %v8278, %v8275
        %8282 = vmatprep.subr.bf16.mxu0 0
        %8283 = vmatpush1.bf16.msra.mxu0 %v8281
        %8284 = vmatprep.subr.bf16.mxu0 0
        %8285 = vmatpush1.bf16.msra.mxu0 0
        %8286 = vmatprep.subr.bf16.mxu0 0
        %8287 = vmatpush1.bf16.msra.mxu0 0
        %8288 = vmatprep.subr.bf16.mxu0 0
        %8289 = vmatpush1.bf16.msra.mxu0 0
        %8290 = vmatprep.subr.bf16.mxu0 0
        %8291 = vmatpush1.bf16.msra.mxu0 0
        %8292 = vmatprep.subr.bf16.mxu0 0
        %8293 = vmatpush1.bf16.msra.mxu0 0
        %8294 = vmatprep.subr.bf16.mxu0 0
        %8295 = vmatpush1.bf16.msra.mxu0 0
        %8296 = vmatprep.subr.bf16.mxu0 0
        %8297 = vmatpush1.bf16.msra.mxu0 0
        %8298 = vmatprep.subr.bf16.mxu0 0
        %8299 = vmatpush1.bf16.msra.mxu0 0
        %8300 = vmatprep.subr.bf16.mxu0 0
        %8301 = vmatpush1.bf16.msra.mxu0 0
        %8302 = vmatprep.subr.bf16.mxu0 0
        %8303 = vmatpush1.bf16.msra.mxu0 0
        %8304 = vmatprep.subr.bf16.mxu0 0
        %8305 = vmatpush1.bf16.msra.mxu0 0
        %8306 = vmatprep.subr.bf16.mxu0 0
        %8307 = vmatpush1.bf16.msra.mxu0 0
        %8308 = vmatprep.subr.bf16.mxu0 0
        %8309 = vmatpush1.bf16.msra.mxu0 0
        %8310 = vmatprep.subr.bf16.mxu0 0
        %8311 = vmatpush1.bf16.msra.mxu0 0
        %8312 = vmatprep.subr.bf16.mxu0 0
        %8313 = vmatpush1.bf16.msra.mxu0 0
        %8314 = vmatprep.mubr.bf16.mxu0 0
        %8315 = vmatmul.mubr.bf16.gmra.mrb[0].mxu0 %v7198
        %v8316 = vpop.f32.mrb[0].mxu0
        %v8317 = vadd.f32 0.0, %v8316
        %v8318 = vpop.f32.mrb[0].mxu0
        %v8319 = vpop.f32.mrb[0].mxu0
        %v8320 = vadd.f32 0.0, %v8319
        %v8321 = vpop.f32.mrb[0].mxu0
        %8322 = vdwg.mxu0
        %v8323 = vadd.f32 %v8221, %v8317
        %v8324 = vadd.f32 %v8222, %v8320
        %s8325 = scalar_lea.vmem %s67, 128
        %v8326 = vld [vmem:[%s8325] sm:$0xf]
        %v8327 = vld [vmem:[%s8325 + $0x4] sm:$0xf]
        %v8328 = vld [vmem:[%s8325 + $0x8] sm:$0xf]
        %v8329 = vld [vmem:[%s8325 + $0xc] sm:$0xf]
        %v8334 = vunpack.c.l.b16 %v8326
        %v8335 = vunpack.c.l.b16 %v8327
        %v8336 = vunpack.c.l.b16 %v8328
        %v8337 = vunpack.c.l.b16 %v8329
        %v8338 = vpack.c.b16 %v8335, %v8334
        %v8339 = vpack.c.b16 %v8337, %v8336
        %8342 = vmatprep.subr.bf16.mxu0 0
        %8343 = vmatpush1.bf16.msra.mxu0 %v8338
        %8344 = vmatprep.subr.bf16.mxu0 0
        %8345 = vmatpush1.bf16.msra.mxu0 %v8339
        %8346 = vmatprep.subr.bf16.mxu0 0
        %8347 = vmatpush1.bf16.msra.mxu0 0
        %8348 = vmatprep.subr.bf16.mxu0 0
        %8349 = vmatpush1.bf16.msra.mxu0 0
        %8350 = vmatprep.subr.bf16.mxu0 0
        %8351 = vmatpush1.bf16.msra.mxu0 0
        %8352 = vmatprep.subr.bf16.mxu0 0
        %8353 = vmatpush1.bf16.msra.mxu0 0
        %8354 = vmatprep.subr.bf16.mxu0 0
        %8355 = vmatpush1.bf16.msra.mxu0 0
        %8356 = vmatprep.subr.bf16.mxu0 0
        %8357 = vmatpush1.bf16.msra.mxu0 0
        %8358 = vmatprep.subr.bf16.mxu0 0
        %8359 = vmatpush1.bf16.msra.mxu0 0
        %8360 = vmatprep.subr.bf16.mxu0 0
        %8361 = vmatpush1.bf16.msra.mxu0 0
        %8362 = vmatprep.subr.bf16.mxu0 0
        %8363 = vmatpush1.bf16.msra.mxu0 0
        %8364 = vmatprep.subr.bf16.mxu0 0
        %8365 = vmatpush1.bf16.msra.mxu0 0
        %8366 = vmatprep.subr.bf16.mxu0 0
        %8367 = vmatpush1.bf16.msra.mxu0 0
        %8368 = vmatprep.subr.bf16.mxu0 0
        %8369 = vmatpush1.bf16.msra.mxu0 0
        %8370 = vmatprep.subr.bf16.mxu0 0
        %8371 = vmatpush1.bf16.msra.mxu0 0
        %8372 = vmatprep.subr.bf16.mxu0 0
        %8373 = vmatpush1.bf16.msra.mxu0 0
        %8374 = vmatprep.mubr.bf16.mxu0 0
        %8375 = vmatmul.mubr.bf16.gmra.mrb[0].mxu0 %v7528
        %v8376 = vpop.f32.mrb[0].mxu0
        %v8377 = vadd.f32 0.0, %v8376
        %v8378 = vpop.f32.mrb[0].mxu0
        %v8379 = vpop.f32.mrb[0].mxu0
        %v8380 = vadd.f32 0.0, %v8379
        %v8381 = vpop.f32.mrb[0].mxu0
        %8382 = vdwg.mxu0
        %v8383 = vpack.c.bf16 %v8380, %v8377
        %8384 = vmatprep.subr.bf16.mxu0 0
        %8385 = vmatpush1.bf16.msra.mxu0 %v8383
        %8386 = vmatprep.subr.bf16.mxu0 0
        %8387 = vmatpush1.bf16.msra.mxu0 0
        %8388 = vmatprep.subr.bf16.mxu0 0
        %8389 = vmatpush1.bf16.msra.mxu0 0
        %8390 = vmatprep.subr.bf16.mxu0 0
        %8391 = vmatpush1.bf16.msra.mxu0 0
        %8392 = vmatprep.subr.bf16.mxu0 0
        %8393 = vmatpush1.bf16.msra.mxu0 0
        %8394 = vmatprep.subr.bf16.mxu0 0
        %8395 = vmatpush1.bf16.msra.mxu0 0
        %8396 = vmatprep.subr.bf16.mxu0 0
        %8397 = vmatpush1.bf16.msra.mxu0 0
        %8398 = vmatprep.subr.bf16.mxu0 0
        %8399 = vmatpush1.bf16.msra.mxu0 0
        %8400 = vmatprep.subr.bf16.mxu0 0
        %8401 = vmatpush1.bf16.msra.mxu0 0
        %8402 = vmatprep.subr.bf16.mxu0 0
        %8403 = vmatpush1.bf16.msra.mxu0 0
        %8404 = vmatprep.subr.bf16.mxu0 0
        %8405 = vmatpush1.bf16.msra.mxu0 0
        %8406 = vmatprep.subr.bf16.mxu0 0
        %8407 = vmatpush1.bf16.msra.mxu0 0
        %8408 = vmatprep.subr.bf16.mxu0 0
        %8409 = vmatpush1.bf16.msra.mxu0 0
        %8410 = vmatprep.subr.bf16.mxu0 0
        %8411 = vmatpush1.bf16.msra.mxu0 0
        %8412 = vmatprep.subr.bf16.mxu0 0
        %8413 = vmatpush1.bf16.msra.mxu0 0
        %8414 = vmatprep.subr.bf16.mxu0 0
        %8415 = vmatpush1.bf16.msra.mxu0 0
        %8416 = vmatprep.mubr.bf16.mxu0 0
        %8417 = vmatmul.mubr.bf16.gmra.mrb[0].mxu0 %v7311
        %v8418 = vpop.f32.mrb[0].mxu0
        %v8419 = vadd.f32 0.0, %v8418
        %v8420 = vpop.f32.mrb[0].mxu0
        %v8421 = vpop.f32.mrb[0].mxu0
        %v8422 = vadd.f32 0.0, %v8421
        %v8423 = vpop.f32.mrb[0].mxu0
        %8424 = vdwg.mxu0
        %v8425 = vadd.f32 %v8323, %v8419
        %v8426 = vadd.f32 %v8324, %v8422
        %v8427 = vld [vmem:[%s69] sm:$0x1]
        %v8429 = vlaneseq
        %v8430 = vshrl.u32 %v8429, 7
        %v8431 = vsub.s32 0, %v8430
        %v8432 = vrot.slane %v8427, %v8431
        %v8434 = vmul.f32 %v6242, %v8432
        %v8435 = vmul.f32 %v6245, %v8432
        %v8436 = vld [vmem:[%s71] sm:$0x1]
        %v8438 = vlaneseq
        %v8439 = vshrl.u32 %v8438, 7
        %v8440 = vsub.s32 0, %v8439
        %v8441 = vrot.slane %v8436, %v8440
        %v8443 = vadd.f32 %v8434, %v8441
        %v8444 = vadd.f32 %v8435, %v8441
        %v8445 = vmax.f32 %v8443, 0.0
        %v8446 = vmax.f32 %v8444, 0.0
        %v8447 = vld [vmem:[%s73] sm:$0xf]
        %v8448 = vld [vmem:[%s73 + $0x4] sm:$0xf]
        %v8449 = vpack.c.bf16 %v8446, %v8445
        %8450 = vrot.lane.b32.xlu0 %v8432, 112
        %v8451 = vpop.permute.xlu0 %8450
        %v8453 = vmul.f32 %v7354, %v8451
        %v8454 = vmul.f32 %v7355, %v8451
        %8455 = vrot.lane.b32.xlu0 %v8441, 112
        %v8456 = vpop.permute.xlu0 %8455
        %v8458 = vadd.f32 %v8453, %v8456
        %v8459 = vadd.f32 %v8454, %v8456
        %v8460 = vmax.f32 %v8458, 0.0
        %v8461 = vmax.f32 %v8459, 0.0
        %v8462 = vld [vmem:[%s73 + $0x8] sm:$0xf]
        %v8463 = vpack.c.bf16 %v8461, %v8460
        %v8465 = vsel %vm4195, %v8463, 0
        %v8468 = vsel %vm4208, %v8462, 0
        %8470 = vmatprep.subr.bf16.mxu0 0
        %8471 = vmatpush1.bf16.msra.mxu0 %v8468
        %8472 = vmatprep.subr.bf16.mxu0 0
        %8473 = vmatpush1.bf16.msra.mxu0 0
        %8474 = vmatprep.subr.bf16.mxu0 0
        %8475 = vmatpush1.bf16.msra.mxu0 0
        %8476 = vmatprep.subr.bf16.mxu0 0
        %8477 = vmatpush1.bf16.msra.mxu0 0
        %8478 = vmatprep.subr.bf16.mxu0 0
        %8479 = vmatpush1.bf16.msra.mxu0 0
        %8480 = vmatprep.subr.bf16.mxu0 0
        %8481 = vmatpush1.bf16.msra.mxu0 0
        %8482 = vmatprep.subr.bf16.mxu0 0
        %8483 = vmatpush1.bf16.msra.mxu0 0
        %8484 = vmatprep.subr.bf16.mxu0 0
        %8485 = vmatpush1.bf16.msra.mxu0 0
        %8486 = vmatprep.subr.bf16.mxu0 0
        %8487 = vmatpush1.bf16.msra.mxu0 0
        %8488 = vmatprep.subr.bf16.mxu0 0
        %8489 = vmatpush1.bf16.msra.mxu0 0
        %8490 = vmatprep.subr.bf16.mxu0 0
        %8491 = vmatpush1.bf16.msra.mxu0 0
        %8492 = vmatprep.subr.bf16.mxu0 0
        %8493 = vmatpush1.bf16.msra.mxu0 0
        %8494 = vmatprep.subr.bf16.mxu0 0
        %8495 = vmatpush1.bf16.msra.mxu0 0
        %8496 = vmatprep.subr.bf16.mxu0 0
        %8497 = vmatpush1.bf16.msra.mxu0 0
        %8498 = vmatprep.subr.bf16.mxu0 0
        %8499 = vmatpush1.bf16.msra.mxu0 0
        %8500 = vmatprep.subr.bf16.mxu0 0
        %8501 = vmatpush1.bf16.msra.mxu0 0
        %8502 = vmatprep.mubr.bf16.mxu0 0
        %8503 = vmatmul.mubr.bf16.gmra.mrb[0].mxu0 %v8465
        %v8504 = vpop.f32.mrb[0].mxu0
        %v8505 = vadd.f32 0.0, %v8504
        %v8506 = vpop.f32.mrb[0].mxu0
        %v8507 = vpop.f32.mrb[0].mxu0
        %v8508 = vadd.f32 0.0, %v8507
        %v8509 = vpop.f32.mrb[0].mxu0
        %8510 = vdwg.mxu0
        %v8513 = vunpack.c.l.b16 %v8447
        %v8514 = vunpack.c.l.b16 %v8448
        %v8515 = vpack.c.b16 %v8514, %v8513
        %v8518 = vsel %vm2200, %v8449, 0
        %8520 = vmatprep.subr.bf16.mxu0 0
        %8521 = vmatpush1.bf16.msra.mxu0 %v8515
        %8522 = vmatprep.subr.bf16.mxu0 0
        %8523 = vmatpush1.bf16.msra.mxu0 0
        %8524 = vmatprep.subr.bf16.mxu0 0
        %8525 = vmatpush1.bf16.msra.mxu0 0
        %8526 = vmatprep.subr.bf16.mxu0 0
        %8527 = vmatpush1.bf16.msra.mxu0 0
        %8528 = vmatprep.subr.bf16.mxu0 0
        %8529 = vmatpush1.bf16.msra.mxu0 0
        %8530 = vmatprep.subr.bf16.mxu0 0
        %8531 = vmatpush1.bf16.msra.mxu0 0
        %8532 = vmatprep.subr.bf16.mxu0 0
        %8533 = vmatpush1.bf16.msra.mxu0 0
        %8534 = vmatprep.subr.bf16.mxu0 0
        %8535 = vmatpush1.bf16.msra.mxu0 0
        %8536 = vmatprep.subr.bf16.mxu0 0
        %8537 = vmatpush1.bf16.msra.mxu0 0
        %8538 = vmatprep.subr.bf16.mxu0 0
        %8539 = vmatpush1.bf16.msra.mxu0 0
        %8540 = vmatprep.subr.bf16.mxu0 0
        %8541 = vmatpush1.bf16.msra.mxu0 0
        %8542 = vmatprep.subr.bf16.mxu0 0
        %8543 = vmatpush1.bf16.msra.mxu0 0
        %8544 = vmatprep.subr.bf16.mxu0 0
        %8545 = vmatpush1.bf16.msra.mxu0 0
        %8546 = vmatprep.subr.bf16.mxu0 0
        %8547 = vmatpush1.bf16.msra.mxu0 0
        %8548 = vmatprep.subr.bf16.mxu0 0
        %8549 = vmatpush1.bf16.msra.mxu0 0
        %8550 = vmatprep.subr.bf16.mxu0 0
        %8551 = vmatpush1.bf16.msra.mxu0 0
        %8552 = vmatprep.mubr.bf16.mxu0 0
        %8553 = vmatmul.mubr.bf16.gmra.mrb[0].mxu0 %v8518
        %v8554 = vpop.f32.mrb[0].mxu0
        %v8555 = vadd.f32 %v8505, %v8554
        %v8556 = vpop.f32.mrb[0].mxu0
        %v8557 = vpop.f32.mrb[0].mxu0
        %v8558 = vadd.f32 %v8508, %v8557
        %v8559 = vpop.f32.mrb[0].mxu0
        %8560 = vdwg.mxu0
        %8561 = vrot.lane.b32.xlu0 %v8432, 104
        %v8562 = vpop.permute.xlu0 %8561
        %v8564 = vmul.f32 %v8425, %v8562
        %v8565 = vmul.f32 %v8426, %v8562
        %8566 = vrot.lane.b32.xlu0 %v8441, 104
        %v8567 = vpop.permute.xlu0 %8566
        %v8569 = vadd.f32 %v8564, %v8567
        %v8570 = vadd.f32 %v8565, %v8567
        %v8571 = vmax.f32 %v8569, 0.0
        %v8572 = vmax.f32 %v8570, 0.0
        %v8573 = vld [vmem:[%s73 + $0xc] sm:$0xf]
        %v8574 = vpack.c.bf16 %v8572, %v8571
        %v8576 = vsel %vm4195, %v8574, 0
        %v8579 = vsel %vm4208, %v8573, 0
        %8581 = vmatprep.subr.bf16.mxu0 0
        %8582 = vmatpush1.bf16.msra.mxu0 %v8579
        %8583 = vmatprep.subr.bf16.mxu0 0
        %8584 = vmatpush1.bf16.msra.mxu0 0
        %8585 = vmatprep.subr.bf16.mxu0 0
        %8586 = vmatpush1.bf16.msra.mxu0 0
        %8587 = vmatprep.subr.bf16.mxu0 0
        %8588 = vmatpush1.bf16.msra.mxu0 0
        %8589 = vmatprep.subr.bf16.mxu0 0
        %8590 = vmatpush1.bf16.msra.mxu0 0
        %8591 = vmatprep.subr.bf16.mxu0 0
        %8592 = vmatpush1.bf16.msra.mxu0 0
        %8593 = vmatprep.subr.bf16.mxu0 0
        %8594 = vmatpush1.bf16.msra.mxu0 0
        %8595 = vmatprep.subr.bf16.mxu0 0
        %8596 = vmatpush1.bf16.msra.mxu0 0
        %8597 = vmatprep.subr.bf16.mxu0 0
        %8598 = vmatpush1.bf16.msra.mxu0 0
        %8599 = vmatprep.subr.bf16.mxu0 0
        %8600 = vmatpush1.bf16.msra.mxu0 0
        %8601 = vmatprep.subr.bf16.mxu0 0
        %8602 = vmatpush1.bf16.msra.mxu0 0
        %8603 = vmatprep.subr.bf16.mxu0 0
        %8604 = vmatpush1.bf16.msra.mxu0 0
        %8605 = vmatprep.subr.bf16.mxu0 0
        %8606 = vmatpush1.bf16.msra.mxu0 0
        %8607 = vmatprep.subr.bf16.mxu0 0
        %8608 = vmatpush1.bf16.msra.mxu0 0
        %8609 = vmatprep.subr.bf16.mxu0 0
        %8610 = vmatpush1.bf16.msra.mxu0 0
        %8611 = vmatprep.subr.bf16.mxu0 0
        %8612 = vmatpush1.bf16.msra.mxu0 0
        %8613 = vmatprep.mubr.bf16.mxu0 0
        %8614 = vmatmul.mubr.bf16.gmra.mrb[0].mxu0 %v8576
        %v8615 = vpop.f32.mrb[0].mxu0
        %v8616 = vadd.f32 0.0, %v8615
        %v8617 = vpop.f32.mrb[0].mxu0
        %v8618 = vpop.f32.mrb[0].mxu0
        %v8619 = vadd.f32 0.0, %v8618
        %v8620 = vpop.f32.mrb[0].mxu0
        %8621 = vdwg.mxu0
        %v8622 = vadd.f32 %v8555, %v8616
        %v8623 = vadd.f32 %v8558, %v8619
        %8624 = vst.msk [vmem:[%s1119] sm:$0xff] %vm2200, %v8622
        %8625 = vst.msk [vmem:[%s1119 + $0x8] sm:$0xff] %vm2200, %v8623
        %s8626 = sand.u32 %s879, 1
        %s8627 = scalar_lea.sflag [#allocation3], %s8626
        %s8628 = sand.u32 %s879, 1
        %s8629 = smul.addr %s8628, 16
        %s8630 = scalar_lea.vmem [#allocation2], %s8629
        // Predicated region
        $region169: #{smaller_deep_cnn300_forward.1} parent=167 // pred_check
          %p8631 = pneg %p889
        $region170: #{smaller_deep_cnn300_forward.1} parent=167 // pred_check_branch
          %8633 = sbr.rel (%p8631) target = $region172
        $region171: #{smaller_deep_cnn300_forward.1} parent=167 // pred_region
          %s8635 = ssub.s32 256, 256
          %8636 = vsyncadd %s8627, %s8635
          %s8637 = smul.addr %s89, 2
          %s8638 = smul.addr %s8637, 128
          %s8639 = scalar_lea.hbm %s75, %s8638
          %s8640 = sshll.u32 %s8630, 4
          %s8641 = int_to_ptr.vmem [resolvable:$true] %s8640
          %8646 = dma.vmem_to_hbm [thread:$0]  %s8641, 256, %s8639, %s8627, 128, 128, 8
        $region172: #{smaller_deep_cnn300_forward.1} parent=167 // pred_fallthru
          _
      $region168: #{smaller_deep_cnn300_forward.1} parent=5 // pred_fallthru
        _
      %p8647 = scmp.le.s32.totalorder 2, %s84
      // Predicated region
      $region173: #{smaller_deep_cnn300_forward.1} parent=5 // pred_check
        %p8648 = pneg %p8647
      $region174: #{smaller_deep_cnn300_forward.1} parent=5 // pred_check_branch
        %8650 = sbr.rel (%p8648) target = $region176
      $region175: #{smaller_deep_cnn300_forward.1} parent=5 // pred_region
        %s8651 = ssub.s32 %s84, 2
        // Predicated region
        $region177: #{smaller_deep_cnn300_forward.1} parent=175 // pred_check
          %p8652 = pneg %p895
        $region178: #{smaller_deep_cnn300_forward.1} parent=175 // pred_check_branch
          %8654 = sbr.rel (%p8652) target = $region180
        $region179: #{smaller_deep_cnn300_forward.1} parent=175 // pred_region
          %s8655 = sand.u32 %s880, 1
          %s8656 = scalar_lea.sflag [#allocation3], %s8655
          %s8657 = sand.u32 %s880, 1
          %s8658 = smul.addr %s8657, 16
          %s8659 = scalar_lea.vmem [#allocation2], %s8658
          %8660 = dma.done %s8656, 256
        $region180: #{smaller_deep_cnn300_forward.1} parent=175 // pred_fallthru
          _
      $region176: #{smaller_deep_cnn300_forward.1} parent=5 // pred_fallthru
        _
    $region6: #{smaller_deep_cnn300_forward.1} parent=1 // loop_footer
      %s88 = sadd.s32 1, %s84
    $region7: #{smaller_deep_cnn300_forward.1} parent=1 // loop_footer_branch
      %83 = sbr.rel target = $region3
    $region8: #{smaller_deep_cnn300_forward.1} parent=1 // loop_exit
      _
    %8661 = vsyncpa [#allocation3], 1
    %s8662 = scalar_lea.sflag [#allocation3], 1
    %8663 = vsyncpa %s8662, 1

</llo_original>
